<compile_context>
chip_gen: v7x
topology: tpu7x:2x2x1
jax: 0.10.0
libtpu: 0.0.40
codegen_flags: <defaults>
</compile_context>

<pallas_src>
import math

import jax
import jax.numpy as jnp
from jax import lax
from jax.experimental import pallas as pl
from jax.experimental.pallas import tpu as pltpu

# ----------------------- configuration (Mamba(d_model=16)) -----------------------
D_MODEL = 16
D_STATE = 16
D_CONV = 4
EXPAND = 2
D_INNER = EXPAND * D_MODEL            # 32
DT_RANK = math.ceil(D_MODEL / 16)     # 1
CA_RATIO = 16
CA_HIDDEN = D_INNER // CA_RATIO       # 2
SA_KSIZE = 7
SA_PAD = SA_KSIZE // 2                # 3

B = 2
H = 8
W = 8
L = H * W                             # 64
C2 = 2 * D_INNER                      # 64
NS = D_INNER * D_STATE                # 512  (lane-flattened state width)
OUT_PAD = 128                         # lane-padded out_proj width

# flattened-L padded buffer for the 5x5 depthwise conv
DW_SHIFT_ROWS = L + 4 * W             # 96  rows per dx-shifted copy
DW_PAD_ROWS = DW_SHIFT_ROWS + 8       # 104 (>= max slice end 100, x8 aligned)
DW_OFF = 2 * W + 2                    # 18  row where image row 0 lands


# ----------------------------- small math helpers ---------------------------------
def _sigmoid(x):
    return 1.0 / (1.0 + jnp.exp(-x))


def _silu(x):
    return x * _sigmoid(x)


def _softplus(x):
    # numerically-stable softplus (matches F.softplus semantics)
    return jnp.maximum(x, 0.0) + jnp.log(1.0 + jnp.exp(-jnp.abs(x)))


# ================================ fused kernel =====================================
def _mamba_fused_kernel(
        h_ref, w_in_ref, w_dw_ref, w_ca1_ref, w_ca2_ref,
        m_sa_avg_ref, m_sa_max_ref, w_c1_ref, b_c1_ref,
        w_ssm_ref, a_rep_ref, dtb_rep_ref, rt_ref, d_ref, w_out_ref,
        o_ref,
        xzp_scr, ccp_scr, da_scr, dbu_scr, h_scr):
    f32 = jnp.float32

    # ---- 1) in_proj : 1x1 Conv2d == channel matmul --------------------------------
    h_in = h_ref[0]                                                      # (L, D_MODEL)
    xz = jnp.dot(h_in, w_in_ref[...], preferred_element_type=f32)        # (L, C2)

    # ---- 2) depthwise 5x5 Conv2d, computed in flattened-L space -------------------
    # out[l] = sum_{dy,dx} w[dy,dx] * xpad[l + 8*dy + dx], column-masked per dx.
    xzp_scr[...] = jnp.zeros_like(xzp_scr)
    xzp_scr[DW_OFF:DW_OFF + L, :] = xz
    rmod = lax.broadcasted_iota(jnp.int32, (DW_SHIFT_ROWS, 1), 0) & 7     # l mod 8
    acc = jnp.zeros((L, C2), f32)
    for dx in range(5):
        sh = xzp_scr[dx:dx + DW_SHIFT_ROWS, :]                           # (96, C2)
        lo = 2 - dx                                                      # valid col range
        hi = 9 - dx
        if lo > 0 or hi < 7:                                             # dx==2 needs no mask
            keep = (rmod >= lo) & (rmod <= hi)
            sh = jnp.where(keep, sh, 0.0)
        for dy in range(5):
            w_tap = w_dw_ref[5 * dy + dx:5 * dy + dx + 1, :]             # (1, C2)
            acc = acc + sh[8 * dy:8 * dy + L, :] * w_tap                 # 8-aligned slice
    x = acc[:, :D_INNER]                                                 # (L, D_INNER)
    z = acc[:, D_INNER:]                                                 # (L, D_INNER)

    # ---- 3) channel attention gate on x : x = sigmoid(fc2(silu(fc1(pool)))) * x ---
    avg = jnp.mean(x, axis=0, keepdims=True)                             # (1, D_INNER)
    mx = jnp.max(x, axis=0, keepdims=True)                               # (1, D_INNER)

    def _ca_branch(p):
        hid = _silu(jnp.dot(p, w_ca1_ref[...], preferred_element_type=f32))
        return jnp.dot(hid, w_ca2_ref[...], preferred_element_type=f32)

    scale = _sigmoid(_ca_branch(avg) + _ca_branch(mx))                   # (1, D_INNER)
    x = x * scale

    # ---- 4) spatial attention gate on z (7-tap conv folded into Toeplitz matmuls) -
    z_avg = jnp.mean(z, axis=1, keepdims=True)                           # (L, 1)
    z_max = jnp.max(z, axis=1, keepdims=True)                            # (L, 1)
    att = _sigmoid(
        jnp.dot(m_sa_avg_ref[...], z_avg, preferred_element_type=f32)
        + jnp.dot(m_sa_max_ref[...], z_max, preferred_element_type=f32))  # (L, 1)
    z = z * att

    # ---- 5) causal depthwise Conv1d (k=4) + bias + SiLU ---------------------------
    ccp_scr[...] = jnp.zeros_like(ccp_scr)
    ccp_scr[D_CONV - 1:D_CONV - 1 + L, :] = x
    cacc = jnp.zeros((L, D_INNER), f32)
    for k in range(D_CONV):
        cacc = cacc + ccp_scr[k:k + L, :] * w_c1_ref[k:k + 1, :]
    x = _silu(cacc + b_c1_ref[...])                                      # (L, D_INNER)

    # ---- 6) SSM: merged projections -> lane-dense (L, 512) scan -> out_proj -------
    # one MXU push: [delta_pre | B_rep | C_rep | x_rep] all expanded to d*D_STATE+n
    big = jnp.dot(x, w_ssm_ref[...], preferred_element_type=f32)         # (L, 4*NS)
    delta_rep = _softplus(big[:, 0:NS] + dtb_rep_ref[...])               # (L, NS)
    b_rep = big[:, NS:2 * NS]
    c_rep = big[:, 2 * NS:3 * NS]
    x_rep = big[:, 3 * NS:4 * NS]

    da_scr[...] = jnp.exp(delta_rep * a_rep_ref[...])                    # deltaA
    dbu_scr[...] = delta_rep * x_rep * b_rep                             # deltaB * u

    # fully unrolled selective scan (static L=64), lane-dense 512-wide rows
    h = jnp.zeros((1, NS), f32)
    for l in range(L):
        h = da_scr[l:l + 1, :] * h + dbu_scr[l:l + 1, :]
        h_scr[l:l + 1, :] = h

    # y_l[d] = sum_n h_l[d,n] * C_l[n]  ->  one (L,NS) @ (NS,D_INNER) matmul
    y = jnp.dot(h_scr[...] * c_rep, rt_ref[...], preferred_element_type=f32)  # (L, D_INNER)
    y = y + x * d_ref[...]                                               # D skip connection
    y = y * _silu(z)                                                     # gate with silu(z)
    # out_proj with lane-padded weight -> full-width unmasked stores
    o_ref[0] = jnp.dot(y, w_out_ref[...], preferred_element_type=f32)    # (L, OUT_PAD)


# ================================ parameters ======================================
def init_params(key):
    ks = jax.random.split(key, 12)
    w_in = jax.random.normal(ks[0], (C2, D_MODEL), jnp.float32) / math.sqrt(D_MODEL)
    w_dw = jax.random.normal(ks[1], (C2, 1, 5, 5), jnp.float32) * 0.2
    w_c1 = jax.random.normal(ks[2], (D_INNER, 1, D_CONV), jnp.float32) * 0.5
    b_c1 = jax.random.normal(ks[3], (D_INNER,), jnp.float32) * 0.1
    w_x = jax.random.normal(ks[4], (DT_RANK + 2 * D_STATE, D_INNER), jnp.float32) / math.sqrt(D_INNER)

    dt_init_std = DT_RANK ** (-0.5)
    w_dt = jax.random.uniform(ks[5], (D_INNER, DT_RANK), jnp.float32, -dt_init_std, dt_init_std)
    dt_min, dt_max, dt_init_floor = 1e-3, 0.1, 1e-4
    dt = jnp.exp(jax.random.uniform(ks[6], (D_INNER,), jnp.float32)
                 * (math.log(dt_max) - math.log(dt_min)) + math.log(dt_min))
    dt = jnp.maximum(dt, dt_init_floor)
    inv_dt = dt + jnp.log(-jnp.expm1(-dt))

    a_log = jnp.log(jnp.broadcast_to(jnp.arange(1, D_STATE + 1, dtype=jnp.float32),
                                     (D_INNER, D_STATE)))
    d_param = jnp.ones((D_INNER,), jnp.float32)
    w_out = jax.random.normal(ks[7], (D_MODEL, D_INNER), jnp.float32) / math.sqrt(D_INNER)
    w_sa = jax.random.normal(ks[8], (1, 2, SA_KSIZE), jnp.float32) * 0.3
    w_ca1 = jax.random.normal(ks[9], (CA_HIDDEN, D_INNER, 1), jnp.float32) / math.sqrt(D_INNER)
    w_ca2 = jax.random.normal(ks[10], (D_INNER, CA_HIDDEN, 1), jnp.float32) / math.sqrt(CA_HIDDEN)

    # ---------------- derived / pre-fused tensors (parameter pre-processing) ------
    # depthwise 5x5 weights flattened to (25, C2), row index = 5*dy + dx
    w_dw_flat = jnp.transpose(w_dw[:, 0, :, :], (1, 2, 0)).reshape(25, C2)

    # spatial-attention 7-tap conv as two (L, L) banded Toeplitz matrices
    idx = jnp.arange(L)
    band = idx[None, :] - idx[:, None] + SA_PAD          # = k index into the 7 taps
    valid = (band >= 0) & (band < SA_KSIZE)
    kidx = jnp.clip(band, 0, SA_KSIZE - 1)
    m_sa_avg = jnp.where(valid, w_sa[0, 0][kidx], 0.0).astype(jnp.float32)
    m_sa_max = jnp.where(valid, w_sa[0, 1][kidx], 0.0).astype(jnp.float32)

    # SSM weights: compose dt_proj with x_proj(dt) and expand B/C/x/delta maps to
    # the lane-flattened state layout j = d*D_STATE + n
    wx_dt_t = w_x[:DT_RANK, :].T                         # (D_INNER, DT_RANK)
    wx_b_t = w_x[DT_RANK:DT_RANK + D_STATE, :].T         # (D_INNER, D_STATE)
    wx_c_t = w_x[DT_RANK + D_STATE:, :].T                # (D_INNER, D_STATE)
    w_dt_t = w_dt.T                                      # (DT_RANK, D_INNER)
    r_expand = jnp.kron(jnp.eye(D_INNER, dtype=jnp.float32),
                        jnp.ones((1, D_STATE), jnp.float32))       # (D_INNER, NS)
    t_state = jnp.kron(jnp.ones((1, D_INNER), jnp.float32),
                       jnp.eye(D_STATE, dtype=jnp.float32))        # (D_STATE, NS)
    w_delta = wx_dt_t @ w_dt_t                                     # (D_INNER, D_INNER)
    w_ssm = jnp.concatenate(
        [w_delta @ r_expand,          # -> delta_pre (expanded)
         wx_b_t @ t_state,            # -> B_rep
         wx_c_t @ t_state,            # -> C_rep
         r_expand],                   # -> x_rep
        axis=1)                                                    # (D_INNER, 4*NS)

    a_mat = -jnp.exp(a_log)                                        # A = -exp(A_log)
    a_rep = a_mat.reshape(1, NS)
    dtb_rep = jnp.repeat(inv_dt, D_STATE).reshape(1, NS)

    w_out_pad = jnp.zeros((D_INNER, OUT_PAD), jnp.float32).at[:, :D_MODEL].set(w_out.T)

    return dict(
        w_in_t=w_in.T,                                   # (D_MODEL, C2)
        w_dw_flat=w_dw_flat,                             # (25, C2)
        w_ca1_t=w_ca1[:, :, 0].T,                        # (D_INNER, CA_HIDDEN)
        w_ca2_t=w_ca2[:, :, 0].T,                        # (CA_HIDDEN, D_INNER)
        m_sa_avg=m_sa_avg,                               # (L, L)
        m_sa_max=m_sa_max,                               # (L, L)
        w_c1_t=w_c1[:, 0, :].T,                          # (D_CONV, D_INNER)
        b_c1=b_c1.reshape(1, D_INNER),
        w_ssm=w_ssm,                                     # (D_INNER, 4*NS)
        a_rep=a_rep,                                     # (1, NS)
        dtb_rep=dtb_rep,                                 # (1, NS)
        rt_sum=r_expand.T,                               # (NS, D_INNER) group-sum matrix
        d_vec=d_param.reshape(1, D_INNER),
        w_out_pad=w_out_pad,                             # (D_INNER, OUT_PAD)
    )


# ================================ forward =========================================
def mamba_forward(hidden_states, p):
    # hidden_states: NCHW (B, D_MODEL, H, W) -> channel-last sequence (B, L, D_MODEL)
    h_nlc = jnp.transpose(hidden_states, (0, 2, 3, 1)).reshape(B, L, D_MODEL)

    out_pad = pl.pallas_call(
        _mamba_fused_kernel,
        out_shape=jax.ShapeDtypeStruct((B, L, OUT_PAD), jnp.float32),
        grid=(B,),
        in_specs=[
            pl.BlockSpec((1, L, D_MODEL), lambda b: (b, 0, 0)),        # hidden states
            pl.BlockSpec((D_MODEL, C2), lambda b: (0, 0)),             # in_proj
            pl.BlockSpec((25, C2), lambda b: (0, 0)),                  # dwconv taps
            pl.BlockSpec((D_INNER, CA_HIDDEN), lambda b: (0, 0)),      # ca fc1
            pl.BlockSpec((CA_HIDDEN, D_INNER), lambda b: (0, 0)),      # ca fc2
            pl.BlockSpec((L, L), lambda b: (0, 0)),                    # sa Toeplitz (avg)
            pl.BlockSpec((L, L), lambda b: (0, 0)),                    # sa Toeplitz (max)
            pl.BlockSpec((D_CONV, D_INNER), lambda b: (0, 0)),         # causal conv w
            pl.BlockSpec((1, D_INNER), lambda b: (0, 0)),              # causal conv b
            pl.BlockSpec((D_INNER, 4 * NS), lambda b: (0, 0)),         # merged SSM proj
            pl.BlockSpec((1, NS), lambda b: (0, 0)),                   # A (flattened)
            pl.BlockSpec((1, NS), lambda b: (0, 0)),                   # dt bias (flattened)
            pl.BlockSpec((NS, D_INNER), lambda b: (0, 0)),             # group-sum matrix
            pl.BlockSpec((1, D_INNER), lambda b: (0, 0)),              # D skip
            pl.BlockSpec((D_INNER, OUT_PAD), lambda b: (0, 0)),        # out_proj (padded)
        ],
        out_specs=pl.BlockSpec((1, L, OUT_PAD), lambda b: (b, 0, 0)),
        scratch_shapes=[
            pltpu.VMEM((DW_PAD_ROWS, C2), jnp.float32),                # dwconv zero-pad
            pltpu.VMEM((L + 8, D_INNER), jnp.float32),                 # causal-conv pad
            pltpu.VMEM((L, NS), jnp.float32),                          # deltaA
            pltpu.VMEM((L, NS), jnp.float32),                          # deltaB * u
            pltpu.VMEM((L, NS), jnp.float32),                          # hidden states h_l
        ],
        compiler_params=pltpu.CompilerParams(
            dimension_semantics=("parallel",)),                        # v7x: 1 batch / TC
    )(h_nlc, p['w_in_t'], p['w_dw_flat'], p['w_ca1_t'], p['w_ca2_t'],
      p['m_sa_avg'], p['m_sa_max'], p['w_c1_t'], p['b_c1'],
      p['w_ssm'], p['a_rep'], p['dtb_rep'], p['rt_sum'], p['d_vec'],
      p['w_out_pad'])

    out = out_pad[:, :, :D_MODEL]                                      # drop lane padding
    return jnp.transpose(out, (0, 2, 1)).reshape(B, D_MODEL, H, W)     # back to NCHW


if __name__ == "__main__":
    key = jax.random.PRNGKey(0)
    k_params, k_x = jax.random.split(key)
    params = init_params(k_params)
    x_in = jax.random.normal(k_x, (B, D_MODEL, H, W), jnp.float32)

    out = jax.jit(mamba_forward)(x_in, params)
    out = jax.block_until_ready(out)

    assert out.shape == (B, D_MODEL, H, W)
    assert bool(jnp.all(jnp.isfinite(out)))
    print("KERNEL_OK")
</pallas_src>

<mosaic_0001>
module attributes {stable_mosaic.version = 11 : i64} {
  func.func @_mamba_fused_kernel(%arg0: i32, %arg1: memref<1x64x16xf32, #tpu.memory_space<vmem>>, %arg2: memref<16x64xf32, #tpu.memory_space<vmem>>, %arg3: memref<25x64xf32, #tpu.memory_space<vmem>>, %arg4: memref<32x2xf32, #tpu.memory_space<vmem>>, %arg5: memref<2x32xf32, #tpu.memory_space<vmem>>, %arg6: memref<64x64xf32, #tpu.memory_space<vmem>>, %arg7: memref<64x64xf32, #tpu.memory_space<vmem>>, %arg8: memref<4x32xf32, #tpu.memory_space<vmem>>, %arg9: memref<1x32xf32, #tpu.memory_space<vmem>>, %arg10: memref<32x2048xf32, #tpu.memory_space<vmem>>, %arg11: memref<1x512xf32, #tpu.memory_space<vmem>>, %arg12: memref<1x512xf32, #tpu.memory_space<vmem>>, %arg13: memref<512x32xf32, #tpu.memory_space<vmem>>, %arg14: memref<1x32xf32, #tpu.memory_space<vmem>>, %arg15: memref<32x128xf32, #tpu.memory_space<vmem>>, %arg16: memref<1x64x128xf32, #tpu.memory_space<vmem>>, %arg17: memref<104x64xf32, #tpu.memory_space<vmem>>, %arg18: memref<72x32xf32, #tpu.memory_space<vmem>>, %arg19: memref<64x512xf32, #tpu.memory_space<vmem>>, %arg20: memref<64x512xf32, #tpu.memory_space<vmem>>, %arg21: memref<64x512xf32, #tpu.memory_space<vmem>>) attributes {dimension_semantics = [#tpu.dimension_semantics<parallel>], iteration_bounds = array<i64: 2>, scalar_prefetch = 0 : i64, scratch_operands = 5 : i64, tpu.core_type = #tpu.core_type<tc>, window_params = [{transform_indices = @transform_0, window_bounds = array<i64: 1, 64, 16>}, {pipeline_mode = #tpu.pipeline_mode<synchronous>, transform_indices = @transform_1, window_bounds = array<i64: 16, 64>}, {pipeline_mode = #tpu.pipeline_mode<synchronous>, transform_indices = @transform_2, window_bounds = array<i64: 25, 64>}, {pipeline_mode = #tpu.pipeline_mode<synchronous>, transform_indices = @transform_3, window_bounds = array<i64: 32, 2>}, {pipeline_mode = #tpu.pipeline_mode<synchronous>, transform_indices = @transform_4, window_bounds = array<i64: 2, 32>}, {pipeline_mode = #tpu.pipeline_mode<synchronous>, transform_indices = @transform_5, window_bounds = array<i64: 64, 64>}, {pipeline_mode = #tpu.pipeline_mode<synchronous>, transform_indices = @transform_6, window_bounds = array<i64: 64, 64>}, {pipeline_mode = #tpu.pipeline_mode<synchronous>, transform_indices = @transform_7, window_bounds = array<i64: 4, 32>}, {pipeline_mode = #tpu.pipeline_mode<synchronous>, transform_indices = @transform_8, window_bounds = array<i64: 1, 32>}, {pipeline_mode = #tpu.pipeline_mode<synchronous>, transform_indices = @transform_9, window_bounds = array<i64: 32, 2048>}, {pipeline_mode = #tpu.pipeline_mode<synchronous>, transform_indices = @transform_10, window_bounds = array<i64: 1, 512>}, {pipeline_mode = #tpu.pipeline_mode<synchronous>, transform_indices = @transform_11, window_bounds = array<i64: 1, 512>}, {pipeline_mode = #tpu.pipeline_mode<synchronous>, transform_indices = @transform_12, window_bounds = array<i64: 512, 32>}, {pipeline_mode = #tpu.pipeline_mode<synchronous>, transform_indices = @transform_13, window_bounds = array<i64: 1, 32>}, {pipeline_mode = #tpu.pipeline_mode<synchronous>, transform_indices = @transform_14, window_bounds = array<i64: 32, 128>}, {transform_indices = @transform_15, window_bounds = array<i64: 1, 64, 128>}]} {
    %c0 = arith.constant 0 : index
    %c0_0 = arith.constant 0 : index
    %c0_1 = arith.constant 0 : index
    %0 = vector.load %arg1[%c0, %c0_0, %c0_1] : memref<1x64x16xf32, #tpu.memory_space<vmem>>, vector<1x64x16xf32>
    %1 = vector.shape_cast %0 : vector<1x64x16xf32> to vector<64x16xf32>
    %c0_2 = arith.constant 0 : index
    %c0_3 = arith.constant 0 : index
    %2 = vector.load %arg2[%c0_2, %c0_3] : memref<16x64xf32, #tpu.memory_space<vmem>>, vector<16x64xf32>
    %cst = arith.constant dense<0.000000e+00> : vector<64x64xf32>
    %3 = tpu.matmul %1, %2, %cst {dimension_numbers = #tpu.dot_dimension_numbers<[1], [0], [0], [1], [0, 0, 1, 1], [], []>} : vector<64x16xf32>, vector<16x64xf32>, vector<64x64xf32> -> vector<64x64xf32>
    %cst_4 = arith.constant 0.000000e+00 : f32
    %4 = vector.broadcast %cst_4 : f32 to vector<104x64xf32>
    %c0_5 = arith.constant 0 : index
    %c0_6 = arith.constant 0 : index
    %5 = vector.load %arg17[%c0_5, %c0_6] : memref<104x64xf32, #tpu.memory_space<vmem>>, vector<104x64xf32>
    tpu.vector_store %arg17[%c0_5, %c0_6], %4 {strides = array<i32>} : memref<104x64xf32, #tpu.memory_space<vmem>>, vector<104x64xf32>,
    %c18 = arith.constant 18 : index
    %c0_7 = arith.constant 0 : index
    %6 = vector.load %arg17[%c18, %c0_7] : memref<104x64xf32, #tpu.memory_space<vmem>>, vector<64x64xf32>
    tpu.vector_store %arg17[%c18, %c0_7], %3 {strides = array<i32>} : memref<104x64xf32, #tpu.memory_space<vmem>>, vector<64x64xf32>,
    %7 = tpu.iota {dimensions = array<i32: 0>} : vector<96x1xi32>
    %c7_i32 = arith.constant 7 : i32
    %8 = vector.broadcast %c7_i32 : i32 to vector<96x1xi32>
    %9 = arith.andi %7, %8 : vector<96x1xi32>
    %cst_8 = arith.constant 0.000000e+00 : f32
    %10 = vector.broadcast %cst_8 : f32 to vector<64x64xf32>
    %c0_9 = arith.constant 0 : index
    %c0_10 = arith.constant 0 : index
    %11 = vector.load %arg17[%c0_9, %c0_10] : memref<104x64xf32, #tpu.memory_space<vmem>>, vector<96x64xf32>
    %c2_i32 = arith.constant 2 : i32
    %12 = vector.broadcast %c2_i32 : i32 to vector<96x1xi32>
    %13 = arith.cmpi sge, %9, %12 : vector<96x1xi32>
    %c9_i32 = arith.constant 9 : i32
    %14 = vector.broadcast %c9_i32 : i32 to vector<96x1xi32>
    %15 = arith.cmpi sle, %9, %14 : vector<96x1xi32>
    %16 = arith.andi %13, %15 : vector<96x1xi1>
    %cst_11 = arith.constant 0.000000e+00 : f32
    %17 = vector.shape_cast %16 : vector<96x1xi1> to vector<96x1xi1>
    %18 = vector.broadcast %17 : vector<96x1xi1> to vector<96x64xi1>
    %19 = vector.broadcast %cst_11 : f32 to vector<96x64xf32>
    %20 = arith.select %18, %11, %19 : vector<96x64xi1>, vector<96x64xf32>
    %c0_12 = arith.constant 0 : index
    %c0_13 = arith.constant 0 : index
    %21 = vector.load %arg3[%c0_12, %c0_13] : memref<25x64xf32, #tpu.memory_space<vmem>>, vector<1x64xf32>
    %22 = vector.extract_strided_slice %20 {offsets = [0, 0], sizes = [64, 64], strides = [1, 1]} : vector<96x64xf32> to vector<64x64xf32>
    %23 = vector.broadcast %21 : vector<1x64xf32> to vector<64x64xf32>
    %24 = arith.mulf %22, %23 : vector<64x64xf32>
    %25 = arith.addf %10, %24 : vector<64x64xf32>
    %c5 = arith.constant 5 : index
    %c0_14 = arith.constant 0 : index
    %26 = vector.load %arg3[%c5, %c0_14] : memref<25x64xf32, #tpu.memory_space<vmem>>, vector<1x64xf32>
    %27 = vector.extract_strided_slice %20 {offsets = [8, 0], sizes = [64, 64], strides = [1, 1]} : vector<96x64xf32> to vector<64x64xf32>
    %28 = vector.broadcast %26 : vector<1x64xf32> to vector<64x64xf32>
    %29 = arith.mulf %27, %28 : vector<64x64xf32>
    %30 = arith.addf %25, %29 : vector<64x64xf32>
    %c10 = arith.constant 10 : index
    %c0_15 = arith.constant 0 : index
    %31 = vector.load %arg3[%c10, %c0_15] : memref<25x64xf32, #tpu.memory_space<vmem>>, vector<1x64xf32>
    %32 = vector.extract_strided_slice %20 {offsets = [16, 0], sizes = [64, 64], strides = [1, 1]} : vector<96x64xf32> to vector<64x64xf32>
    %33 = vector.broadcast %31 : vector<1x64xf32> to vector<64x64xf32>
    %34 = arith.mulf %32, %33 : vector<64x64xf32>
    %35 = arith.addf %30, %34 : vector<64x64xf32>
    %c15 = arith.constant 15 : index
    %c0_16 = arith.constant 0 : index
    %36 = vector.load %arg3[%c15, %c0_16] : memref<25x64xf32, #tpu.memory_space<vmem>>, vector<1x64xf32>
    %37 = vector.extract_strided_slice %20 {offsets = [24, 0], sizes = [64, 64], strides = [1, 1]} : vector<96x64xf32> to vector<64x64xf32>
    %38 = vector.broadcast %36 : vector<1x64xf32> to vector<64x64xf32>
    %39 = arith.mulf %37, %38 : vector<64x64xf32>
    %40 = arith.addf %35, %39 : vector<64x64xf32>
    %c20 = arith.constant 20 : index
    %c0_17 = arith.constant 0 : index
    %41 = vector.load %arg3[%c20, %c0_17] : memref<25x64xf32, #tpu.memory_space<vmem>>, vector<1x64xf32>
    %42 = vector.extract_strided_slice %20 {offsets = [32, 0], sizes = [64, 64], strides = [1, 1]} : vector<96x64xf32> to vector<64x64xf32>
    %43 = vector.broadcast %41 : vector<1x64xf32> to vector<64x64xf32>
    %44 = arith.mulf %42, %43 : vector<64x64xf32>
    %45 = arith.addf %40, %44 : vector<64x64xf32>
    %c1 = arith.constant 1 : index
    %c0_18 = arith.constant 0 : index
    %46 = vector.load %arg17[%c1, %c0_18] : memref<104x64xf32, #tpu.memory_space<vmem>>, vector<96x64xf32>
    %c1_i32 = arith.constant 1 : i32
    %47 = vector.broadcast %c1_i32 : i32 to vector<96x1xi32>
    %48 = arith.cmpi sge, %9, %47 : vector<96x1xi32>
    %c8_i32 = arith.constant 8 : i32
    %49 = vector.broadcast %c8_i32 : i32 to vector<96x1xi32>
    %50 = arith.cmpi sle, %9, %49 : vector<96x1xi32>
    %51 = arith.andi %48, %50 : vector<96x1xi1>
    %cst_19 = arith.constant 0.000000e+00 : f32
    %52 = vector.shape_cast %51 : vector<96x1xi1> to vector<96x1xi1>
    %53 = vector.broadcast %52 : vector<96x1xi1> to vector<96x64xi1>
    %54 = vector.broadcast %cst_19 : f32 to vector<96x64xf32>
    %55 = arith.select %53, %46, %54 : vector<96x64xi1>, vector<96x64xf32>
    %c1_20 = arith.constant 1 : index
    %c0_21 = arith.constant 0 : index
    %56 = vector.load %arg3[%c1_20, %c0_21] : memref<25x64xf32, #tpu.memory_space<vmem>>, vector<1x64xf32>
    %57 = vector.extract_strided_slice %55 {offsets = [0, 0], sizes = [64, 64], strides = [1, 1]} : vector<96x64xf32> to vector<64x64xf32>
    %58 = vector.broadcast %56 : vector<1x64xf32> to vector<64x64xf32>
    %59 = arith.mulf %57, %58 : vector<64x64xf32>
    %60 = arith.addf %45, %59 : vector<64x64xf32>
    %c6 = arith.constant 6 : index
    %c0_22 = arith.constant 0 : index
    %61 = vector.load %arg3[%c6, %c0_22] : memref<25x64xf32, #tpu.memory_space<vmem>>, vector<1x64xf32>
    %62 = vector.extract_strided_slice %55 {offsets = [8, 0], sizes = [64, 64], strides = [1, 1]} : vector<96x64xf32> to vector<64x64xf32>
    %63 = vector.broadcast %61 : vector<1x64xf32> to vector<64x64xf32>
    %64 = arith.mulf %62, %63 : vector<64x64xf32>
    %65 = arith.addf %60, %64 : vector<64x64xf32>
    %c11 = arith.constant 11 : index
    %c0_23 = arith.constant 0 : index
    %66 = vector.load %arg3[%c11, %c0_23] : memref<25x64xf32, #tpu.memory_space<vmem>>, vector<1x64xf32>
    %67 = vector.extract_strided_slice %55 {offsets = [16, 0], sizes = [64, 64], strides = [1, 1]} : vector<96x64xf32> to vector<64x64xf32>
    %68 = vector.broadcast %66 : vector<1x64xf32> to vector<64x64xf32>
    %69 = arith.mulf %67, %68 : vector<64x64xf32>
    %70 = arith.addf %65, %69 : vector<64x64xf32>
    %c16 = arith.constant 16 : index
    %c0_24 = arith.constant 0 : index
    %71 = vector.load %arg3[%c16, %c0_24] : memref<25x64xf32, #tpu.memory_space<vmem>>, vector<1x64xf32>
    %72 = vector.extract_strided_slice %55 {offsets = [24, 0], sizes = [64, 64], strides = [1, 1]} : vector<96x64xf32> to vector<64x64xf32>
    %73 = vector.broadcast %71 : vector<1x64xf32> to vector<64x64xf32>
    %74 = arith.mulf %72, %73 : vector<64x64xf32>
    %75 = arith.addf %70, %74 : vector<64x64xf32>
    %c21 = arith.constant 21 : index
    %c0_25 = arith.constant 0 : index
    %76 = vector.load %arg3[%c21, %c0_25] : memref<25x64xf32, #tpu.memory_space<vmem>>, vector<1x64xf32>
    %77 = vector.extract_strided_slice %55 {offsets = [32, 0], sizes = [64, 64], strides = [1, 1]} : vector<96x64xf32> to vector<64x64xf32>
    %78 = vector.broadcast %76 : vector<1x64xf32> to vector<64x64xf32>
    %79 = arith.mulf %77, %78 : vector<64x64xf32>
    %80 = arith.addf %75, %79 : vector<64x64xf32>
    %c2 = arith.constant 2 : index
    %c0_26 = arith.constant 0 : index
    %81 = vector.load %arg17[%c2, %c0_26] : memref<104x64xf32, #tpu.memory_space<vmem>>, vector<96x64xf32>
    %c2_27 = arith.constant 2 : index
    %c0_28 = arith.constant 0 : index
    %82 = vector.load %arg3[%c2_27, %c0_28] : memref<25x64xf32, #tpu.memory_space<vmem>>, vector<1x64xf32>
    %83 = vector.extract_strided_slice %81 {offsets = [0, 0], sizes = [64, 64], strides = [1, 1]} : vector<96x64xf32> to vector<64x64xf32>
    %84 = vector.broadcast %82 : vector<1x64xf32> to vector<64x64xf32>
    %85 = arith.mulf %83, %84 : vector<64x64xf32>
    %86 = arith.addf %80, %85 : vector<64x64xf32>
    %c7 = arith.constant 7 : index
    %c0_29 = arith.constant 0 : index
    %87 = vector.load %arg3[%c7, %c0_29] : memref<25x64xf32, #tpu.memory_space<vmem>>, vector<1x64xf32>
    %88 = vector.extract_strided_slice %81 {offsets = [8, 0], sizes = [64, 64], strides = [1, 1]} : vector<96x64xf32> to vector<64x64xf32>
    %89 = vector.broadcast %87 : vector<1x64xf32> to vector<64x64xf32>
    %90 = arith.mulf %88, %89 : vector<64x64xf32>
    %91 = arith.addf %86, %90 : vector<64x64xf32>
    %c12 = arith.constant 12 : index
    %c0_30 = arith.constant 0 : index
    %92 = vector.load %arg3[%c12, %c0_30] : memref<25x64xf32, #tpu.memory_space<vmem>>, vector<1x64xf32>
    %93 = vector.extract_strided_slice %81 {offsets = [16, 0], sizes = [64, 64], strides = [1, 1]} : vector<96x64xf32> to vector<64x64xf32>
    %94 = vector.broadcast %92 : vector<1x64xf32> to vector<64x64xf32>
    %95 = arith.mulf %93, %94 : vector<64x64xf32>
    %96 = arith.addf %91, %95 : vector<64x64xf32>
    %c17 = arith.constant 17 : index
    %c0_31 = arith.constant 0 : index
    %97 = vector.load %arg3[%c17, %c0_31] : memref<25x64xf32, #tpu.memory_space<vmem>>, vector<1x64xf32>
    %98 = vector.extract_strided_slice %81 {offsets = [24, 0], sizes = [64, 64], strides = [1, 1]} : vector<96x64xf32> to vector<64x64xf32>
    %99 = vector.broadcast %97 : vector<1x64xf32> to vector<64x64xf32>
    %100 = arith.mulf %98, %99 : vector<64x64xf32>
    %101 = arith.addf %96, %100 : vector<64x64xf32>
    %c22 = arith.constant 22 : index
    %c0_32 = arith.constant 0 : index
    %102 = vector.load %arg3[%c22, %c0_32] : memref<25x64xf32, #tpu.memory_space<vmem>>, vector<1x64xf32>
    %103 = vector.extract_strided_slice %81 {offsets = [32, 0], sizes = [64, 64], strides = [1, 1]} : vector<96x64xf32> to vector<64x64xf32>
    %104 = vector.broadcast %102 : vector<1x64xf32> to vector<64x64xf32>
    %105 = arith.mulf %103, %104 : vector<64x64xf32>
    %106 = arith.addf %101, %105 : vector<64x64xf32>
    %c3 = arith.constant 3 : index
    %c0_33 = arith.constant 0 : index
    %107 = vector.load %arg17[%c3, %c0_33] : memref<104x64xf32, #tpu.memory_space<vmem>>, vector<96x64xf32>
    %c-1_i32 = arith.constant -1 : i32
    %108 = vector.broadcast %c-1_i32 : i32 to vector<96x1xi32>
    %109 = arith.cmpi sge, %9, %108 : vector<96x1xi32>
    %c6_i32 = arith.constant 6 : i32
    %110 = vector.broadcast %c6_i32 : i32 to vector<96x1xi32>
    %111 = arith.cmpi sle, %9, %110 : vector<96x1xi32>
    %112 = arith.andi %109, %111 : vector<96x1xi1>
    %cst_34 = arith.constant 0.000000e+00 : f32
    %113 = vector.shape_cast %112 : vector<96x1xi1> to vector<96x1xi1>
    %114 = vector.broadcast %113 : vector<96x1xi1> to vector<96x64xi1>
    %115 = vector.broadcast %cst_34 : f32 to vector<96x64xf32>
    %116 = arith.select %114, %107, %115 : vector<96x64xi1>, vector<96x64xf32>
    %c3_35 = arith.constant 3 : index
    %c0_36 = arith.constant 0 : index
    %117 = vector.load %arg3[%c3_35, %c0_36] : memref<25x64xf32, #tpu.memory_space<vmem>>, vector<1x64xf32>
    %118 = vector.extract_strided_slice %116 {offsets = [0, 0], sizes = [64, 64], strides = [1, 1]} : vector<96x64xf32> to vector<64x64xf32>
    %119 = vector.broadcast %117 : vector<1x64xf32> to vector<64x64xf32>
    %120 = arith.mulf %118, %119 : vector<64x64xf32>
    %121 = arith.addf %106, %120 : vector<64x64xf32>
    %c8 = arith.constant 8 : index
    %c0_37 = arith.constant 0 : index
    %122 = vector.load %arg3[%c8, %c0_37] : memref<25x64xf32, #tpu.memory_space<vmem>>, vector<1x64xf32>
    %123 = vector.extract_strided_slice %116 {offsets = [8, 0], sizes = [64, 64], strides = [1, 1]} : vector<96x64xf32> to vector<64x64xf32>
    %124 = vector.broadcast %122 : vector<1x64xf32> to vector<64x64xf32>
    %125 = arith.mulf %123, %124 : vector<64x64xf32>
    %126 = arith.addf %121, %125 : vector<64x64xf32>
    %c13 = arith.constant 13 : index
    %c0_38 = arith.constant 0 : index
    %127 = vector.load %arg3[%c13, %c0_38] : memref<25x64xf32, #tpu.memory_space<vmem>>, vector<1x64xf32>
    %128 = vector.extract_strided_slice %116 {offsets = [16, 0], sizes = [64, 64], strides = [1, 1]} : vector<96x64xf32> to vector<64x64xf32>
    %129 = vector.broadcast %127 : vector<1x64xf32> to vector<64x64xf32>
    %130 = arith.mulf %128, %129 : vector<64x64xf32>
    %131 = arith.addf %126, %130 : vector<64x64xf32>
    %c18_39 = arith.constant 18 : index
    %c0_40 = arith.constant 0 : index
    %132 = vector.load %arg3[%c18_39, %c0_40] : memref<25x64xf32, #tpu.memory_space<vmem>>, vector<1x64xf32>
    %133 = vector.extract_strided_slice %116 {offsets = [24, 0], sizes = [64, 64], strides = [1, 1]} : vector<96x64xf32> to vector<64x64xf32>
    %134 = vector.broadcast %132 : vector<1x64xf32> to vector<64x64xf32>
    %135 = arith.mulf %133, %134 : vector<64x64xf32>
    %136 = arith.addf %131, %135 : vector<64x64xf32>
    %c23 = arith.constant 23 : index
    %c0_41 = arith.constant 0 : index
    %137 = vector.load %arg3[%c23, %c0_41] : memref<25x64xf32, #tpu.memory_space<vmem>>, vector<1x64xf32>
    %138 = vector.extract_strided_slice %116 {offsets = [32, 0], sizes = [64, 64], strides = [1, 1]} : vector<96x64xf32> to vector<64x64xf32>
    %139 = vector.broadcast %137 : vector<1x64xf32> to vector<64x64xf32>
    %140 = arith.mulf %138, %139 : vector<64x64xf32>
    %141 = arith.addf %136, %140 : vector<64x64xf32>
    %c4 = arith.constant 4 : index
    %c0_42 = arith.constant 0 : index
    %142 = vector.load %arg17[%c4, %c0_42] : memref<104x64xf32, #tpu.memory_space<vmem>>, vector<96x64xf32>
    %c-2_i32 = arith.constant -2 : i32
    %143 = vector.broadcast %c-2_i32 : i32 to vector<96x1xi32>
    %144 = arith.cmpi sge, %9, %143 : vector<96x1xi32>
    %c5_i32 = arith.constant 5 : i32
    %145 = vector.broadcast %c5_i32 : i32 to vector<96x1xi32>
    %146 = arith.cmpi sle, %9, %145 : vector<96x1xi32>
    %147 = arith.andi %144, %146 : vector<96x1xi1>
    %cst_43 = arith.constant 0.000000e+00 : f32
    %148 = vector.shape_cast %147 : vector<96x1xi1> to vector<96x1xi1>
    %149 = vector.broadcast %148 : vector<96x1xi1> to vector<96x64xi1>
    %150 = vector.broadcast %cst_43 : f32 to vector<96x64xf32>
    %151 = arith.select %149, %142, %150 : vector<96x64xi1>, vector<96x64xf32>
    %c4_44 = arith.constant 4 : index
    %c0_45 = arith.constant 0 : index
    %152 = vector.load %arg3[%c4_44, %c0_45] : memref<25x64xf32, #tpu.memory_space<vmem>>, vector<1x64xf32>
    %153 = vector.extract_strided_slice %151 {offsets = [0, 0], sizes = [64, 64], strides = [1, 1]} : vector<96x64xf32> to vector<64x64xf32>
    %154 = vector.broadcast %152 : vector<1x64xf32> to vector<64x64xf32>
    %155 = arith.mulf %153, %154 : vector<64x64xf32>
    %156 = arith.addf %141, %155 : vector<64x64xf32>
    %c9 = arith.constant 9 : index
    %c0_46 = arith.constant 0 : index
    %157 = vector.load %arg3[%c9, %c0_46] : memref<25x64xf32, #tpu.memory_space<vmem>>, vector<1x64xf32>
    %158 = vector.extract_strided_slice %151 {offsets = [8, 0], sizes = [64, 64], strides = [1, 1]} : vector<96x64xf32> to vector<64x64xf32>
    %159 = vector.broadcast %157 : vector<1x64xf32> to vector<64x64xf32>
    %160 = arith.mulf %158, %159 : vector<64x64xf32>
    %161 = arith.addf %156, %160 : vector<64x64xf32>
    %c14 = arith.constant 14 : index
    %c0_47 = arith.constant 0 : index
    %162 = vector.load %arg3[%c14, %c0_47] : memref<25x64xf32, #tpu.memory_space<vmem>>, vector<1x64xf32>
    %163 = vector.extract_strided_slice %151 {offsets = [16, 0], sizes = [64, 64], strides = [1, 1]} : vector<96x64xf32> to vector<64x64xf32>
    %164 = vector.broadcast %162 : vector<1x64xf32> to vector<64x64xf32>
    %165 = arith.mulf %163, %164 : vector<64x64xf32>
    %166 = arith.addf %161, %165 : vector<64x64xf32>
    %c19 = arith.constant 19 : index
    %c0_48 = arith.constant 0 : index
    %167 = vector.load %arg3[%c19, %c0_48] : memref<25x64xf32, #tpu.memory_space<vmem>>, vector<1x64xf32>
    %168 = vector.extract_strided_slice %151 {offsets = [24, 0], sizes = [64, 64], strides = [1, 1]} : vector<96x64xf32> to vector<64x64xf32>
    %169 = vector.broadcast %167 : vector<1x64xf32> to vector<64x64xf32>
    %170 = arith.mulf %168, %169 : vector<64x64xf32>
    %171 = arith.addf %166, %170 : vector<64x64xf32>
    %c24 = arith.constant 24 : index
    %c0_49 = arith.constant 0 : index
    %172 = vector.load %arg3[%c24, %c0_49] : memref<25x64xf32, #tpu.memory_space<vmem>>, vector<1x64xf32>
    %173 = vector.extract_strided_slice %151 {offsets = [32, 0], sizes = [64, 64], strides = [1, 1]} : vector<96x64xf32> to vector<64x64xf32>
    %174 = vector.broadcast %172 : vector<1x64xf32> to vector<64x64xf32>
    %175 = arith.mulf %173, %174 : vector<64x64xf32>
    %176 = arith.addf %171, %175 : vector<64x64xf32>
    %177 = vector.extract_strided_slice %176 {offsets = [0, 0], sizes = [64, 32], strides = [1, 1]} : vector<64x64xf32> to vector<64x32xf32>
    %178 = vector.extract_strided_slice %176 {offsets = [0, 32], sizes = [64, 32], strides = [1, 1]} : vector<64x64xf32> to vector<64x32xf32>
    %cst_50 = arith.constant dense<0.000000e+00> : vector<32xf32>
    %179 = vector.multi_reduction <add>, %177, %cst_50 [0] : vector<64x32xf32> to vector<32xf32>
    %180 = vector.shape_cast %179 : vector<32xf32> to vector<1x32xf32>
    %cst_51 = arith.constant 6.400000e+01 : f32
    %181 = vector.broadcast %cst_51 : f32 to vector<1x32xf32>
    %182 = arith.divf %180, %181 : vector<1x32xf32>
    %cst_52 = arith.constant dense<0xFF800000> : vector<32xf32>
    %183 = vector.multi_reduction <maximumf>, %177, %cst_52 [0] : vector<64x32xf32> to vector<32xf32>
    %184 = vector.shape_cast %183 : vector<32xf32> to vector<1x32xf32>
    %c0_53 = arith.constant 0 : index
    %c0_54 = arith.constant 0 : index
    %185 = vector.load %arg4[%c0_53, %c0_54] : memref<32x2xf32, #tpu.memory_space<vmem>>, vector<32x2xf32>
    %cst_55 = arith.constant dense<0.000000e+00> : vector<1x2xf32>
    %186 = tpu.matmul %182, %185, %cst_55 {dimension_numbers = #tpu.dot_dimension_numbers<[1], [0], [0], [1], [0, 0, 1, 1], [], []>} : vector<1x32xf32>, vector<32x2xf32>, vector<1x2xf32> -> vector<1x2xf32>
    %cst_56 = arith.constant 0.000000e+00 : f32
    %187 = vector.broadcast %cst_56 : f32 to vector<1x2xf32>
    %188 = arith.subf %187, %186 : vector<1x2xf32>
    %189 = math.exp %188 : vector<1x2xf32>
    %cst_57 = arith.constant 1.000000e+00 : f32
    %190 = vector.broadcast %cst_57 : f32 to vector<1x2xf32>
    %191 = arith.addf %190, %189 : vector<1x2xf32>
    %cst_58 = arith.constant 1.000000e+00 : f32
    %192 = vector.broadcast %cst_58 : f32 to vector<1x2xf32>
    %193 = arith.divf %192, %191 : vector<1x2xf32>
    %194 = arith.mulf %186, %193 : vector<1x2xf32>
    %c0_59 = arith.constant 0 : index
    %c0_60 = arith.constant 0 : index
    %195 = vector.load %arg5[%c0_59, %c0_60] : memref<2x32xf32, #tpu.memory_space<vmem>>, vector<2x32xf32>
    %cst_61 = arith.constant dense<0.000000e+00> : vector<1x32xf32>
    %196 = tpu.matmul %194, %195, %cst_61 {dimension_numbers = #tpu.dot_dimension_numbers<[1], [0], [0], [1], [0, 0, 1, 1], [], []>} : vector<1x2xf32>, vector<2x32xf32>, vector<1x32xf32> -> vector<1x32xf32>
    %c0_62 = arith.constant 0 : index
    %c0_63 = arith.constant 0 : index
    %197 = vector.load %arg4[%c0_62, %c0_63] : memref<32x2xf32, #tpu.memory_space<vmem>>, vector<32x2xf32>
    %cst_64 = arith.constant dense<0.000000e+00> : vector<1x2xf32>
    %198 = tpu.matmul %184, %197, %cst_64 {dimension_numbers = #tpu.dot_dimension_numbers<[1], [0], [0], [1], [0, 0, 1, 1], [], []>} : vector<1x32xf32>, vector<32x2xf32>, vector<1x2xf32> -> vector<1x2xf32>
    %cst_65 = arith.constant 0.000000e+00 : f32
    %199 = vector.broadcast %cst_65 : f32 to vector<1x2xf32>
    %200 = arith.subf %199, %198 : vector<1x2xf32>
    %201 = math.exp %200 : vector<1x2xf32>
    %cst_66 = arith.constant 1.000000e+00 : f32
    %202 = vector.broadcast %cst_66 : f32 to vector<1x2xf32>
    %203 = arith.addf %202, %201 : vector<1x2xf32>
    %cst_67 = arith.constant 1.000000e+00 : f32
    %204 = vector.broadcast %cst_67 : f32 to vector<1x2xf32>
    %205 = arith.divf %204, %203 : vector<1x2xf32>
    %206 = arith.mulf %198, %205 : vector<1x2xf32>
    %c0_68 = arith.constant 0 : index
    %c0_69 = arith.constant 0 : index
    %207 = vector.load %arg5[%c0_68, %c0_69] : memref<2x32xf32, #tpu.memory_space<vmem>>, vector<2x32xf32>
    %cst_70 = arith.constant dense<0.000000e+00> : vector<1x32xf32>
    %208 = tpu.matmul %206, %207, %cst_70 {dimension_numbers = #tpu.dot_dimension_numbers<[1], [0], [0], [1], [0, 0, 1, 1], [], []>} : vector<1x2xf32>, vector<2x32xf32>, vector<1x32xf32> -> vector<1x32xf32>
    %209 = arith.addf %196, %208 : vector<1x32xf32>
    %cst_71 = arith.constant 0.000000e+00 : f32
    %210 = vector.broadcast %cst_71 : f32 to vector<1x32xf32>
    %211 = arith.subf %210, %209 : vector<1x32xf32>
    %212 = math.exp %211 : vector<1x32xf32>
    %cst_72 = arith.constant 1.000000e+00 : f32
    %213 = vector.broadcast %cst_72 : f32 to vector<1x32xf32>
    %214 = arith.addf %213, %212 : vector<1x32xf32>
    %cst_73 = arith.constant 1.000000e+00 : f32
    %215 = vector.broadcast %cst_73 : f32 to vector<1x32xf32>
    %216 = arith.divf %215, %214 : vector<1x32xf32>
    %217 = vector.broadcast %216 : vector<1x32xf32> to vector<64x32xf32>
    %218 = arith.mulf %177, %217 : vector<64x32xf32>
    %cst_74 = arith.constant dense<0.000000e+00> : vector<64xf32>
    %219 = vector.multi_reduction <add>, %178, %cst_74 [1] : vector<64x32xf32> to vector<64xf32>
    %220 = vector.shape_cast %219 : vector<64xf32> to vector<64x1xf32>
    %cst_75 = arith.constant 3.200000e+01 : f32
    %221 = vector.broadcast %cst_75 : f32 to vector<64x1xf32>
    %222 = arith.divf %220, %221 : vector<64x1xf32>
    %cst_76 = arith.constant dense<0xFF800000> : vector<64xf32>
    %223 = vector.multi_reduction <maximumf>, %178, %cst_76 [1] : vector<64x32xf32> to vector<64xf32>
    %224 = vector.shape_cast %223 : vector<64xf32> to vector<64x1xf32>
    %c0_77 = arith.constant 0 : index
    %c0_78 = arith.constant 0 : index
    %225 = vector.load %arg6[%c0_77, %c0_78] : memref<64x64xf32, #tpu.memory_space<vmem>>, vector<64x64xf32>
    %cst_79 = arith.constant dense<0.000000e+00> : vector<64x1xf32>
    %226 = tpu.matmul %225, %222, %cst_79 {dimension_numbers = #tpu.dot_dimension_numbers<[1], [0], [0], [1], [0, 0, 1, 1], [], []>} : vector<64x64xf32>, vector<64x1xf32>, vector<64x1xf32> -> vector<64x1xf32>
    %c0_80 = arith.constant 0 : index
    %c0_81 = arith.constant 0 : index
    %227 = vector.load %arg7[%c0_80, %c0_81] : memref<64x64xf32, #tpu.memory_space<vmem>>, vector<64x64xf32>
    %cst_82 = arith.constant dense<0.000000e+00> : vector<64x1xf32>
    %228 = tpu.matmul %227, %224, %cst_82 {dimension_numbers = #tpu.dot_dimension_numbers<[1], [0], [0], [1], [0, 0, 1, 1], [], []>} : vector<64x64xf32>, vector<64x1xf32>, vector<64x1xf32> -> vector<64x1xf32>
    %229 = arith.addf %226, %228 : vector<64x1xf32>
    %cst_83 = arith.constant 0.000000e+00 : f32
    %230 = vector.broadcast %cst_83 : f32 to vector<64x1xf32>
    %231 = arith.subf %230, %229 : vector<64x1xf32>
    %232 = math.exp %231 : vector<64x1xf32>
    %cst_84 = arith.constant 1.000000e+00 : f32
    %233 = vector.broadcast %cst_84 : f32 to vector<64x1xf32>
    %234 = arith.addf %233, %232 : vector<64x1xf32>
    %cst_85 = arith.constant 1.000000e+00 : f32
    %235 = vector.broadcast %cst_85 : f32 to vector<64x1xf32>
    %236 = arith.divf %235, %234 : vector<64x1xf32>
    %237 = vector.broadcast %236 : vector<64x1xf32> to vector<64x32xf32>
    %238 = arith.mulf %178, %237 : vector<64x32xf32>
    %cst_86 = arith.constant 0.000000e+00 : f32
    %239 = vector.broadcast %cst_86 : f32 to vector<72x32xf32>
    %c0_87 = arith.constant 0 : index
    %c0_88 = arith.constant 0 : index
    %240 = vector.load %arg18[%c0_87, %c0_88] : memref<72x32xf32, #tpu.memory_space<vmem>>, vector<72x32xf32>
    tpu.vector_store %arg18[%c0_87, %c0_88], %239 {strides = array<i32>} : memref<72x32xf32, #tpu.memory_space<vmem>>, vector<72x32xf32>,
    %c3_89 = arith.constant 3 : index
    %c0_90 = arith.constant 0 : index
    %241 = vector.load %arg18[%c3_89, %c0_90] : memref<72x32xf32, #tpu.memory_space<vmem>>, vector<64x32xf32>
    tpu.vector_store %arg18[%c3_89, %c0_90], %218 {strides = array<i32>} : memref<72x32xf32, #tpu.memory_space<vmem>>, vector<64x32xf32>,
    %cst_91 = arith.constant 0.000000e+00 : f32
    %242 = vector.broadcast %cst_91 : f32 to vector<64x32xf32>
    %c0_92 = arith.constant 0 : index
    %c0_93 = arith.constant 0 : index
    %243 = vector.load %arg18[%c0_92, %c0_93] : memref<72x32xf32, #tpu.memory_space<vmem>>, vector<64x32xf32>
    %c0_94 = arith.constant 0 : index
    %c0_95 = arith.constant 0 : index
    %244 = vector.load %arg8[%c0_94, %c0_95] : memref<4x32xf32, #tpu.memory_space<vmem>>, vector<1x32xf32>
    %245 = vector.broadcast %244 : vector<1x32xf32> to vector<64x32xf32>
    %246 = arith.mulf %243, %245 : vector<64x32xf32>
    %247 = arith.addf %242, %246 : vector<64x32xf32>
    %c1_96 = arith.constant 1 : index
    %c0_97 = arith.constant 0 : index
    %248 = vector.load %arg18[%c1_96, %c0_97] : memref<72x32xf32, #tpu.memory_space<vmem>>, vector<64x32xf32>
    %c1_98 = arith.constant 1 : index
    %c0_99 = arith.constant 0 : index
    %249 = vector.load %arg8[%c1_98, %c0_99] : memref<4x32xf32, #tpu.memory_space<vmem>>, vector<1x32xf32>
    %250 = vector.broadcast %249 : vector<1x32xf32> to vector<64x32xf32>
    %251 = arith.mulf %248, %250 : vector<64x32xf32>
    %252 = arith.addf %247, %251 : vector<64x32xf32>
    %c2_100 = arith.constant 2 : index
    %c0_101 = arith.constant 0 : index
    %253 = vector.load %arg18[%c2_100, %c0_101] : memref<72x32xf32, #tpu.memory_space<vmem>>, vector<64x32xf32>
    %c2_102 = arith.constant 2 : index
    %c0_103 = arith.constant 0 : index
    %254 = vector.load %arg8[%c2_102, %c0_103] : memref<4x32xf32, #tpu.memory_space<vmem>>, vector<1x32xf32>
    %255 = vector.broadcast %254 : vector<1x32xf32> to vector<64x32xf32>
    %256 = arith.mulf %253, %255 : vector<64x32xf32>
    %257 = arith.addf %252, %256 : vector<64x32xf32>
    %c3_104 = arith.constant 3 : index
    %c0_105 = arith.constant 0 : index
    %258 = vector.load %arg18[%c3_104, %c0_105] : memref<72x32xf32, #tpu.memory_space<vmem>>, vector<64x32xf32>
    %c3_106 = arith.constant 3 : index
    %c0_107 = arith.constant 0 : index
    %259 = vector.load %arg8[%c3_106, %c0_107] : memref<4x32xf32, #tpu.memory_space<vmem>>, vector<1x32xf32>
    %260 = vector.broadcast %259 : vector<1x32xf32> to vector<64x32xf32>
    %261 = arith.mulf %258, %260 : vector<64x32xf32>
    %262 = arith.addf %257, %261 : vector<64x32xf32>
    %c0_108 = arith.constant 0 : index
    %c0_109 = arith.constant 0 : index
    %263 = vector.load %arg9[%c0_108, %c0_109] : memref<1x32xf32, #tpu.memory_space<vmem>>, vector<1x32xf32>
    %264 = vector.broadcast %263 : vector<1x32xf32> to vector<64x32xf32>
    %265 = arith.addf %262, %264 : vector<64x32xf32>
    %cst_110 = arith.constant 0.000000e+00 : f32
    %266 = vector.broadcast %cst_110 : f32 to vector<64x32xf32>
    %267 = arith.subf %266, %265 : vector<64x32xf32>
    %268 = math.exp %267 : vector<64x32xf32>
    %cst_111 = arith.constant 1.000000e+00 : f32
    %269 = vector.broadcast %cst_111 : f32 to vector<64x32xf32>
    %270 = arith.addf %269, %268 : vector<64x32xf32>
    %cst_112 = arith.constant 1.000000e+00 : f32
    %271 = vector.broadcast %cst_112 : f32 to vector<64x32xf32>
    %272 = arith.divf %271, %270 : vector<64x32xf32>
    %273 = arith.mulf %265, %272 : vector<64x32xf32>
    %c0_113 = arith.constant 0 : index
    %c0_114 = arith.constant 0 : index
    %274 = vector.load %arg10[%c0_113, %c0_114] : memref<32x2048xf32, #tpu.memory_space<vmem>>, vector<32x2048xf32>
    %cst_115 = arith.constant dense<0.000000e+00> : vector<64x2048xf32>
    %275 = tpu.matmul %273, %274, %cst_115 {dimension_numbers = #tpu.dot_dimension_numbers<[1], [0], [0], [1], [0, 0, 1, 1], [], []>} : vector<64x32xf32>, vector<32x2048xf32>, vector<64x2048xf32> -> vector<64x2048xf32>
    %276 = vector.extract_strided_slice %275 {offsets = [0, 0], sizes = [64, 512], strides = [1, 1]} : vector<64x2048xf32> to vector<64x512xf32>
    %c0_116 = arith.constant 0 : index
    %c0_117 = arith.constant 0 : index
    %277 = vector.load %arg12[%c0_116, %c0_117] : memref<1x512xf32, #tpu.memory_space<vmem>>, vector<1x512xf32>
    %278 = vector.broadcast %277 : vector<1x512xf32> to vector<64x512xf32>
    %279 = arith.addf %276, %278 : vector<64x512xf32>
    %cst_118 = arith.constant 0.000000e+00 : f32
    %280 = vector.broadcast %cst_118 : f32 to vector<64x512xf32>
    %281 = arith.maximumf %279, %280 : vector<64x512xf32>
    %282 = math.absf %279 : vector<64x512xf32>
    %cst_119 = arith.constant 0.000000e+00 : f32
    %283 = vector.broadcast %cst_119 : f32 to vector<64x512xf32>
    %284 = arith.subf %283, %282 : vector<64x512xf32>
    %285 = math.exp %284 : vector<64x512xf32>
    %cst_120 = arith.constant 1.000000e+00 : f32
    %286 = vector.broadcast %cst_120 : f32 to vector<64x512xf32>
    %287 = arith.addf %286, %285 : vector<64x512xf32>
    %288 = math.log %287 : vector<64x512xf32>
    %289 = arith.addf %281, %288 : vector<64x512xf32>
    %290 = vector.extract_strided_slice %275 {offsets = [0, 512], sizes = [64, 512], strides = [1, 1]} : vector<64x2048xf32> to vector<64x512xf32>
    %291 = vector.extract_strided_slice %275 {offsets = [0, 1024], sizes = [64, 512], strides = [1, 1]} : vector<64x2048xf32> to vector<64x512xf32>
    %292 = vector.extract_strided_slice %275 {offsets = [0, 1536], sizes = [64, 512], strides = [1, 1]} : vector<64x2048xf32> to vector<64x512xf32>
    %c0_121 = arith.constant 0 : index
    %c0_122 = arith.constant 0 : index
    %293 = vector.load %arg11[%c0_121, %c0_122] : memref<1x512xf32, #tpu.memory_space<vmem>>, vector<1x512xf32>
    %294 = vector.broadcast %293 : vector<1x512xf32> to vector<64x512xf32>
    %295 = arith.mulf %289, %294 : vector<64x512xf32>
    %296 = math.exp %295 : vector<64x512xf32>
    %c0_123 = arith.constant 0 : index
    %c0_124 = arith.constant 0 : index
    %297 = vector.load %arg19[%c0_123, %c0_124] : memref<64x512xf32, #tpu.memory_space<vmem>>, vector<64x512xf32>
    tpu.vector_store %arg19[%c0_123, %c0_124], %296 {strides = array<i32>} : memref<64x512xf32, #tpu.memory_space<vmem>>, vector<64x512xf32>,
    %298 = arith.mulf %289, %292 : vector<64x512xf32>
    %299 = arith.mulf %298, %290 : vector<64x512xf32>
    %c0_125 = arith.constant 0 : index
    %c0_126 = arith.constant 0 : index
    %300 = vector.load %arg20[%c0_125, %c0_126] : memref<64x512xf32, #tpu.memory_space<vmem>>, vector<64x512xf32>
    tpu.vector_store %arg20[%c0_125, %c0_126], %299 {strides = array<i32>} : memref<64x512xf32, #tpu.memory_space<vmem>>, vector<64x512xf32>,
    %cst_127 = arith.constant 0.000000e+00 : f32
    %301 = vector.broadcast %cst_127 : f32 to vector<1x512xf32>
    %c0_128 = arith.constant 0 : index
    %c0_129 = arith.constant 0 : index
    %302 = vector.load %arg19[%c0_128, %c0_129] : memref<64x512xf32, #tpu.memory_space<vmem>>, vector<1x512xf32>
    %303 = arith.mulf %302, %301 : vector<1x512xf32>
    %c0_130 = arith.constant 0 : index
    %c0_131 = arith.constant 0 : index
    %304 = vector.load %arg20[%c0_130, %c0_131] : memref<64x512xf32, #tpu.memory_space<vmem>>, vector<1x512xf32>
    %305 = arith.addf %303, %304 : vector<1x512xf32>
    %c0_132 = arith.constant 0 : index
    %c0_133 = arith.constant 0 : index
    %306 = vector.load %arg21[%c0_132, %c0_133] : memref<64x512xf32, #tpu.memory_space<vmem>>, vector<1x512xf32>
    tpu.vector_store %arg21[%c0_132, %c0_133], %305 {strides = array<i32>} : memref<64x512xf32, #tpu.memory_space<vmem>>, vector<1x512xf32>,
    %c1_134 = arith.constant 1 : index
    %c0_135 = arith.constant 0 : index
    %307 = vector.load %arg19[%c1_134, %c0_135] : memref<64x512xf32, #tpu.memory_space<vmem>>, vector<1x512xf32>
    %308 = arith.mulf %307, %305 : vector<1x512xf32>
    %c1_136 = arith.constant 1 : index
    %c0_137 = arith.constant 0 : index
    %309 = vector.load %arg20[%c1_136, %c0_137] : memref<64x512xf32, #tpu.memory_space<vmem>>, vector<1x512xf32>
    %310 = arith.addf %308, %309 : vector<1x512xf32>
    %c1_138 = arith.constant 1 : index
    %c0_139 = arith.constant 0 : index
    %311 = vector.load %arg21[%c1_138, %c0_139] : memref<64x512xf32, #tpu.memory_space<vmem>>, vector<1x512xf32>
    tpu.vector_store %arg21[%c1_138, %c0_139], %310 {strides = array<i32>} : memref<64x512xf32, #tpu.memory_space<vmem>>, vector<1x512xf32>,
    %c2_140 = arith.constant 2 : index
    %c0_141 = arith.constant 0 : index
    %312 = vector.load %arg19[%c2_140, %c0_141] : memref<64x512xf32, #tpu.memory_space<vmem>>, vector<1x512xf32>
    %313 = arith.mulf %312, %310 : vector<1x512xf32>
    %c2_142 = arith.constant 2 : index
    %c0_143 = arith.constant 0 : index
    %314 = vector.load %arg20[%c2_142, %c0_143] : memref<64x512xf32, #tpu.memory_space<vmem>>, vector<1x512xf32>
    %315 = arith.addf %313, %314 : vector<1x512xf32>
    %c2_144 = arith.constant 2 : index
    %c0_145 = arith.constant 0 : index
    %316 = vector.load %arg21[%c2_144, %c0_145] : memref<64x512xf32, #tpu.memory_space<vmem>>, vector<1x512xf32>
    tpu.vector_store %arg21[%c2_144, %c0_145], %315 {strides = array<i32>} : memref<64x512xf32, #tpu.memory_space<vmem>>, vector<1x512xf32>,
    %c3_146 = arith.constant 3 : index
    %c0_147 = arith.constant 0 : index
    %317 = vector.load %arg19[%c3_146, %c0_147] : memref<64x512xf32, #tpu.memory_space<vmem>>, vector<1x512xf32>
    %318 = arith.mulf %317, %315 : vector<1x512xf32>
    %c3_148 = arith.constant 3 : index
    %c0_149 = arith.constant 0 : index
    %319 = vector.load %arg20[%c3_148, %c0_149] : memref<64x512xf32, #tpu.memory_space<vmem>>, vector<1x512xf32>
    %320 = arith.addf %318, %319 : vector<1x512xf32>
    %c3_150 = arith.constant 3 : index
    %c0_151 = arith.constant 0 : index
    %321 = vector.load %arg21[%c3_150, %c0_151] : memref<64x512xf32, #tpu.memory_space<vmem>>, vector<1x512xf32>
    tpu.vector_store %arg21[%c3_150, %c0_151], %320 {strides = array<i32>} : memref<64x512xf32, #tpu.memory_space<vmem>>, vector<1x512xf32>,
    %c4_152 = arith.constant 4 : index
    %c0_153 = arith.constant 0 : index
    %322 = vector.load %arg19[%c4_152, %c0_153] : memref<64x512xf32, #tpu.memory_space<vmem>>, vector<1x512xf32>
    %323 = arith.mulf %322, %320 : vector<1x512xf32>
    %c4_154 = arith.constant 4 : index
    %c0_155 = arith.constant 0 : index
    %324 = vector.load %arg20[%c4_154, %c0_155] : memref<64x512xf32, #tpu.memory_space<vmem>>, vector<1x512xf32>
    %325 = arith.addf %323, %324 : vector<1x512xf32>
    %c4_156 = arith.constant 4 : index
    %c0_157 = arith.constant 0 : index
    %326 = vector.load %arg21[%c4_156, %c0_157] : memref<64x512xf32, #tpu.memory_space<vmem>>, vector<1x512xf32>
    tpu.vector_store %arg21[%c4_156, %c0_157], %325 {strides = array<i32>} : memref<64x512xf32, #tpu.memory_space<vmem>>, vector<1x512xf32>,
    %c5_158 = arith.constant 5 : index
    %c0_159 = arith.constant 0 : index
    %327 = vector.load %arg19[%c5_158, %c0_159] : memref<64x512xf32, #tpu.memory_space<vmem>>, vector<1x512xf32>
    %328 = arith.mulf %327, %325 : vector<1x512xf32>
    %c5_160 = arith.constant 5 : index
    %c0_161 = arith.constant 0 : index
    %329 = vector.load %arg20[%c5_160, %c0_161] : memref<64x512xf32, #tpu.memory_space<vmem>>, vector<1x512xf32>
    %330 = arith.addf %328, %329 : vector<1x512xf32>
    %c5_162 = arith.constant 5 : index
    %c0_163 = arith.constant 0 : index
    %331 = vector.load %arg21[%c5_162, %c0_163] : memref<64x512xf32, #tpu.memory_space<vmem>>, vector<1x512xf32>
    tpu.vector_store %arg21[%c5_162, %c0_163], %330 {strides = array<i32>} : memref<64x512xf32, #tpu.memory_space<vmem>>, vector<1x512xf32>,
    %c6_164 = arith.constant 6 : index
    %c0_165 = arith.constant 0 : index
    %332 = vector.load %arg19[%c6_164, %c0_165] : memref<64x512xf32, #tpu.memory_space<vmem>>, vector<1x512xf32>
    %333 = arith.mulf %332, %330 : vector<1x512xf32>
    %c6_166 = arith.constant 6 : index
    %c0_167 = arith.constant 0 : index
    %334 = vector.load %arg20[%c6_166, %c0_167] : memref<64x512xf32, #tpu.memory_space<vmem>>, vector<1x512xf32>
    %335 = arith.addf %333, %334 : vector<1x512xf32>
    %c6_168 = arith.constant 6 : index
    %c0_169 = arith.constant 0 : index
    %336 = vector.load %arg21[%c6_168, %c0_169] : memref<64x512xf32, #tpu.memory_space<vmem>>, vector<1x512xf32>
    tpu.vector_store %arg21[%c6_168, %c0_169], %335 {strides = array<i32>} : memref<64x512xf32, #tpu.memory_space<vmem>>, vector<1x512xf32>,
    %c7_170 = arith.constant 7 : index
    %c0_171 = arith.constant 0 : index
    %337 = vector.load %arg19[%c7_170, %c0_171] : memref<64x512xf32, #tpu.memory_space<vmem>>, vector<1x512xf32>
    %338 = arith.mulf %337, %335 : vector<1x512xf32>
    %c7_172 = arith.constant 7 : index
    %c0_173 = arith.constant 0 : index
    %339 = vector.load %arg20[%c7_172, %c0_173] : memref<64x512xf32, #tpu.memory_space<vmem>>, vector<1x512xf32>
    %340 = arith.addf %338, %339 : vector<1x512xf32>
    %c7_174 = arith.constant 7 : index
    %c0_175 = arith.constant 0 : index
    %341 = vector.load %arg21[%c7_174, %c0_175] : memref<64x512xf32, #tpu.memory_space<vmem>>, vector<1x512xf32>
    tpu.vector_store %arg21[%c7_174, %c0_175], %340 {strides = array<i32>} : memref<64x512xf32, #tpu.memory_space<vmem>>, vector<1x512xf32>,
    %c8_176 = arith.constant 8 : index
    %c0_177 = arith.constant 0 : index
    %342 = vector.load %arg19[%c8_176, %c0_177] : memref<64x512xf32, #tpu.memory_space<vmem>>, vector<1x512xf32>
    %343 = arith.mulf %342, %340 : vector<1x512xf32>
    %c8_178 = arith.constant 8 : index
    %c0_179 = arith.constant 0 : index
    %344 = vector.load %arg20[%c8_178, %c0_179] : memref<64x512xf32, #tpu.memory_space<vmem>>, vector<1x512xf32>
    %345 = arith.addf %343, %344 : vector<1x512xf32>
    %c8_180 = arith.constant 8 : index
    %c0_181 = arith.constant 0 : index
    %346 = vector.load %arg21[%c8_180, %c0_181] : memref<64x512xf32, #tpu.memory_space<vmem>>, vector<1x512xf32>
    tpu.vector_store %arg21[%c8_180, %c0_181], %345 {strides = array<i32>} : memref<64x512xf32, #tpu.memory_space<vmem>>, vector<1x512xf32>,
    %c9_182 = arith.constant 9 : index
    %c0_183 = arith.constant 0 : index
    %347 = vector.load %arg19[%c9_182, %c0_183] : memref<64x512xf32, #tpu.memory_space<vmem>>, vector<1x512xf32>
    %348 = arith.mulf %347, %345 : vector<1x512xf32>
    %c9_184 = arith.constant 9 : index
    %c0_185 = arith.constant 0 : index
    %349 = vector.load %arg20[%c9_184, %c0_185] : memref<64x512xf32, #tpu.memory_space<vmem>>, vector<1x512xf32>
    %350 = arith.addf %348, %349 : vector<1x512xf32>
    %c9_186 = arith.constant 9 : index
    %c0_187 = arith.constant 0 : index
    %351 = vector.load %arg21[%c9_186, %c0_187] : memref<64x512xf32, #tpu.memory_space<vmem>>, vector<1x512xf32>
    tpu.vector_store %arg21[%c9_186, %c0_187], %350 {strides = array<i32>} : memref<64x512xf32, #tpu.memory_space<vmem>>, vector<1x512xf32>,
    %c10_188 = arith.constant 10 : index
    %c0_189 = arith.constant 0 : index
    %352 = vector.load %arg19[%c10_188, %c0_189] : memref<64x512xf32, #tpu.memory_space<vmem>>, vector<1x512xf32>
    %353 = arith.mulf %352, %350 : vector<1x512xf32>
    %c10_190 = arith.constant 10 : index
    %c0_191 = arith.constant 0 : index
    %354 = vector.load %arg20[%c10_190, %c0_191] : memref<64x512xf32, #tpu.memory_space<vmem>>, vector<1x512xf32>
    %355 = arith.addf %353, %354 : vector<1x512xf32>
    %c10_192 = arith.constant 10 : index
    %c0_193 = arith.constant 0 : index
    %356 = vector.load %arg21[%c10_192, %c0_193] : memref<64x512xf32, #tpu.memory_space<vmem>>, vector<1x512xf32>
    tpu.vector_store %arg21[%c10_192, %c0_193], %355 {strides = array<i32>} : memref<64x512xf32, #tpu.memory_space<vmem>>, vector<1x512xf32>,
    %c11_194 = arith.constant 11 : index
    %c0_195 = arith.constant 0 : index
    %357 = vector.load %arg19[%c11_194, %c0_195] : memref<64x512xf32, #tpu.memory_space<vmem>>, vector<1x512xf32>
    %358 = arith.mulf %357, %355 : vector<1x512xf32>
    %c11_196 = arith.constant 11 : index
    %c0_197 = arith.constant 0 : index
    %359 = vector.load %arg20[%c11_196, %c0_197] : memref<64x512xf32, #tpu.memory_space<vmem>>, vector<1x512xf32>
    %360 = arith.addf %358, %359 : vector<1x512xf32>
    %c11_198 = arith.constant 11 : index
    %c0_199 = arith.constant 0 : index
    %361 = vector.load %arg21[%c11_198, %c0_199] : memref<64x512xf32, #tpu.memory_space<vmem>>, vector<1x512xf32>
    tpu.vector_store %arg21[%c11_198, %c0_199], %360 {strides = array<i32>} : memref<64x512xf32, #tpu.memory_space<vmem>>, vector<1x512xf32>,
    %c12_200 = arith.constant 12 : index
    %c0_201 = arith.constant 0 : index
    %362 = vector.load %arg19[%c12_200, %c0_201] : memref<64x512xf32, #tpu.memory_space<vmem>>, vector<1x512xf32>
    %363 = arith.mulf %362, %360 : vector<1x512xf32>
    %c12_202 = arith.constant 12 : index
    %c0_203 = arith.constant 0 : index
    %364 = vector.load %arg20[%c12_202, %c0_203] : memref<64x512xf32, #tpu.memory_space<vmem>>, vector<1x512xf32>
    %365 = arith.addf %363, %364 : vector<1x512xf32>
    %c12_204 = arith.constant 12 : index
    %c0_205 = arith.constant 0 : index
    %366 = vector.load %arg21[%c12_204, %c0_205] : memref<64x512xf32, #tpu.memory_space<vmem>>, vector<1x512xf32>
    tpu.vector_store %arg21[%c12_204, %c0_205], %365 {strides = array<i32>} : memref<64x512xf32, #tpu.memory_space<vmem>>, vector<1x512xf32>,
    %c13_206 = arith.constant 13 : index
    %c0_207 = arith.constant 0 : index
    %367 = vector.load %arg19[%c13_206, %c0_207] : memref<64x512xf32, #tpu.memory_space<vmem>>, vector<1x512xf32>
    %368 = arith.mulf %367, %365 : vector<1x512xf32>
    %c13_208 = arith.constant 13 : index
    %c0_209 = arith.constant 0 : index
    %369 = vector.load %arg20[%c13_208, %c0_209] : memref<64x512xf32, #tpu.memory_space<vmem>>, vector<1x512xf32>
    %370 = arith.addf %368, %369 : vector<1x512xf32>
    %c13_210 = arith.constant 13 : index
    %c0_211 = arith.constant 0 : index
    %371 = vector.load %arg21[%c13_210, %c0_211] : memref<64x512xf32, #tpu.memory_space<vmem>>, vector<1x512xf32>
    tpu.vector_store %arg21[%c13_210, %c0_211], %370 {strides = array<i32>} : memref<64x512xf32, #tpu.memory_space<vmem>>, vector<1x512xf32>,
    %c14_212 = arith.constant 14 : index
    %c0_213 = arith.constant 0 : index
    %372 = vector.load %arg19[%c14_212, %c0_213] : memref<64x512xf32, #tpu.memory_space<vmem>>, vector<1x512xf32>
    %373 = arith.mulf %372, %370 : vector<1x512xf32>
    %c14_214 = arith.constant 14 : index
    %c0_215 = arith.constant 0 : index
    %374 = vector.load %arg20[%c14_214, %c0_215] : memref<64x512xf32, #tpu.memory_space<vmem>>, vector<1x512xf32>
    %375 = arith.addf %373, %374 : vector<1x512xf32>
    %c14_216 = arith.constant 14 : index
    %c0_217 = arith.constant 0 : index
    %376 = vector.load %arg21[%c14_216, %c0_217] : memref<64x512xf32, #tpu.memory_space<vmem>>, vector<1x512xf32>
    tpu.vector_store %arg21[%c14_216, %c0_217], %375 {strides = array<i32>} : memref<64x512xf32, #tpu.memory_space<vmem>>, vector<1x512xf32>,
    %c15_218 = arith.constant 15 : index
    %c0_219 = arith.constant 0 : index
    %377 = vector.load %arg19[%c15_218, %c0_219] : memref<64x512xf32, #tpu.memory_space<vmem>>, vector<1x512xf32>
    %378 = arith.mulf %377, %375 : vector<1x512xf32>
    %c15_220 = arith.constant 15 : index
    %c0_221 = arith.constant 0 : index
    %379 = vector.load %arg20[%c15_220, %c0_221] : memref<64x512xf32, #tpu.memory_space<vmem>>, vector<1x512xf32>
    %380 = arith.addf %378, %379 : vector<1x512xf32>
    %c15_222 = arith.constant 15 : index
    %c0_223 = arith.constant 0 : index
    %381 = vector.load %arg21[%c15_222, %c0_223] : memref<64x512xf32, #tpu.memory_space<vmem>>, vector<1x512xf32>
    tpu.vector_store %arg21[%c15_222, %c0_223], %380 {strides = array<i32>} : memref<64x512xf32, #tpu.memory_space<vmem>>, vector<1x512xf32>,
    %c16_224 = arith.constant 16 : index
    %c0_225 = arith.constant 0 : index
    %382 = vector.load %arg19[%c16_224, %c0_225] : memref<64x512xf32, #tpu.memory_space<vmem>>, vector<1x512xf32>
    %383 = arith.mulf %382, %380 : vector<1x512xf32>
    %c16_226 = arith.constant 16 : index
    %c0_227 = arith.constant 0 : index
    %384 = vector.load %arg20[%c16_226, %c0_227] : memref<64x512xf32, #tpu.memory_space<vmem>>, vector<1x512xf32>
    %385 = arith.addf %383, %384 : vector<1x512xf32>
    %c16_228 = arith.constant 16 : index
    %c0_229 = arith.constant 0 : index
    %386 = vector.load %arg21[%c16_228, %c0_229] : memref<64x512xf32, #tpu.memory_space<vmem>>, vector<1x512xf32>
    tpu.vector_store %arg21[%c16_228, %c0_229], %385 {strides = array<i32>} : memref<64x512xf32, #tpu.memory_space<vmem>>, vector<1x512xf32>,
    %c17_230 = arith.constant 17 : index
    %c0_231 = arith.constant 0 : index
    %387 = vector.load %arg19[%c17_230, %c0_231] : memref<64x512xf32, #tpu.memory_space<vmem>>, vector<1x512xf32>
    %388 = arith.mulf %387, %385 : vector<1x512xf32>
    %c17_232 = arith.constant 17 : index
    %c0_233 = arith.constant 0 : index
    %389 = vector.load %arg20[%c17_232, %c0_233] : memref<64x512xf32, #tpu.memory_space<vmem>>, vector<1x512xf32>
    %390 = arith.addf %388, %389 : vector<1x512xf32>
    %c17_234 = arith.constant 17 : index
    %c0_235 = arith.constant 0 : index
    %391 = vector.load %arg21[%c17_234, %c0_235] : memref<64x512xf32, #tpu.memory_space<vmem>>, vector<1x512xf32>
    tpu.vector_store %arg21[%c17_234, %c0_235], %390 {strides = array<i32>} : memref<64x512xf32, #tpu.memory_space<vmem>>, vector<1x512xf32>,
    %c18_236 = arith.constant 18 : index
    %c0_237 = arith.constant 0 : index
    %392 = vector.load %arg19[%c18_236, %c0_237] : memref<64x512xf32, #tpu.memory_space<vmem>>, vector<1x512xf32>
    %393 = arith.mulf %392, %390 : vector<1x512xf32>
    %c18_238 = arith.constant 18 : index
    %c0_239 = arith.constant 0 : index
    %394 = vector.load %arg20[%c18_238, %c0_239] : memref<64x512xf32, #tpu.memory_space<vmem>>, vector<1x512xf32>
    %395 = arith.addf %393, %394 : vector<1x512xf32>
    %c18_240 = arith.constant 18 : index
    %c0_241 = arith.constant 0 : index
    %396 = vector.load %arg21[%c18_240, %c0_241] : memref<64x512xf32, #tpu.memory_space<vmem>>, vector<1x512xf32>
    tpu.vector_store %arg21[%c18_240, %c0_241], %395 {strides = array<i32>} : memref<64x512xf32, #tpu.memory_space<vmem>>, vector<1x512xf32>,
    %c19_242 = arith.constant 19 : index
    %c0_243 = arith.constant 0 : index
    %397 = vector.load %arg19[%c19_242, %c0_243] : memref<64x512xf32, #tpu.memory_space<vmem>>, vector<1x512xf32>
    %398 = arith.mulf %397, %395 : vector<1x512xf32>
    %c19_244 = arith.constant 19 : index
    %c0_245 = arith.constant 0 : index
    %399 = vector.load %arg20[%c19_244, %c0_245] : memref<64x512xf32, #tpu.memory_space<vmem>>, vector<1x512xf32>
    %400 = arith.addf %398, %399 : vector<1x512xf32>
    %c19_246 = arith.constant 19 : index
    %c0_247 = arith.constant 0 : index
    %401 = vector.load %arg21[%c19_246, %c0_247] : memref<64x512xf32, #tpu.memory_space<vmem>>, vector<1x512xf32>
    tpu.vector_store %arg21[%c19_246, %c0_247], %400 {strides = array<i32>} : memref<64x512xf32, #tpu.memory_space<vmem>>, vector<1x512xf32>,
    %c20_248 = arith.constant 20 : index
    %c0_249 = arith.constant 0 : index
    %402 = vector.load %arg19[%c20_248, %c0_249] : memref<64x512xf32, #tpu.memory_space<vmem>>, vector<1x512xf32>
    %403 = arith.mulf %402, %400 : vector<1x512xf32>
    %c20_250 = arith.constant 20 : index
    %c0_251 = arith.constant 0 : index
    %404 = vector.load %arg20[%c20_250, %c0_251] : memref<64x512xf32, #tpu.memory_space<vmem>>, vector<1x512xf32>
    %405 = arith.addf %403, %404 : vector<1x512xf32>
    %c20_252 = arith.constant 20 : index
    %c0_253 = arith.constant 0 : index
    %406 = vector.load %arg21[%c20_252, %c0_253] : memref<64x512xf32, #tpu.memory_space<vmem>>, vector<1x512xf32>
    tpu.vector_store %arg21[%c20_252, %c0_253], %405 {strides = array<i32>} : memref<64x512xf32, #tpu.memory_space<vmem>>, vector<1x512xf32>,
    %c21_254 = arith.constant 21 : index
    %c0_255 = arith.constant 0 : index
    %407 = vector.load %arg19[%c21_254, %c0_255] : memref<64x512xf32, #tpu.memory_space<vmem>>, vector<1x512xf32>
    %408 = arith.mulf %407, %405 : vector<1x512xf32>
    %c21_256 = arith.constant 21 : index
    %c0_257 = arith.constant 0 : index
    %409 = vector.load %arg20[%c21_256, %c0_257] : memref<64x512xf32, #tpu.memory_space<vmem>>, vector<1x512xf32>
    %410 = arith.addf %408, %409 : vector<1x512xf32>
    %c21_258 = arith.constant 21 : index
    %c0_259 = arith.constant 0 : index
    %411 = vector.load %arg21[%c21_258, %c0_259] : memref<64x512xf32, #tpu.memory_space<vmem>>, vector<1x512xf32>
    tpu.vector_store %arg21[%c21_258, %c0_259], %410 {strides = array<i32>} : memref<64x512xf32, #tpu.memory_space<vmem>>, vector<1x512xf32>,
    %c22_260 = arith.constant 22 : index
    %c0_261 = arith.constant 0 : index
    %412 = vector.load %arg19[%c22_260, %c0_261] : memref<64x512xf32, #tpu.memory_space<vmem>>, vector<1x512xf32>
    %413 = arith.mulf %412, %410 : vector<1x512xf32>
    %c22_262 = arith.constant 22 : index
    %c0_263 = arith.constant 0 : index
    %414 = vector.load %arg20[%c22_262, %c0_263] : memref<64x512xf32, #tpu.memory_space<vmem>>, vector<1x512xf32>
    %415 = arith.addf %413, %414 : vector<1x512xf32>
    %c22_264 = arith.constant 22 : index
    %c0_265 = arith.constant 0 : index
    %416 = vector.load %arg21[%c22_264, %c0_265] : memref<64x512xf32, #tpu.memory_space<vmem>>, vector<1x512xf32>
    tpu.vector_store %arg21[%c22_264, %c0_265], %415 {strides = array<i32>} : memref<64x512xf32, #tpu.memory_space<vmem>>, vector<1x512xf32>,
    %c23_266 = arith.constant 23 : index
    %c0_267 = arith.constant 0 : index
    %417 = vector.load %arg19[%c23_266, %c0_267] : memref<64x512xf32, #tpu.memory_space<vmem>>, vector<1x512xf32>
    %418 = arith.mulf %417, %415 : vector<1x512xf32>
    %c23_268 = arith.constant 23 : index
    %c0_269 = arith.constant 0 : index
    %419 = vector.load %arg20[%c23_268, %c0_269] : memref<64x512xf32, #tpu.memory_space<vmem>>, vector<1x512xf32>
    %420 = arith.addf %418, %419 : vector<1x512xf32>
    %c23_270 = arith.constant 23 : index
    %c0_271 = arith.constant 0 : index
    %421 = vector.load %arg21[%c23_270, %c0_271] : memref<64x512xf32, #tpu.memory_space<vmem>>, vector<1x512xf32>
    tpu.vector_store %arg21[%c23_270, %c0_271], %420 {strides = array<i32>} : memref<64x512xf32, #tpu.memory_space<vmem>>, vector<1x512xf32>,
    %c24_272 = arith.constant 24 : index
    %c0_273 = arith.constant 0 : index
    %422 = vector.load %arg19[%c24_272, %c0_273] : memref<64x512xf32, #tpu.memory_space<vmem>>, vector<1x512xf32>
    %423 = arith.mulf %422, %420 : vector<1x512xf32>
    %c24_274 = arith.constant 24 : index
    %c0_275 = arith.constant 0 : index
    %424 = vector.load %arg20[%c24_274, %c0_275] : memref<64x512xf32, #tpu.memory_space<vmem>>, vector<1x512xf32>
    %425 = arith.addf %423, %424 : vector<1x512xf32>
    %c24_276 = arith.constant 24 : index
    %c0_277 = arith.constant 0 : index
    %426 = vector.load %arg21[%c24_276, %c0_277] : memref<64x512xf32, #tpu.memory_space<vmem>>, vector<1x512xf32>
    tpu.vector_store %arg21[%c24_276, %c0_277], %425 {strides = array<i32>} : memref<64x512xf32, #tpu.memory_space<vmem>>, vector<1x512xf32>,
    %c25 = arith.constant 25 : index
    %c0_278 = arith.constant 0 : index
    %427 = vector.load %arg19[%c25, %c0_278] : memref<64x512xf32, #tpu.memory_space<vmem>>, vector<1x512xf32>
    %428 = arith.mulf %427, %425 : vector<1x512xf32>
    %c25_279 = arith.constant 25 : index
    %c0_280 = arith.constant 0 : index
    %429 = vector.load %arg20[%c25_279, %c0_280] : memref<64x512xf32, #tpu.memory_space<vmem>>, vector<1x512xf32>
    %430 = arith.addf %428, %429 : vector<1x512xf32>
    %c25_281 = arith.constant 25 : index
    %c0_282 = arith.constant 0 : index
    %431 = vector.load %arg21[%c25_281, %c0_282] : memref<64x512xf32, #tpu.memory_space<vmem>>, vector<1x512xf32>
    tpu.vector_store %arg21[%c25_281, %c0_282], %430 {strides = array<i32>} : memref<64x512xf32, #tpu.memory_space<vmem>>, vector<1x512xf32>,
    %c26 = arith.constant 26 : index
    %c0_283 = arith.constant 0 : index
    %432 = vector.load %arg19[%c26, %c0_283] : memref<64x512xf32, #tpu.memory_space<vmem>>, vector<1x512xf32>
    %433 = arith.mulf %432, %430 : vector<1x512xf32>
    %c26_284 = arith.constant 26 : index
    %c0_285 = arith.constant 0 : index
    %434 = vector.load %arg20[%c26_284, %c0_285] : memref<64x512xf32, #tpu.memory_space<vmem>>, vector<1x512xf32>
    %435 = arith.addf %433, %434 : vector<1x512xf32>
    %c26_286 = arith.constant 26 : index
    %c0_287 = arith.constant 0 : index
    %436 = vector.load %arg21[%c26_286, %c0_287] : memref<64x512xf32, #tpu.memory_space<vmem>>, vector<1x512xf32>
    tpu.vector_store %arg21[%c26_286, %c0_287], %435 {strides = array<i32>} : memref<64x512xf32, #tpu.memory_space<vmem>>, vector<1x512xf32>,
    %c27 = arith.constant 27 : index
    %c0_288 = arith.constant 0 : index
    %437 = vector.load %arg19[%c27, %c0_288] : memref<64x512xf32, #tpu.memory_space<vmem>>, vector<1x512xf32>
    %438 = arith.mulf %437, %435 : vector<1x512xf32>
    %c27_289 = arith.constant 27 : index
    %c0_290 = arith.constant 0 : index
    %439 = vector.load %arg20[%c27_289, %c0_290] : memref<64x512xf32, #tpu.memory_space<vmem>>, vector<1x512xf32>
    %440 = arith.addf %438, %439 : vector<1x512xf32>
    %c27_291 = arith.constant 27 : index
    %c0_292 = arith.constant 0 : index
    %441 = vector.load %arg21[%c27_291, %c0_292] : memref<64x512xf32, #tpu.memory_space<vmem>>, vector<1x512xf32>
    tpu.vector_store %arg21[%c27_291, %c0_292], %440 {strides = array<i32>} : memref<64x512xf32, #tpu.memory_space<vmem>>, vector<1x512xf32>,
    %c28 = arith.constant 28 : index
    %c0_293 = arith.constant 0 : index
    %442 = vector.load %arg19[%c28, %c0_293] : memref<64x512xf32, #tpu.memory_space<vmem>>, vector<1x512xf32>
    %443 = arith.mulf %442, %440 : vector<1x512xf32>
    %c28_294 = arith.constant 28 : index
    %c0_295 = arith.constant 0 : index
    %444 = vector.load %arg20[%c28_294, %c0_295] : memref<64x512xf32, #tpu.memory_space<vmem>>, vector<1x512xf32>
    %445 = arith.addf %443, %444 : vector<1x512xf32>
    %c28_296 = arith.constant 28 : index
    %c0_297 = arith.constant 0 : index
    %446 = vector.load %arg21[%c28_296, %c0_297] : memref<64x512xf32, #tpu.memory_space<vmem>>, vector<1x512xf32>
    tpu.vector_store %arg21[%c28_296, %c0_297], %445 {strides = array<i32>} : memref<64x512xf32, #tpu.memory_space<vmem>>, vector<1x512xf32>,
    %c29 = arith.constant 29 : index
    %c0_298 = arith.constant 0 : index
    %447 = vector.load %arg19[%c29, %c0_298] : memref<64x512xf32, #tpu.memory_space<vmem>>, vector<1x512xf32>
    %448 = arith.mulf %447, %445 : vector<1x512xf32>
    %c29_299 = arith.constant 29 : index
    %c0_300 = arith.constant 0 : index
    %449 = vector.load %arg20[%c29_299, %c0_300] : memref<64x512xf32, #tpu.memory_space<vmem>>, vector<1x512xf32>
    %450 = arith.addf %448, %449 : vector<1x512xf32>
    %c29_301 = arith.constant 29 : index
    %c0_302 = arith.constant 0 : index
    %451 = vector.load %arg21[%c29_301, %c0_302] : memref<64x512xf32, #tpu.memory_space<vmem>>, vector<1x512xf32>
    tpu.vector_store %arg21[%c29_301, %c0_302], %450 {strides = array<i32>} : memref<64x512xf32, #tpu.memory_space<vmem>>, vector<1x512xf32>,
    %c30 = arith.constant 30 : index
    %c0_303 = arith.constant 0 : index
    %452 = vector.load %arg19[%c30, %c0_303] : memref<64x512xf32, #tpu.memory_space<vmem>>, vector<1x512xf32>
    %453 = arith.mulf %452, %450 : vector<1x512xf32>
    %c30_304 = arith.constant 30 : index
    %c0_305 = arith.constant 0 : index
    %454 = vector.load %arg20[%c30_304, %c0_305] : memref<64x512xf32, #tpu.memory_space<vmem>>, vector<1x512xf32>
    %455 = arith.addf %453, %454 : vector<1x512xf32>
    %c30_306 = arith.constant 30 : index
    %c0_307 = arith.constant 0 : index
    %456 = vector.load %arg21[%c30_306, %c0_307] : memref<64x512xf32, #tpu.memory_space<vmem>>, vector<1x512xf32>
    tpu.vector_store %arg21[%c30_306, %c0_307], %455 {strides = array<i32>} : memref<64x512xf32, #tpu.memory_space<vmem>>, vector<1x512xf32>,
    %c31 = arith.constant 31 : index
    %c0_308 = arith.constant 0 : index
    %457 = vector.load %arg19[%c31, %c0_308] : memref<64x512xf32, #tpu.memory_space<vmem>>, vector<1x512xf32>
    %458 = arith.mulf %457, %455 : vector<1x512xf32>
    %c31_309 = arith.constant 31 : index
    %c0_310 = arith.constant 0 : index
    %459 = vector.load %arg20[%c31_309, %c0_310] : memref<64x512xf32, #tpu.memory_space<vmem>>, vector<1x512xf32>
    %460 = arith.addf %458, %459 : vector<1x512xf32>
    %c31_311 = arith.constant 31 : index
    %c0_312 = arith.constant 0 : index
    %461 = vector.load %arg21[%c31_311, %c0_312] : memref<64x512xf32, #tpu.memory_space<vmem>>, vector<1x512xf32>
    tpu.vector_store %arg21[%c31_311, %c0_312], %460 {strides = array<i32>} : memref<64x512xf32, #tpu.memory_space<vmem>>, vector<1x512xf32>,
    %c32 = arith.constant 32 : index
    %c0_313 = arith.constant 0 : index
    %462 = vector.load %arg19[%c32, %c0_313] : memref<64x512xf32, #tpu.memory_space<vmem>>, vector<1x512xf32>
    %463 = arith.mulf %462, %460 : vector<1x512xf32>
    %c32_314 = arith.constant 32 : index
    %c0_315 = arith.constant 0 : index
    %464 = vector.load %arg20[%c32_314, %c0_315] : memref<64x512xf32, #tpu.memory_space<vmem>>, vector<1x512xf32>
    %465 = arith.addf %463, %464 : vector<1x512xf32>
    %c32_316 = arith.constant 32 : index
    %c0_317 = arith.constant 0 : index
    %466 = vector.load %arg21[%c32_316, %c0_317] : memref<64x512xf32, #tpu.memory_space<vmem>>, vector<1x512xf32>
    tpu.vector_store %arg21[%c32_316, %c0_317], %465 {strides = array<i32>} : memref<64x512xf32, #tpu.memory_space<vmem>>, vector<1x512xf32>,
    %c33 = arith.constant 33 : index
    %c0_318 = arith.constant 0 : index
    %467 = vector.load %arg19[%c33, %c0_318] : memref<64x512xf32, #tpu.memory_space<vmem>>, vector<1x512xf32>
    %468 = arith.mulf %467, %465 : vector<1x512xf32>
    %c33_319 = arith.constant 33 : index
    %c0_320 = arith.constant 0 : index
    %469 = vector.load %arg20[%c33_319, %c0_320] : memref<64x512xf32, #tpu.memory_space<vmem>>, vector<1x512xf32>
    %470 = arith.addf %468, %469 : vector<1x512xf32>
    %c33_321 = arith.constant 33 : index
    %c0_322 = arith.constant 0 : index
    %471 = vector.load %arg21[%c33_321, %c0_322] : memref<64x512xf32, #tpu.memory_space<vmem>>, vector<1x512xf32>
    tpu.vector_store %arg21[%c33_321, %c0_322], %470 {strides = array<i32>} : memref<64x512xf32, #tpu.memory_space<vmem>>, vector<1x512xf32>,
    %c34 = arith.constant 34 : index
    %c0_323 = arith.constant 0 : index
    %472 = vector.load %arg19[%c34, %c0_323] : memref<64x512xf32, #tpu.memory_space<vmem>>, vector<1x512xf32>
    %473 = arith.mulf %472, %470 : vector<1x512xf32>
    %c34_324 = arith.constant 34 : index
    %c0_325 = arith.constant 0 : index
    %474 = vector.load %arg20[%c34_324, %c0_325] : memref<64x512xf32, #tpu.memory_space<vmem>>, vector<1x512xf32>
    %475 = arith.addf %473, %474 : vector<1x512xf32>
    %c34_326 = arith.constant 34 : index
    %c0_327 = arith.constant 0 : index
    %476 = vector.load %arg21[%c34_326, %c0_327] : memref<64x512xf32, #tpu.memory_space<vmem>>, vector<1x512xf32>
    tpu.vector_store %arg21[%c34_326, %c0_327], %475 {strides = array<i32>} : memref<64x512xf32, #tpu.memory_space<vmem>>, vector<1x512xf32>,
    %c35 = arith.constant 35 : index
    %c0_328 = arith.constant 0 : index
    %477 = vector.load %arg19[%c35, %c0_328] : memref<64x512xf32, #tpu.memory_space<vmem>>, vector<1x512xf32>
    %478 = arith.mulf %477, %475 : vector<1x512xf32>
    %c35_329 = arith.constant 35 : index
    %c0_330 = arith.constant 0 : index
    %479 = vector.load %arg20[%c35_329, %c0_330] : memref<64x512xf32, #tpu.memory_space<vmem>>, vector<1x512xf32>
    %480 = arith.addf %478, %479 : vector<1x512xf32>
    %c35_331 = arith.constant 35 : index
    %c0_332 = arith.constant 0 : index
    %481 = vector.load %arg21[%c35_331, %c0_332] : memref<64x512xf32, #tpu.memory_space<vmem>>, vector<1x512xf32>
    tpu.vector_store %arg21[%c35_331, %c0_332], %480 {strides = array<i32>} : memref<64x512xf32, #tpu.memory_space<vmem>>, vector<1x512xf32>,
    %c36 = arith.constant 36 : index
    %c0_333 = arith.constant 0 : index
    %482 = vector.load %arg19[%c36, %c0_333] : memref<64x512xf32, #tpu.memory_space<vmem>>, vector<1x512xf32>
    %483 = arith.mulf %482, %480 : vector<1x512xf32>
    %c36_334 = arith.constant 36 : index
    %c0_335 = arith.constant 0 : index
    %484 = vector.load %arg20[%c36_334, %c0_335] : memref<64x512xf32, #tpu.memory_space<vmem>>, vector<1x512xf32>
    %485 = arith.addf %483, %484 : vector<1x512xf32>
    %c36_336 = arith.constant 36 : index
    %c0_337 = arith.constant 0 : index
    %486 = vector.load %arg21[%c36_336, %c0_337] : memref<64x512xf32, #tpu.memory_space<vmem>>, vector<1x512xf32>
    tpu.vector_store %arg21[%c36_336, %c0_337], %485 {strides = array<i32>} : memref<64x512xf32, #tpu.memory_space<vmem>>, vector<1x512xf32>,
    %c37 = arith.constant 37 : index
    %c0_338 = arith.constant 0 : index
    %487 = vector.load %arg19[%c37, %c0_338] : memref<64x512xf32, #tpu.memory_space<vmem>>, vector<1x512xf32>
    %488 = arith.mulf %487, %485 : vector<1x512xf32>
    %c37_339 = arith.constant 37 : index
    %c0_340 = arith.constant 0 : index
    %489 = vector.load %arg20[%c37_339, %c0_340] : memref<64x512xf32, #tpu.memory_space<vmem>>, vector<1x512xf32>
    %490 = arith.addf %488, %489 : vector<1x512xf32>
    %c37_341 = arith.constant 37 : index
    %c0_342 = arith.constant 0 : index
    %491 = vector.load %arg21[%c37_341, %c0_342] : memref<64x512xf32, #tpu.memory_space<vmem>>, vector<1x512xf32>
    tpu.vector_store %arg21[%c37_341, %c0_342], %490 {strides = array<i32>} : memref<64x512xf32, #tpu.memory_space<vmem>>, vector<1x512xf32>,
    %c38 = arith.constant 38 : index
    %c0_343 = arith.constant 0 : index
    %492 = vector.load %arg19[%c38, %c0_343] : memref<64x512xf32, #tpu.memory_space<vmem>>, vector<1x512xf32>
    %493 = arith.mulf %492, %490 : vector<1x512xf32>
    %c38_344 = arith.constant 38 : index
    %c0_345 = arith.constant 0 : index
    %494 = vector.load %arg20[%c38_344, %c0_345] : memref<64x512xf32, #tpu.memory_space<vmem>>, vector<1x512xf32>
    %495 = arith.addf %493, %494 : vector<1x512xf32>
    %c38_346 = arith.constant 38 : index
    %c0_347 = arith.constant 0 : index
    %496 = vector.load %arg21[%c38_346, %c0_347] : memref<64x512xf32, #tpu.memory_space<vmem>>, vector<1x512xf32>
    tpu.vector_store %arg21[%c38_346, %c0_347], %495 {strides = array<i32>} : memref<64x512xf32, #tpu.memory_space<vmem>>, vector<1x512xf32>,
    %c39 = arith.constant 39 : index
    %c0_348 = arith.constant 0 : index
    %497 = vector.load %arg19[%c39, %c0_348] : memref<64x512xf32, #tpu.memory_space<vmem>>, vector<1x512xf32>
    %498 = arith.mulf %497, %495 : vector<1x512xf32>
    %c39_349 = arith.constant 39 : index
    %c0_350 = arith.constant 0 : index
    %499 = vector.load %arg20[%c39_349, %c0_350] : memref<64x512xf32, #tpu.memory_space<vmem>>, vector<1x512xf32>
    %500 = arith.addf %498, %499 : vector<1x512xf32>
    %c39_351 = arith.constant 39 : index
    %c0_352 = arith.constant 0 : index
    %501 = vector.load %arg21[%c39_351, %c0_352] : memref<64x512xf32, #tpu.memory_space<vmem>>, vector<1x512xf32>
    tpu.vector_store %arg21[%c39_351, %c0_352], %500 {strides = array<i32>} : memref<64x512xf32, #tpu.memory_space<vmem>>, vector<1x512xf32>,
    %c40 = arith.constant 40 : index
    %c0_353 = arith.constant 0 : index
    %502 = vector.load %arg19[%c40, %c0_353] : memref<64x512xf32, #tpu.memory_space<vmem>>, vector<1x512xf32>
    %503 = arith.mulf %502, %500 : vector<1x512xf32>
    %c40_354 = arith.constant 40 : index
    %c0_355 = arith.constant 0 : index
    %504 = vector.load %arg20[%c40_354, %c0_355] : memref<64x512xf32, #tpu.memory_space<vmem>>, vector<1x512xf32>
    %505 = arith.addf %503, %504 : vector<1x512xf32>
    %c40_356 = arith.constant 40 : index
    %c0_357 = arith.constant 0 : index
    %506 = vector.load %arg21[%c40_356, %c0_357] : memref<64x512xf32, #tpu.memory_space<vmem>>, vector<1x512xf32>
    tpu.vector_store %arg21[%c40_356, %c0_357], %505 {strides = array<i32>} : memref<64x512xf32, #tpu.memory_space<vmem>>, vector<1x512xf32>,
    %c41 = arith.constant 41 : index
    %c0_358 = arith.constant 0 : index
    %507 = vector.load %arg19[%c41, %c0_358] : memref<64x512xf32, #tpu.memory_space<vmem>>, vector<1x512xf32>
    %508 = arith.mulf %507, %505 : vector<1x512xf32>
    %c41_359 = arith.constant 41 : index
    %c0_360 = arith.constant 0 : index
    %509 = vector.load %arg20[%c41_359, %c0_360] : memref<64x512xf32, #tpu.memory_space<vmem>>, vector<1x512xf32>
    %510 = arith.addf %508, %509 : vector<1x512xf32>
    %c41_361 = arith.constant 41 : index
    %c0_362 = arith.constant 0 : index
    %511 = vector.load %arg21[%c41_361, %c0_362] : memref<64x512xf32, #tpu.memory_space<vmem>>, vector<1x512xf32>
    tpu.vector_store %arg21[%c41_361, %c0_362], %510 {strides = array<i32>} : memref<64x512xf32, #tpu.memory_space<vmem>>, vector<1x512xf32>,
    %c42 = arith.constant 42 : index
    %c0_363 = arith.constant 0 : index
    %512 = vector.load %arg19[%c42, %c0_363] : memref<64x512xf32, #tpu.memory_space<vmem>>, vector<1x512xf32>
    %513 = arith.mulf %512, %510 : vector<1x512xf32>
    %c42_364 = arith.constant 42 : index
    %c0_365 = arith.constant 0 : index
    %514 = vector.load %arg20[%c42_364, %c0_365] : memref<64x512xf32, #tpu.memory_space<vmem>>, vector<1x512xf32>
    %515 = arith.addf %513, %514 : vector<1x512xf32>
    %c42_366 = arith.constant 42 : index
    %c0_367 = arith.constant 0 : index
    %516 = vector.load %arg21[%c42_366, %c0_367] : memref<64x512xf32, #tpu.memory_space<vmem>>, vector<1x512xf32>
    tpu.vector_store %arg21[%c42_366, %c0_367], %515 {strides = array<i32>} : memref<64x512xf32, #tpu.memory_space<vmem>>, vector<1x512xf32>,
    %c43 = arith.constant 43 : index
    %c0_368 = arith.constant 0 : index
    %517 = vector.load %arg19[%c43, %c0_368] : memref<64x512xf32, #tpu.memory_space<vmem>>, vector<1x512xf32>
    %518 = arith.mulf %517, %515 : vector<1x512xf32>
    %c43_369 = arith.constant 43 : index
    %c0_370 = arith.constant 0 : index
    %519 = vector.load %arg20[%c43_369, %c0_370] : memref<64x512xf32, #tpu.memory_space<vmem>>, vector<1x512xf32>
    %520 = arith.addf %518, %519 : vector<1x512xf32>
    %c43_371 = arith.constant 43 : index
    %c0_372 = arith.constant 0 : index
    %521 = vector.load %arg21[%c43_371, %c0_372] : memref<64x512xf32, #tpu.memory_space<vmem>>, vector<1x512xf32>
    tpu.vector_store %arg21[%c43_371, %c0_372], %520 {strides = array<i32>} : memref<64x512xf32, #tpu.memory_space<vmem>>, vector<1x512xf32>,
    %c44 = arith.constant 44 : index
    %c0_373 = arith.constant 0 : index
    %522 = vector.load %arg19[%c44, %c0_373] : memref<64x512xf32, #tpu.memory_space<vmem>>, vector<1x512xf32>
    %523 = arith.mulf %522, %520 : vector<1x512xf32>
    %c44_374 = arith.constant 44 : index
    %c0_375 = arith.constant 0 : index
    %524 = vector.load %arg20[%c44_374, %c0_375] : memref<64x512xf32, #tpu.memory_space<vmem>>, vector<1x512xf32>
    %525 = arith.addf %523, %524 : vector<1x512xf32>
    %c44_376 = arith.constant 44 : index
    %c0_377 = arith.constant 0 : index
    %526 = vector.load %arg21[%c44_376, %c0_377] : memref<64x512xf32, #tpu.memory_space<vmem>>, vector<1x512xf32>
    tpu.vector_store %arg21[%c44_376, %c0_377], %525 {strides = array<i32>} : memref<64x512xf32, #tpu.memory_space<vmem>>, vector<1x512xf32>,
    %c45 = arith.constant 45 : index
    %c0_378 = arith.constant 0 : index
    %527 = vector.load %arg19[%c45, %c0_378] : memref<64x512xf32, #tpu.memory_space<vmem>>, vector<1x512xf32>
    %528 = arith.mulf %527, %525 : vector<1x512xf32>
    %c45_379 = arith.constant 45 : index
    %c0_380 = arith.constant 0 : index
    %529 = vector.load %arg20[%c45_379, %c0_380] : memref<64x512xf32, #tpu.memory_space<vmem>>, vector<1x512xf32>
    %530 = arith.addf %528, %529 : vector<1x512xf32>
    %c45_381 = arith.constant 45 : index
    %c0_382 = arith.constant 0 : index
    %531 = vector.load %arg21[%c45_381, %c0_382] : memref<64x512xf32, #tpu.memory_space<vmem>>, vector<1x512xf32>
    tpu.vector_store %arg21[%c45_381, %c0_382], %530 {strides = array<i32>} : memref<64x512xf32, #tpu.memory_space<vmem>>, vector<1x512xf32>,
    %c46 = arith.constant 46 : index
    %c0_383 = arith.constant 0 : index
    %532 = vector.load %arg19[%c46, %c0_383] : memref<64x512xf32, #tpu.memory_space<vmem>>, vector<1x512xf32>
    %533 = arith.mulf %532, %530 : vector<1x512xf32>
    %c46_384 = arith.constant 46 : index
    %c0_385 = arith.constant 0 : index
    %534 = vector.load %arg20[%c46_384, %c0_385] : memref<64x512xf32, #tpu.memory_space<vmem>>, vector<1x512xf32>
    %535 = arith.addf %533, %534 : vector<1x512xf32>
    %c46_386 = arith.constant 46 : index
    %c0_387 = arith.constant 0 : index
    %536 = vector.load %arg21[%c46_386, %c0_387] : memref<64x512xf32, #tpu.memory_space<vmem>>, vector<1x512xf32>
    tpu.vector_store %arg21[%c46_386, %c0_387], %535 {strides = array<i32>} : memref<64x512xf32, #tpu.memory_space<vmem>>, vector<1x512xf32>,
    %c47 = arith.constant 47 : index
    %c0_388 = arith.constant 0 : index
    %537 = vector.load %arg19[%c47, %c0_388] : memref<64x512xf32, #tpu.memory_space<vmem>>, vector<1x512xf32>
    %538 = arith.mulf %537, %535 : vector<1x512xf32>
    %c47_389 = arith.constant 47 : index
    %c0_390 = arith.constant 0 : index
    %539 = vector.load %arg20[%c47_389, %c0_390] : memref<64x512xf32, #tpu.memory_space<vmem>>, vector<1x512xf32>
    %540 = arith.addf %538, %539 : vector<1x512xf32>
    %c47_391 = arith.constant 47 : index
    %c0_392 = arith.constant 0 : index
    %541 = vector.load %arg21[%c47_391, %c0_392] : memref<64x512xf32, #tpu.memory_space<vmem>>, vector<1x512xf32>
    tpu.vector_store %arg21[%c47_391, %c0_392], %540 {strides = array<i32>} : memref<64x512xf32, #tpu.memory_space<vmem>>, vector<1x512xf32>,
    %c48 = arith.constant 48 : index
    %c0_393 = arith.constant 0 : index
    %542 = vector.load %arg19[%c48, %c0_393] : memref<64x512xf32, #tpu.memory_space<vmem>>, vector<1x512xf32>
    %543 = arith.mulf %542, %540 : vector<1x512xf32>
    %c48_394 = arith.constant 48 : index
    %c0_395 = arith.constant 0 : index
    %544 = vector.load %arg20[%c48_394, %c0_395] : memref<64x512xf32, #tpu.memory_space<vmem>>, vector<1x512xf32>
    %545 = arith.addf %543, %544 : vector<1x512xf32>
    %c48_396 = arith.constant 48 : index
    %c0_397 = arith.constant 0 : index
    %546 = vector.load %arg21[%c48_396, %c0_397] : memref<64x512xf32, #tpu.memory_space<vmem>>, vector<1x512xf32>
    tpu.vector_store %arg21[%c48_396, %c0_397], %545 {strides = array<i32>} : memref<64x512xf32, #tpu.memory_space<vmem>>, vector<1x512xf32>,
    %c49 = arith.constant 49 : index
    %c0_398 = arith.constant 0 : index
    %547 = vector.load %arg19[%c49, %c0_398] : memref<64x512xf32, #tpu.memory_space<vmem>>, vector<1x512xf32>
    %548 = arith.mulf %547, %545 : vector<1x512xf32>
    %c49_399 = arith.constant 49 : index
    %c0_400 = arith.constant 0 : index
    %549 = vector.load %arg20[%c49_399, %c0_400] : memref<64x512xf32, #tpu.memory_space<vmem>>, vector<1x512xf32>
    %550 = arith.addf %548, %549 : vector<1x512xf32>
    %c49_401 = arith.constant 49 : index
    %c0_402 = arith.constant 0 : index
    %551 = vector.load %arg21[%c49_401, %c0_402] : memref<64x512xf32, #tpu.memory_space<vmem>>, vector<1x512xf32>
    tpu.vector_store %arg21[%c49_401, %c0_402], %550 {strides = array<i32>} : memref<64x512xf32, #tpu.memory_space<vmem>>, vector<1x512xf32>,
    %c50 = arith.constant 50 : index
    %c0_403 = arith.constant 0 : index
    %552 = vector.load %arg19[%c50, %c0_403] : memref<64x512xf32, #tpu.memory_space<vmem>>, vector<1x512xf32>
    %553 = arith.mulf %552, %550 : vector<1x512xf32>
    %c50_404 = arith.constant 50 : index
    %c0_405 = arith.constant 0 : index
    %554 = vector.load %arg20[%c50_404, %c0_405] : memref<64x512xf32, #tpu.memory_space<vmem>>, vector<1x512xf32>
    %555 = arith.addf %553, %554 : vector<1x512xf32>
    %c50_406 = arith.constant 50 : index
    %c0_407 = arith.constant 0 : index
    %556 = vector.load %arg21[%c50_406, %c0_407] : memref<64x512xf32, #tpu.memory_space<vmem>>, vector<1x512xf32>
    tpu.vector_store %arg21[%c50_406, %c0_407], %555 {strides = array<i32>} : memref<64x512xf32, #tpu.memory_space<vmem>>, vector<1x512xf32>,
    %c51 = arith.constant 51 : index
    %c0_408 = arith.constant 0 : index
    %557 = vector.load %arg19[%c51, %c0_408] : memref<64x512xf32, #tpu.memory_space<vmem>>, vector<1x512xf32>
    %558 = arith.mulf %557, %555 : vector<1x512xf32>
    %c51_409 = arith.constant 51 : index
    %c0_410 = arith.constant 0 : index
    %559 = vector.load %arg20[%c51_409, %c0_410] : memref<64x512xf32, #tpu.memory_space<vmem>>, vector<1x512xf32>
    %560 = arith.addf %558, %559 : vector<1x512xf32>
    %c51_411 = arith.constant 51 : index
    %c0_412 = arith.constant 0 : index
    %561 = vector.load %arg21[%c51_411, %c0_412] : memref<64x512xf32, #tpu.memory_space<vmem>>, vector<1x512xf32>
    tpu.vector_store %arg21[%c51_411, %c0_412], %560 {strides = array<i32>} : memref<64x512xf32, #tpu.memory_space<vmem>>, vector<1x512xf32>,
    %c52 = arith.constant 52 : index
    %c0_413 = arith.constant 0 : index
    %562 = vector.load %arg19[%c52, %c0_413] : memref<64x512xf32, #tpu.memory_space<vmem>>, vector<1x512xf32>
    %563 = arith.mulf %562, %560 : vector<1x512xf32>
    %c52_414 = arith.constant 52 : index
    %c0_415 = arith.constant 0 : index
    %564 = vector.load %arg20[%c52_414, %c0_415] : memref<64x512xf32, #tpu.memory_space<vmem>>, vector<1x512xf32>
    %565 = arith.addf %563, %564 : vector<1x512xf32>
    %c52_416 = arith.constant 52 : index
    %c0_417 = arith.constant 0 : index
    %566 = vector.load %arg21[%c52_416, %c0_417] : memref<64x512xf32, #tpu.memory_space<vmem>>, vector<1x512xf32>
    tpu.vector_store %arg21[%c52_416, %c0_417], %565 {strides = array<i32>} : memref<64x512xf32, #tpu.memory_space<vmem>>, vector<1x512xf32>,
    %c53 = arith.constant 53 : index
    %c0_418 = arith.constant 0 : index
    %567 = vector.load %arg19[%c53, %c0_418] : memref<64x512xf32, #tpu.memory_space<vmem>>, vector<1x512xf32>
    %568 = arith.mulf %567, %565 : vector<1x512xf32>
    %c53_419 = arith.constant 53 : index
    %c0_420 = arith.constant 0 : index
    %569 = vector.load %arg20[%c53_419, %c0_420] : memref<64x512xf32, #tpu.memory_space<vmem>>, vector<1x512xf32>
    %570 = arith.addf %568, %569 : vector<1x512xf32>
    %c53_421 = arith.constant 53 : index
    %c0_422 = arith.constant 0 : index
    %571 = vector.load %arg21[%c53_421, %c0_422] : memref<64x512xf32, #tpu.memory_space<vmem>>, vector<1x512xf32>
    tpu.vector_store %arg21[%c53_421, %c0_422], %570 {strides = array<i32>} : memref<64x512xf32, #tpu.memory_space<vmem>>, vector<1x512xf32>,
    %c54 = arith.constant 54 : index
    %c0_423 = arith.constant 0 : index
    %572 = vector.load %arg19[%c54, %c0_423] : memref<64x512xf32, #tpu.memory_space<vmem>>, vector<1x512xf32>
    %573 = arith.mulf %572, %570 : vector<1x512xf32>
    %c54_424 = arith.constant 54 : index
    %c0_425 = arith.constant 0 : index
    %574 = vector.load %arg20[%c54_424, %c0_425] : memref<64x512xf32, #tpu.memory_space<vmem>>, vector<1x512xf32>
    %575 = arith.addf %573, %574 : vector<1x512xf32>
    %c54_426 = arith.constant 54 : index
    %c0_427 = arith.constant 0 : index
    %576 = vector.load %arg21[%c54_426, %c0_427] : memref<64x512xf32, #tpu.memory_space<vmem>>, vector<1x512xf32>
    tpu.vector_store %arg21[%c54_426, %c0_427], %575 {strides = array<i32>} : memref<64x512xf32, #tpu.memory_space<vmem>>, vector<1x512xf32>,
    %c55 = arith.constant 55 : index
    %c0_428 = arith.constant 0 : index
    %577 = vector.load %arg19[%c55, %c0_428] : memref<64x512xf32, #tpu.memory_space<vmem>>, vector<1x512xf32>
    %578 = arith.mulf %577, %575 : vector<1x512xf32>
    %c55_429 = arith.constant 55 : index
    %c0_430 = arith.constant 0 : index
    %579 = vector.load %arg20[%c55_429, %c0_430] : memref<64x512xf32, #tpu.memory_space<vmem>>, vector<1x512xf32>
    %580 = arith.addf %578, %579 : vector<1x512xf32>
    %c55_431 = arith.constant 55 : index
    %c0_432 = arith.constant 0 : index
    %581 = vector.load %arg21[%c55_431, %c0_432] : memref<64x512xf32, #tpu.memory_space<vmem>>, vector<1x512xf32>
    tpu.vector_store %arg21[%c55_431, %c0_432], %580 {strides = array<i32>} : memref<64x512xf32, #tpu.memory_space<vmem>>, vector<1x512xf32>,
    %c56 = arith.constant 56 : index
    %c0_433 = arith.constant 0 : index
    %582 = vector.load %arg19[%c56, %c0_433] : memref<64x512xf32, #tpu.memory_space<vmem>>, vector<1x512xf32>
    %583 = arith.mulf %582, %580 : vector<1x512xf32>
    %c56_434 = arith.constant 56 : index
    %c0_435 = arith.constant 0 : index
    %584 = vector.load %arg20[%c56_434, %c0_435] : memref<64x512xf32, #tpu.memory_space<vmem>>, vector<1x512xf32>
    %585 = arith.addf %583, %584 : vector<1x512xf32>
    %c56_436 = arith.constant 56 : index
    %c0_437 = arith.constant 0 : index
    %586 = vector.load %arg21[%c56_436, %c0_437] : memref<64x512xf32, #tpu.memory_space<vmem>>, vector<1x512xf32>
    tpu.vector_store %arg21[%c56_436, %c0_437], %585 {strides = array<i32>} : memref<64x512xf32, #tpu.memory_space<vmem>>, vector<1x512xf32>,
    %c57 = arith.constant 57 : index
    %c0_438 = arith.constant 0 : index
    %587 = vector.load %arg19[%c57, %c0_438] : memref<64x512xf32, #tpu.memory_space<vmem>>, vector<1x512xf32>
    %588 = arith.mulf %587, %585 : vector<1x512xf32>
    %c57_439 = arith.constant 57 : index
    %c0_440 = arith.constant 0 : index
    %589 = vector.load %arg20[%c57_439, %c0_440] : memref<64x512xf32, #tpu.memory_space<vmem>>, vector<1x512xf32>
    %590 = arith.addf %588, %589 : vector<1x512xf32>
    %c57_441 = arith.constant 57 : index
    %c0_442 = arith.constant 0 : index
    %591 = vector.load %arg21[%c57_441, %c0_442] : memref<64x512xf32, #tpu.memory_space<vmem>>, vector<1x512xf32>
    tpu.vector_store %arg21[%c57_441, %c0_442], %590 {strides = array<i32>} : memref<64x512xf32, #tpu.memory_space<vmem>>, vector<1x512xf32>,
    %c58 = arith.constant 58 : index
    %c0_443 = arith.constant 0 : index
    %592 = vector.load %arg19[%c58, %c0_443] : memref<64x512xf32, #tpu.memory_space<vmem>>, vector<1x512xf32>
    %593 = arith.mulf %592, %590 : vector<1x512xf32>
    %c58_444 = arith.constant 58 : index
    %c0_445 = arith.constant 0 : index
    %594 = vector.load %arg20[%c58_444, %c0_445] : memref<64x512xf32, #tpu.memory_space<vmem>>, vector<1x512xf32>
    %595 = arith.addf %593, %594 : vector<1x512xf32>
    %c58_446 = arith.constant 58 : index
    %c0_447 = arith.constant 0 : index
    %596 = vector.load %arg21[%c58_446, %c0_447] : memref<64x512xf32, #tpu.memory_space<vmem>>, vector<1x512xf32>
    tpu.vector_store %arg21[%c58_446, %c0_447], %595 {strides = array<i32>} : memref<64x512xf32, #tpu.memory_space<vmem>>, vector<1x512xf32>,
    %c59 = arith.constant 59 : index
    %c0_448 = arith.constant 0 : index
    %597 = vector.load %arg19[%c59, %c0_448] : memref<64x512xf32, #tpu.memory_space<vmem>>, vector<1x512xf32>
    %598 = arith.mulf %597, %595 : vector<1x512xf32>
    %c59_449 = arith.constant 59 : index
    %c0_450 = arith.constant 0 : index
    %599 = vector.load %arg20[%c59_449, %c0_450] : memref<64x512xf32, #tpu.memory_space<vmem>>, vector<1x512xf32>
    %600 = arith.addf %598, %599 : vector<1x512xf32>
    %c59_451 = arith.constant 59 : index
    %c0_452 = arith.constant 0 : index
    %601 = vector.load %arg21[%c59_451, %c0_452] : memref<64x512xf32, #tpu.memory_space<vmem>>, vector<1x512xf32>
    tpu.vector_store %arg21[%c59_451, %c0_452], %600 {strides = array<i32>} : memref<64x512xf32, #tpu.memory_space<vmem>>, vector<1x512xf32>,
    %c60 = arith.constant 60 : index
    %c0_453 = arith.constant 0 : index
    %602 = vector.load %arg19[%c60, %c0_453] : memref<64x512xf32, #tpu.memory_space<vmem>>, vector<1x512xf32>
    %603 = arith.mulf %602, %600 : vector<1x512xf32>
    %c60_454 = arith.constant 60 : index
    %c0_455 = arith.constant 0 : index
    %604 = vector.load %arg20[%c60_454, %c0_455] : memref<64x512xf32, #tpu.memory_space<vmem>>, vector<1x512xf32>
    %605 = arith.addf %603, %604 : vector<1x512xf32>
    %c60_456 = arith.constant 60 : index
    %c0_457 = arith.constant 0 : index
    %606 = vector.load %arg21[%c60_456, %c0_457] : memref<64x512xf32, #tpu.memory_space<vmem>>, vector<1x512xf32>
    tpu.vector_store %arg21[%c60_456, %c0_457], %605 {strides = array<i32>} : memref<64x512xf32, #tpu.memory_space<vmem>>, vector<1x512xf32>,
    %c61 = arith.constant 61 : index
    %c0_458 = arith.constant 0 : index
    %607 = vector.load %arg19[%c61, %c0_458] : memref<64x512xf32, #tpu.memory_space<vmem>>, vector<1x512xf32>
    %608 = arith.mulf %607, %605 : vector<1x512xf32>
    %c61_459 = arith.constant 61 : index
    %c0_460 = arith.constant 0 : index
    %609 = vector.load %arg20[%c61_459, %c0_460] : memref<64x512xf32, #tpu.memory_space<vmem>>, vector<1x512xf32>
    %610 = arith.addf %608, %609 : vector<1x512xf32>
    %c61_461 = arith.constant 61 : index
    %c0_462 = arith.constant 0 : index
    %611 = vector.load %arg21[%c61_461, %c0_462] : memref<64x512xf32, #tpu.memory_space<vmem>>, vector<1x512xf32>
    tpu.vector_store %arg21[%c61_461, %c0_462], %610 {strides = array<i32>} : memref<64x512xf32, #tpu.memory_space<vmem>>, vector<1x512xf32>,
    %c62 = arith.constant 62 : index
    %c0_463 = arith.constant 0 : index
    %612 = vector.load %arg19[%c62, %c0_463] : memref<64x512xf32, #tpu.memory_space<vmem>>, vector<1x512xf32>
    %613 = arith.mulf %612, %610 : vector<1x512xf32>
    %c62_464 = arith.constant 62 : index
    %c0_465 = arith.constant 0 : index
    %614 = vector.load %arg20[%c62_464, %c0_465] : memref<64x512xf32, #tpu.memory_space<vmem>>, vector<1x512xf32>
    %615 = arith.addf %613, %614 : vector<1x512xf32>
    %c62_466 = arith.constant 62 : index
    %c0_467 = arith.constant 0 : index
    %616 = vector.load %arg21[%c62_466, %c0_467] : memref<64x512xf32, #tpu.memory_space<vmem>>, vector<1x512xf32>
    tpu.vector_store %arg21[%c62_466, %c0_467], %615 {strides = array<i32>} : memref<64x512xf32, #tpu.memory_space<vmem>>, vector<1x512xf32>,
    %c63 = arith.constant 63 : index
    %c0_468 = arith.constant 0 : index
    %617 = vector.load %arg19[%c63, %c0_468] : memref<64x512xf32, #tpu.memory_space<vmem>>, vector<1x512xf32>
    %618 = arith.mulf %617, %615 : vector<1x512xf32>
    %c63_469 = arith.constant 63 : index
    %c0_470 = arith.constant 0 : index
    %619 = vector.load %arg20[%c63_469, %c0_470] : memref<64x512xf32, #tpu.memory_space<vmem>>, vector<1x512xf32>
    %620 = arith.addf %618, %619 : vector<1x512xf32>
    %c63_471 = arith.constant 63 : index
    %c0_472 = arith.constant 0 : index
    %621 = vector.load %arg21[%c63_471, %c0_472] : memref<64x512xf32, #tpu.memory_space<vmem>>, vector<1x512xf32>
    tpu.vector_store %arg21[%c63_471, %c0_472], %620 {strides = array<i32>} : memref<64x512xf32, #tpu.memory_space<vmem>>, vector<1x512xf32>,
    %c0_473 = arith.constant 0 : index
    %c0_474 = arith.constant 0 : index
    %622 = vector.load %arg21[%c0_473, %c0_474] : memref<64x512xf32, #tpu.memory_space<vmem>>, vector<64x512xf32>
    %623 = arith.mulf %622, %291 : vector<64x512xf32>
    %c0_475 = arith.constant 0 : index
    %c0_476 = arith.constant 0 : index
    %624 = vector.load %arg13[%c0_475, %c0_476] : memref<512x32xf32, #tpu.memory_space<vmem>>, vector<512x32xf32>
    %cst_477 = arith.constant dense<0.000000e+00> : vector<64x32xf32>
    %625 = tpu.matmul %623, %624, %cst_477 {dimension_numbers = #tpu.dot_dimension_numbers<[1], [0], [0], [1], [0, 0, 1, 1], [], []>} : vector<64x512xf32>, vector<512x32xf32>, vector<64x32xf32> -> vector<64x32xf32>
    %c0_478 = arith.constant 0 : index
    %c0_479 = arith.constant 0 : index
    %626 = vector.load %arg14[%c0_478, %c0_479] : memref<1x32xf32, #tpu.memory_space<vmem>>, vector<1x32xf32>
    %627 = vector.broadcast %626 : vector<1x32xf32> to vector<64x32xf32>
    %628 = arith.mulf %273, %627 : vector<64x32xf32>
    %629 = arith.addf %625, %628 : vector<64x32xf32>
    %cst_480 = arith.constant 0.000000e+00 : f32
    %630 = vector.broadcast %cst_480 : f32 to vector<64x32xf32>
    %631 = arith.subf %630, %238 : vector<64x32xf32>
    %632 = math.exp %631 : vector<64x32xf32>
    %cst_481 = arith.constant 1.000000e+00 : f32
    %633 = vector.broadcast %cst_481 : f32 to vector<64x32xf32>
    %634 = arith.addf %633, %632 : vector<64x32xf32>
    %cst_482 = arith.constant 1.000000e+00 : f32
    %635 = vector.broadcast %cst_482 : f32 to vector<64x32xf32>
    %636 = arith.divf %635, %634 : vector<64x32xf32>
    %637 = arith.mulf %238, %636 : vector<64x32xf32>
    %638 = arith.mulf %629, %637 : vector<64x32xf32>
    %c0_483 = arith.constant 0 : index
    %c0_484 = arith.constant 0 : index
    %639 = vector.load %arg15[%c0_483, %c0_484] : memref<32x128xf32, #tpu.memory_space<vmem>>, vector<32x128xf32>
    %cst_485 = arith.constant dense<0.000000e+00> : vector<64x128xf32>
    %640 = tpu.matmul %638, %639, %cst_485 {dimension_numbers = #tpu.dot_dimension_numbers<[1], [0], [0], [1], [0, 0, 1, 1], [], []>} : vector<64x32xf32>, vector<32x128xf32>, vector<64x128xf32> -> vector<64x128xf32>
    %c0_486 = arith.constant 0 : index
    %c0_487 = arith.constant 0 : index
    %c0_488 = arith.constant 0 : index
    %641 = vector.load %arg16[%c0_486, %c0_487, %c0_488] : memref<1x64x128xf32, #tpu.memory_space<vmem>>, vector<1x64x128xf32>
    %642 = vector.shape_cast %641 : vector<1x64x128xf32> to vector<64x128xf32>
    %643 = vector.shape_cast %640 : vector<64x128xf32> to vector<1x64x128xf32>
    tpu.vector_store %arg16[%c0_486, %c0_487, %c0_488], %643 {strides = array<i32>} : memref<1x64x128xf32, #tpu.memory_space<vmem>>, vector<1x64x128xf32>,
    return
  }
  func.func @transform_0(%arg0: i32) -> (i32, i32, i32) {
    %c0_i32 = arith.constant 0 : i32
    %c0_i32_0 = arith.constant 0 : i32
    %c0_i32_1 = arith.constant 0 : i32
    return %arg0, %c0_i32, %c0_i32_0 : i32, i32, i32
  }
  func.func @transform_1(%arg0: i32) -> (i32, i32) {
    %c0_i32 = arith.constant 0 : i32
    %c0_i32_0 = arith.constant 0 : i32
    %c0_i32_1 = arith.constant 0 : i32
    return %c0_i32, %c0_i32_0 : i32, i32
  }
  func.func @transform_2(%arg0: i32) -> (i32, i32) {
    %c0_i32 = arith.constant 0 : i32
    %c0_i32_0 = arith.constant 0 : i32
    %c0_i32_1 = arith.constant 0 : i32
    return %c0_i32, %c0_i32_0 : i32, i32
  }
  func.func @transform_3(%arg0: i32) -> (i32, i32) {
    %c0_i32 = arith.constant 0 : i32
    %c0_i32_0 = arith.constant 0 : i32
    %c0_i32_1 = arith.constant 0 : i32
    return %c0_i32, %c0_i32_0 : i32, i32
  }
  func.func @transform_4(%arg0: i32) -> (i32, i32) {
    %c0_i32 = arith.constant 0 : i32
    %c0_i32_0 = arith.constant 0 : i32
    %c0_i32_1 = arith.constant 0 : i32
    return %c0_i32, %c0_i32_0 : i32, i32
  }
  func.func @transform_5(%arg0: i32) -> (i32, i32) {
    %c0_i32 = arith.constant 0 : i32
    %c0_i32_0 = arith.constant 0 : i32
    %c0_i32_1 = arith.constant 0 : i32
    return %c0_i32, %c0_i32_0 : i32, i32
  }
  func.func @transform_6(%arg0: i32) -> (i32, i32) {
    %c0_i32 = arith.constant 0 : i32
    %c0_i32_0 = arith.constant 0 : i32
    %c0_i32_1 = arith.constant 0 : i32
    return %c0_i32, %c0_i32_0 : i32, i32
  }
  func.func @transform_7(%arg0: i32) -> (i32, i32) {
    %c0_i32 = arith.constant 0 : i32
    %c0_i32_0 = arith.constant 0 : i32
    %c0_i32_1 = arith.constant 0 : i32
    return %c0_i32, %c0_i32_0 : i32, i32
  }
  func.func @transform_8(%arg0: i32) -> (i32, i32) {
    %c0_i32 = arith.constant 0 : i32
    %c0_i32_0 = arith.constant 0 : i32
    %c0_i32_1 = arith.constant 0 : i32
    return %c0_i32, %c0_i32_0 : i32, i32
  }
  func.func @transform_9(%arg0: i32) -> (i32, i32) {
    %c0_i32 = arith.constant 0 : i32
    %c0_i32_0 = arith.constant 0 : i32
    %c0_i32_1 = arith.constant 0 : i32
    return %c0_i32, %c0_i32_0 : i32, i32
  }
  func.func @transform_10(%arg0: i32) -> (i32, i32) {
    %c0_i32 = arith.constant 0 : i32
    %c0_i32_0 = arith.constant 0 : i32
    %c0_i32_1 = arith.constant 0 : i32
    return %c0_i32, %c0_i32_0 : i32, i32
  }
  func.func @transform_11(%arg0: i32) -> (i32, i32) {
    %c0_i32 = arith.constant 0 : i32
    %c0_i32_0 = arith.constant 0 : i32
    %c0_i32_1 = arith.constant 0 : i32
    return %c0_i32, %c0_i32_0 : i32, i32
  }
  func.func @transform_12(%arg0: i32) -> (i32, i32) {
    %c0_i32 = arith.constant 0 : i32
    %c0_i32_0 = arith.constant 0 : i32
    %c0_i32_1 = arith.constant 0 : i32
    return %c0_i32, %c0_i32_0 : i32, i32
  }
  func.func @transform_13(%arg0: i32) -> (i32, i32) {
    %c0_i32 = arith.constant 0 : i32
    %c0_i32_0 = arith.constant 0 : i32
    %c0_i32_1 = arith.constant 0 : i32
    return %c0_i32, %c0_i32_0 : i32, i32
  }
  func.func @transform_14(%arg0: i32) -> (i32, i32) {
    %c0_i32 = arith.constant 0 : i32
    %c0_i32_0 = arith.constant 0 : i32
    %c0_i32_1 = arith.constant 0 : i32
    return %c0_i32, %c0_i32_0 : i32, i32
  }
  func.func @transform_15(%arg0: i32) -> (i32, i32, i32) {
    %c0_i32 = arith.constant 0 : i32
    %c0_i32_0 = arith.constant 0 : i32
    %c0_i32_1 = arith.constant 0 : i32
    return %arg0, %c0_i32, %c0_i32_0 : i32, i32, i32
  }
}

</mosaic_0001>

<llo_original>
// kernel: mamba_forward.1
$region0: #{mamba_forward.1}
  #allocation0 [shape = 'u32[]', space=smem, size = 0x4, offset = 0x4, fixed_abs, tag = 'smem constant byte address 0x4 - core index']
  #allocation1 [shape = 'u32[144,128]{1,0:T(1,128)}', space=vmem, size = 0x12000, scoped, tag = 'internal scratch']
  #allocation2 [shape = 'f32[104,64]{1,0:T(8,128)}', space=vmem, size = 0xd000, scoped, tag = 'scratch operand']
  #allocation3 [shape = 'f32[72,32]{1,0:T(8,128)}', space=vmem, size = 0x9000, scoped, tag = 'scratch operand']
  #allocation4 [shape = 'f32[64,512]{1,0:T(8,128)}', space=vmem, size = 0x20000, scoped, tag = 'scratch operand']
  #allocation5 [shape = 'f32[64,512]{1,0:T(8,128)}', space=vmem, size = 0x20000, scoped, tag = 'scratch operand']
  #allocation6 [shape = 'f32[64,512]{1,0:T(8,128)}', space=vmem, size = 0x20000, scoped, tag = 'scratch operand']
  %s0 = inlined_call_operand.vmem [shape: f32[2,64,16], index: 0, kind: input, shape index: {}]
  %s1 = inlined_call_operand.vmem [shape: f32[16,64], index: 1, kind: input, shape index: {}]
  %s2 = inlined_call_operand.hbm [shape: f32[25,64], index: 2, kind: input, shape index: {}]
  %s3 = inlined_call_operand.vmem [shape: f32[32,2], index: 3, kind: input, shape index: {}]
  %s4 = inlined_call_operand.vmem [shape: f32[2,32], index: 4, kind: input, shape index: {}]
  %s5 = inlined_call_operand.vmem [shape: f32[64,64], index: 5, kind: input, shape index: {}]
  %s6 = inlined_call_operand.hbm [shape: f32[64,64], index: 6, kind: input, shape index: {}]
  %s7 = inlined_call_operand.vmem [shape: f32[4,32], index: 7, kind: input, shape index: {}]
  %s8 = inlined_call_operand.hbm [shape: f32[1,32], index: 8, kind: input, shape index: {}]
  %s9 = inlined_call_operand.vmem [shape: f32[32,2048], index: 9, kind: input, shape index: {}]
  %s10 = inlined_call_operand.vmem [shape: f32[1,512], index: 10, kind: input, shape index: {}]
  %s11 = inlined_call_operand.hbm [shape: f32[1,512], index: 11, kind: input, shape index: {}]
  %s12 = inlined_call_operand.vmem [shape: f32[512,32], index: 12, kind: input, shape index: {}]
  %s13 = inlined_call_operand.hbm [shape: f32[1,32], index: 13, kind: input, shape index: {}]
  %s14 = inlined_call_operand.hbm [shape: f32[32,128], index: 14, kind: input, shape index: {}]
  %s15 = inlined_call_operand.vmem [shape: f32[2,64,128], index: 15, kind: output, shape index: {}]
  %s16 = sld [smem:[#allocation0]]
  $region117: #{mamba_forward.1} parent=0
    _
  %s18 = ssub.s32 1, %s16
  %s19 = scalar_select 0, %s18, %s16
  $region1: #{mamba_forward.1} parent=0
    #allocation7 [shape = 'u8[16384]{0}', space=vmem, size = 0x4000, scoped, tag = 'input window, operand 2, single buffered']
    #allocation8 [shape = 's32[2]{0}', space=sflag, size = 0x8, scoped, tag = 'scoped memory for mamba_forward.1']
    #allocation9 [shape = 'u8[32768]{0}', space=vmem, size = 0x8000, scoped, tag = 'input window, operand 6, single buffered']
    #allocation10 [shape = 's32[1]{0}', space=sflag, size = 0x4, scoped, tag = 'scoped memory for mamba_forward.1']
    #allocation11 [shape = 'u8[512]{0}', space=vmem, size = 0x400, scoped, tag = 'input window, operand 8, single buffered']
    #allocation12 [shape = 'u8[2048]{0}', space=vmem, size = 0x800, scoped, tag = 'input window, operand 11, single buffered']
    #allocation13 [shape = 's32[1]{0}', space=sflag, size = 0x4, scoped, tag = 'scoped memory for mamba_forward.1']
    #allocation14 [shape = 'u8[512]{0}', space=vmem, size = 0x400, scoped, tag = 'input window, operand 13, single buffered']
    #allocation15 [shape = 'u8[16384]{0}', space=vmem, size = 0x4000, scoped, tag = 'input window, operand 14, single buffered']
    #allocation16 [shape = 's32[1]{0}', space=sflag, size = 0x4, scoped, tag = 'scoped memory for mamba_forward.1']
    %20 = vsyncpa [#allocation8], 0
    %21 = vsyncpa [#allocation10], 0
    %22 = vsyncpa [#allocation13], 0
    %23 = vsyncpa [#allocation16], 0
    loop: start=0, step=1, limit=4
    $region2: #{mamba_forward.1} parent=1 // loop_pre_header
      _
    $region3: #{mamba_forward.1} parent=1 // loop_header
      %s25 = sphi 0, %s29
      %p26 = scmp.ge.s32.totalorder %s25, 4
      %s35 = sphi 0, %s37
      %s38 = sphi 0, %s35
      %s39 = sphi 0, %s38
      %s55 = sphi 0, %s39
      %s59 = sphi 0, %s59
      %s61 = sphi 0, %s59
      %s62 = sphi 0, %s61
      %s76 = sphi 0, %s62
      %s80 = sphi 0, %s80
      %s82 = sphi 0, %s80
      %s83 = sphi 0, %s82
      %s97 = sphi 0, %s83
      %s101 = sphi 0, %s101
      %s103 = sphi 0, %s101
      %s104 = sphi 0, %s103
      %s118 = sphi 0, %s104
      %s122 = sphi 0, %s122
      %s124 = sphi 0, %s122
      %s125 = sphi 0, %s124
      %s139 = sphi 0, %s125
      %s143 = sphi 0, %s143
      %s145 = sphi 0, %s143
      %s146 = sphi 0, %s145
      %s160 = sphi 0, %s146
      %s164 = sphi 0, %s164
      %s166 = sphi 0, %s164
      %s167 = sphi 0, %s166
      %s181 = sphi 0, %s167
      %s185 = sphi 0, %s185
      %s187 = sphi 0, %s185
      %s188 = sphi 0, %s187
      %s202 = sphi 0, %s188
      %s206 = sphi 0, %s206
      %s208 = sphi 0, %s206
      %s209 = sphi 0, %s208
      %s223 = sphi 0, %s209
      %s227 = sphi 0, %s227
      %s229 = sphi 0, %s227
      %s230 = sphi 0, %s229
      %s244 = sphi 0, %s230
      %s248 = sphi 0, %s248
      %s250 = sphi 0, %s248
      %s251 = sphi 0, %s250
      %s265 = sphi 0, %s251
      %s269 = sphi 0, %s269
      %s271 = sphi 0, %s269
      %s272 = sphi 0, %s271
      %s286 = sphi 0, %s272
      %s290 = sphi 0, %s290
      %s292 = sphi 0, %s290
      %s293 = sphi 0, %s292
      %s307 = sphi 0, %s293
      %s311 = sphi 0, %s311
      %s313 = sphi 0, %s311
      %s314 = sphi 0, %s313
      %s328 = sphi 0, %s314
      %s332 = sphi 0, %s332
      %s334 = sphi 0, %s332
      %s335 = sphi 0, %s334
      %s349 = sphi 0, %s335
      %s355 = sphi 0, %s357
      %s358 = sphi 0, %s355
      %s359 = sphi 0, %s358
      %s375 = sphi 0, %s359
    $region4: #{mamba_forward.1} parent=1 // loop_header_branch
      %28 = sbr.rel (%p26) target = $region8
    $region5: #{mamba_forward.1} parent=1 // loop_body
      %s30 = ssub.s32 %s25, 1
      %s31 = ssub.s32 %s25, 2
      %s32 = sadd.s32 %s25, 1
      %s33 = ssub.s32 %s25, %s32
      %p34 = scmp.eq.s32.totalorder %s33, 0
      %s36 = sadd.s32 %s35, 1
      %s37 = scalar_select %p34, %s35, %s36
      %p40 = pneg %p34
      %p41 = scmp.eq.s32.totalorder %s25, 1
      %p42 = por %p40, %p41
      %p43 = scmp.ne.s32.totalorder %s35, %s38
      %p44 = scmp.eq.s32.totalorder %s25, 0
      %p45 = por %p43, %p44
      %p46 = scmp.ne.s32.totalorder %s35, %s38
      %p47 = scmp.eq.s32.totalorder %s30, 1
      %p48 = por %p46, %p47
      %p49 = scmp.ne.s32.totalorder %s38, %s39
      %p50 = scmp.eq.s32.totalorder %s30, 0
      %p51 = por %p49, %p50
      %p52 = scmp.ne.s32.totalorder %s38, %s39
      %p53 = scmp.eq.s32.totalorder %s31, 1
      %p54 = por %p52, %p53
      %p56 = scmp.ne.s32.totalorder %s39, %s55
      %p57 = scmp.eq.s32.totalorder %s31, 0
      %p58 = por %p56, %p57
      %s60 = sadd.s32 %s59, 1
      %p63 = scmp.eq.s32.totalorder %s25, 1
      %p64 = scmp.ne.s32.totalorder %s59, %s61
      %p65 = scmp.eq.s32.totalorder %s25, 0
      %p66 = por %p64, %p65
      %p67 = scmp.ne.s32.totalorder %s59, %s61
      %p68 = scmp.eq.s32.totalorder %s30, 1
      %p69 = por %p67, %p68
      %p70 = scmp.ne.s32.totalorder %s61, %s62
      %p71 = scmp.eq.s32.totalorder %s30, 0
      %p72 = por %p70, %p71
      %p73 = scmp.ne.s32.totalorder %s61, %s62
      %p74 = scmp.eq.s32.totalorder %s31, 1
      %p75 = por %p73, %p74
      %p77 = scmp.ne.s32.totalorder %s62, %s76
      %p78 = scmp.eq.s32.totalorder %s31, 0
      %p79 = por %p77, %p78
      %s81 = sadd.s32 %s80, 1
      %p84 = scmp.eq.s32.totalorder %s25, 1
      %p85 = scmp.ne.s32.totalorder %s80, %s82
      %p86 = scmp.eq.s32.totalorder %s25, 0
      %p87 = por %p85, %p86
      %p88 = scmp.ne.s32.totalorder %s80, %s82
      %p89 = scmp.eq.s32.totalorder %s30, 1
      %p90 = por %p88, %p89
      %p91 = scmp.ne.s32.totalorder %s82, %s83
      %p92 = scmp.eq.s32.totalorder %s30, 0
      %p93 = por %p91, %p92
      %p94 = scmp.ne.s32.totalorder %s82, %s83
      %p95 = scmp.eq.s32.totalorder %s31, 1
      %p96 = por %p94, %p95
      %p98 = scmp.ne.s32.totalorder %s83, %s97
      %p99 = scmp.eq.s32.totalorder %s31, 0
      %p100 = por %p98, %p99
      %s102 = sadd.s32 %s101, 1
      %p105 = scmp.eq.s32.totalorder %s25, 1
      %p106 = scmp.ne.s32.totalorder %s101, %s103
      %p107 = scmp.eq.s32.totalorder %s25, 0
      %p108 = por %p106, %p107
      %p109 = scmp.ne.s32.totalorder %s101, %s103
      %p110 = scmp.eq.s32.totalorder %s30, 1
      %p111 = por %p109, %p110
      %p112 = scmp.ne.s32.totalorder %s103, %s104
      %p113 = scmp.eq.s32.totalorder %s30, 0
      %p114 = por %p112, %p113
      %p115 = scmp.ne.s32.totalorder %s103, %s104
      %p116 = scmp.eq.s32.totalorder %s31, 1
      %p117 = por %p115, %p116
      %p119 = scmp.ne.s32.totalorder %s104, %s118
      %p120 = scmp.eq.s32.totalorder %s31, 0
      %p121 = por %p119, %p120
      %s123 = sadd.s32 %s122, 1
      %p126 = scmp.eq.s32.totalorder %s25, 1
      %p127 = scmp.ne.s32.totalorder %s122, %s124
      %p128 = scmp.eq.s32.totalorder %s25, 0
      %p129 = por %p127, %p128
      %p130 = scmp.ne.s32.totalorder %s122, %s124
      %p131 = scmp.eq.s32.totalorder %s30, 1
      %p132 = por %p130, %p131
      %p133 = scmp.ne.s32.totalorder %s124, %s125
      %p134 = scmp.eq.s32.totalorder %s30, 0
      %p135 = por %p133, %p134
      %p136 = scmp.ne.s32.totalorder %s124, %s125
      %p137 = scmp.eq.s32.totalorder %s31, 1
      %p138 = por %p136, %p137
      %p140 = scmp.ne.s32.totalorder %s125, %s139
      %p141 = scmp.eq.s32.totalorder %s31, 0
      %p142 = por %p140, %p141
      %s144 = sadd.s32 %s143, 1
      %p147 = scmp.eq.s32.totalorder %s25, 1
      %p148 = scmp.ne.s32.totalorder %s143, %s145
      %p149 = scmp.eq.s32.totalorder %s25, 0
      %p150 = por %p148, %p149
      %p151 = scmp.ne.s32.totalorder %s143, %s145
      %p152 = scmp.eq.s32.totalorder %s30, 1
      %p153 = por %p151, %p152
      %p154 = scmp.ne.s32.totalorder %s145, %s146
      %p155 = scmp.eq.s32.totalorder %s30, 0
      %p156 = por %p154, %p155
      %p157 = scmp.ne.s32.totalorder %s145, %s146
      %p158 = scmp.eq.s32.totalorder %s31, 1
      %p159 = por %p157, %p158
      %p161 = scmp.ne.s32.totalorder %s146, %s160
      %p162 = scmp.eq.s32.totalorder %s31, 0
      %p163 = por %p161, %p162
      %s165 = sadd.s32 %s164, 1
      %p168 = scmp.eq.s32.totalorder %s25, 1
      %p169 = scmp.ne.s32.totalorder %s164, %s166
      %p170 = scmp.eq.s32.totalorder %s25, 0
      %p171 = por %p169, %p170
      %p172 = scmp.ne.s32.totalorder %s164, %s166
      %p173 = scmp.eq.s32.totalorder %s30, 1
      %p174 = por %p172, %p173
      %p175 = scmp.ne.s32.totalorder %s166, %s167
      %p176 = scmp.eq.s32.totalorder %s30, 0
      %p177 = por %p175, %p176
      %p178 = scmp.ne.s32.totalorder %s166, %s167
      %p179 = scmp.eq.s32.totalorder %s31, 1
      %p180 = por %p178, %p179
      %p182 = scmp.ne.s32.totalorder %s167, %s181
      %p183 = scmp.eq.s32.totalorder %s31, 0
      %p184 = por %p182, %p183
      %s186 = sadd.s32 %s185, 1
      %p189 = scmp.eq.s32.totalorder %s25, 1
      %p190 = scmp.ne.s32.totalorder %s185, %s187
      %p191 = scmp.eq.s32.totalorder %s25, 0
      %p192 = por %p190, %p191
      %p193 = scmp.ne.s32.totalorder %s185, %s187
      %p194 = scmp.eq.s32.totalorder %s30, 1
      %p195 = por %p193, %p194
      %p196 = scmp.ne.s32.totalorder %s187, %s188
      %p197 = scmp.eq.s32.totalorder %s30, 0
      %p198 = por %p196, %p197
      %p199 = scmp.ne.s32.totalorder %s187, %s188
      %p200 = scmp.eq.s32.totalorder %s31, 1
      %p201 = por %p199, %p200
      %p203 = scmp.ne.s32.totalorder %s188, %s202
      %p204 = scmp.eq.s32.totalorder %s31, 0
      %p205 = por %p203, %p204
      %s207 = sadd.s32 %s206, 1
      %p210 = scmp.eq.s32.totalorder %s25, 1
      %p211 = scmp.ne.s32.totalorder %s206, %s208
      %p212 = scmp.eq.s32.totalorder %s25, 0
      %p213 = por %p211, %p212
      %p214 = scmp.ne.s32.totalorder %s206, %s208
      %p215 = scmp.eq.s32.totalorder %s30, 1
      %p216 = por %p214, %p215
      %p217 = scmp.ne.s32.totalorder %s208, %s209
      %p218 = scmp.eq.s32.totalorder %s30, 0
      %p219 = por %p217, %p218
      %p220 = scmp.ne.s32.totalorder %s208, %s209
      %p221 = scmp.eq.s32.totalorder %s31, 1
      %p222 = por %p220, %p221
      %p224 = scmp.ne.s32.totalorder %s209, %s223
      %p225 = scmp.eq.s32.totalorder %s31, 0
      %p226 = por %p224, %p225
      %s228 = sadd.s32 %s227, 1
      %p231 = scmp.eq.s32.totalorder %s25, 1
      %p232 = scmp.ne.s32.totalorder %s227, %s229
      %p233 = scmp.eq.s32.totalorder %s25, 0
      %p234 = por %p232, %p233
      %p235 = scmp.ne.s32.totalorder %s227, %s229
      %p236 = scmp.eq.s32.totalorder %s30, 1
      %p237 = por %p235, %p236
      %p238 = scmp.ne.s32.totalorder %s229, %s230
      %p239 = scmp.eq.s32.totalorder %s30, 0
      %p240 = por %p238, %p239
      %p241 = scmp.ne.s32.totalorder %s229, %s230
      %p242 = scmp.eq.s32.totalorder %s31, 1
      %p243 = por %p241, %p242
      %p245 = scmp.ne.s32.totalorder %s230, %s244
      %p246 = scmp.eq.s32.totalorder %s31, 0
      %p247 = por %p245, %p246
      %s249 = sadd.s32 %s248, 1
      %p252 = scmp.eq.s32.totalorder %s25, 1
      %p253 = scmp.ne.s32.totalorder %s248, %s250
      %p254 = scmp.eq.s32.totalorder %s25, 0
      %p255 = por %p253, %p254
      %p256 = scmp.ne.s32.totalorder %s248, %s250
      %p257 = scmp.eq.s32.totalorder %s30, 1
      %p258 = por %p256, %p257
      %p259 = scmp.ne.s32.totalorder %s250, %s251
      %p260 = scmp.eq.s32.totalorder %s30, 0
      %p261 = por %p259, %p260
      %p262 = scmp.ne.s32.totalorder %s250, %s251
      %p263 = scmp.eq.s32.totalorder %s31, 1
      %p264 = por %p262, %p263
      %p266 = scmp.ne.s32.totalorder %s251, %s265
      %p267 = scmp.eq.s32.totalorder %s31, 0
      %p268 = por %p266, %p267
      %s270 = sadd.s32 %s269, 1
      %p273 = scmp.eq.s32.totalorder %s25, 1
      %p274 = scmp.ne.s32.totalorder %s269, %s271
      %p275 = scmp.eq.s32.totalorder %s25, 0
      %p276 = por %p274, %p275
      %p277 = scmp.ne.s32.totalorder %s269, %s271
      %p278 = scmp.eq.s32.totalorder %s30, 1
      %p279 = por %p277, %p278
      %p280 = scmp.ne.s32.totalorder %s271, %s272
      %p281 = scmp.eq.s32.totalorder %s30, 0
      %p282 = por %p280, %p281
      %p283 = scmp.ne.s32.totalorder %s271, %s272
      %p284 = scmp.eq.s32.totalorder %s31, 1
      %p285 = por %p283, %p284
      %p287 = scmp.ne.s32.totalorder %s272, %s286
      %p288 = scmp.eq.s32.totalorder %s31, 0
      %p289 = por %p287, %p288
      %s291 = sadd.s32 %s290, 1
      %p294 = scmp.eq.s32.totalorder %s25, 1
      %p295 = scmp.ne.s32.totalorder %s290, %s292
      %p296 = scmp.eq.s32.totalorder %s25, 0
      %p297 = por %p295, %p296
      %p298 = scmp.ne.s32.totalorder %s290, %s292
      %p299 = scmp.eq.s32.totalorder %s30, 1
      %p300 = por %p298, %p299
      %p301 = scmp.ne.s32.totalorder %s292, %s293
      %p302 = scmp.eq.s32.totalorder %s30, 0
      %p303 = por %p301, %p302
      %p304 = scmp.ne.s32.totalorder %s292, %s293
      %p305 = scmp.eq.s32.totalorder %s31, 1
      %p306 = por %p304, %p305
      %p308 = scmp.ne.s32.totalorder %s293, %s307
      %p309 = scmp.eq.s32.totalorder %s31, 0
      %p310 = por %p308, %p309
      %s312 = sadd.s32 %s311, 1
      %p315 = scmp.eq.s32.totalorder %s25, 1
      %p316 = scmp.ne.s32.totalorder %s311, %s313
      %p317 = scmp.eq.s32.totalorder %s25, 0
      %p318 = por %p316, %p317
      %p319 = scmp.ne.s32.totalorder %s311, %s313
      %p320 = scmp.eq.s32.totalorder %s30, 1
      %p321 = por %p319, %p320
      %p322 = scmp.ne.s32.totalorder %s313, %s314
      %p323 = scmp.eq.s32.totalorder %s30, 0
      %p324 = por %p322, %p323
      %p325 = scmp.ne.s32.totalorder %s313, %s314
      %p326 = scmp.eq.s32.totalorder %s31, 1
      %p327 = por %p325, %p326
      %p329 = scmp.ne.s32.totalorder %s314, %s328
      %p330 = scmp.eq.s32.totalorder %s31, 0
      %p331 = por %p329, %p330
      %s333 = sadd.s32 %s332, 1
      %p336 = scmp.eq.s32.totalorder %s25, 1
      %p337 = scmp.ne.s32.totalorder %s332, %s334
      %p338 = scmp.eq.s32.totalorder %s25, 0
      %p339 = por %p337, %p338
      %p340 = scmp.ne.s32.totalorder %s332, %s334
      %p341 = scmp.eq.s32.totalorder %s30, 1
      %p342 = por %p340, %p341
      %p343 = scmp.ne.s32.totalorder %s334, %s335
      %p344 = scmp.eq.s32.totalorder %s30, 0
      %p345 = por %p343, %p344
      %p346 = scmp.ne.s32.totalorder %s334, %s335
      %p347 = scmp.eq.s32.totalorder %s31, 1
      %p348 = por %p346, %p347
      %p350 = scmp.ne.s32.totalorder %s335, %s349
      %p351 = scmp.eq.s32.totalorder %s31, 0
      %p352 = por %p350, %p351
      %s353 = ssub.s32 %s25, %s32
      %p354 = scmp.eq.s32.totalorder %s353, 0
      %s356 = sadd.s32 %s355, 1
      %s357 = scalar_select %p354, %s355, %s356
      %p360 = pneg %p354
      %p361 = scmp.eq.s32.totalorder %s25, 1
      %p362 = por %p360, %p361
      %p363 = scmp.ne.s32.totalorder %s355, %s358
      %p364 = scmp.eq.s32.totalorder %s25, 0
      %p365 = por %p363, %p364
      %p366 = scmp.ne.s32.totalorder %s355, %s358
      %p367 = scmp.eq.s32.totalorder %s30, 1
      %p368 = por %p366, %p367
      %p369 = scmp.ne.s32.totalorder %s358, %s359
      %p370 = scmp.eq.s32.totalorder %s30, 0
      %p371 = por %p369, %p370
      %p372 = scmp.ne.s32.totalorder %s358, %s359
      %p373 = scmp.eq.s32.totalorder %s31, 1
      %p374 = por %p372, %p373
      %p376 = scmp.ne.s32.totalorder %s359, %s375
      %p377 = scmp.eq.s32.totalorder %s31, 0
      %p378 = por %p376, %p377
      %p379 = scmp.le.s32.totalorder 1, %s25
      %p380 = scmp.lt.s32.totalorder %s25, 3
      %p381 = pnand %p379, %p380
      %p382 = pneg %p381
      // Predicated region
      $region9: #{mamba_forward.1} parent=5 // pred_check
        _
      $region10: #{mamba_forward.1} parent=5 // pred_check_branch
        %384 = sbr.rel (%p381) target = $region12
      $region11: #{mamba_forward.1} parent=5 // pred_region
        %s385 = ssub.s32 %s25, 1
        // Predicated region
        $region13: #{mamba_forward.1} parent=11 // pred_check
          %p386 = pneg %p72
        $region14: #{mamba_forward.1} parent=11 // pred_check_branch
          %388 = sbr.rel (%p386) target = $region16
        $region15: #{mamba_forward.1} parent=11 // pred_region
          _
        $region16: #{mamba_forward.1} parent=11 // pred_fallthru
          _
        // Predicated region
        $region17: #{mamba_forward.1} parent=11 // pred_check
          %p389 = pneg %p93
        $region18: #{mamba_forward.1} parent=11 // pred_check_branch
          %391 = sbr.rel (%p389) target = $region20
        $region19: #{mamba_forward.1} parent=11 // pred_region
          %s393 = ssub.s32 512, 512
          %394 = vsyncadd [#allocation8], %s393
          %s395 = sshll.u32 [#allocation7], 4
          %s396 = int_to_ptr.vmem [resolvable:$true] %s395
          %401 = dma.hbm_to_vmem [thread:$0]  %s2, 512, %s396, [#allocation8], 128, 128, 8
        $region20: #{mamba_forward.1} parent=11 // pred_fallthru
          _
        // Predicated region
        $region21: #{mamba_forward.1} parent=11 // pred_check
          %p402 = pneg %p114
        $region22: #{mamba_forward.1} parent=11 // pred_check_branch
          %404 = sbr.rel (%p402) target = $region24
        $region23: #{mamba_forward.1} parent=11 // pred_region
          _
        $region24: #{mamba_forward.1} parent=11 // pred_fallthru
          _
        // Predicated region
        $region25: #{mamba_forward.1} parent=11 // pred_check
          %p405 = pneg %p135
        $region26: #{mamba_forward.1} parent=11 // pred_check_branch
          %407 = sbr.rel (%p405) target = $region28
        $region27: #{mamba_forward.1} parent=11 // pred_region
          _
        $region28: #{mamba_forward.1} parent=11 // pred_fallthru
          _
        // Predicated region
        $region29: #{mamba_forward.1} parent=11 // pred_check
          %p408 = pneg %p156
        $region30: #{mamba_forward.1} parent=11 // pred_check_branch
          %410 = sbr.rel (%p408) target = $region32
        $region31: #{mamba_forward.1} parent=11 // pred_region
          _
        $region32: #{mamba_forward.1} parent=11 // pred_fallthru
          _
        // Predicated region
        $region33: #{mamba_forward.1} parent=11 // pred_check
          %p411 = pneg %p177
        $region34: #{mamba_forward.1} parent=11 // pred_check_branch
          %413 = sbr.rel (%p411) target = $region36
        $region35: #{mamba_forward.1} parent=11 // pred_region
          %s415 = ssub.s32 1024, 1024
          %416 = vsyncadd [#allocation10], %s415
          %s417 = sshll.u32 [#allocation9], 4
          %s418 = int_to_ptr.vmem [resolvable:$true] %s417
          %423 = dma.hbm_to_vmem [thread:$0]  %s6, 1024, %s418, [#allocation10], 128, 128, 8
        $region36: #{mamba_forward.1} parent=11 // pred_fallthru
          _
        // Predicated region
        $region37: #{mamba_forward.1} parent=11 // pred_check
          %p424 = pneg %p198
        $region38: #{mamba_forward.1} parent=11 // pred_check_branch
          %426 = sbr.rel (%p424) target = $region40
        $region39: #{mamba_forward.1} parent=11 // pred_region
          _
        $region40: #{mamba_forward.1} parent=11 // pred_fallthru
          _
        // Predicated region
        $region41: #{mamba_forward.1} parent=11 // pred_check
          %p427 = pneg %p219
        $region42: #{mamba_forward.1} parent=11 // pred_check_branch
          %429 = sbr.rel (%p427) target = $region44
        $region43: #{mamba_forward.1} parent=11 // pred_region
          %s431 = ssub.s32 16, 16
          %432 = vsyncadd [#allocation10], %s431
          %s434 = sshll.u32 [#allocation11], 4
          %s435 = int_to_ptr.vmem [resolvable:$true] %s434
          %437 = dma.hbm_to_vmem [thread:$0]  %s8, 16, %s435, [#allocation10]
        $region44: #{mamba_forward.1} parent=11 // pred_fallthru
          _
        // Predicated region
        $region45: #{mamba_forward.1} parent=11 // pred_check
          %p438 = pneg %p240
        $region46: #{mamba_forward.1} parent=11 // pred_check_branch
          %440 = sbr.rel (%p438) target = $region48
        $region47: #{mamba_forward.1} parent=11 // pred_region
          _
        $region48: #{mamba_forward.1} parent=11 // pred_fallthru
          _
        // Predicated region
        $region49: #{mamba_forward.1} parent=11 // pred_check
          %p441 = pneg %p261
        $region50: #{mamba_forward.1} parent=11 // pred_check_branch
          %443 = sbr.rel (%p441) target = $region52
        $region51: #{mamba_forward.1} parent=11 // pred_region
          _
        $region52: #{mamba_forward.1} parent=11 // pred_fallthru
          _
        // Predicated region
        $region53: #{mamba_forward.1} parent=11 // pred_check
          %p444 = pneg %p282
        $region54: #{mamba_forward.1} parent=11 // pred_check_branch
          %446 = sbr.rel (%p444) target = $region56
        $region55: #{mamba_forward.1} parent=11 // pred_region
          %s448 = ssub.s32 64, 64
          %449 = vsyncadd [#allocation13], %s448
          %s451 = sshll.u32 [#allocation12], 4
          %s452 = int_to_ptr.vmem [resolvable:$true] %s451
          %454 = dma.hbm_to_vmem [thread:$0]  %s11, 64, %s452, [#allocation13]
        $region56: #{mamba_forward.1} parent=11 // pred_fallthru
          _
        // Predicated region
        $region57: #{mamba_forward.1} parent=11 // pred_check
          %p455 = pneg %p303
        $region58: #{mamba_forward.1} parent=11 // pred_check_branch
          %457 = sbr.rel (%p455) target = $region60
        $region59: #{mamba_forward.1} parent=11 // pred_region
          _
        $region60: #{mamba_forward.1} parent=11 // pred_fallthru
          _
        // Predicated region
        $region61: #{mamba_forward.1} parent=11 // pred_check
          %p458 = pneg %p324
        $region62: #{mamba_forward.1} parent=11 // pred_check_branch
          %460 = sbr.rel (%p458) target = $region64
        $region63: #{mamba_forward.1} parent=11 // pred_region
          %s462 = ssub.s32 16, 16
          %463 = vsyncadd [#allocation13], %s462
          %s465 = sshll.u32 [#allocation14], 4
          %s466 = int_to_ptr.vmem [resolvable:$true] %s465
          %468 = dma.hbm_to_vmem [thread:$0]  %s13, 16, %s466, [#allocation13]
        $region64: #{mamba_forward.1} parent=11 // pred_fallthru
          _
        // Predicated region
        $region65: #{mamba_forward.1} parent=11 // pred_check
          %p469 = pneg %p345
        $region66: #{mamba_forward.1} parent=11 // pred_check_branch
          %471 = sbr.rel (%p469) target = $region68
        $region67: #{mamba_forward.1} parent=11 // pred_region
          %s473 = ssub.s32 512, 512
          %474 = vsyncadd [#allocation16], %s473
          %s475 = sshll.u32 [#allocation15], 4
          %s476 = int_to_ptr.vmem [resolvable:$true] %s475
          %481 = dma.hbm_to_vmem [thread:$0]  %s14, 512, %s476, [#allocation16], 128, 128, 8
        $region68: #{mamba_forward.1} parent=11 // pred_fallthru
          _
      $region12: #{mamba_forward.1} parent=5 // pred_fallthru
        _
      %p482 = scmp.lt.s32.totalorder %s25, 2
      // Predicated region
      $region69: #{mamba_forward.1} parent=5 // pred_check
        %p483 = pneg %p482
      $region70: #{mamba_forward.1} parent=5 // pred_check_branch
        %485 = sbr.rel (%p483) target = $region72
      $region71: #{mamba_forward.1} parent=5 // pred_region
        // Predicated region
        $region73: #{mamba_forward.1} parent=71 // pred_check
          %p486 = pneg %p45
        $region74: #{mamba_forward.1} parent=71 // pred_check_branch
          %488 = sbr.rel (%p486) target = $region76
        $region75: #{mamba_forward.1} parent=71 // pred_region
          %p489 = scmp.lt.s32.totalorder %s25, 1
          %s490 = scalar_select %p489, %s25, 1
          %s491 = smul.addr %s490, 8
          %s492 = smul.addr %s491, 8
          %s493 = scalar_lea.vmem %s0, %s492
        $region76: #{mamba_forward.1} parent=71 // pred_fallthru
          _
      $region72: #{mamba_forward.1} parent=5 // pred_fallthru
        _
      %p494 = scmp.le.s32.totalorder 1, %s25
      %p495 = scmp.lt.s32.totalorder %s25, 3
      %p496 = pnand %p494, %p495
      %p497 = pneg %p496
      // Predicated region
      $region77: #{mamba_forward.1} parent=5 // pred_check
        _
      $region78: #{mamba_forward.1} parent=5 // pred_check_branch
        %499 = sbr.rel (%p496) target = $region80
      $region79: #{mamba_forward.1} parent=5 // pred_region
        %s500 = ssub.s32 %s25, 1
        // Predicated region
        $region81: #{mamba_forward.1} parent=79 // pred_check
          %p501 = pneg %p93
        $region82: #{mamba_forward.1} parent=79 // pred_check_branch
          %503 = sbr.rel (%p501) target = $region84
        $region83: #{mamba_forward.1} parent=79 // pred_region
          %504 = dma.done [#allocation8], 512
        $region84: #{mamba_forward.1} parent=79 // pred_fallthru
          _
        // Predicated region
        $region85: #{mamba_forward.1} parent=79 // pred_check
          %p505 = pneg %p177
        $region86: #{mamba_forward.1} parent=79 // pred_check_branch
          %507 = sbr.rel (%p505) target = $region88
        $region87: #{mamba_forward.1} parent=79 // pred_region
          %508 = dma.done [#allocation10], 1024
        $region88: #{mamba_forward.1} parent=79 // pred_fallthru
          _
        // Predicated region
        $region89: #{mamba_forward.1} parent=79 // pred_check
          %p509 = pneg %p219
        $region90: #{mamba_forward.1} parent=79 // pred_check_branch
          %511 = sbr.rel (%p509) target = $region92
        $region91: #{mamba_forward.1} parent=79 // pred_region
          %512 = dma.done [#allocation10], 16
        $region92: #{mamba_forward.1} parent=79 // pred_fallthru
          _
        // Predicated region
        $region93: #{mamba_forward.1} parent=79 // pred_check
          %p513 = pneg %p282
        $region94: #{mamba_forward.1} parent=79 // pred_check_branch
          %515 = sbr.rel (%p513) target = $region96
        $region95: #{mamba_forward.1} parent=79 // pred_region
          %516 = dma.done [#allocation13], 64
        $region96: #{mamba_forward.1} parent=79 // pred_fallthru
          _
        // Predicated region
        $region97: #{mamba_forward.1} parent=79 // pred_check
          %p517 = pneg %p324
        $region98: #{mamba_forward.1} parent=79 // pred_check_branch
          %519 = sbr.rel (%p517) target = $region100
        $region99: #{mamba_forward.1} parent=79 // pred_region
          %520 = dma.done [#allocation13], 16
        $region100: #{mamba_forward.1} parent=79 // pred_fallthru
          _
        // Predicated region
        $region101: #{mamba_forward.1} parent=79 // pred_check
          %p521 = pneg %p345
        $region102: #{mamba_forward.1} parent=79 // pred_check_branch
          %523 = sbr.rel (%p521) target = $region104
        $region103: #{mamba_forward.1} parent=79 // pred_region
          %524 = dma.done [#allocation16], 512
        $region104: #{mamba_forward.1} parent=79 // pred_fallthru
          _
        %p525 = scmp.lt.s32.totalorder %s30, 1
        %s526 = scalar_select %p525, %s30, 1
        %s527 = smul.addr %s526, 8
        %s528 = smul.addr %s527, 8
        %s529 = scalar_lea.vmem %s0, %s528
        %p530 = pneg %p51
        %p531 = pneg %p48
        %p532 = pneg %p72
        %p533 = pneg %p69
        %p534 = pneg %p93
        %p535 = pneg %p90
        %p536 = pneg %p114
        %p537 = pneg %p111
        %p538 = pneg %p135
        %p539 = pneg %p132
        %p540 = pneg %p156
        %p541 = pneg %p153
        %p542 = pneg %p177
        %p543 = pneg %p174
        %p544 = pneg %p198
        %p545 = pneg %p195
        %p546 = pneg %p219
        %p547 = pneg %p216
        %p548 = pneg %p240
        %p549 = pneg %p237
        %p550 = pneg %p261
        %p551 = pneg %p258
        %p552 = pneg %p282
        %p553 = pneg %p279
        %p554 = pneg %p303
        %p555 = pneg %p300
        %p556 = pneg %p324
        %p557 = pneg %p321
        %p558 = pneg %p345
        %p559 = pneg %p342
        %p560 = pneg %p371
        %p561 = pneg %p368
        %p562 = scmp.lt.s32.totalorder %s30, 1
        %s563 = scalar_select %p562, %s30, 1
        %s564 = smul.addr %s563, 8
        %s565 = smul.addr %s564, 8
        %s566 = scalar_lea.vmem %s15, %s565
        %p567 = scmp.lt.s32.totalorder %s30, 1
        %s568 = scalar_select %p567, %s30, 1
        %s569 = smul.addr %s568, 8
        %s570 = smul.addr %s569, 8
        %s571 = scalar_lea.vmem %s0, %s570
        %p572 = scmp.lt.s32.totalorder %s30, 1
        %s573 = scalar_select %p572, %s30, 1
        %s574 = smul.addr %s573, 8
        %s575 = smul.addr %s574, 8
        %s576 = scalar_lea.vmem %s15, %s575
        %v577 = vld [vmem:[%s571] sm:$0xff]
        %v578 = vld [vmem:[%s571 + $0x8] sm:$0xff]
        %v579 = vld [vmem:[%s571 + $0x10] sm:$0xff]
        %v580 = vld [vmem:[%s571 + $0x18] sm:$0xff]
        %v581 = vld [vmem:[%s571 + $0x20] sm:$0xff]
        %v582 = vld [vmem:[%s571 + $0x28] sm:$0xff]
        %v583 = vld [vmem:[%s571 + $0x30] sm:$0xff]
        %v584 = vld [vmem:[%s571 + $0x38] sm:$0xff]
        %v585 = vld [vmem:[%s1] sm:$0xff]
        %v586 = vld [vmem:[%s1 + $0x8] sm:$0xff]
        %vm587 = vcmask 130048
        %v589 = vsel %vm587, %v577, 0
        %v592 = vsel %vm587, %v578, 0
        %v595 = vsel %vm587, %v579, 0
        %v598 = vsel %vm587, %v580, 0
        %v601 = vsel %vm587, %v581, 0
        %v604 = vsel %vm587, %v582, 0
        %v607 = vsel %vm587, %v583, 0
        %v610 = vsel %vm587, %v584, 0
        %612 = vmatprep.subr.mxu0 0.0
        %613 = vmatpush1.msra.mxu0 %v585
        %614 = vmatprep.subr.mxu0 0.0
        %615 = vmatpush1.msra.mxu0 %v586
        %616 = vmatprep.subr.mxu0 0.0
        %617 = vmatpush1.msra.mxu0 0.0
        %618 = vmatprep.subr.mxu0 0.0
        %619 = vmatpush1.msra.mxu0 0.0
        %620 = vmatprep.subr.mxu0 0.0
        %621 = vmatpush1.msra.mxu0 0.0
        %622 = vmatprep.subr.mxu0 0.0
        %623 = vmatpush1.msra.mxu0 0.0
        %624 = vmatprep.subr.mxu0 0.0
        %625 = vmatpush1.msra.mxu0 0.0
        %626 = vmatprep.subr.mxu0 0.0
        %627 = vmatpush1.msra.mxu0 0.0
        %628 = vmatprep.subr.mxu0 0.0
        %629 = vmatpush1.msra.mxu0 0.0
        %630 = vmatprep.subr.mxu0 0.0
        %631 = vmatpush1.msra.mxu0 0.0
        %632 = vmatprep.subr.mxu0 0.0
        %633 = vmatpush1.msra.mxu0 0.0
        %634 = vmatprep.subr.mxu0 0.0
        %635 = vmatpush1.msra.mxu0 0.0
        %636 = vmatprep.subr.mxu0 0.0
        %637 = vmatpush1.msra.mxu0 0.0
        %638 = vmatprep.subr.mxu0 0.0
        %639 = vmatpush1.msra.mxu0 0.0
        %640 = vmatprep.subr.mxu0 0.0
        %641 = vmatpush1.msra.mxu0 0.0
        %642 = vmatprep.subr.mxu0 0.0
        %643 = vmatpush1.msra.mxu0 0.0
        %644 = vmatprep.subr.mxu0 0.0
        %645 = vmatpush1.msra.mxu0 0.0
        %646 = vmatprep.subr.mxu0 0.0
        %647 = vmatpush1.msra.mxu0 0.0
        %648 = vmatprep.subr.mxu0 0.0
        %649 = vmatpush1.msra.mxu0 0.0
        %650 = vmatprep.subr.mxu0 0.0
        %651 = vmatpush1.msra.mxu0 0.0
        %652 = vmatprep.subr.mxu0 0.0
        %653 = vmatpush1.msra.mxu0 0.0
        %654 = vmatprep.subr.mxu0 0.0
        %655 = vmatpush1.msra.mxu0 0.0
        %656 = vmatprep.subr.mxu0 0.0
        %657 = vmatpush1.msra.mxu0 0.0
        %658 = vmatprep.subr.mxu0 0.0
        %659 = vmatpush1.msra.mxu0 0.0
        %660 = vmatprep.subr.mxu0 0.0
        %661 = vmatpush1.msra.mxu0 0.0
        %662 = vmatprep.subr.mxu0 0.0
        %663 = vmatpush1.msra.mxu0 0.0
        %664 = vmatprep.subr.mxu0 0.0
        %665 = vmatpush1.msra.mxu0 0.0
        %666 = vmatprep.subr.mxu0 0.0
        %667 = vmatpush1.msra.mxu0 0.0
        %668 = vmatprep.subr.mxu0 0.0
        %669 = vmatpush1.msra.mxu0 0.0
        %670 = vmatprep.subr.mxu0 0.0
        %671 = vmatpush1.msra.mxu0 0.0
        %672 = vmatprep.subr.mxu0 0.0
        %673 = vmatpush1.msra.mxu0 0.0
        %674 = vmatprep.subr.mxu0 0.0
        %675 = vmatpush1.msra.mxu0 0.0
        %676 = vmatprep.mubr.f32.mxu0 0.0
        %677 = vmatmul.mubr.f32.gmra.mrb[0].mxu0 %v589
        %v678 = vpop.f32.mrb[0].mxu0
        %v679 = vadd.f32 0.0, %v678
        %v680 = vpop.f32.mrb[0].mxu0
        %681 = vmatprep.mubr.f32.mxu0 0.0
        %682 = vmatmul.mubr.f32.gmra.mrb[0].mxu0 %v592
        %v683 = vpop.f32.mrb[0].mxu0
        %v684 = vadd.f32 0.0, %v683
        %v685 = vpop.f32.mrb[0].mxu0
        %686 = vmatprep.mubr.f32.mxu0 0.0
        %687 = vmatmul.mubr.f32.gmra.mrb[0].mxu0 %v595
        %v688 = vpop.f32.mrb[0].mxu0
        %v689 = vadd.f32 0.0, %v688
        %v690 = vpop.f32.mrb[0].mxu0
        %691 = vmatprep.mubr.f32.mxu0 0.0
        %692 = vmatmul.mubr.f32.gmra.mrb[0].mxu0 %v598
        %v693 = vpop.f32.mrb[0].mxu0
        %v694 = vadd.f32 0.0, %v693
        %v695 = vpop.f32.mrb[0].mxu0
        %696 = vmatprep.mubr.f32.mxu0 0.0
        %697 = vmatmul.mubr.f32.gmra.mrb[0].mxu0 %v601
        %v698 = vpop.f32.mrb[0].mxu0
        %v699 = vadd.f32 0.0, %v698
        %v700 = vpop.f32.mrb[0].mxu0
        %701 = vmatprep.mubr.f32.mxu0 0.0
        %702 = vmatmul.mubr.f32.gmra.mrb[0].mxu0 %v604
        %v703 = vpop.f32.mrb[0].mxu0
        %v704 = vadd.f32 0.0, %v703
        %v705 = vpop.f32.mrb[0].mxu0
        %706 = vmatprep.mubr.f32.mxu0 0.0
        %707 = vmatmul.mubr.f32.gmra.mrb[0].mxu0 %v607
        %v708 = vpop.f32.mrb[0].mxu0
        %v709 = vadd.f32 0.0, %v708
        %v710 = vpop.f32.mrb[0].mxu0
        %711 = vmatprep.mubr.f32.mxu0 0.0
        %712 = vmatmul.mubr.f32.gmra.mrb[0].mxu0 %v610
        %v713 = vpop.f32.mrb[0].mxu0
        %v714 = vadd.f32 0.0, %v713
        %v715 = vpop.f32.mrb[0].mxu0
        %716 = vdwg.mxu0
        %vm717 = vcmask 523264
        %718 = vst.msk [vmem:[#allocation2] sm:$0xff] %vm717, 0.0
        %719 = vst.msk [vmem:[#allocation2 + $0x8] sm:$0xff] %vm717, 0.0
        %720 = vst.msk [vmem:[#allocation2 + $0x10] sm:$0xff] %vm717, 0.0
        %721 = vst.msk [vmem:[#allocation2 + $0x18] sm:$0xff] %vm717, 0.0
        %722 = vst.msk [vmem:[#allocation2 + $0x20] sm:$0xff] %vm717, 0.0
        %723 = vst.msk [vmem:[#allocation2 + $0x28] sm:$0xff] %vm717, 0.0
        %724 = vst.msk [vmem:[#allocation2 + $0x30] sm:$0xff] %vm717, 0.0
        %725 = vst.msk [vmem:[#allocation2 + $0x38] sm:$0xff] %vm717, 0.0
        %726 = vst.msk [vmem:[#allocation2 + $0x40] sm:$0xff] %vm717, 0.0
        %727 = vst.msk [vmem:[#allocation2 + $0x48] sm:$0xff] %vm717, 0.0
        %728 = vst.msk [vmem:[#allocation2 + $0x50] sm:$0xff] %vm717, 0.0
        %729 = vst.msk [vmem:[#allocation2 + $0x58] sm:$0xff] %vm717, 0.0
        %730 = vst.msk [vmem:[#allocation2 + $0x60] sm:$0xff] %vm717, 0.0
        %731 = vst.msk [vmem:[#allocation2 + $0x12] sm:$0xff] %vm717, %v679
        %732 = vst.msk [vmem:[#allocation2 + $0x1a] sm:$0xff] %vm717, %v684
        %733 = vst.msk [vmem:[#allocation2 + $0x22] sm:$0xff] %vm717, %v689
        %734 = vst.msk [vmem:[#allocation2 + $0x2a] sm:$0xff] %vm717, %v694
        %735 = vst.msk [vmem:[#allocation2 + $0x32] sm:$0xff] %vm717, %v699
        %736 = vst.msk [vmem:[#allocation2 + $0x3a] sm:$0xff] %vm717, %v704
        %737 = vst.msk [vmem:[#allocation2 + $0x42] sm:$0xff] %vm717, %v709
        %738 = vst.msk [vmem:[#allocation2 + $0x4a] sm:$0xff] %vm717, %v714
        %v739 = vlaneseq
        %v740 = vshrl.u32 %v739, 7
        %v741 = vadd.s32 %v740, 8
        %v742 = vadd.s32 %v740, 16
        %v743 = vadd.s32 %v740, 24
        %v744 = vadd.s32 %v740, 32
        %v745 = vadd.s32 %v740, 40
        %v746 = vadd.s32 %v740, 48
        %v747 = vadd.s32 %v740, 56
        %v748 = vadd.s32 %v740, 64
        %v749 = vadd.s32 %v740, 72
        %v750 = vadd.s32 %v740, 80
        %v751 = vadd.s32 %v740, 88
        %v752 = vand.u32 %v740, 7
        %v753 = vand.u32 %v741, 7
        %v754 = vand.u32 %v742, 7
        %v755 = vand.u32 %v743, 7
        %v756 = vand.u32 %v744, 7
        %v757 = vand.u32 %v745, 7
        %v758 = vand.u32 %v746, 7
        %v759 = vand.u32 %v747, 7
        %v760 = vand.u32 %v748, 7
        %v761 = vand.u32 %v749, 7
        %v762 = vand.u32 %v750, 7
        %v763 = vand.u32 %v751, 7
        %v764 = vld [vmem:[#allocation2] sm:$0xff]
        %v765 = vld [vmem:[#allocation2 + $0x8] sm:$0xff]
        %v766 = vld [vmem:[#allocation2 + $0x10] sm:$0xff]
        %v767 = vld [vmem:[#allocation2 + $0x18] sm:$0xff]
        %v768 = vld [vmem:[#allocation2 + $0x20] sm:$0xff]
        %v769 = vld [vmem:[#allocation2 + $0x28] sm:$0xff]
        %v770 = vld [vmem:[#allocation2 + $0x30] sm:$0xff]
        %v771 = vld [vmem:[#allocation2 + $0x38] sm:$0xff]
        %v772 = vld [vmem:[#allocation2 + $0x40] sm:$0xff]
        %v773 = vld [vmem:[#allocation2 + $0x48] sm:$0xff]
        %v774 = vld [vmem:[#allocation2 + $0x50] sm:$0xff]
        %v775 = vld [vmem:[#allocation2 + $0x58] sm:$0xff]
        %vm776 = vcmp.ge.s32.totalorder %v752, 2
        %vm777 = vcmp.ge.s32.totalorder %v753, 2
        %vm778 = vcmp.ge.s32.totalorder %v754, 2
        %vm779 = vcmp.ge.s32.totalorder %v755, 2
        %vm780 = vcmp.ge.s32.totalorder %v756, 2
        %vm781 = vcmp.ge.s32.totalorder %v757, 2
        %vm782 = vcmp.ge.s32.totalorder %v758, 2
        %vm783 = vcmp.ge.s32.totalorder %v759, 2
        %vm784 = vcmp.ge.s32.totalorder %v760, 2
        %vm785 = vcmp.ge.s32.totalorder %v761, 2
        %vm786 = vcmp.ge.s32.totalorder %v762, 2
        %vm787 = vcmp.ge.s32.totalorder %v763, 2
        %vm788 = vcmp.le.s32.totalorder %v752, 9
        %vm789 = vcmp.le.s32.totalorder %v753, 9
        %vm790 = vcmp.le.s32.totalorder %v754, 9
        %vm791 = vcmp.le.s32.totalorder %v755, 9
        %vm792 = vcmp.le.s32.totalorder %v756, 9
        %vm793 = vcmp.le.s32.totalorder %v757, 9
        %vm794 = vcmp.le.s32.totalorder %v758, 9
        %vm795 = vcmp.le.s32.totalorder %v759, 9
        %vm796 = vcmp.le.s32.totalorder %v760, 9
        %vm797 = vcmp.le.s32.totalorder %v761, 9
        %vm798 = vcmp.le.s32.totalorder %v762, 9
        %vm799 = vcmp.le.s32.totalorder %v763, 9
        %vm800 = vmand %vm776, %vm788
        %vm801 = vmand %vm777, %vm789
        %vm802 = vmand %vm778, %vm790
        %vm803 = vmand %vm779, %vm791
        %vm804 = vmand %vm780, %vm792
        %vm805 = vmand %vm781, %vm793
        %vm806 = vmand %vm782, %vm794
        %vm807 = vmand %vm783, %vm795
        %vm808 = vmand %vm784, %vm796
        %vm809 = vmand %vm785, %vm797
        %vm810 = vmand %vm786, %vm798
        %vm811 = vmand %vm787, %vm799
        %v812 = vsel %vm800, 1, 0
        %v813 = vsel %vm801, 1, 0
        %v814 = vsel %vm802, 1, 0
        %v815 = vsel %vm803, 1, 0
        %v816 = vsel %vm804, 1, 0
        %v817 = vsel %vm805, 1, 0
        %v818 = vsel %vm806, 1, 0
        %v819 = vsel %vm807, 1, 0
        %v820 = vsel %vm808, 1, 0
        %v821 = vsel %vm809, 1, 0
        %v822 = vsel %vm810, 1, 0
        %v823 = vsel %vm811, 1, 0
        %vm824 = vcmp.eq.s32.totalorder %v812, 1
        %vm825 = vcmp.eq.s32.totalorder %v813, 1
        %vm826 = vcmp.eq.s32.totalorder %v814, 1
        %vm827 = vcmp.eq.s32.totalorder %v815, 1
        %vm828 = vcmp.eq.s32.totalorder %v816, 1
        %vm829 = vcmp.eq.s32.totalorder %v817, 1
        %vm830 = vcmp.eq.s32.totalorder %v818, 1
        %vm831 = vcmp.eq.s32.totalorder %v819, 1
        %vm832 = vcmp.eq.s32.totalorder %v820, 1
        %vm833 = vcmp.eq.s32.totalorder %v821, 1
        %vm834 = vcmp.eq.s32.totalorder %v822, 1
        %vm835 = vcmp.eq.s32.totalorder %v823, 1
        %v836 = vsel %vm824, %v764, 0.0
        %v837 = vsel %vm825, %v765, 0.0
        %v838 = vsel %vm826, %v766, 0.0
        %v839 = vsel %vm827, %v767, 0.0
        %v840 = vsel %vm828, %v768, 0.0
        %v841 = vsel %vm829, %v769, 0.0
        %v842 = vsel %vm830, %v770, 0.0
        %v843 = vsel %vm831, %v771, 0.0
        %v844 = vsel %vm832, %v772, 0.0
        %v845 = vsel %vm833, %v773, 0.0
        %v846 = vsel %vm834, %v774, 0.0
        %v847 = vsel %vm835, %v775, 0.0
        %v848 = vld [vmem:[#allocation7] sm:$0x1]
        %v849 = vlaneseq
        %v850 = vshrl.u32 %v849, 7
        %v851 = vsub.s32 0, %v850
        %v852 = vrot.slane %v848, %v851
        %v853 = vmul.f32 %v836, %v852
        %v854 = vmul.f32 %v837, %v852
        %v855 = vmul.f32 %v838, %v852
        %v856 = vmul.f32 %v839, %v852
        %v857 = vmul.f32 %v840, %v852
        %v858 = vmul.f32 %v841, %v852
        %v859 = vmul.f32 %v842, %v852
        %v860 = vmul.f32 %v843, %v852
        %v861 = vadd.f32 %v853, 0.0
        %v862 = vadd.f32 %v854, 0.0
        %v863 = vadd.f32 %v855, 0.0
        %v864 = vadd.f32 %v856, 0.0
        %v865 = vadd.f32 %v857, 0.0
        %v866 = vadd.f32 %v858, 0.0
        %v867 = vadd.f32 %v859, 0.0
        %v868 = vadd.f32 %v860, 0.0
        %v869 = vld [vmem:[#allocation7 + $0x5] sm:$0x1]
        %v870 = vlaneseq
        %v871 = vshrl.u32 %v870, 7
        %v872 = vsub.s32 0, %v871
        %v873 = vrot.slane %v869, %v872
        %v874 = vmul.f32 %v837, %v873
        %v875 = vmul.f32 %v838, %v873
        %v876 = vmul.f32 %v839, %v873
        %v877 = vmul.f32 %v840, %v873
        %v878 = vmul.f32 %v841, %v873
        %v879 = vmul.f32 %v842, %v873
        %v880 = vmul.f32 %v843, %v873
        %v881 = vmul.f32 %v844, %v873
        %v882 = vadd.f32 %v861, %v874
        %v883 = vadd.f32 %v862, %v875
        %v884 = vadd.f32 %v863, %v876
        %v885 = vadd.f32 %v864, %v877
        %v886 = vadd.f32 %v865, %v878
        %v887 = vadd.f32 %v866, %v879
        %v888 = vadd.f32 %v867, %v880
        %v889 = vadd.f32 %v868, %v881
        %v890 = vld [vmem:[#allocation7 + $0xa] sm:$0x1]
        %v891 = vlaneseq
        %v892 = vshrl.u32 %v891, 7
        %v893 = vsub.s32 0, %v892
        %v894 = vrot.slane %v890, %v893
        %v895 = vmul.f32 %v838, %v894
        %v896 = vmul.f32 %v839, %v894
        %v897 = vmul.f32 %v840, %v894
        %v898 = vmul.f32 %v841, %v894
        %v899 = vmul.f32 %v842, %v894
        %v900 = vmul.f32 %v843, %v894
        %v901 = vmul.f32 %v844, %v894
        %v902 = vmul.f32 %v845, %v894
        %v903 = vadd.f32 %v882, %v895
        %v904 = vadd.f32 %v883, %v896
        %v905 = vadd.f32 %v884, %v897
        %v906 = vadd.f32 %v885, %v898
        %v907 = vadd.f32 %v886, %v899
        %v908 = vadd.f32 %v887, %v900
        %v909 = vadd.f32 %v888, %v901
        %v910 = vadd.f32 %v889, %v902
        %v911 = vld [vmem:[#allocation7 + $0xf] sm:$0x1]
        %v912 = vlaneseq
        %v913 = vshrl.u32 %v912, 7
        %v914 = vsub.s32 0, %v913
        %v915 = vrot.slane %v911, %v914
        %v916 = vmul.f32 %v839, %v915
        %v917 = vmul.f32 %v840, %v915
        %v918 = vmul.f32 %v841, %v915
        %v919 = vmul.f32 %v842, %v915
        %v920 = vmul.f32 %v843, %v915
        %v921 = vmul.f32 %v844, %v915
        %v922 = vmul.f32 %v845, %v915
        %v923 = vmul.f32 %v846, %v915
        %v924 = vadd.f32 %v903, %v916
        %v925 = vadd.f32 %v904, %v917
        %v926 = vadd.f32 %v905, %v918
        %v927 = vadd.f32 %v906, %v919
        %v928 = vadd.f32 %v907, %v920
        %v929 = vadd.f32 %v908, %v921
        %v930 = vadd.f32 %v909, %v922
        %v931 = vadd.f32 %v910, %v923
        %v932 = vld [vmem:[#allocation7 + $0x14] sm:$0x1]
        %v933 = vlaneseq
        %v934 = vshrl.u32 %v933, 7
        %v935 = vsub.s32 0, %v934
        %v936 = vrot.slane %v932, %v935
        %v937 = vmul.f32 %v840, %v936
        %v938 = vmul.f32 %v841, %v936
        %v939 = vmul.f32 %v842, %v936
        %v940 = vmul.f32 %v843, %v936
        %v941 = vmul.f32 %v844, %v936
        %v942 = vmul.f32 %v845, %v936
        %v943 = vmul.f32 %v846, %v936
        %v944 = vmul.f32 %v847, %v936
        %v945 = vadd.f32 %v924, %v937
        %v946 = vadd.f32 %v925, %v938
        %v947 = vadd.f32 %v926, %v939
        %v948 = vadd.f32 %v927, %v940
        %v949 = vadd.f32 %v928, %v941
        %v950 = vadd.f32 %v929, %v942
        %v951 = vadd.f32 %v930, %v943
        %v952 = vadd.f32 %v931, %v944
        %v953 = vld [vmem:[#allocation2 + $0x1] sm:$0xff]
        %v954 = vld [vmem:[#allocation2 + $0x9] sm:$0xff]
        %v955 = vld [vmem:[#allocation2 + $0x11] sm:$0xff]
        %v956 = vld [vmem:[#allocation2 + $0x19] sm:$0xff]
        %v957 = vld [vmem:[#allocation2 + $0x21] sm:$0xff]
        %v958 = vld [vmem:[#allocation2 + $0x29] sm:$0xff]
        %v959 = vld [vmem:[#allocation2 + $0x31] sm:$0xff]
        %v960 = vld [vmem:[#allocation2 + $0x39] sm:$0xff]
        %v961 = vld [vmem:[#allocation2 + $0x41] sm:$0xff]
        %v962 = vld [vmem:[#allocation2 + $0x49] sm:$0xff]
        %v963 = vld [vmem:[#allocation2 + $0x51] sm:$0xff]
        %v964 = vld [vmem:[#allocation2 + $0x59] sm:$0xff]
        %vm965 = vcmp.ge.s32.totalorder %v752, 1
        %vm966 = vcmp.ge.s32.totalorder %v753, 1
        %vm967 = vcmp.ge.s32.totalorder %v754, 1
        %vm968 = vcmp.ge.s32.totalorder %v755, 1
        %vm969 = vcmp.ge.s32.totalorder %v756, 1
        %vm970 = vcmp.ge.s32.totalorder %v757, 1
        %vm971 = vcmp.ge.s32.totalorder %v758, 1
        %vm972 = vcmp.ge.s32.totalorder %v759, 1
        %vm973 = vcmp.ge.s32.totalorder %v760, 1
        %vm974 = vcmp.ge.s32.totalorder %v761, 1
        %vm975 = vcmp.ge.s32.totalorder %v762, 1
        %vm976 = vcmp.ge.s32.totalorder %v763, 1
        %vm977 = vcmp.le.s32.totalorder %v752, 8
        %vm978 = vcmp.le.s32.totalorder %v753, 8
        %vm979 = vcmp.le.s32.totalorder %v754, 8
        %vm980 = vcmp.le.s32.totalorder %v755, 8
        %vm981 = vcmp.le.s32.totalorder %v756, 8
        %vm982 = vcmp.le.s32.totalorder %v757, 8
        %vm983 = vcmp.le.s32.totalorder %v758, 8
        %vm984 = vcmp.le.s32.totalorder %v759, 8
        %vm985 = vcmp.le.s32.totalorder %v760, 8
        %vm986 = vcmp.le.s32.totalorder %v761, 8
        %vm987 = vcmp.le.s32.totalorder %v762, 8
        %vm988 = vcmp.le.s32.totalorder %v763, 8
        %vm989 = vmand %vm965, %vm977
        %vm990 = vmand %vm966, %vm978
        %vm991 = vmand %vm967, %vm979
        %vm992 = vmand %vm968, %vm980
        %vm993 = vmand %vm969, %vm981
        %vm994 = vmand %vm970, %vm982
        %vm995 = vmand %vm971, %vm983
        %vm996 = vmand %vm972, %vm984
        %vm997 = vmand %vm973, %vm985
        %vm998 = vmand %vm974, %vm986
        %vm999 = vmand %vm975, %vm987
        %vm1000 = vmand %vm976, %vm988
        %v1001 = vsel %vm989, 1, 0
        %v1002 = vsel %vm990, 1, 0
        %v1003 = vsel %vm991, 1, 0
        %v1004 = vsel %vm992, 1, 0
        %v1005 = vsel %vm993, 1, 0
        %v1006 = vsel %vm994, 1, 0
        %v1007 = vsel %vm995, 1, 0
        %v1008 = vsel %vm996, 1, 0
        %v1009 = vsel %vm997, 1, 0
        %v1010 = vsel %vm998, 1, 0
        %v1011 = vsel %vm999, 1, 0
        %v1012 = vsel %vm1000, 1, 0
        %vm1013 = vcmp.eq.s32.totalorder %v1001, 1
        %vm1014 = vcmp.eq.s32.totalorder %v1002, 1
        %vm1015 = vcmp.eq.s32.totalorder %v1003, 1
        %vm1016 = vcmp.eq.s32.totalorder %v1004, 1
        %vm1017 = vcmp.eq.s32.totalorder %v1005, 1
        %vm1018 = vcmp.eq.s32.totalorder %v1006, 1
        %vm1019 = vcmp.eq.s32.totalorder %v1007, 1
        %vm1020 = vcmp.eq.s32.totalorder %v1008, 1
        %vm1021 = vcmp.eq.s32.totalorder %v1009, 1
        %vm1022 = vcmp.eq.s32.totalorder %v1010, 1
        %vm1023 = vcmp.eq.s32.totalorder %v1011, 1
        %vm1024 = vcmp.eq.s32.totalorder %v1012, 1
        %v1025 = vsel %vm1013, %v953, 0.0
        %v1026 = vsel %vm1014, %v954, 0.0
        %v1027 = vsel %vm1015, %v955, 0.0
        %v1028 = vsel %vm1016, %v956, 0.0
        %v1029 = vsel %vm1017, %v957, 0.0
        %v1030 = vsel %vm1018, %v958, 0.0
        %v1031 = vsel %vm1019, %v959, 0.0
        %v1032 = vsel %vm1020, %v960, 0.0
        %v1033 = vsel %vm1021, %v961, 0.0
        %v1034 = vsel %vm1022, %v962, 0.0
        %v1035 = vsel %vm1023, %v963, 0.0
        %v1036 = vsel %vm1024, %v964, 0.0
        %v1037 = vld [vmem:[#allocation7 + $0x1] sm:$0x1]
        %v1038 = vlaneseq
        %v1039 = vshrl.u32 %v1038, 7
        %v1040 = vsub.s32 0, %v1039
        %v1041 = vrot.slane %v1037, %v1040
        %v1042 = vmul.f32 %v1025, %v1041
        %v1043 = vmul.f32 %v1026, %v1041
        %v1044 = vmul.f32 %v1027, %v1041
        %v1045 = vmul.f32 %v1028, %v1041
        %v1046 = vmul.f32 %v1029, %v1041
        %v1047 = vmul.f32 %v1030, %v1041
        %v1048 = vmul.f32 %v1031, %v1041
        %v1049 = vmul.f32 %v1032, %v1041
        %v1050 = vadd.f32 %v945, %v1042
        %v1051 = vadd.f32 %v946, %v1043
        %v1052 = vadd.f32 %v947, %v1044
        %v1053 = vadd.f32 %v948, %v1045
        %v1054 = vadd.f32 %v949, %v1046
        %v1055 = vadd.f32 %v950, %v1047
        %v1056 = vadd.f32 %v951, %v1048
        %v1057 = vadd.f32 %v952, %v1049
        %v1058 = vld [vmem:[#allocation7 + $0x6] sm:$0x1]
        %v1059 = vlaneseq
        %v1060 = vshrl.u32 %v1059, 7
        %v1061 = vsub.s32 0, %v1060
        %v1062 = vrot.slane %v1058, %v1061
        %v1063 = vmul.f32 %v1026, %v1062
        %v1064 = vmul.f32 %v1027, %v1062
        %v1065 = vmul.f32 %v1028, %v1062
        %v1066 = vmul.f32 %v1029, %v1062
        %v1067 = vmul.f32 %v1030, %v1062
        %v1068 = vmul.f32 %v1031, %v1062
        %v1069 = vmul.f32 %v1032, %v1062
        %v1070 = vmul.f32 %v1033, %v1062
        %v1071 = vadd.f32 %v1050, %v1063
        %v1072 = vadd.f32 %v1051, %v1064
        %v1073 = vadd.f32 %v1052, %v1065
        %v1074 = vadd.f32 %v1053, %v1066
        %v1075 = vadd.f32 %v1054, %v1067
        %v1076 = vadd.f32 %v1055, %v1068
        %v1077 = vadd.f32 %v1056, %v1069
        %v1078 = vadd.f32 %v1057, %v1070
        %v1079 = vld [vmem:[#allocation7 + $0xb] sm:$0x1]
        %v1080 = vlaneseq
        %v1081 = vshrl.u32 %v1080, 7
        %v1082 = vsub.s32 0, %v1081
        %v1083 = vrot.slane %v1079, %v1082
        %v1084 = vmul.f32 %v1027, %v1083
        %v1085 = vmul.f32 %v1028, %v1083
        %v1086 = vmul.f32 %v1029, %v1083
        %v1087 = vmul.f32 %v1030, %v1083
        %v1088 = vmul.f32 %v1031, %v1083
        %v1089 = vmul.f32 %v1032, %v1083
        %v1090 = vmul.f32 %v1033, %v1083
        %v1091 = vmul.f32 %v1034, %v1083
        %v1092 = vadd.f32 %v1071, %v1084
        %v1093 = vadd.f32 %v1072, %v1085
        %v1094 = vadd.f32 %v1073, %v1086
        %v1095 = vadd.f32 %v1074, %v1087
        %v1096 = vadd.f32 %v1075, %v1088
        %v1097 = vadd.f32 %v1076, %v1089
        %v1098 = vadd.f32 %v1077, %v1090
        %v1099 = vadd.f32 %v1078, %v1091
        %v1100 = vld [vmem:[#allocation7 + $0x10] sm:$0x1]
        %v1101 = vlaneseq
        %v1102 = vshrl.u32 %v1101, 7
        %v1103 = vsub.s32 0, %v1102
        %v1104 = vrot.slane %v1100, %v1103
        %v1105 = vmul.f32 %v1028, %v1104
        %v1106 = vmul.f32 %v1029, %v1104
        %v1107 = vmul.f32 %v1030, %v1104
        %v1108 = vmul.f32 %v1031, %v1104
        %v1109 = vmul.f32 %v1032, %v1104
        %v1110 = vmul.f32 %v1033, %v1104
        %v1111 = vmul.f32 %v1034, %v1104
        %v1112 = vmul.f32 %v1035, %v1104
        %v1113 = vadd.f32 %v1092, %v1105
        %v1114 = vadd.f32 %v1093, %v1106
        %v1115 = vadd.f32 %v1094, %v1107
        %v1116 = vadd.f32 %v1095, %v1108
        %v1117 = vadd.f32 %v1096, %v1109
        %v1118 = vadd.f32 %v1097, %v1110
        %v1119 = vadd.f32 %v1098, %v1111
        %v1120 = vadd.f32 %v1099, %v1112
        %v1121 = vld [vmem:[#allocation7 + $0x15] sm:$0x1]
        %v1122 = vlaneseq
        %v1123 = vshrl.u32 %v1122, 7
        %v1124 = vsub.s32 0, %v1123
        %v1125 = vrot.slane %v1121, %v1124
        %v1126 = vmul.f32 %v1029, %v1125
        %v1127 = vmul.f32 %v1030, %v1125
        %v1128 = vmul.f32 %v1031, %v1125
        %v1129 = vmul.f32 %v1032, %v1125
        %v1130 = vmul.f32 %v1033, %v1125
        %v1131 = vmul.f32 %v1034, %v1125
        %v1132 = vmul.f32 %v1035, %v1125
        %v1133 = vmul.f32 %v1036, %v1125
        %v1134 = vadd.f32 %v1113, %v1126
        %v1135 = vadd.f32 %v1114, %v1127
        %v1136 = vadd.f32 %v1115, %v1128
        %v1137 = vadd.f32 %v1116, %v1129
        %v1138 = vadd.f32 %v1117, %v1130
        %v1139 = vadd.f32 %v1118, %v1131
        %v1140 = vadd.f32 %v1119, %v1132
        %v1141 = vadd.f32 %v1120, %v1133
        %v1142 = vld [vmem:[#allocation2 + $0x2] sm:$0xff]
        %v1143 = vld [vmem:[#allocation2 + $0xa] sm:$0xff]
        %v1144 = vld [vmem:[#allocation2 + $0x12] sm:$0xff]
        %v1145 = vld [vmem:[#allocation2 + $0x1a] sm:$0xff]
        %v1146 = vld [vmem:[#allocation2 + $0x22] sm:$0xff]
        %v1147 = vld [vmem:[#allocation2 + $0x2a] sm:$0xff]
        %v1148 = vld [vmem:[#allocation2 + $0x32] sm:$0xff]
        %v1149 = vld [vmem:[#allocation2 + $0x3a] sm:$0xff]
        %v1150 = vld [vmem:[#allocation2 + $0x42] sm:$0xff]
        %v1151 = vld [vmem:[#allocation2 + $0x4a] sm:$0xff]
        %v1152 = vld [vmem:[#allocation2 + $0x52] sm:$0xff]
        %v1153 = vld [vmem:[#allocation2 + $0x5a] sm:$0xff]
        %v1154 = vld [vmem:[#allocation7 + $0x2] sm:$0x1]
        %v1155 = vlaneseq
        %v1156 = vshrl.u32 %v1155, 7
        %v1157 = vsub.s32 0, %v1156
        %v1158 = vrot.slane %v1154, %v1157
        %v1159 = vmul.f32 %v1142, %v1158
        %v1160 = vmul.f32 %v1143, %v1158
        %v1161 = vmul.f32 %v1144, %v1158
        %v1162 = vmul.f32 %v1145, %v1158
        %v1163 = vmul.f32 %v1146, %v1158
        %v1164 = vmul.f32 %v1147, %v1158
        %v1165 = vmul.f32 %v1148, %v1158
        %v1166 = vmul.f32 %v1149, %v1158
        %v1167 = vadd.f32 %v1134, %v1159
        %v1168 = vadd.f32 %v1135, %v1160
        %v1169 = vadd.f32 %v1136, %v1161
        %v1170 = vadd.f32 %v1137, %v1162
        %v1171 = vadd.f32 %v1138, %v1163
        %v1172 = vadd.f32 %v1139, %v1164
        %v1173 = vadd.f32 %v1140, %v1165
        %v1174 = vadd.f32 %v1141, %v1166
        %v1175 = vld [vmem:[#allocation7 + $0x7] sm:$0x1]
        %v1176 = vlaneseq
        %v1177 = vshrl.u32 %v1176, 7
        %v1178 = vsub.s32 0, %v1177
        %v1179 = vrot.slane %v1175, %v1178
        %v1180 = vmul.f32 %v1143, %v1179
        %v1181 = vmul.f32 %v1144, %v1179
        %v1182 = vmul.f32 %v1145, %v1179
        %v1183 = vmul.f32 %v1146, %v1179
        %v1184 = vmul.f32 %v1147, %v1179
        %v1185 = vmul.f32 %v1148, %v1179
        %v1186 = vmul.f32 %v1149, %v1179
        %v1187 = vmul.f32 %v1150, %v1179
        %v1188 = vadd.f32 %v1167, %v1180
        %v1189 = vadd.f32 %v1168, %v1181
        %v1190 = vadd.f32 %v1169, %v1182
        %v1191 = vadd.f32 %v1170, %v1183
        %v1192 = vadd.f32 %v1171, %v1184
        %v1193 = vadd.f32 %v1172, %v1185
        %v1194 = vadd.f32 %v1173, %v1186
        %v1195 = vadd.f32 %v1174, %v1187
        %v1196 = vld [vmem:[#allocation7 + $0xc] sm:$0x1]
        %v1197 = vlaneseq
        %v1198 = vshrl.u32 %v1197, 7
        %v1199 = vsub.s32 0, %v1198
        %v1200 = vrot.slane %v1196, %v1199
        %v1201 = vmul.f32 %v1144, %v1200
        %v1202 = vmul.f32 %v1145, %v1200
        %v1203 = vmul.f32 %v1146, %v1200
        %v1204 = vmul.f32 %v1147, %v1200
        %v1205 = vmul.f32 %v1148, %v1200
        %v1206 = vmul.f32 %v1149, %v1200
        %v1207 = vmul.f32 %v1150, %v1200
        %v1208 = vmul.f32 %v1151, %v1200
        %v1209 = vadd.f32 %v1188, %v1201
        %v1210 = vadd.f32 %v1189, %v1202
        %v1211 = vadd.f32 %v1190, %v1203
        %v1212 = vadd.f32 %v1191, %v1204
        %v1213 = vadd.f32 %v1192, %v1205
        %v1214 = vadd.f32 %v1193, %v1206
        %v1215 = vadd.f32 %v1194, %v1207
        %v1216 = vadd.f32 %v1195, %v1208
        %v1217 = vld [vmem:[#allocation7 + $0x11] sm:$0x1]
        %v1218 = vlaneseq
        %v1219 = vshrl.u32 %v1218, 7
        %v1220 = vsub.s32 0, %v1219
        %v1221 = vrot.slane %v1217, %v1220
        %v1222 = vmul.f32 %v1145, %v1221
        %v1223 = vmul.f32 %v1146, %v1221
        %v1224 = vmul.f32 %v1147, %v1221
        %v1225 = vmul.f32 %v1148, %v1221
        %v1226 = vmul.f32 %v1149, %v1221
        %v1227 = vmul.f32 %v1150, %v1221
        %v1228 = vmul.f32 %v1151, %v1221
        %v1229 = vmul.f32 %v1152, %v1221
        %v1230 = vadd.f32 %v1209, %v1222
        %v1231 = vadd.f32 %v1210, %v1223
        %v1232 = vadd.f32 %v1211, %v1224
        %v1233 = vadd.f32 %v1212, %v1225
        %v1234 = vadd.f32 %v1213, %v1226
        %v1235 = vadd.f32 %v1214, %v1227
        %v1236 = vadd.f32 %v1215, %v1228
        %v1237 = vadd.f32 %v1216, %v1229
        %v1238 = vld [vmem:[#allocation7 + $0x16] sm:$0x1]
        %v1239 = vlaneseq
        %v1240 = vshrl.u32 %v1239, 7
        %v1241 = vsub.s32 0, %v1240
        %v1242 = vrot.slane %v1238, %v1241
        %v1243 = vmul.f32 %v1146, %v1242
        %v1244 = vmul.f32 %v1147, %v1242
        %v1245 = vmul.f32 %v1148, %v1242
        %v1246 = vmul.f32 %v1149, %v1242
        %v1247 = vmul.f32 %v1150, %v1242
        %v1248 = vmul.f32 %v1151, %v1242
        %v1249 = vmul.f32 %v1152, %v1242
        %v1250 = vmul.f32 %v1153, %v1242
        %v1251 = vadd.f32 %v1230, %v1243
        %v1252 = vadd.f32 %v1231, %v1244
        %v1253 = vadd.f32 %v1232, %v1245
        %v1254 = vadd.f32 %v1233, %v1246
        %v1255 = vadd.f32 %v1234, %v1247
        %v1256 = vadd.f32 %v1235, %v1248
        %v1257 = vadd.f32 %v1236, %v1249
        %v1258 = vadd.f32 %v1237, %v1250
        %v1259 = vld [vmem:[#allocation2 + $0x3] sm:$0xff]
        %v1260 = vld [vmem:[#allocation2 + $0xb] sm:$0xff]
        %v1261 = vld [vmem:[#allocation2 + $0x13] sm:$0xff]
        %v1262 = vld [vmem:[#allocation2 + $0x1b] sm:$0xff]
        %v1263 = vld [vmem:[#allocation2 + $0x23] sm:$0xff]
        %v1264 = vld [vmem:[#allocation2 + $0x2b] sm:$0xff]
        %v1265 = vld [vmem:[#allocation2 + $0x33] sm:$0xff]
        %v1266 = vld [vmem:[#allocation2 + $0x3b] sm:$0xff]
        %v1267 = vld [vmem:[#allocation2 + $0x43] sm:$0xff]
        %v1268 = vld [vmem:[#allocation2 + $0x4b] sm:$0xff]
        %v1269 = vld [vmem:[#allocation2 + $0x53] sm:$0xff]
        %v1270 = vld [vmem:[#allocation2 + $0x5b] sm:$0xff]
        %vm1271 = vcmp.ge.s32.totalorder %v752, 4294967295
        %vm1272 = vcmp.ge.s32.totalorder %v753, 4294967295
        %vm1273 = vcmp.ge.s32.totalorder %v754, 4294967295
        %vm1274 = vcmp.ge.s32.totalorder %v755, 4294967295
        %vm1275 = vcmp.ge.s32.totalorder %v756, 4294967295
        %vm1276 = vcmp.ge.s32.totalorder %v757, 4294967295
        %vm1277 = vcmp.ge.s32.totalorder %v758, 4294967295
        %vm1278 = vcmp.ge.s32.totalorder %v759, 4294967295
        %vm1279 = vcmp.ge.s32.totalorder %v760, 4294967295
        %vm1280 = vcmp.ge.s32.totalorder %v761, 4294967295
        %vm1281 = vcmp.ge.s32.totalorder %v762, 4294967295
        %vm1282 = vcmp.ge.s32.totalorder %v763, 4294967295
        %vm1283 = vcmp.le.s32.totalorder %v752, 6
        %vm1284 = vcmp.le.s32.totalorder %v753, 6
        %vm1285 = vcmp.le.s32.totalorder %v754, 6
        %vm1286 = vcmp.le.s32.totalorder %v755, 6
        %vm1287 = vcmp.le.s32.totalorder %v756, 6
        %vm1288 = vcmp.le.s32.totalorder %v757, 6
        %vm1289 = vcmp.le.s32.totalorder %v758, 6
        %vm1290 = vcmp.le.s32.totalorder %v759, 6
        %vm1291 = vcmp.le.s32.totalorder %v760, 6
        %vm1292 = vcmp.le.s32.totalorder %v761, 6
        %vm1293 = vcmp.le.s32.totalorder %v762, 6
        %vm1294 = vcmp.le.s32.totalorder %v763, 6
        %vm1295 = vmand %vm1271, %vm1283
        %vm1296 = vmand %vm1272, %vm1284
        %vm1297 = vmand %vm1273, %vm1285
        %vm1298 = vmand %vm1274, %vm1286
        %vm1299 = vmand %vm1275, %vm1287
        %vm1300 = vmand %vm1276, %vm1288
        %vm1301 = vmand %vm1277, %vm1289
        %vm1302 = vmand %vm1278, %vm1290
        %vm1303 = vmand %vm1279, %vm1291
        %vm1304 = vmand %vm1280, %vm1292
        %vm1305 = vmand %vm1281, %vm1293
        %vm1306 = vmand %vm1282, %vm1294
        %v1307 = vsel %vm1295, 1, 0
        %v1308 = vsel %vm1296, 1, 0
        %v1309 = vsel %vm1297, 1, 0
        %v1310 = vsel %vm1298, 1, 0
        %v1311 = vsel %vm1299, 1, 0
        %v1312 = vsel %vm1300, 1, 0
        %v1313 = vsel %vm1301, 1, 0
        %v1314 = vsel %vm1302, 1, 0
        %v1315 = vsel %vm1303, 1, 0
        %v1316 = vsel %vm1304, 1, 0
        %v1317 = vsel %vm1305, 1, 0
        %v1318 = vsel %vm1306, 1, 0
        %vm1319 = vcmp.eq.s32.totalorder %v1307, 1
        %vm1320 = vcmp.eq.s32.totalorder %v1308, 1
        %vm1321 = vcmp.eq.s32.totalorder %v1309, 1
        %vm1322 = vcmp.eq.s32.totalorder %v1310, 1
        %vm1323 = vcmp.eq.s32.totalorder %v1311, 1
        %vm1324 = vcmp.eq.s32.totalorder %v1312, 1
        %vm1325 = vcmp.eq.s32.totalorder %v1313, 1
        %vm1326 = vcmp.eq.s32.totalorder %v1314, 1
        %vm1327 = vcmp.eq.s32.totalorder %v1315, 1
        %vm1328 = vcmp.eq.s32.totalorder %v1316, 1
        %vm1329 = vcmp.eq.s32.totalorder %v1317, 1
        %vm1330 = vcmp.eq.s32.totalorder %v1318, 1
        %v1331 = vsel %vm1319, %v1259, 0.0
        %v1332 = vsel %vm1320, %v1260, 0.0
        %v1333 = vsel %vm1321, %v1261, 0.0
        %v1334 = vsel %vm1322, %v1262, 0.0
        %v1335 = vsel %vm1323, %v1263, 0.0
        %v1336 = vsel %vm1324, %v1264, 0.0
        %v1337 = vsel %vm1325, %v1265, 0.0
        %v1338 = vsel %vm1326, %v1266, 0.0
        %v1339 = vsel %vm1327, %v1267, 0.0
        %v1340 = vsel %vm1328, %v1268, 0.0
        %v1341 = vsel %vm1329, %v1269, 0.0
        %v1342 = vsel %vm1330, %v1270, 0.0
        %v1343 = vld [vmem:[#allocation7 + $0x3] sm:$0x1]
        %v1344 = vlaneseq
        %v1345 = vshrl.u32 %v1344, 7
        %v1346 = vsub.s32 0, %v1345
        %v1347 = vrot.slane %v1343, %v1346
        %v1348 = vmul.f32 %v1331, %v1347
        %v1349 = vmul.f32 %v1332, %v1347
        %v1350 = vmul.f32 %v1333, %v1347
        %v1351 = vmul.f32 %v1334, %v1347
        %v1352 = vmul.f32 %v1335, %v1347
        %v1353 = vmul.f32 %v1336, %v1347
        %v1354 = vmul.f32 %v1337, %v1347
        %v1355 = vmul.f32 %v1338, %v1347
        %v1356 = vadd.f32 %v1251, %v1348
        %v1357 = vadd.f32 %v1252, %v1349
        %v1358 = vadd.f32 %v1253, %v1350
        %v1359 = vadd.f32 %v1254, %v1351
        %v1360 = vadd.f32 %v1255, %v1352
        %v1361 = vadd.f32 %v1256, %v1353
        %v1362 = vadd.f32 %v1257, %v1354
        %v1363 = vadd.f32 %v1258, %v1355
        %v1364 = vld [vmem:[#allocation7 + $0x8] sm:$0x1]
        %v1365 = vlaneseq
        %v1366 = vshrl.u32 %v1365, 7
        %v1367 = vsub.s32 0, %v1366
        %v1368 = vrot.slane %v1364, %v1367
        %v1369 = vmul.f32 %v1332, %v1368
        %v1370 = vmul.f32 %v1333, %v1368
        %v1371 = vmul.f32 %v1334, %v1368
        %v1372 = vmul.f32 %v1335, %v1368
        %v1373 = vmul.f32 %v1336, %v1368
        %v1374 = vmul.f32 %v1337, %v1368
        %v1375 = vmul.f32 %v1338, %v1368
        %v1376 = vmul.f32 %v1339, %v1368
        %v1377 = vadd.f32 %v1356, %v1369
        %v1378 = vadd.f32 %v1357, %v1370
        %v1379 = vadd.f32 %v1358, %v1371
        %v1380 = vadd.f32 %v1359, %v1372
        %v1381 = vadd.f32 %v1360, %v1373
        %v1382 = vadd.f32 %v1361, %v1374
        %v1383 = vadd.f32 %v1362, %v1375
        %v1384 = vadd.f32 %v1363, %v1376
        %v1385 = vld [vmem:[#allocation7 + $0xd] sm:$0x1]
        %v1386 = vlaneseq
        %v1387 = vshrl.u32 %v1386, 7
        %v1388 = vsub.s32 0, %v1387
        %v1389 = vrot.slane %v1385, %v1388
        %v1390 = vmul.f32 %v1333, %v1389
        %v1391 = vmul.f32 %v1334, %v1389
        %v1392 = vmul.f32 %v1335, %v1389
        %v1393 = vmul.f32 %v1336, %v1389
        %v1394 = vmul.f32 %v1337, %v1389
        %v1395 = vmul.f32 %v1338, %v1389
        %v1396 = vmul.f32 %v1339, %v1389
        %v1397 = vmul.f32 %v1340, %v1389
        %v1398 = vadd.f32 %v1377, %v1390
        %v1399 = vadd.f32 %v1378, %v1391
        %v1400 = vadd.f32 %v1379, %v1392
        %v1401 = vadd.f32 %v1380, %v1393
        %v1402 = vadd.f32 %v1381, %v1394
        %v1403 = vadd.f32 %v1382, %v1395
        %v1404 = vadd.f32 %v1383, %v1396
        %v1405 = vadd.f32 %v1384, %v1397
        %v1406 = vld [vmem:[#allocation7 + $0x12] sm:$0x1]
        %v1407 = vlaneseq
        %v1408 = vshrl.u32 %v1407, 7
        %v1409 = vsub.s32 0, %v1408
        %v1410 = vrot.slane %v1406, %v1409
        %v1411 = vmul.f32 %v1334, %v1410
        %v1412 = vmul.f32 %v1335, %v1410
        %v1413 = vmul.f32 %v1336, %v1410
        %v1414 = vmul.f32 %v1337, %v1410
        %v1415 = vmul.f32 %v1338, %v1410
        %v1416 = vmul.f32 %v1339, %v1410
        %v1417 = vmul.f32 %v1340, %v1410
        %v1418 = vmul.f32 %v1341, %v1410
        %v1419 = vadd.f32 %v1398, %v1411
        %v1420 = vadd.f32 %v1399, %v1412
        %v1421 = vadd.f32 %v1400, %v1413
        %v1422 = vadd.f32 %v1401, %v1414
        %v1423 = vadd.f32 %v1402, %v1415
        %v1424 = vadd.f32 %v1403, %v1416
        %v1425 = vadd.f32 %v1404, %v1417
        %v1426 = vadd.f32 %v1405, %v1418
        %v1427 = vld [vmem:[#allocation7 + $0x17] sm:$0x1]
        %v1428 = vlaneseq
        %v1429 = vshrl.u32 %v1428, 7
        %v1430 = vsub.s32 0, %v1429
        %v1431 = vrot.slane %v1427, %v1430
        %v1432 = vmul.f32 %v1335, %v1431
        %v1433 = vmul.f32 %v1336, %v1431
        %v1434 = vmul.f32 %v1337, %v1431
        %v1435 = vmul.f32 %v1338, %v1431
        %v1436 = vmul.f32 %v1339, %v1431
        %v1437 = vmul.f32 %v1340, %v1431
        %v1438 = vmul.f32 %v1341, %v1431
        %v1439 = vmul.f32 %v1342, %v1431
        %v1440 = vadd.f32 %v1419, %v1432
        %v1441 = vadd.f32 %v1420, %v1433
        %v1442 = vadd.f32 %v1421, %v1434
        %v1443 = vadd.f32 %v1422, %v1435
        %v1444 = vadd.f32 %v1423, %v1436
        %v1445 = vadd.f32 %v1424, %v1437
        %v1446 = vadd.f32 %v1425, %v1438
        %v1447 = vadd.f32 %v1426, %v1439
        %v1448 = vld [vmem:[#allocation2 + $0x4] sm:$0xff]
        %v1449 = vld [vmem:[#allocation2 + $0xc] sm:$0xff]
        %v1450 = vld [vmem:[#allocation2 + $0x14] sm:$0xff]
        %v1451 = vld [vmem:[#allocation2 + $0x1c] sm:$0xff]
        %v1452 = vld [vmem:[#allocation2 + $0x24] sm:$0xff]
        %v1453 = vld [vmem:[#allocation2 + $0x2c] sm:$0xff]
        %v1454 = vld [vmem:[#allocation2 + $0x34] sm:$0xff]
        %v1455 = vld [vmem:[#allocation2 + $0x3c] sm:$0xff]
        %v1456 = vld [vmem:[#allocation2 + $0x44] sm:$0xff]
        %v1457 = vld [vmem:[#allocation2 + $0x4c] sm:$0xff]
        %v1458 = vld [vmem:[#allocation2 + $0x54] sm:$0xff]
        %v1459 = vld [vmem:[#allocation2 + $0x5c] sm:$0xff]
        %vm1460 = vcmp.ge.s32.totalorder %v752, 4294967294
        %vm1461 = vcmp.ge.s32.totalorder %v753, 4294967294
        %vm1462 = vcmp.ge.s32.totalorder %v754, 4294967294
        %vm1463 = vcmp.ge.s32.totalorder %v755, 4294967294
        %vm1464 = vcmp.ge.s32.totalorder %v756, 4294967294
        %vm1465 = vcmp.ge.s32.totalorder %v757, 4294967294
        %vm1466 = vcmp.ge.s32.totalorder %v758, 4294967294
        %vm1467 = vcmp.ge.s32.totalorder %v759, 4294967294
        %vm1468 = vcmp.ge.s32.totalorder %v760, 4294967294
        %vm1469 = vcmp.ge.s32.totalorder %v761, 4294967294
        %vm1470 = vcmp.ge.s32.totalorder %v762, 4294967294
        %vm1471 = vcmp.ge.s32.totalorder %v763, 4294967294
        %vm1472 = vcmp.le.s32.totalorder %v752, 5
        %vm1473 = vcmp.le.s32.totalorder %v753, 5
        %vm1474 = vcmp.le.s32.totalorder %v754, 5
        %vm1475 = vcmp.le.s32.totalorder %v755, 5
        %vm1476 = vcmp.le.s32.totalorder %v756, 5
        %vm1477 = vcmp.le.s32.totalorder %v757, 5
        %vm1478 = vcmp.le.s32.totalorder %v758, 5
        %vm1479 = vcmp.le.s32.totalorder %v759, 5
        %vm1480 = vcmp.le.s32.totalorder %v760, 5
        %vm1481 = vcmp.le.s32.totalorder %v761, 5
        %vm1482 = vcmp.le.s32.totalorder %v762, 5
        %vm1483 = vcmp.le.s32.totalorder %v763, 5
        %vm1484 = vmand %vm1460, %vm1472
        %vm1485 = vmand %vm1461, %vm1473
        %vm1486 = vmand %vm1462, %vm1474
        %vm1487 = vmand %vm1463, %vm1475
        %vm1488 = vmand %vm1464, %vm1476
        %vm1489 = vmand %vm1465, %vm1477
        %vm1490 = vmand %vm1466, %vm1478
        %vm1491 = vmand %vm1467, %vm1479
        %vm1492 = vmand %vm1468, %vm1480
        %vm1493 = vmand %vm1469, %vm1481
        %vm1494 = vmand %vm1470, %vm1482
        %vm1495 = vmand %vm1471, %vm1483
        %v1496 = vsel %vm1484, 1, 0
        %v1497 = vsel %vm1485, 1, 0
        %v1498 = vsel %vm1486, 1, 0
        %v1499 = vsel %vm1487, 1, 0
        %v1500 = vsel %vm1488, 1, 0
        %v1501 = vsel %vm1489, 1, 0
        %v1502 = vsel %vm1490, 1, 0
        %v1503 = vsel %vm1491, 1, 0
        %v1504 = vsel %vm1492, 1, 0
        %v1505 = vsel %vm1493, 1, 0
        %v1506 = vsel %vm1494, 1, 0
        %v1507 = vsel %vm1495, 1, 0
        %vm1508 = vcmp.eq.s32.totalorder %v1496, 1
        %vm1509 = vcmp.eq.s32.totalorder %v1497, 1
        %vm1510 = vcmp.eq.s32.totalorder %v1498, 1
        %vm1511 = vcmp.eq.s32.totalorder %v1499, 1
        %vm1512 = vcmp.eq.s32.totalorder %v1500, 1
        %vm1513 = vcmp.eq.s32.totalorder %v1501, 1
        %vm1514 = vcmp.eq.s32.totalorder %v1502, 1
        %vm1515 = vcmp.eq.s32.totalorder %v1503, 1
        %vm1516 = vcmp.eq.s32.totalorder %v1504, 1
        %vm1517 = vcmp.eq.s32.totalorder %v1505, 1
        %vm1518 = vcmp.eq.s32.totalorder %v1506, 1
        %vm1519 = vcmp.eq.s32.totalorder %v1507, 1
        %v1520 = vsel %vm1508, %v1448, 0.0
        %v1521 = vsel %vm1509, %v1449, 0.0
        %v1522 = vsel %vm1510, %v1450, 0.0
        %v1523 = vsel %vm1511, %v1451, 0.0
        %v1524 = vsel %vm1512, %v1452, 0.0
        %v1525 = vsel %vm1513, %v1453, 0.0
        %v1526 = vsel %vm1514, %v1454, 0.0
        %v1527 = vsel %vm1515, %v1455, 0.0
        %v1528 = vsel %vm1516, %v1456, 0.0
        %v1529 = vsel %vm1517, %v1457, 0.0
        %v1530 = vsel %vm1518, %v1458, 0.0
        %v1531 = vsel %vm1519, %v1459, 0.0
        %v1532 = vld [vmem:[#allocation7 + $0x4] sm:$0x1]
        %v1533 = vlaneseq
        %v1534 = vshrl.u32 %v1533, 7
        %v1535 = vsub.s32 0, %v1534
        %v1536 = vrot.slane %v1532, %v1535
        %v1537 = vmul.f32 %v1520, %v1536
        %v1538 = vmul.f32 %v1521, %v1536
        %v1539 = vmul.f32 %v1522, %v1536
        %v1540 = vmul.f32 %v1523, %v1536
        %v1541 = vmul.f32 %v1524, %v1536
        %v1542 = vmul.f32 %v1525, %v1536
        %v1543 = vmul.f32 %v1526, %v1536
        %v1544 = vmul.f32 %v1527, %v1536
        %v1545 = vadd.f32 %v1440, %v1537
        %v1546 = vadd.f32 %v1441, %v1538
        %v1547 = vadd.f32 %v1442, %v1539
        %v1548 = vadd.f32 %v1443, %v1540
        %v1549 = vadd.f32 %v1444, %v1541
        %v1550 = vadd.f32 %v1445, %v1542
        %v1551 = vadd.f32 %v1446, %v1543
        %v1552 = vadd.f32 %v1447, %v1544
        %v1553 = vld [vmem:[#allocation7 + $0x9] sm:$0x1]
        %v1554 = vlaneseq
        %v1555 = vshrl.u32 %v1554, 7
        %v1556 = vsub.s32 0, %v1555
        %v1557 = vrot.slane %v1553, %v1556
        %v1558 = vmul.f32 %v1521, %v1557
        %v1559 = vmul.f32 %v1522, %v1557
        %v1560 = vmul.f32 %v1523, %v1557
        %v1561 = vmul.f32 %v1524, %v1557
        %v1562 = vmul.f32 %v1525, %v1557
        %v1563 = vmul.f32 %v1526, %v1557
        %v1564 = vmul.f32 %v1527, %v1557
        %v1565 = vmul.f32 %v1528, %v1557
        %v1566 = vadd.f32 %v1545, %v1558
        %v1567 = vadd.f32 %v1546, %v1559
        %v1568 = vadd.f32 %v1547, %v1560
        %v1569 = vadd.f32 %v1548, %v1561
        %v1570 = vadd.f32 %v1549, %v1562
        %v1571 = vadd.f32 %v1550, %v1563
        %v1572 = vadd.f32 %v1551, %v1564
        %v1573 = vadd.f32 %v1552, %v1565
        %v1574 = vld [vmem:[#allocation7 + $0xe] sm:$0x1]
        %v1575 = vlaneseq
        %v1576 = vshrl.u32 %v1575, 7
        %v1577 = vsub.s32 0, %v1576
        %v1578 = vrot.slane %v1574, %v1577
        %v1579 = vmul.f32 %v1522, %v1578
        %v1580 = vmul.f32 %v1523, %v1578
        %v1581 = vmul.f32 %v1524, %v1578
        %v1582 = vmul.f32 %v1525, %v1578
        %v1583 = vmul.f32 %v1526, %v1578
        %v1584 = vmul.f32 %v1527, %v1578
        %v1585 = vmul.f32 %v1528, %v1578
        %v1586 = vmul.f32 %v1529, %v1578
        %v1587 = vadd.f32 %v1566, %v1579
        %v1588 = vadd.f32 %v1567, %v1580
        %v1589 = vadd.f32 %v1568, %v1581
        %v1590 = vadd.f32 %v1569, %v1582
        %v1591 = vadd.f32 %v1570, %v1583
        %v1592 = vadd.f32 %v1571, %v1584
        %v1593 = vadd.f32 %v1572, %v1585
        %v1594 = vadd.f32 %v1573, %v1586
        %v1595 = vld [vmem:[#allocation7 + $0x13] sm:$0x1]
        %v1596 = vlaneseq
        %v1597 = vshrl.u32 %v1596, 7
        %v1598 = vsub.s32 0, %v1597
        %v1599 = vrot.slane %v1595, %v1598
        %v1600 = vmul.f32 %v1523, %v1599
        %v1601 = vmul.f32 %v1524, %v1599
        %v1602 = vmul.f32 %v1525, %v1599
        %v1603 = vmul.f32 %v1526, %v1599
        %v1604 = vmul.f32 %v1527, %v1599
        %v1605 = vmul.f32 %v1528, %v1599
        %v1606 = vmul.f32 %v1529, %v1599
        %v1607 = vmul.f32 %v1530, %v1599
        %v1608 = vadd.f32 %v1587, %v1600
        %v1609 = vadd.f32 %v1588, %v1601
        %v1610 = vadd.f32 %v1589, %v1602
        %v1611 = vadd.f32 %v1590, %v1603
        %v1612 = vadd.f32 %v1591, %v1604
        %v1613 = vadd.f32 %v1592, %v1605
        %v1614 = vadd.f32 %v1593, %v1606
        %v1615 = vadd.f32 %v1594, %v1607
        %v1616 = vld [vmem:[#allocation7 + $0x18] sm:$0x1]
        %v1617 = vlaneseq
        %v1618 = vshrl.u32 %v1617, 7
        %v1619 = vsub.s32 0, %v1618
        %v1620 = vrot.slane %v1616, %v1619
        %v1621 = vmul.f32 %v1524, %v1620
        %v1622 = vmul.f32 %v1525, %v1620
        %v1623 = vmul.f32 %v1526, %v1620
        %v1624 = vmul.f32 %v1527, %v1620
        %v1625 = vmul.f32 %v1528, %v1620
        %v1626 = vmul.f32 %v1529, %v1620
        %v1627 = vmul.f32 %v1530, %v1620
        %v1628 = vmul.f32 %v1531, %v1620
        %v1629 = vadd.f32 %v1608, %v1621
        %v1630 = vadd.f32 %v1609, %v1622
        %v1631 = vadd.f32 %v1610, %v1623
        %v1632 = vadd.f32 %v1611, %v1624
        %v1633 = vadd.f32 %v1612, %v1625
        %v1634 = vadd.f32 %v1613, %v1626
        %v1635 = vadd.f32 %v1614, %v1627
        %v1636 = vadd.f32 %v1615, %v1628
        %vm1637 = vcmask 261120
        %v1638 = vsel %vm1637, %v1629, 0.0
        %v1639 = vsel %vm1637, %v1630, 0.0
        %v1640 = vadd.f32 %v1638, %v1639
        %v1641 = vsel %vm1637, %v1631, 0.0
        %v1642 = vadd.f32 %v1640, %v1641
        %v1643 = vsel %vm1637, %v1632, 0.0
        %v1644 = vadd.f32 %v1642, %v1643
        %v1645 = vsel %vm1637, %v1633, 0.0
        %v1646 = vadd.f32 %v1644, %v1645
        %v1647 = vsel %vm1637, %v1634, 0.0
        %v1648 = vadd.f32 %v1646, %v1647
        %v1649 = vsel %vm1637, %v1635, 0.0
        %v1650 = vadd.f32 %v1648, %v1649
        %v1651 = vsel %vm1637, %v1636, 0.0
        %v1652 = vadd.f32 %v1650, %v1651
        %v1653 = vrot.slane %v1652, 4
        %v1654 = vadd.f32 %v1652, %v1653
        %v1655 = vrot.slane %v1654, 2
        %v1656 = vadd.f32 %v1654, %v1655
        %v1657 = vrot.slane %v1656, 1
        %v1658 = vadd.f32 %v1656, %v1657
        %v1659 = vrcp.pop 64.0
        %v1660 = vmul.f32 %v1658, %v1659
        %v1661 = vsel %vm1637, %v1629, -inf
        %v1662 = vsel %vm1637, %v1630, -inf
        %v1663 = vsel %vm1637, %v1631, -inf
        %v1664 = vsel %vm1637, %v1632, -inf
        %v1665 = vsel %vm1637, %v1633, -inf
        %v1666 = vmax.f32 %v1661, %v1665
        %v1667 = vsel %vm1637, %v1634, -inf
        %v1668 = vmax.f32 %v1662, %v1667
        %v1669 = vsel %vm1637, %v1635, -inf
        %v1670 = vmax.f32 %v1663, %v1669
        %v1671 = vsel %vm1637, %v1636, -inf
        %v1672 = vmax.f32 %v1664, %v1671
        %v1673 = vmax.f32 %v1666, %v1668
        %v1674 = vmax.f32 %v1670, %v1672
        %v1675 = vmax.f32 %v1673, %v1674
        %v1676 = vrot.slane %v1675, 4
        %v1677 = vmax.f32 %v1675, %v1676
        %v1678 = vrot.slane %v1677, 2
        %v1679 = vmax.f32 %v1677, %v1678
        %v1680 = vrot.slane %v1679, 1
        %v1681 = vmax.f32 %v1679, %v1680
        %v1682 = vld [vmem:[%s3] sm:$0xff]
        %v1683 = vld [vmem:[%s3 + $0x8] sm:$0xff]
        %v1684 = vld [vmem:[%s3 + $0x10] sm:$0xff]
        %v1685 = vld [vmem:[%s3 + $0x18] sm:$0xff]
        %v1687 = vsel %vm1637, %v1660, 0
        %1689 = vmatprep.subr.mxu0 0.0
        %1690 = vmatpush1.msra.mxu0 %v1682
        %1691 = vmatprep.subr.mxu0 0.0
        %1692 = vmatpush1.msra.mxu0 %v1683
        %1693 = vmatprep.subr.mxu0 0.0
        %1694 = vmatpush1.msra.mxu0 %v1684
        %1695 = vmatprep.subr.mxu0 0.0
        %1696 = vmatpush1.msra.mxu0 %v1685
        %1697 = vmatprep.subr.mxu0 0.0
        %1698 = vmatpush1.msra.mxu0 0.0
        %1699 = vmatprep.subr.mxu0 0.0
        %1700 = vmatpush1.msra.mxu0 0.0
        %1701 = vmatprep.subr.mxu0 0.0
        %1702 = vmatpush1.msra.mxu0 0.0
        %1703 = vmatprep.subr.mxu0 0.0
        %1704 = vmatpush1.msra.mxu0 0.0
        %1705 = vmatprep.subr.mxu0 0.0
        %1706 = vmatpush1.msra.mxu0 0.0
        %1707 = vmatprep.subr.mxu0 0.0
        %1708 = vmatpush1.msra.mxu0 0.0
        %1709 = vmatprep.subr.mxu0 0.0
        %1710 = vmatpush1.msra.mxu0 0.0
        %1711 = vmatprep.subr.mxu0 0.0
        %1712 = vmatpush1.msra.mxu0 0.0
        %1713 = vmatprep.subr.mxu0 0.0
        %1714 = vmatpush1.msra.mxu0 0.0
        %1715 = vmatprep.subr.mxu0 0.0
        %1716 = vmatpush1.msra.mxu0 0.0
        %1717 = vmatprep.subr.mxu0 0.0
        %1718 = vmatpush1.msra.mxu0 0.0
        %1719 = vmatprep.subr.mxu0 0.0
        %1720 = vmatpush1.msra.mxu0 0.0
        %1721 = vmatprep.subr.mxu0 0.0
        %1722 = vmatpush1.msra.mxu0 0.0
        %1723 = vmatprep.subr.mxu0 0.0
        %1724 = vmatpush1.msra.mxu0 0.0
        %1725 = vmatprep.subr.mxu0 0.0
        %1726 = vmatpush1.msra.mxu0 0.0
        %1727 = vmatprep.subr.mxu0 0.0
        %1728 = vmatpush1.msra.mxu0 0.0
        %1729 = vmatprep.subr.mxu0 0.0
        %1730 = vmatpush1.msra.mxu0 0.0
        %1731 = vmatprep.subr.mxu0 0.0
        %1732 = vmatpush1.msra.mxu0 0.0
        %1733 = vmatprep.subr.mxu0 0.0
        %1734 = vmatpush1.msra.mxu0 0.0
        %1735 = vmatprep.subr.mxu0 0.0
        %1736 = vmatpush1.msra.mxu0 0.0
        %1737 = vmatprep.subr.mxu0 0.0
        %1738 = vmatpush1.msra.mxu0 0.0
        %1739 = vmatprep.subr.mxu0 0.0
        %1740 = vmatpush1.msra.mxu0 0.0
        %1741 = vmatprep.subr.mxu0 0.0
        %1742 = vmatpush1.msra.mxu0 0.0
        %1743 = vmatprep.subr.mxu0 0.0
        %1744 = vmatpush1.msra.mxu0 0.0
        %1745 = vmatprep.subr.mxu0 0.0
        %1746 = vmatpush1.msra.mxu0 0.0
        %1747 = vmatprep.subr.mxu0 0.0
        %1748 = vmatpush1.msra.mxu0 0.0
        %1749 = vmatprep.subr.mxu0 0.0
        %1750 = vmatpush1.msra.mxu0 0.0
        %1751 = vmatprep.subr.mxu0 0.0
        %1752 = vmatpush1.msra.mxu0 0.0
        %1753 = vmatprep.mubr.f32.mxu0 0.0
        %1754 = vmatmul.mubr.f32.gmra.mrb[0].mxu0 %v1687
        %v1755 = vpop.f32.mrb[0].mxu0
        %v1756 = vadd.f32 0.0, %v1755
        %v1757 = vpop.f32.mrb[0].mxu0
        %1758 = vdwg.mxu0
        %v1759 = vsub.f32 0.0, %v1756
        %v1760 = vmul.f32 %v1759, 1.442695
        %v1761 = vpow.pop %v1760
        %v1762 = vadd.f32 %v1761, 1.0
        %v1763 = vrcp.pop %v1762
        %v1764 = vmul.f32 1.0, %v1763
        %v1765 = vmul.f32 %v1756, %v1764
        %v1766 = vld [vmem:[%s4] sm:$0x3]
        %v1768 = vsel %vm1637, %v1681, 0
        %1770 = vmatprep.subr.mxu0 0.0
        %1771 = vmatpush1.msra.mxu0 %v1682
        %1772 = vmatprep.subr.mxu0 0.0
        %1773 = vmatpush1.msra.mxu0 %v1683
        %1774 = vmatprep.subr.mxu0 0.0
        %1775 = vmatpush1.msra.mxu0 %v1684
        %1776 = vmatprep.subr.mxu0 0.0
        %1777 = vmatpush1.msra.mxu0 %v1685
        %1778 = vmatprep.subr.mxu0 0.0
        %1779 = vmatpush1.msra.mxu0 0.0
        %1780 = vmatprep.subr.mxu0 0.0
        %1781 = vmatpush1.msra.mxu0 0.0
        %1782 = vmatprep.subr.mxu0 0.0
        %1783 = vmatpush1.msra.mxu0 0.0
        %1784 = vmatprep.subr.mxu0 0.0
        %1785 = vmatpush1.msra.mxu0 0.0
        %1786 = vmatprep.subr.mxu0 0.0
        %1787 = vmatpush1.msra.mxu0 0.0
        %1788 = vmatprep.subr.mxu0 0.0
        %1789 = vmatpush1.msra.mxu0 0.0
        %1790 = vmatprep.subr.mxu0 0.0
        %1791 = vmatpush1.msra.mxu0 0.0
        %1792 = vmatprep.subr.mxu0 0.0
        %1793 = vmatpush1.msra.mxu0 0.0
        %1794 = vmatprep.subr.mxu0 0.0
        %1795 = vmatpush1.msra.mxu0 0.0
        %1796 = vmatprep.subr.mxu0 0.0
        %1797 = vmatpush1.msra.mxu0 0.0
        %1798 = vmatprep.subr.mxu0 0.0
        %1799 = vmatpush1.msra.mxu0 0.0
        %1800 = vmatprep.subr.mxu0 0.0
        %1801 = vmatpush1.msra.mxu0 0.0
        %1802 = vmatprep.subr.mxu0 0.0
        %1803 = vmatpush1.msra.mxu0 0.0
        %1804 = vmatprep.subr.mxu0 0.0
        %1805 = vmatpush1.msra.mxu0 0.0
        %1806 = vmatprep.subr.mxu0 0.0
        %1807 = vmatpush1.msra.mxu0 0.0
        %1808 = vmatprep.subr.mxu0 0.0
        %1809 = vmatpush1.msra.mxu0 0.0
        %1810 = vmatprep.subr.mxu0 0.0
        %1811 = vmatpush1.msra.mxu0 0.0
        %1812 = vmatprep.subr.mxu0 0.0
        %1813 = vmatpush1.msra.mxu0 0.0
        %1814 = vmatprep.subr.mxu0 0.0
        %1815 = vmatpush1.msra.mxu0 0.0
        %1816 = vmatprep.subr.mxu0 0.0
        %1817 = vmatpush1.msra.mxu0 0.0
        %1818 = vmatprep.subr.mxu0 0.0
        %1819 = vmatpush1.msra.mxu0 0.0
        %1820 = vmatprep.subr.mxu0 0.0
        %1821 = vmatpush1.msra.mxu0 0.0
        %1822 = vmatprep.subr.mxu0 0.0
        %1823 = vmatpush1.msra.mxu0 0.0
        %1824 = vmatprep.subr.mxu0 0.0
        %1825 = vmatpush1.msra.mxu0 0.0
        %1826 = vmatprep.subr.mxu0 0.0
        %1827 = vmatpush1.msra.mxu0 0.0
        %1828 = vmatprep.subr.mxu0 0.0
        %1829 = vmatpush1.msra.mxu0 0.0
        %1830 = vmatprep.subr.mxu0 0.0
        %1831 = vmatpush1.msra.mxu0 0.0
        %1832 = vmatprep.subr.mxu0 0.0
        %1833 = vmatpush1.msra.mxu0 0.0
        %1834 = vmatprep.mubr.f32.mxu0 0.0
        %1835 = vmatmul.mubr.f32.gmra.mrb[0].mxu0 %v1768
        %v1836 = vpop.f32.mrb[0].mxu0
        %v1837 = vadd.f32 0.0, %v1836
        %v1838 = vpop.f32.mrb[0].mxu0
        %1839 = vdwg.mxu0
        %v1840 = vsub.f32 0.0, %v1837
        %v1841 = vmul.f32 %v1840, 1.442695
        %v1842 = vpow.pop %v1841
        %v1843 = vadd.f32 %v1842, 1.0
        %v1844 = vrcp.pop %v1843
        %v1845 = vmul.f32 1.0, %v1844
        %v1846 = vmul.f32 %v1837, %v1845
        %vm1847 = vcmask 15360
        %v1849 = vsel %vm1847, %v1846, 0
        %vm1851 = vcmask 1041408
        %v1853 = vsel %vm1851, %v1766, 0
        %1855 = vmatprep.subr.mxu0 0.0
        %1856 = vmatpush1.msra.mxu0 %v1853
        %1857 = vmatprep.subr.mxu0 0.0
        %1858 = vmatpush1.msra.mxu0 0.0
        %1859 = vmatprep.subr.mxu0 0.0
        %1860 = vmatpush1.msra.mxu0 0.0
        %1861 = vmatprep.subr.mxu0 0.0
        %1862 = vmatpush1.msra.mxu0 0.0
        %1863 = vmatprep.subr.mxu0 0.0
        %1864 = vmatpush1.msra.mxu0 0.0
        %1865 = vmatprep.subr.mxu0 0.0
        %1866 = vmatpush1.msra.mxu0 0.0
        %1867 = vmatprep.subr.mxu0 0.0
        %1868 = vmatpush1.msra.mxu0 0.0
        %1869 = vmatprep.subr.mxu0 0.0
        %1870 = vmatpush1.msra.mxu0 0.0
        %1871 = vmatprep.subr.mxu0 0.0
        %1872 = vmatpush1.msra.mxu0 0.0
        %1873 = vmatprep.subr.mxu0 0.0
        %1874 = vmatpush1.msra.mxu0 0.0
        %1875 = vmatprep.subr.mxu0 0.0
        %1876 = vmatpush1.msra.mxu0 0.0
        %1877 = vmatprep.subr.mxu0 0.0
        %1878 = vmatpush1.msra.mxu0 0.0
        %1879 = vmatprep.subr.mxu0 0.0
        %1880 = vmatpush1.msra.mxu0 0.0
        %1881 = vmatprep.subr.mxu0 0.0
        %1882 = vmatpush1.msra.mxu0 0.0
        %1883 = vmatprep.subr.mxu0 0.0
        %1884 = vmatpush1.msra.mxu0 0.0
        %1885 = vmatprep.subr.mxu0 0.0
        %1886 = vmatpush1.msra.mxu0 0.0
        %1887 = vmatprep.subr.mxu0 0.0
        %1888 = vmatpush1.msra.mxu0 0.0
        %1889 = vmatprep.subr.mxu0 0.0
        %1890 = vmatpush1.msra.mxu0 0.0
        %1891 = vmatprep.subr.mxu0 0.0
        %1892 = vmatpush1.msra.mxu0 0.0
        %1893 = vmatprep.subr.mxu0 0.0
        %1894 = vmatpush1.msra.mxu0 0.0
        %1895 = vmatprep.subr.mxu0 0.0
        %1896 = vmatpush1.msra.mxu0 0.0
        %1897 = vmatprep.subr.mxu0 0.0
        %1898 = vmatpush1.msra.mxu0 0.0
        %1899 = vmatprep.subr.mxu0 0.0
        %1900 = vmatpush1.msra.mxu0 0.0
        %1901 = vmatprep.subr.mxu0 0.0
        %1902 = vmatpush1.msra.mxu0 0.0
        %1903 = vmatprep.subr.mxu0 0.0
        %1904 = vmatpush1.msra.mxu0 0.0
        %1905 = vmatprep.subr.mxu0 0.0
        %1906 = vmatpush1.msra.mxu0 0.0
        %1907 = vmatprep.subr.mxu0 0.0
        %1908 = vmatpush1.msra.mxu0 0.0
        %1909 = vmatprep.subr.mxu0 0.0
        %1910 = vmatpush1.msra.mxu0 0.0
        %1911 = vmatprep.subr.mxu0 0.0
        %1912 = vmatpush1.msra.mxu0 0.0
        %1913 = vmatprep.subr.mxu0 0.0
        %1914 = vmatpush1.msra.mxu0 0.0
        %1915 = vmatprep.subr.mxu0 0.0
        %1916 = vmatpush1.msra.mxu0 0.0
        %1917 = vmatprep.subr.mxu0 0.0
        %1918 = vmatpush1.msra.mxu0 0.0
        %1919 = vmatprep.mubr.f32.mxu0 0.0
        %1920 = vmatmul.mubr.f32.gmra.mrb[0].mxu0 %v1849
        %v1921 = vpop.f32.mrb[0].mxu0
        %v1922 = vadd.f32 0.0, %v1921
        %v1923 = vpop.f32.mrb[0].mxu0
        %1924 = vdwg.mxu0
        %v1926 = vsel %vm1847, %v1765, 0
        %1928 = vmatprep.subr.mxu0 0.0
        %1929 = vmatpush1.msra.mxu0 %v1853
        %1930 = vmatprep.subr.mxu0 0.0
        %1931 = vmatpush1.msra.mxu0 0.0
        %1932 = vmatprep.subr.mxu0 0.0
        %1933 = vmatpush1.msra.mxu0 0.0
        %1934 = vmatprep.subr.mxu0 0.0
        %1935 = vmatpush1.msra.mxu0 0.0
        %1936 = vmatprep.subr.mxu0 0.0
        %1937 = vmatpush1.msra.mxu0 0.0
        %1938 = vmatprep.subr.mxu0 0.0
        %1939 = vmatpush1.msra.mxu0 0.0
        %1940 = vmatprep.subr.mxu0 0.0
        %1941 = vmatpush1.msra.mxu0 0.0
        %1942 = vmatprep.subr.mxu0 0.0
        %1943 = vmatpush1.msra.mxu0 0.0
        %1944 = vmatprep.subr.mxu0 0.0
        %1945 = vmatpush1.msra.mxu0 0.0
        %1946 = vmatprep.subr.mxu0 0.0
        %1947 = vmatpush1.msra.mxu0 0.0
        %1948 = vmatprep.subr.mxu0 0.0
        %1949 = vmatpush1.msra.mxu0 0.0
        %1950 = vmatprep.subr.mxu0 0.0
        %1951 = vmatpush1.msra.mxu0 0.0
        %1952 = vmatprep.subr.mxu0 0.0
        %1953 = vmatpush1.msra.mxu0 0.0
        %1954 = vmatprep.subr.mxu0 0.0
        %1955 = vmatpush1.msra.mxu0 0.0
        %1956 = vmatprep.subr.mxu0 0.0
        %1957 = vmatpush1.msra.mxu0 0.0
        %1958 = vmatprep.subr.mxu0 0.0
        %1959 = vmatpush1.msra.mxu0 0.0
        %1960 = vmatprep.subr.mxu0 0.0
        %1961 = vmatpush1.msra.mxu0 0.0
        %1962 = vmatprep.subr.mxu0 0.0
        %1963 = vmatpush1.msra.mxu0 0.0
        %1964 = vmatprep.subr.mxu0 0.0
        %1965 = vmatpush1.msra.mxu0 0.0
        %1966 = vmatprep.subr.mxu0 0.0
        %1967 = vmatpush1.msra.mxu0 0.0
        %1968 = vmatprep.subr.mxu0 0.0
        %1969 = vmatpush1.msra.mxu0 0.0
        %1970 = vmatprep.subr.mxu0 0.0
        %1971 = vmatpush1.msra.mxu0 0.0
        %1972 = vmatprep.subr.mxu0 0.0
        %1973 = vmatpush1.msra.mxu0 0.0
        %1974 = vmatprep.subr.mxu0 0.0
        %1975 = vmatpush1.msra.mxu0 0.0
        %1976 = vmatprep.subr.mxu0 0.0
        %1977 = vmatpush1.msra.mxu0 0.0
        %1978 = vmatprep.subr.mxu0 0.0
        %1979 = vmatpush1.msra.mxu0 0.0
        %1980 = vmatprep.subr.mxu0 0.0
        %1981 = vmatpush1.msra.mxu0 0.0
        %1982 = vmatprep.subr.mxu0 0.0
        %1983 = vmatpush1.msra.mxu0 0.0
        %1984 = vmatprep.subr.mxu0 0.0
        %1985 = vmatpush1.msra.mxu0 0.0
        %1986 = vmatprep.subr.mxu0 0.0
        %1987 = vmatpush1.msra.mxu0 0.0
        %1988 = vmatprep.subr.mxu0 0.0
        %1989 = vmatpush1.msra.mxu0 0.0
        %1990 = vmatprep.subr.mxu0 0.0
        %1991 = vmatpush1.msra.mxu0 0.0
        %1992 = vmatprep.mubr.f32.mxu0 0.0
        %1993 = vmatmul.mubr.f32.gmra.mrb[0].mxu0 %v1926
        %v1994 = vpop.f32.mrb[0].mxu0
        %v1995 = vadd.f32 %v1922, %v1994
        %v1996 = vpop.f32.mrb[0].mxu0
        %1997 = vdwg.mxu0
        %v1998 = vsub.f32 0.0, %v1995
        %v1999 = vmul.f32 %v1998, 1.442695
        %v2000 = vpow.pop %v1999
        %v2001 = vadd.f32 %v2000, 1.0
        %v2002 = vrcp.pop %v2001
        %v2003 = vmul.f32 1.0, %v2002
        %v2004 = vlaneseq
        %v2005 = vshrl.u32 %v2004, 7
        %v2006 = vsub.s32 0, %v2005
        %v2007 = vrot.slane %v2003, %v2006
        %v2008 = vmul.f32 %v1629, %v2007
        %v2009 = vmul.f32 %v1630, %v2007
        %v2010 = vmul.f32 %v1631, %v2007
        %v2011 = vmul.f32 %v1632, %v2007
        %v2012 = vmul.f32 %v1633, %v2007
        %v2013 = vmul.f32 %v1634, %v2007
        %v2014 = vmul.f32 %v1635, %v2007
        %v2015 = vmul.f32 %v1636, %v2007
        %2024 = vrot.lane.b32.xlu0 %v1629, 96
        %v2025 = vpop.permute.xlu0 %2024
        %2026 = vrot.lane.b32.xlu0 %v1630, 96
        %v2027 = vpop.permute.xlu0 %2026
        %2028 = vrot.lane.b32.xlu0 %v1631, 96
        %v2029 = vpop.permute.xlu0 %2028
        %2030 = vrot.lane.b32.xlu0 %v1632, 96
        %v2031 = vpop.permute.xlu0 %2030
        %2032 = vrot.lane.b32.xlu0 %v1633, 96
        %v2033 = vpop.permute.xlu0 %2032
        %2034 = vrot.lane.b32.xlu0 %v1634, 96
        %v2035 = vpop.permute.xlu0 %2034
        %2036 = vrot.lane.b32.xlu0 %v1635, 96
        %v2037 = vpop.permute.xlu0 %2036
        %2038 = vrot.lane.b32.xlu0 %v1636, 96
        %v2039 = vpop.permute.xlu0 %2038
        %v2048 = vsel %vm1637, %v2025, 0.0
        %2049 = vadd.xlane.f32.xlu0 %v2048
        %v2050 = vpop.xlane.xlu0 %2049
        %v2051 = vsel %vm1637, %v2027, 0.0
        %2052 = vadd.xlane.f32.xlu0 %v2051
        %v2053 = vpop.xlane.xlu0 %2052
        %v2054 = vsel %vm1637, %v2029, 0.0
        %2055 = vadd.xlane.f32.xlu0 %v2054
        %v2056 = vpop.xlane.xlu0 %2055
        %v2057 = vsel %vm1637, %v2031, 0.0
        %2058 = vadd.xlane.f32.xlu0 %v2057
        %v2059 = vpop.xlane.xlu0 %2058
        %v2060 = vsel %vm1637, %v2033, 0.0
        %2061 = vadd.xlane.f32.xlu0 %v2060
        %v2062 = vpop.xlane.xlu0 %2061
        %v2063 = vsel %vm1637, %v2035, 0.0
        %2064 = vadd.xlane.f32.xlu0 %v2063
        %v2065 = vpop.xlane.xlu0 %2064
        %v2066 = vsel %vm1637, %v2037, 0.0
        %2067 = vadd.xlane.f32.xlu0 %v2066
        %v2068 = vpop.xlane.xlu0 %2067
        %v2069 = vsel %vm1637, %v2039, 0.0
        %2070 = vadd.xlane.f32.xlu0 %v2069
        %v2071 = vpop.xlane.xlu0 %2070
        %v2072 = vrcp.pop 32.0
        %v2073 = vmul.f32 %v2050, %v2072
        %v2074 = vmul.f32 %v2053, %v2072
        %v2075 = vmul.f32 %v2056, %v2072
        %v2076 = vmul.f32 %v2059, %v2072
        %v2077 = vmul.f32 %v2062, %v2072
        %v2078 = vmul.f32 %v2065, %v2072
        %v2079 = vmul.f32 %v2068, %v2072
        %v2080 = vmul.f32 %v2071, %v2072
        %vm2081 = vcmask 523520
        %v2082 = vsel %vm2081, %v1629, -inf
        %2083 = vmax.xlane.f32.xlu0 %v2082
        %v2084 = vpop.xlane.xlu0 %2083
        %v2085 = vsel %vm2081, %v1630, -inf
        %2086 = vmax.xlane.f32.xlu0 %v2085
        %v2087 = vpop.xlane.xlu0 %2086
        %v2088 = vsel %vm2081, %v1631, -inf
        %2089 = vmax.xlane.f32.xlu0 %v2088
        %v2090 = vpop.xlane.xlu0 %2089
        %v2091 = vsel %vm2081, %v1632, -inf
        %2092 = vmax.xlane.f32.xlu0 %v2091
        %v2093 = vpop.xlane.xlu0 %2092
        %v2094 = vsel %vm2081, %v1633, -inf
        %2095 = vmax.xlane.f32.xlu0 %v2094
        %v2096 = vpop.xlane.xlu0 %2095
        %v2097 = vsel %vm2081, %v1634, -inf
        %2098 = vmax.xlane.f32.xlu0 %v2097
        %v2099 = vpop.xlane.xlu0 %2098
        %v2100 = vsel %vm2081, %v1635, -inf
        %2101 = vmax.xlane.f32.xlu0 %v2100
        %v2102 = vpop.xlane.xlu0 %2101
        %v2103 = vsel %vm2081, %v1636, -inf
        %2104 = vmax.xlane.f32.xlu0 %v2103
        %v2105 = vpop.xlane.xlu0 %2104
        %v2106 = vld [vmem:[%s5] sm:$0xff]
        %v2107 = vld [vmem:[%s5 + $0x8] sm:$0xff]
        %v2108 = vld [vmem:[%s5 + $0x10] sm:$0xff]
        %v2109 = vld [vmem:[%s5 + $0x18] sm:$0xff]
        %v2110 = vld [vmem:[%s5 + $0x20] sm:$0xff]
        %v2111 = vld [vmem:[%s5 + $0x28] sm:$0xff]
        %v2112 = vld [vmem:[%s5 + $0x30] sm:$0xff]
        %v2113 = vld [vmem:[%s5 + $0x38] sm:$0xff]
        %v2114 = vld [vmem:[#allocation9] sm:$0xff]
        %v2115 = vld [vmem:[#allocation9 + $0x8] sm:$0xff]
        %v2116 = vld [vmem:[#allocation9 + $0x10] sm:$0xff]
        %v2117 = vld [vmem:[#allocation9 + $0x18] sm:$0xff]
        %v2118 = vld [vmem:[#allocation9 + $0x20] sm:$0xff]
        %v2119 = vld [vmem:[#allocation9 + $0x28] sm:$0xff]
        %v2120 = vld [vmem:[#allocation9 + $0x30] sm:$0xff]
        %v2121 = vld [vmem:[#allocation9 + $0x38] sm:$0xff]
        %v2123 = vsel %vm717, %v2114, 0
        %v2126 = vsel %vm717, %v2115, 0
        %v2129 = vsel %vm717, %v2116, 0
        %v2132 = vsel %vm717, %v2117, 0
        %v2135 = vsel %vm717, %v2118, 0
        %v2138 = vsel %vm717, %v2119, 0
        %v2141 = vsel %vm717, %v2120, 0
        %v2144 = vsel %vm717, %v2121, 0
        %2146 = vmatprep.subr.mxu0 0.0
        %2147 = vmatpush1.msra.mxu0 %v2084
        %2148 = vmatprep.subr.mxu0 0.0
        %2149 = vmatpush1.msra.mxu0 %v2087
        %2150 = vmatprep.subr.mxu0 0.0
        %2151 = vmatpush1.msra.mxu0 %v2090
        %2152 = vmatprep.subr.mxu0 0.0
        %2153 = vmatpush1.msra.mxu0 %v2093
        %2154 = vmatprep.subr.mxu0 0.0
        %2155 = vmatpush1.msra.mxu0 %v2096
        %2156 = vmatprep.subr.mxu0 0.0
        %2157 = vmatpush1.msra.mxu0 %v2099
        %2158 = vmatprep.subr.mxu0 0.0
        %2159 = vmatpush1.msra.mxu0 %v2102
        %2160 = vmatprep.subr.mxu0 0.0
        %2161 = vmatpush1.msra.mxu0 %v2105
        %2162 = vmatprep.subr.mxu0 0.0
        %2163 = vmatpush1.msra.mxu0 0.0
        %2164 = vmatprep.subr.mxu0 0.0
        %2165 = vmatpush1.msra.mxu0 0.0
        %2166 = vmatprep.subr.mxu0 0.0
        %2167 = vmatpush1.msra.mxu0 0.0
        %2168 = vmatprep.subr.mxu0 0.0
        %2169 = vmatpush1.msra.mxu0 0.0
        %2170 = vmatprep.subr.mxu0 0.0
        %2171 = vmatpush1.msra.mxu0 0.0
        %2172 = vmatprep.subr.mxu0 0.0
        %2173 = vmatpush1.msra.mxu0 0.0
        %2174 = vmatprep.subr.mxu0 0.0
        %2175 = vmatpush1.msra.mxu0 0.0
        %2176 = vmatprep.subr.mxu0 0.0
        %2177 = vmatpush1.msra.mxu0 0.0
        %2178 = vmatprep.subr.mxu0 0.0
        %2179 = vmatpush1.msra.mxu0 0.0
        %2180 = vmatprep.subr.mxu0 0.0
        %2181 = vmatpush1.msra.mxu0 0.0
        %2182 = vmatprep.subr.mxu0 0.0
        %2183 = vmatpush1.msra.mxu0 0.0
        %2184 = vmatprep.subr.mxu0 0.0
        %2185 = vmatpush1.msra.mxu0 0.0
        %2186 = vmatprep.subr.mxu0 0.0
        %2187 = vmatpush1.msra.mxu0 0.0
        %2188 = vmatprep.subr.mxu0 0.0
        %2189 = vmatpush1.msra.mxu0 0.0
        %2190 = vmatprep.subr.mxu0 0.0
        %2191 = vmatpush1.msra.mxu0 0.0
        %2192 = vmatprep.subr.mxu0 0.0
        %2193 = vmatpush1.msra.mxu0 0.0
        %2194 = vmatprep.subr.mxu0 0.0
        %2195 = vmatpush1.msra.mxu0 0.0
        %2196 = vmatprep.subr.mxu0 0.0
        %2197 = vmatpush1.msra.mxu0 0.0
        %2198 = vmatprep.subr.mxu0 0.0
        %2199 = vmatpush1.msra.mxu0 0.0
        %2200 = vmatprep.subr.mxu0 0.0
        %2201 = vmatpush1.msra.mxu0 0.0
        %2202 = vmatprep.subr.mxu0 0.0
        %2203 = vmatpush1.msra.mxu0 0.0
        %2204 = vmatprep.subr.mxu0 0.0
        %2205 = vmatpush1.msra.mxu0 0.0
        %2206 = vmatprep.subr.mxu0 0.0
        %2207 = vmatpush1.msra.mxu0 0.0
        %2208 = vmatprep.subr.mxu0 0.0
        %2209 = vmatpush1.msra.mxu0 0.0
        %2210 = vmatprep.mubr.f32.mxu0 0.0
        %2211 = vmatmul.mubr.f32.gmra.mrb[0].mxu0 %v2123
        %v2212 = vpop.f32.mrb[0].mxu0
        %v2213 = vadd.f32 0.0, %v2212
        %v2214 = vpop.f32.mrb[0].mxu0
        %2215 = vmatprep.mubr.f32.mxu0 0.0
        %2216 = vmatmul.mubr.f32.gmra.mrb[0].mxu0 %v2126
        %v2217 = vpop.f32.mrb[0].mxu0
        %v2218 = vadd.f32 0.0, %v2217
        %v2219 = vpop.f32.mrb[0].mxu0
        %2220 = vmatprep.mubr.f32.mxu0 0.0
        %2221 = vmatmul.mubr.f32.gmra.mrb[0].mxu0 %v2129
        %v2222 = vpop.f32.mrb[0].mxu0
        %v2223 = vadd.f32 0.0, %v2222
        %v2224 = vpop.f32.mrb[0].mxu0
        %2225 = vmatprep.mubr.f32.mxu0 0.0
        %2226 = vmatmul.mubr.f32.gmra.mrb[0].mxu0 %v2132
        %v2227 = vpop.f32.mrb[0].mxu0
        %v2228 = vadd.f32 0.0, %v2227
        %v2229 = vpop.f32.mrb[0].mxu0
        %2230 = vmatprep.mubr.f32.mxu0 0.0
        %2231 = vmatmul.mubr.f32.gmra.mrb[0].mxu0 %v2135
        %v2232 = vpop.f32.mrb[0].mxu0
        %v2233 = vadd.f32 0.0, %v2232
        %v2234 = vpop.f32.mrb[0].mxu0
        %2235 = vmatprep.mubr.f32.mxu0 0.0
        %2236 = vmatmul.mubr.f32.gmra.mrb[0].mxu0 %v2138
        %v2237 = vpop.f32.mrb[0].mxu0
        %v2238 = vadd.f32 0.0, %v2237
        %v2239 = vpop.f32.mrb[0].mxu0
        %2240 = vmatprep.mubr.f32.mxu0 0.0
        %2241 = vmatmul.mubr.f32.gmra.mrb[0].mxu0 %v2141
        %v2242 = vpop.f32.mrb[0].mxu0
        %v2243 = vadd.f32 0.0, %v2242
        %v2244 = vpop.f32.mrb[0].mxu0
        %2245 = vmatprep.mubr.f32.mxu0 0.0
        %2246 = vmatmul.mubr.f32.gmra.mrb[0].mxu0 %v2144
        %v2247 = vpop.f32.mrb[0].mxu0
        %v2248 = vadd.f32 0.0, %v2247
        %v2249 = vpop.f32.mrb[0].mxu0
        %2250 = vdwg.mxu0
        %v2252 = vsel %vm717, %v2106, 0
        %v2255 = vsel %vm717, %v2107, 0
        %v2258 = vsel %vm717, %v2108, 0
        %v2261 = vsel %vm717, %v2109, 0
        %v2264 = vsel %vm717, %v2110, 0
        %v2267 = vsel %vm717, %v2111, 0
        %v2270 = vsel %vm717, %v2112, 0
        %v2273 = vsel %vm717, %v2113, 0
        %2275 = vmatprep.subr.mxu0 0.0
        %2276 = vmatpush1.msra.mxu0 %v2073
        %2277 = vmatprep.subr.mxu0 0.0
        %2278 = vmatpush1.msra.mxu0 %v2074
        %2279 = vmatprep.subr.mxu0 0.0
        %2280 = vmatpush1.msra.mxu0 %v2075
        %2281 = vmatprep.subr.mxu0 0.0
        %2282 = vmatpush1.msra.mxu0 %v2076
        %2283 = vmatprep.subr.mxu0 0.0
        %2284 = vmatpush1.msra.mxu0 %v2077
        %2285 = vmatprep.subr.mxu0 0.0
        %2286 = vmatpush1.msra.mxu0 %v2078
        %2287 = vmatprep.subr.mxu0 0.0
        %2288 = vmatpush1.msra.mxu0 %v2079
        %2289 = vmatprep.subr.mxu0 0.0
        %2290 = vmatpush1.msra.mxu0 %v2080
        %2291 = vmatprep.subr.mxu0 0.0
        %2292 = vmatpush1.msra.mxu0 0.0
        %2293 = vmatprep.subr.mxu0 0.0
        %2294 = vmatpush1.msra.mxu0 0.0
        %2295 = vmatprep.subr.mxu0 0.0
        %2296 = vmatpush1.msra.mxu0 0.0
        %2297 = vmatprep.subr.mxu0 0.0
        %2298 = vmatpush1.msra.mxu0 0.0
        %2299 = vmatprep.subr.mxu0 0.0
        %2300 = vmatpush1.msra.mxu0 0.0
        %2301 = vmatprep.subr.mxu0 0.0
        %2302 = vmatpush1.msra.mxu0 0.0
        %2303 = vmatprep.subr.mxu0 0.0
        %2304 = vmatpush1.msra.mxu0 0.0
        %2305 = vmatprep.subr.mxu0 0.0
        %2306 = vmatpush1.msra.mxu0 0.0
        %2307 = vmatprep.subr.mxu0 0.0
        %2308 = vmatpush1.msra.mxu0 0.0
        %2309 = vmatprep.subr.mxu0 0.0
        %2310 = vmatpush1.msra.mxu0 0.0
        %2311 = vmatprep.subr.mxu0 0.0
        %2312 = vmatpush1.msra.mxu0 0.0
        %2313 = vmatprep.subr.mxu0 0.0
        %2314 = vmatpush1.msra.mxu0 0.0
        %2315 = vmatprep.subr.mxu0 0.0
        %2316 = vmatpush1.msra.mxu0 0.0
        %2317 = vmatprep.subr.mxu0 0.0
        %2318 = vmatpush1.msra.mxu0 0.0
        %2319 = vmatprep.subr.mxu0 0.0
        %2320 = vmatpush1.msra.mxu0 0.0
        %2321 = vmatprep.subr.mxu0 0.0
        %2322 = vmatpush1.msra.mxu0 0.0
        %2323 = vmatprep.subr.mxu0 0.0
        %2324 = vmatpush1.msra.mxu0 0.0
        %2325 = vmatprep.subr.mxu0 0.0
        %2326 = vmatpush1.msra.mxu0 0.0
        %2327 = vmatprep.subr.mxu0 0.0
        %2328 = vmatpush1.msra.mxu0 0.0
        %2329 = vmatprep.subr.mxu0 0.0
        %2330 = vmatpush1.msra.mxu0 0.0
        %2331 = vmatprep.subr.mxu0 0.0
        %2332 = vmatpush1.msra.mxu0 0.0
        %2333 = vmatprep.subr.mxu0 0.0
        %2334 = vmatpush1.msra.mxu0 0.0
        %2335 = vmatprep.subr.mxu0 0.0
        %2336 = vmatpush1.msra.mxu0 0.0
        %2337 = vmatprep.subr.mxu0 0.0
        %2338 = vmatpush1.msra.mxu0 0.0
        %2339 = vmatprep.mubr.f32.mxu0 0.0
        %2340 = vmatmul.mubr.f32.gmra.mrb[0].mxu0 %v2252
        %v2341 = vpop.f32.mrb[0].mxu0
        %v2342 = vadd.f32 %v2213, %v2341
        %v2343 = vpop.f32.mrb[0].mxu0
        %2344 = vmatprep.mubr.f32.mxu0 0.0
        %2345 = vmatmul.mubr.f32.gmra.mrb[0].mxu0 %v2255
        %v2346 = vpop.f32.mrb[0].mxu0
        %v2347 = vadd.f32 %v2218, %v2346
        %v2348 = vpop.f32.mrb[0].mxu0
        %2349 = vmatprep.mubr.f32.mxu0 0.0
        %2350 = vmatmul.mubr.f32.gmra.mrb[0].mxu0 %v2258
        %v2351 = vpop.f32.mrb[0].mxu0
        %v2352 = vadd.f32 %v2223, %v2351
        %v2353 = vpop.f32.mrb[0].mxu0
        %2354 = vmatprep.mubr.f32.mxu0 0.0
        %2355 = vmatmul.mubr.f32.gmra.mrb[0].mxu0 %v2261
        %v2356 = vpop.f32.mrb[0].mxu0
        %v2357 = vadd.f32 %v2228, %v2356
        %v2358 = vpop.f32.mrb[0].mxu0
        %2359 = vmatprep.mubr.f32.mxu0 0.0
        %2360 = vmatmul.mubr.f32.gmra.mrb[0].mxu0 %v2264
        %v2361 = vpop.f32.mrb[0].mxu0
        %v2362 = vadd.f32 %v2233, %v2361
        %v2363 = vpop.f32.mrb[0].mxu0
        %2364 = vmatprep.mubr.f32.mxu0 0.0
        %2365 = vmatmul.mubr.f32.gmra.mrb[0].mxu0 %v2267
        %v2366 = vpop.f32.mrb[0].mxu0
        %v2367 = vadd.f32 %v2238, %v2366
        %v2368 = vpop.f32.mrb[0].mxu0
        %2369 = vmatprep.mubr.f32.mxu0 0.0
        %2370 = vmatmul.mubr.f32.gmra.mrb[0].mxu0 %v2270
        %v2371 = vpop.f32.mrb[0].mxu0
        %v2372 = vadd.f32 %v2243, %v2371
        %v2373 = vpop.f32.mrb[0].mxu0
        %2374 = vmatprep.mubr.f32.mxu0 0.0
        %2375 = vmatmul.mubr.f32.gmra.mrb[0].mxu0 %v2273
        %v2376 = vpop.f32.mrb[0].mxu0
        %v2377 = vadd.f32 %v2248, %v2376
        %v2378 = vpop.f32.mrb[0].mxu0
        %2379 = vdwg.mxu0
        %v2380 = vsub.f32 0.0, %v2342
        %v2381 = vsub.f32 0.0, %v2347
        %v2382 = vsub.f32 0.0, %v2352
        %v2383 = vsub.f32 0.0, %v2357
        %v2384 = vsub.f32 0.0, %v2362
        %v2385 = vsub.f32 0.0, %v2367
        %v2386 = vsub.f32 0.0, %v2372
        %v2387 = vsub.f32 0.0, %v2377
        %v2388 = vmul.f32 %v2380, 1.442695
        %v2389 = vpow.pop %v2388
        %v2390 = vmul.f32 %v2381, 1.442695
        %v2391 = vpow.pop %v2390
        %v2392 = vmul.f32 %v2382, 1.442695
        %v2393 = vpow.pop %v2392
        %v2394 = vmul.f32 %v2383, 1.442695
        %v2395 = vpow.pop %v2394
        %v2396 = vmul.f32 %v2384, 1.442695
        %v2397 = vpow.pop %v2396
        %v2398 = vmul.f32 %v2385, 1.442695
        %v2399 = vpow.pop %v2398
        %v2400 = vmul.f32 %v2386, 1.442695
        %v2401 = vpow.pop %v2400
        %v2402 = vmul.f32 %v2387, 1.442695
        %v2403 = vpow.pop %v2402
        %v2404 = vadd.f32 %v2389, 1.0
        %v2405 = vadd.f32 %v2391, 1.0
        %v2406 = vadd.f32 %v2393, 1.0
        %v2407 = vadd.f32 %v2395, 1.0
        %v2408 = vadd.f32 %v2397, 1.0
        %v2409 = vadd.f32 %v2399, 1.0
        %v2410 = vadd.f32 %v2401, 1.0
        %v2411 = vadd.f32 %v2403, 1.0
        %v2412 = vrcp.pop %v2404
        %v2413 = vmul.f32 1.0, %v2412
        %v2414 = vrcp.pop %v2405
        %v2415 = vmul.f32 1.0, %v2414
        %v2416 = vrcp.pop %v2406
        %v2417 = vmul.f32 1.0, %v2416
        %v2418 = vrcp.pop %v2407
        %v2419 = vmul.f32 1.0, %v2418
        %v2420 = vrcp.pop %v2408
        %v2421 = vmul.f32 1.0, %v2420
        %v2422 = vrcp.pop %v2409
        %v2423 = vmul.f32 1.0, %v2422
        %v2424 = vrcp.pop %v2410
        %v2425 = vmul.f32 1.0, %v2424
        %v2426 = vrcp.pop %v2411
        %v2427 = vmul.f32 1.0, %v2426
        %2429 = vset.pattern.permute.xlu0 0
        %2430 = vperm.xlu0 %2429, %v2413
        %v2431 = vpop.permute.xlu0 %2430
        %2434 = vset.pattern.permute.xlu0 0
        %2435 = vperm.xlu0 %2434, %v2415
        %v2436 = vpop.permute.xlu0 %2435
        %2439 = vset.pattern.permute.xlu0 0
        %2440 = vperm.xlu0 %2439, %v2417
        %v2441 = vpop.permute.xlu0 %2440
        %2444 = vset.pattern.permute.xlu0 0
        %2445 = vperm.xlu0 %2444, %v2419
        %v2446 = vpop.permute.xlu0 %2445
        %2449 = vset.pattern.permute.xlu0 0
        %2450 = vperm.xlu0 %2449, %v2421
        %v2451 = vpop.permute.xlu0 %2450
        %2454 = vset.pattern.permute.xlu0 0
        %2455 = vperm.xlu0 %2454, %v2423
        %v2456 = vpop.permute.xlu0 %2455
        %2459 = vset.pattern.permute.xlu0 0
        %2460 = vperm.xlu0 %2459, %v2425
        %v2461 = vpop.permute.xlu0 %2460
        %2464 = vset.pattern.permute.xlu0 0
        %2465 = vperm.xlu0 %2464, %v2427
        %v2466 = vpop.permute.xlu0 %2465
        %v2468 = vmul.f32 %v1629, %v2431
        %v2469 = vmul.f32 %v1630, %v2436
        %v2470 = vmul.f32 %v1631, %v2441
        %v2471 = vmul.f32 %v1632, %v2446
        %v2472 = vmul.f32 %v1633, %v2451
        %v2473 = vmul.f32 %v1634, %v2456
        %v2474 = vmul.f32 %v1635, %v2461
        %v2475 = vmul.f32 %v1636, %v2466
        %2476 = vst.msk [vmem:[#allocation3] sm:$0xff] %vm1637, 0.0
        %2477 = vst.msk [vmem:[#allocation3 + $0x8] sm:$0xff] %vm1637, 0.0
        %2478 = vst.msk [vmem:[#allocation3 + $0x10] sm:$0xff] %vm1637, 0.0
        %2479 = vst.msk [vmem:[#allocation3 + $0x18] sm:$0xff] %vm1637, 0.0
        %2480 = vst.msk [vmem:[#allocation3 + $0x20] sm:$0xff] %vm1637, 0.0
        %2481 = vst.msk [vmem:[#allocation3 + $0x28] sm:$0xff] %vm1637, 0.0
        %2482 = vst.msk [vmem:[#allocation3 + $0x30] sm:$0xff] %vm1637, 0.0
        %2483 = vst.msk [vmem:[#allocation3 + $0x38] sm:$0xff] %vm1637, 0.0
        %2484 = vst.msk [vmem:[#allocation3 + $0x40] sm:$0xff] %vm1637, 0.0
        %2485 = vst.msk [vmem:[#allocation3 + $0x3] sm:$0xff] %vm1637, %v2008
        %2486 = vst.msk [vmem:[#allocation3 + $0xb] sm:$0xff] %vm1637, %v2009
        %2487 = vst.msk [vmem:[#allocation3 + $0x13] sm:$0xff] %vm1637, %v2010
        %2488 = vst.msk [vmem:[#allocation3 + $0x1b] sm:$0xff] %vm1637, %v2011
        %2489 = vst.msk [vmem:[#allocation3 + $0x23] sm:$0xff] %vm1637, %v2012
        %2490 = vst.msk [vmem:[#allocation3 + $0x2b] sm:$0xff] %vm1637, %v2013
        %2491 = vst.msk [vmem:[#allocation3 + $0x33] sm:$0xff] %vm1637, %v2014
        %2492 = vst.msk [vmem:[#allocation3 + $0x3b] sm:$0xff] %vm1637, %v2015
        %v2493 = vld [vmem:[#allocation3] sm:$0xff]
        %v2494 = vld [vmem:[#allocation3 + $0x8] sm:$0xff]
        %v2495 = vld [vmem:[#allocation3 + $0x10] sm:$0xff]
        %v2496 = vld [vmem:[#allocation3 + $0x18] sm:$0xff]
        %v2497 = vld [vmem:[#allocation3 + $0x20] sm:$0xff]
        %v2498 = vld [vmem:[#allocation3 + $0x28] sm:$0xff]
        %v2499 = vld [vmem:[#allocation3 + $0x30] sm:$0xff]
        %v2500 = vld [vmem:[#allocation3 + $0x38] sm:$0xff]
        %v2501 = vld [vmem:[%s7] sm:$0x1]
        %v2502 = vlaneseq
        %v2503 = vshrl.u32 %v2502, 7
        %v2504 = vsub.s32 0, %v2503
        %v2505 = vrot.slane %v2501, %v2504
        %v2506 = vmul.f32 %v2493, %v2505
        %v2507 = vmul.f32 %v2494, %v2505
        %v2508 = vmul.f32 %v2495, %v2505
        %v2509 = vmul.f32 %v2496, %v2505
        %v2510 = vmul.f32 %v2497, %v2505
        %v2511 = vmul.f32 %v2498, %v2505
        %v2512 = vmul.f32 %v2499, %v2505
        %v2513 = vmul.f32 %v2500, %v2505
        %v2514 = vadd.f32 %v2506, 0.0
        %v2515 = vadd.f32 %v2507, 0.0
        %v2516 = vadd.f32 %v2508, 0.0
        %v2517 = vadd.f32 %v2509, 0.0
        %v2518 = vadd.f32 %v2510, 0.0
        %v2519 = vadd.f32 %v2511, 0.0
        %v2520 = vadd.f32 %v2512, 0.0
        %v2521 = vadd.f32 %v2513, 0.0
        %v2522 = vld [vmem:[#allocation3 + $0x1] sm:$0xff]
        %v2523 = vld [vmem:[#allocation3 + $0x9] sm:$0xff]
        %v2524 = vld [vmem:[#allocation3 + $0x11] sm:$0xff]
        %v2525 = vld [vmem:[#allocation3 + $0x19] sm:$0xff]
        %v2526 = vld [vmem:[#allocation3 + $0x21] sm:$0xff]
        %v2527 = vld [vmem:[#allocation3 + $0x29] sm:$0xff]
        %v2528 = vld [vmem:[#allocation3 + $0x31] sm:$0xff]
        %v2529 = vld [vmem:[#allocation3 + $0x39] sm:$0xff]
        %v2530 = vld [vmem:[%s7 + $0x1] sm:$0x1]
        %v2531 = vlaneseq
        %v2532 = vshrl.u32 %v2531, 7
        %v2533 = vsub.s32 0, %v2532
        %v2534 = vrot.slane %v2530, %v2533
        %v2535 = vmul.f32 %v2522, %v2534
        %v2536 = vmul.f32 %v2523, %v2534
        %v2537 = vmul.f32 %v2524, %v2534
        %v2538 = vmul.f32 %v2525, %v2534
        %v2539 = vmul.f32 %v2526, %v2534
        %v2540 = vmul.f32 %v2527, %v2534
        %v2541 = vmul.f32 %v2528, %v2534
        %v2542 = vmul.f32 %v2529, %v2534
        %v2543 = vadd.f32 %v2514, %v2535
        %v2544 = vadd.f32 %v2515, %v2536
        %v2545 = vadd.f32 %v2516, %v2537
        %v2546 = vadd.f32 %v2517, %v2538
        %v2547 = vadd.f32 %v2518, %v2539
        %v2548 = vadd.f32 %v2519, %v2540
        %v2549 = vadd.f32 %v2520, %v2541
        %v2550 = vadd.f32 %v2521, %v2542
        %v2551 = vld [vmem:[#allocation3 + $0x2] sm:$0xff]
        %v2552 = vld [vmem:[#allocation3 + $0xa] sm:$0xff]
        %v2553 = vld [vmem:[#allocation3 + $0x12] sm:$0xff]
        %v2554 = vld [vmem:[#allocation3 + $0x1a] sm:$0xff]
        %v2555 = vld [vmem:[#allocation3 + $0x22] sm:$0xff]
        %v2556 = vld [vmem:[#allocation3 + $0x2a] sm:$0xff]
        %v2557 = vld [vmem:[#allocation3 + $0x32] sm:$0xff]
        %v2558 = vld [vmem:[#allocation3 + $0x3a] sm:$0xff]
        %v2559 = vld [vmem:[%s7 + $0x2] sm:$0x1]
        %v2560 = vlaneseq
        %v2561 = vshrl.u32 %v2560, 7
        %v2562 = vsub.s32 0, %v2561
        %v2563 = vrot.slane %v2559, %v2562
        %v2564 = vmul.f32 %v2551, %v2563
        %v2565 = vmul.f32 %v2552, %v2563
        %v2566 = vmul.f32 %v2553, %v2563
        %v2567 = vmul.f32 %v2554, %v2563
        %v2568 = vmul.f32 %v2555, %v2563
        %v2569 = vmul.f32 %v2556, %v2563
        %v2570 = vmul.f32 %v2557, %v2563
        %v2571 = vmul.f32 %v2558, %v2563
        %v2572 = vadd.f32 %v2543, %v2564
        %v2573 = vadd.f32 %v2544, %v2565
        %v2574 = vadd.f32 %v2545, %v2566
        %v2575 = vadd.f32 %v2546, %v2567
        %v2576 = vadd.f32 %v2547, %v2568
        %v2577 = vadd.f32 %v2548, %v2569
        %v2578 = vadd.f32 %v2549, %v2570
        %v2579 = vadd.f32 %v2550, %v2571
        %v2580 = vld [vmem:[#allocation3 + $0x3] sm:$0xff]
        %v2581 = vld [vmem:[#allocation3 + $0xb] sm:$0xff]
        %v2582 = vld [vmem:[#allocation3 + $0x13] sm:$0xff]
        %v2583 = vld [vmem:[#allocation3 + $0x1b] sm:$0xff]
        %v2584 = vld [vmem:[#allocation3 + $0x23] sm:$0xff]
        %v2585 = vld [vmem:[#allocation3 + $0x2b] sm:$0xff]
        %v2586 = vld [vmem:[#allocation3 + $0x33] sm:$0xff]
        %v2587 = vld [vmem:[#allocation3 + $0x3b] sm:$0xff]
        %v2588 = vld [vmem:[%s7 + $0x3] sm:$0x1]
        %v2589 = vlaneseq
        %v2590 = vshrl.u32 %v2589, 7
        %v2591 = vsub.s32 0, %v2590
        %v2592 = vrot.slane %v2588, %v2591
        %v2593 = vmul.f32 %v2580, %v2592
        %v2594 = vmul.f32 %v2581, %v2592
        %v2595 = vmul.f32 %v2582, %v2592
        %v2596 = vmul.f32 %v2583, %v2592
        %v2597 = vmul.f32 %v2584, %v2592
        %v2598 = vmul.f32 %v2585, %v2592
        %v2599 = vmul.f32 %v2586, %v2592
        %v2600 = vmul.f32 %v2587, %v2592
        %v2601 = vadd.f32 %v2572, %v2593
        %v2602 = vadd.f32 %v2573, %v2594
        %v2603 = vadd.f32 %v2574, %v2595
        %v2604 = vadd.f32 %v2575, %v2596
        %v2605 = vadd.f32 %v2576, %v2597
        %v2606 = vadd.f32 %v2577, %v2598
        %v2607 = vadd.f32 %v2578, %v2599
        %v2608 = vadd.f32 %v2579, %v2600
        %v2609 = vld [vmem:[#allocation11] sm:$0x1]
        %v2611 = vlaneseq
        %v2612 = vshrl.u32 %v2611, 7
        %v2613 = vsub.s32 0, %v2612
        %v2614 = vrot.slane %v2609, %v2613
        %v2616 = vadd.f32 %v2601, %v2614
        %v2617 = vadd.f32 %v2602, %v2614
        %v2618 = vadd.f32 %v2603, %v2614
        %v2619 = vadd.f32 %v2604, %v2614
        %v2620 = vadd.f32 %v2605, %v2614
        %v2621 = vadd.f32 %v2606, %v2614
        %v2622 = vadd.f32 %v2607, %v2614
        %v2623 = vadd.f32 %v2608, %v2614
        %v2624 = vsub.f32 0.0, %v2616
        %v2625 = vsub.f32 0.0, %v2617
        %v2626 = vsub.f32 0.0, %v2618
        %v2627 = vsub.f32 0.0, %v2619
        %v2628 = vsub.f32 0.0, %v2620
        %v2629 = vsub.f32 0.0, %v2621
        %v2630 = vsub.f32 0.0, %v2622
        %v2631 = vsub.f32 0.0, %v2623
        %v2632 = vmul.f32 %v2624, 1.442695
        %v2633 = vpow.pop %v2632
        %v2634 = vmul.f32 %v2625, 1.442695
        %v2635 = vpow.pop %v2634
        %v2636 = vmul.f32 %v2626, 1.442695
        %v2637 = vpow.pop %v2636
        %v2638 = vmul.f32 %v2627, 1.442695
        %v2639 = vpow.pop %v2638
        %v2640 = vmul.f32 %v2628, 1.442695
        %v2641 = vpow.pop %v2640
        %v2642 = vmul.f32 %v2629, 1.442695
        %v2643 = vpow.pop %v2642
        %v2644 = vmul.f32 %v2630, 1.442695
        %v2645 = vpow.pop %v2644
        %v2646 = vmul.f32 %v2631, 1.442695
        %v2647 = vpow.pop %v2646
        %v2648 = vadd.f32 %v2633, 1.0
        %v2649 = vadd.f32 %v2635, 1.0
        %v2650 = vadd.f32 %v2637, 1.0
        %v2651 = vadd.f32 %v2639, 1.0
        %v2652 = vadd.f32 %v2641, 1.0
        %v2653 = vadd.f32 %v2643, 1.0
        %v2654 = vadd.f32 %v2645, 1.0
        %v2655 = vadd.f32 %v2647, 1.0
        %v2656 = vrcp.pop %v2648
        %v2657 = vmul.f32 1.0, %v2656
        %v2658 = vrcp.pop %v2649
        %v2659 = vmul.f32 1.0, %v2658
        %v2660 = vrcp.pop %v2650
        %v2661 = vmul.f32 1.0, %v2660
        %v2662 = vrcp.pop %v2651
        %v2663 = vmul.f32 1.0, %v2662
        %v2664 = vrcp.pop %v2652
        %v2665 = vmul.f32 1.0, %v2664
        %v2666 = vrcp.pop %v2653
        %v2667 = vmul.f32 1.0, %v2666
        %v2668 = vrcp.pop %v2654
        %v2669 = vmul.f32 1.0, %v2668
        %v2670 = vrcp.pop %v2655
        %v2671 = vmul.f32 1.0, %v2670
        %v2672 = vmul.f32 %v2616, %v2657
        %v2673 = vmul.f32 %v2617, %v2659
        %v2674 = vmul.f32 %v2618, %v2661
        %v2675 = vmul.f32 %v2619, %v2663
        %v2676 = vmul.f32 %v2620, %v2665
        %v2677 = vmul.f32 %v2621, %v2667
        %v2678 = vmul.f32 %v2622, %v2669
        %v2679 = vmul.f32 %v2623, %v2671
        %v2680 = vld [vmem:[%s9] sm:$0xff]
        %v2681 = vld [vmem:[%s9 + $0x8] sm:$0xff]
        %v2682 = vld [vmem:[%s9 + $0x10] sm:$0xff]
        %v2683 = vld [vmem:[%s9 + $0x18] sm:$0xff]
        %v2684 = vld [vmem:[%s9 + $0x20] sm:$0xff]
        %v2685 = vld [vmem:[%s9 + $0x28] sm:$0xff]
        %v2686 = vld [vmem:[%s9 + $0x30] sm:$0xff]
        %v2687 = vld [vmem:[%s9 + $0x38] sm:$0xff]
        %v2688 = vld [vmem:[%s9 + $0x40] sm:$0xff]
        %v2689 = vld [vmem:[%s9 + $0x48] sm:$0xff]
        %v2690 = vld [vmem:[%s9 + $0x50] sm:$0xff]
        %v2691 = vld [vmem:[%s9 + $0x58] sm:$0xff]
        %v2692 = vld [vmem:[%s9 + $0x60] sm:$0xff]
        %v2693 = vld [vmem:[%s9 + $0x68] sm:$0xff]
        %v2694 = vld [vmem:[%s9 + $0x70] sm:$0xff]
        %v2695 = vld [vmem:[%s9 + $0x78] sm:$0xff]
        %v2696 = vld [vmem:[%s9 + $0x80] sm:$0xff]
        %v2697 = vld [vmem:[%s9 + $0x88] sm:$0xff]
        %v2698 = vld [vmem:[%s9 + $0x90] sm:$0xff]
        %v2699 = vld [vmem:[%s9 + $0x98] sm:$0xff]
        %v2700 = vld [vmem:[%s9 + $0xa0] sm:$0xff]
        %v2701 = vld [vmem:[%s9 + $0xa8] sm:$0xff]
        %v2702 = vld [vmem:[%s9 + $0xb0] sm:$0xff]
        %v2703 = vld [vmem:[%s9 + $0xb8] sm:$0xff]
        %v2704 = vld [vmem:[%s9 + $0xc0] sm:$0xff]
        %v2705 = vld [vmem:[%s9 + $0xc8] sm:$0xff]
        %v2706 = vld [vmem:[%s9 + $0xd0] sm:$0xff]
        %v2707 = vld [vmem:[%s9 + $0xd8] sm:$0xff]
        %v2708 = vld [vmem:[%s9 + $0xe0] sm:$0xff]
        %v2709 = vld [vmem:[%s9 + $0xe8] sm:$0xff]
        %v2710 = vld [vmem:[%s9 + $0xf0] sm:$0xff]
        %v2711 = vld [vmem:[%s9 + $0xf8] sm:$0xff]
        %v2712 = vld [vmem:[%s9 + $0x100] sm:$0xff]
        %v2713 = vld [vmem:[%s9 + $0x108] sm:$0xff]
        %v2714 = vld [vmem:[%s9 + $0x110] sm:$0xff]
        %v2715 = vld [vmem:[%s9 + $0x118] sm:$0xff]
        %v2716 = vld [vmem:[%s9 + $0x120] sm:$0xff]
        %v2717 = vld [vmem:[%s9 + $0x128] sm:$0xff]
        %v2718 = vld [vmem:[%s9 + $0x130] sm:$0xff]
        %v2719 = vld [vmem:[%s9 + $0x138] sm:$0xff]
        %v2720 = vld [vmem:[%s9 + $0x140] sm:$0xff]
        %v2721 = vld [vmem:[%s9 + $0x148] sm:$0xff]
        %v2722 = vld [vmem:[%s9 + $0x150] sm:$0xff]
        %v2723 = vld [vmem:[%s9 + $0x158] sm:$0xff]
        %v2724 = vld [vmem:[%s9 + $0x160] sm:$0xff]
        %v2725 = vld [vmem:[%s9 + $0x168] sm:$0xff]
        %v2726 = vld [vmem:[%s9 + $0x170] sm:$0xff]
        %v2727 = vld [vmem:[%s9 + $0x178] sm:$0xff]
        %v2728 = vld [vmem:[%s9 + $0x180] sm:$0xff]
        %v2729 = vld [vmem:[%s9 + $0x188] sm:$0xff]
        %v2730 = vld [vmem:[%s9 + $0x190] sm:$0xff]
        %v2731 = vld [vmem:[%s9 + $0x198] sm:$0xff]
        %v2732 = vld [vmem:[%s9 + $0x1a0] sm:$0xff]
        %v2733 = vld [vmem:[%s9 + $0x1a8] sm:$0xff]
        %v2734 = vld [vmem:[%s9 + $0x1b0] sm:$0xff]
        %v2735 = vld [vmem:[%s9 + $0x1b8] sm:$0xff]
        %v2736 = vld [vmem:[%s9 + $0x1c0] sm:$0xff]
        %v2737 = vld [vmem:[%s9 + $0x1c8] sm:$0xff]
        %v2738 = vld [vmem:[%s9 + $0x1d0] sm:$0xff]
        %v2739 = vld [vmem:[%s9 + $0x1d8] sm:$0xff]
        %v2740 = vld [vmem:[%s9 + $0x1e0] sm:$0xff]
        %v2741 = vld [vmem:[%s9 + $0x1e8] sm:$0xff]
        %v2742 = vld [vmem:[%s9 + $0x1f0] sm:$0xff]
        %v2743 = vld [vmem:[%s9 + $0x1f8] sm:$0xff]
        %v2745 = vsel %vm1637, %v2672, 0
        %v2748 = vsel %vm1637, %v2673, 0
        %v2751 = vsel %vm1637, %v2674, 0
        %v2754 = vsel %vm1637, %v2675, 0
        %v2757 = vsel %vm1637, %v2676, 0
        %v2760 = vsel %vm1637, %v2677, 0
        %v2763 = vsel %vm1637, %v2678, 0
        %v2766 = vsel %vm1637, %v2679, 0
        %2768 = vmatprep.subr.mxu0 %v2681
        %2769 = vmatpush1.msra.mxu0 %v2680
        %2770 = vmatprep.subr.mxu0 %v2697
        %2771 = vmatpush1.msra.mxu0 %v2696
        %2772 = vmatprep.subr.mxu0 %v2713
        %2773 = vmatpush1.msra.mxu0 %v2712
        %2774 = vmatprep.subr.mxu0 %v2729
        %2775 = vmatpush1.msra.mxu0 %v2728
        %2776 = vmatprep.subr.mxu0 0.0
        %2777 = vmatpush1.msra.mxu0 0.0
        %2778 = vmatprep.subr.mxu0 0.0
        %2779 = vmatpush1.msra.mxu0 0.0
        %2780 = vmatprep.subr.mxu0 0.0
        %2781 = vmatpush1.msra.mxu0 0.0
        %2782 = vmatprep.subr.mxu0 0.0
        %2783 = vmatpush1.msra.mxu0 0.0
        %2784 = vmatprep.subr.mxu0 0.0
        %2785 = vmatpush1.msra.mxu0 0.0
        %2786 = vmatprep.subr.mxu0 0.0
        %2787 = vmatpush1.msra.mxu0 0.0
        %2788 = vmatprep.subr.mxu0 0.0
        %2789 = vmatpush1.msra.mxu0 0.0
        %2790 = vmatprep.subr.mxu0 0.0
        %2791 = vmatpush1.msra.mxu0 0.0
        %2792 = vmatprep.subr.mxu0 0.0
        %2793 = vmatpush1.msra.mxu0 0.0
        %2794 = vmatprep.subr.mxu0 0.0
        %2795 = vmatpush1.msra.mxu0 0.0
        %2796 = vmatprep.subr.mxu0 0.0
        %2797 = vmatpush1.msra.mxu0 0.0
        %2798 = vmatprep.subr.mxu0 0.0
        %2799 = vmatpush1.msra.mxu0 0.0
        %2800 = vmatprep.subr.mxu0 0.0
        %2801 = vmatpush1.msra.mxu0 0.0
        %2802 = vmatprep.subr.mxu0 0.0
        %2803 = vmatpush1.msra.mxu0 0.0
        %2804 = vmatprep.subr.mxu0 0.0
        %2805 = vmatpush1.msra.mxu0 0.0
        %2806 = vmatprep.subr.mxu0 0.0
        %2807 = vmatpush1.msra.mxu0 0.0
        %2808 = vmatprep.subr.mxu0 0.0
        %2809 = vmatpush1.msra.mxu0 0.0
        %2810 = vmatprep.subr.mxu0 0.0
        %2811 = vmatpush1.msra.mxu0 0.0
        %2812 = vmatprep.subr.mxu0 0.0
        %2813 = vmatpush1.msra.mxu0 0.0
        %2814 = vmatprep.subr.mxu0 0.0
        %2815 = vmatpush1.msra.mxu0 0.0
        %2816 = vmatprep.subr.mxu0 0.0
        %2817 = vmatpush1.msra.mxu0 0.0
        %2818 = vmatprep.subr.mxu0 0.0
        %2819 = vmatpush1.msra.mxu0 0.0
        %2820 = vmatprep.subr.mxu0 0.0
        %2821 = vmatpush1.msra.mxu0 0.0
        %2822 = vmatprep.subr.mxu0 0.0
        %2823 = vmatpush1.msra.mxu0 0.0
        %2824 = vmatprep.subr.mxu0 0.0
        %2825 = vmatpush1.msra.mxu0 0.0
        %2826 = vmatprep.subr.mxu0 0.0
        %2827 = vmatpush1.msra.mxu0 0.0
        %2828 = vmatprep.subr.mxu0 0.0
        %2829 = vmatpush1.msra.mxu0 0.0
        %2830 = vmatprep.subr.mxu0 0.0
        %2831 = vmatpush1.msra.mxu0 0.0
        %2832 = vmatprep.mubr.f32.mxu0 0.0
        %2833 = vmatmul.mubr.f32.gmra.mrb[0].mxu0 %v2745
        %v2834 = vpop.f32.mrb[0].mxu0
        %v2835 = vadd.f32 0.0, %v2834
        %v2836 = vpop.f32.mrb[0].mxu0
        %v2837 = vadd.f32 0.0, %v2836
        %2838 = vmatprep.mubr.f32.mxu0 0.0
        %2839 = vmatmul.mubr.f32.gmra.mrb[0].mxu0 %v2748
        %v2840 = vpop.f32.mrb[0].mxu0
        %v2841 = vadd.f32 0.0, %v2840
        %v2842 = vpop.f32.mrb[0].mxu0
        %v2843 = vadd.f32 0.0, %v2842
        %2844 = vmatprep.mubr.f32.mxu0 0.0
        %2845 = vmatmul.mubr.f32.gmra.mrb[0].mxu0 %v2751
        %v2846 = vpop.f32.mrb[0].mxu0
        %v2847 = vadd.f32 0.0, %v2846
        %v2848 = vpop.f32.mrb[0].mxu0
        %v2849 = vadd.f32 0.0, %v2848
        %2850 = vmatprep.mubr.f32.mxu0 0.0
        %2851 = vmatmul.mubr.f32.gmra.mrb[0].mxu0 %v2754
        %v2852 = vpop.f32.mrb[0].mxu0
        %v2853 = vadd.f32 0.0, %v2852
        %v2854 = vpop.f32.mrb[0].mxu0
        %v2855 = vadd.f32 0.0, %v2854
        %2856 = vmatprep.mubr.f32.mxu0 0.0
        %2857 = vmatmul.mubr.f32.gmra.mrb[0].mxu0 %v2757
        %v2858 = vpop.f32.mrb[0].mxu0
        %v2859 = vadd.f32 0.0, %v2858
        %v2860 = vpop.f32.mrb[0].mxu0
        %v2861 = vadd.f32 0.0, %v2860
        %2862 = vmatprep.mubr.f32.mxu0 0.0
        %2863 = vmatmul.mubr.f32.gmra.mrb[0].mxu0 %v2760
        %v2864 = vpop.f32.mrb[0].mxu0
        %v2865 = vadd.f32 0.0, %v2864
        %v2866 = vpop.f32.mrb[0].mxu0
        %v2867 = vadd.f32 0.0, %v2866
        %2868 = vmatprep.mubr.f32.mxu0 0.0
        %2869 = vmatmul.mubr.f32.gmra.mrb[0].mxu0 %v2763
        %v2870 = vpop.f32.mrb[0].mxu0
        %v2871 = vadd.f32 0.0, %v2870
        %v2872 = vpop.f32.mrb[0].mxu0
        %v2873 = vadd.f32 0.0, %v2872
        %2874 = vmatprep.mubr.f32.mxu0 0.0
        %2875 = vmatmul.mubr.f32.gmra.mrb[0].mxu0 %v2766
        %v2876 = vpop.f32.mrb[0].mxu0
        %v2877 = vadd.f32 0.0, %v2876
        %v2878 = vpop.f32.mrb[0].mxu0
        %v2879 = vadd.f32 0.0, %v2878
        %2880 = vdwg.mxu0
        %2881 = vmatprep.subr.mxu0 %v2683
        %2882 = vmatpush1.msra.mxu0 %v2682
        %2883 = vmatprep.subr.mxu0 %v2699
        %2884 = vmatpush1.msra.mxu0 %v2698
        %2885 = vmatprep.subr.mxu0 %v2715
        %2886 = vmatpush1.msra.mxu0 %v2714
        %2887 = vmatprep.subr.mxu0 %v2731
        %2888 = vmatpush1.msra.mxu0 %v2730
        %2889 = vmatprep.subr.mxu0 0.0
        %2890 = vmatpush1.msra.mxu0 0.0
        %2891 = vmatprep.subr.mxu0 0.0
        %2892 = vmatpush1.msra.mxu0 0.0
        %2893 = vmatprep.subr.mxu0 0.0
        %2894 = vmatpush1.msra.mxu0 0.0
        %2895 = vmatprep.subr.mxu0 0.0
        %2896 = vmatpush1.msra.mxu0 0.0
        %2897 = vmatprep.subr.mxu0 0.0
        %2898 = vmatpush1.msra.mxu0 0.0
        %2899 = vmatprep.subr.mxu0 0.0
        %2900 = vmatpush1.msra.mxu0 0.0
        %2901 = vmatprep.subr.mxu0 0.0
        %2902 = vmatpush1.msra.mxu0 0.0
        %2903 = vmatprep.subr.mxu0 0.0
        %2904 = vmatpush1.msra.mxu0 0.0
        %2905 = vmatprep.subr.mxu0 0.0
        %2906 = vmatpush1.msra.mxu0 0.0
        %2907 = vmatprep.subr.mxu0 0.0
        %2908 = vmatpush1.msra.mxu0 0.0
        %2909 = vmatprep.subr.mxu0 0.0
        %2910 = vmatpush1.msra.mxu0 0.0
        %2911 = vmatprep.subr.mxu0 0.0
        %2912 = vmatpush1.msra.mxu0 0.0
        %2913 = vmatprep.subr.mxu0 0.0
        %2914 = vmatpush1.msra.mxu0 0.0
        %2915 = vmatprep.subr.mxu0 0.0
        %2916 = vmatpush1.msra.mxu0 0.0
        %2917 = vmatprep.subr.mxu0 0.0
        %2918 = vmatpush1.msra.mxu0 0.0
        %2919 = vmatprep.subr.mxu0 0.0
        %2920 = vmatpush1.msra.mxu0 0.0
        %2921 = vmatprep.subr.mxu0 0.0
        %2922 = vmatpush1.msra.mxu0 0.0
        %2923 = vmatprep.subr.mxu0 0.0
        %2924 = vmatpush1.msra.mxu0 0.0
        %2925 = vmatprep.subr.mxu0 0.0
        %2926 = vmatpush1.msra.mxu0 0.0
        %2927 = vmatprep.subr.mxu0 0.0
        %2928 = vmatpush1.msra.mxu0 0.0
        %2929 = vmatprep.subr.mxu0 0.0
        %2930 = vmatpush1.msra.mxu0 0.0
        %2931 = vmatprep.subr.mxu0 0.0
        %2932 = vmatpush1.msra.mxu0 0.0
        %2933 = vmatprep.subr.mxu0 0.0
        %2934 = vmatpush1.msra.mxu0 0.0
        %2935 = vmatprep.subr.mxu0 0.0
        %2936 = vmatpush1.msra.mxu0 0.0
        %2937 = vmatprep.subr.mxu0 0.0
        %2938 = vmatpush1.msra.mxu0 0.0
        %2939 = vmatprep.subr.mxu0 0.0
        %2940 = vmatpush1.msra.mxu0 0.0
        %2941 = vmatprep.subr.mxu0 0.0
        %2942 = vmatpush1.msra.mxu0 0.0
        %2943 = vmatprep.subr.mxu0 0.0
        %2944 = vmatpush1.msra.mxu0 0.0
        %2945 = vmatprep.mubr.f32.mxu0 0.0
        %2946 = vmatmul.mubr.f32.gmra.mrb[0].mxu0 %v2745
        %v2947 = vpop.f32.mrb[0].mxu0
        %v2948 = vadd.f32 0.0, %v2947
        %v2949 = vpop.f32.mrb[0].mxu0
        %v2950 = vadd.f32 0.0, %v2949
        %2951 = vmatprep.mubr.f32.mxu0 0.0
        %2952 = vmatmul.mubr.f32.gmra.mrb[0].mxu0 %v2748
        %v2953 = vpop.f32.mrb[0].mxu0
        %v2954 = vadd.f32 0.0, %v2953
        %v2955 = vpop.f32.mrb[0].mxu0
        %v2956 = vadd.f32 0.0, %v2955
        %2957 = vmatprep.mubr.f32.mxu0 0.0
        %2958 = vmatmul.mubr.f32.gmra.mrb[0].mxu0 %v2751
        %v2959 = vpop.f32.mrb[0].mxu0
        %v2960 = vadd.f32 0.0, %v2959
        %v2961 = vpop.f32.mrb[0].mxu0
        %v2962 = vadd.f32 0.0, %v2961
        %2963 = vmatprep.mubr.f32.mxu0 0.0
        %2964 = vmatmul.mubr.f32.gmra.mrb[0].mxu0 %v2754
        %v2965 = vpop.f32.mrb[0].mxu0
        %v2966 = vadd.f32 0.0, %v2965
        %v2967 = vpop.f32.mrb[0].mxu0
        %v2968 = vadd.f32 0.0, %v2967
        %2969 = vmatprep.mubr.f32.mxu0 0.0
        %2970 = vmatmul.mubr.f32.gmra.mrb[0].mxu0 %v2757
        %v2971 = vpop.f32.mrb[0].mxu0
        %v2972 = vadd.f32 0.0, %v2971
        %v2973 = vpop.f32.mrb[0].mxu0
        %v2974 = vadd.f32 0.0, %v2973
        %2975 = vmatprep.mubr.f32.mxu0 0.0
        %2976 = vmatmul.mubr.f32.gmra.mrb[0].mxu0 %v2760
        %v2977 = vpop.f32.mrb[0].mxu0
        %v2978 = vadd.f32 0.0, %v2977
        %v2979 = vpop.f32.mrb[0].mxu0
        %v2980 = vadd.f32 0.0, %v2979
        %2981 = vmatprep.mubr.f32.mxu0 0.0
        %2982 = vmatmul.mubr.f32.gmra.mrb[0].mxu0 %v2763
        %v2983 = vpop.f32.mrb[0].mxu0
        %v2984 = vadd.f32 0.0, %v2983
        %v2985 = vpop.f32.mrb[0].mxu0
        %v2986 = vadd.f32 0.0, %v2985
        %2987 = vmatprep.mubr.f32.mxu0 0.0
        %2988 = vmatmul.mubr.f32.gmra.mrb[0].mxu0 %v2766
        %v2989 = vpop.f32.mrb[0].mxu0
        %v2990 = vadd.f32 0.0, %v2989
        %v2991 = vpop.f32.mrb[0].mxu0
        %v2992 = vadd.f32 0.0, %v2991
        %2993 = vdwg.mxu0
        %2994 = vmatprep.subr.mxu0 %v2685
        %2995 = vmatpush1.msra.mxu0 %v2684
        %2996 = vmatprep.subr.mxu0 %v2701
        %2997 = vmatpush1.msra.mxu0 %v2700
        %2998 = vmatprep.subr.mxu0 %v2717
        %2999 = vmatpush1.msra.mxu0 %v2716
        %3000 = vmatprep.subr.mxu0 %v2733
        %3001 = vmatpush1.msra.mxu0 %v2732
        %3002 = vmatprep.subr.mxu0 0.0
        %3003 = vmatpush1.msra.mxu0 0.0
        %3004 = vmatprep.subr.mxu0 0.0
        %3005 = vmatpush1.msra.mxu0 0.0
        %3006 = vmatprep.subr.mxu0 0.0
        %3007 = vmatpush1.msra.mxu0 0.0
        %3008 = vmatprep.subr.mxu0 0.0
        %3009 = vmatpush1.msra.mxu0 0.0
        %3010 = vmatprep.subr.mxu0 0.0
        %3011 = vmatpush1.msra.mxu0 0.0
        %3012 = vmatprep.subr.mxu0 0.0
        %3013 = vmatpush1.msra.mxu0 0.0
        %3014 = vmatprep.subr.mxu0 0.0
        %3015 = vmatpush1.msra.mxu0 0.0
        %3016 = vmatprep.subr.mxu0 0.0
        %3017 = vmatpush1.msra.mxu0 0.0
        %3018 = vmatprep.subr.mxu0 0.0
        %3019 = vmatpush1.msra.mxu0 0.0
        %3020 = vmatprep.subr.mxu0 0.0
        %3021 = vmatpush1.msra.mxu0 0.0
        %3022 = vmatprep.subr.mxu0 0.0
        %3023 = vmatpush1.msra.mxu0 0.0
        %3024 = vmatprep.subr.mxu0 0.0
        %3025 = vmatpush1.msra.mxu0 0.0
        %3026 = vmatprep.subr.mxu0 0.0
        %3027 = vmatpush1.msra.mxu0 0.0
        %3028 = vmatprep.subr.mxu0 0.0
        %3029 = vmatpush1.msra.mxu0 0.0
        %3030 = vmatprep.subr.mxu0 0.0
        %3031 = vmatpush1.msra.mxu0 0.0
        %3032 = vmatprep.subr.mxu0 0.0
        %3033 = vmatpush1.msra.mxu0 0.0
        %3034 = vmatprep.subr.mxu0 0.0
        %3035 = vmatpush1.msra.mxu0 0.0
        %3036 = vmatprep.subr.mxu0 0.0
        %3037 = vmatpush1.msra.mxu0 0.0
        %3038 = vmatprep.subr.mxu0 0.0
        %3039 = vmatpush1.msra.mxu0 0.0
        %3040 = vmatprep.subr.mxu0 0.0
        %3041 = vmatpush1.msra.mxu0 0.0
        %3042 = vmatprep.subr.mxu0 0.0
        %3043 = vmatpush1.msra.mxu0 0.0
        %3044 = vmatprep.subr.mxu0 0.0
        %3045 = vmatpush1.msra.mxu0 0.0
        %3046 = vmatprep.subr.mxu0 0.0
        %3047 = vmatpush1.msra.mxu0 0.0
        %3048 = vmatprep.subr.mxu0 0.0
        %3049 = vmatpush1.msra.mxu0 0.0
        %3050 = vmatprep.subr.mxu0 0.0
        %3051 = vmatpush1.msra.mxu0 0.0
        %3052 = vmatprep.subr.mxu0 0.0
        %3053 = vmatpush1.msra.mxu0 0.0
        %3054 = vmatprep.subr.mxu0 0.0
        %3055 = vmatpush1.msra.mxu0 0.0
        %3056 = vmatprep.subr.mxu0 0.0
        %3057 = vmatpush1.msra.mxu0 0.0
        %3058 = vmatprep.mubr.f32.mxu0 0.0
        %3059 = vmatmul.mubr.f32.gmra.mrb[0].mxu0 %v2745
        %v3060 = vpop.f32.mrb[0].mxu0
        %v3061 = vadd.f32 0.0, %v3060
        %v3062 = vpop.f32.mrb[0].mxu0
        %v3063 = vadd.f32 0.0, %v3062
        %3064 = vmatprep.mubr.f32.mxu0 0.0
        %3065 = vmatmul.mubr.f32.gmra.mrb[0].mxu0 %v2748
        %v3066 = vpop.f32.mrb[0].mxu0
        %v3067 = vadd.f32 0.0, %v3066
        %v3068 = vpop.f32.mrb[0].mxu0
        %v3069 = vadd.f32 0.0, %v3068
        %3070 = vmatprep.mubr.f32.mxu0 0.0
        %3071 = vmatmul.mubr.f32.gmra.mrb[0].mxu0 %v2751
        %v3072 = vpop.f32.mrb[0].mxu0
        %v3073 = vadd.f32 0.0, %v3072
        %v3074 = vpop.f32.mrb[0].mxu0
        %v3075 = vadd.f32 0.0, %v3074
        %3076 = vmatprep.mubr.f32.mxu0 0.0
        %3077 = vmatmul.mubr.f32.gmra.mrb[0].mxu0 %v2754
        %v3078 = vpop.f32.mrb[0].mxu0
        %v3079 = vadd.f32 0.0, %v3078
        %v3080 = vpop.f32.mrb[0].mxu0
        %v3081 = vadd.f32 0.0, %v3080
        %3082 = vmatprep.mubr.f32.mxu0 0.0
        %3083 = vmatmul.mubr.f32.gmra.mrb[0].mxu0 %v2757
        %v3084 = vpop.f32.mrb[0].mxu0
        %v3085 = vadd.f32 0.0, %v3084
        %v3086 = vpop.f32.mrb[0].mxu0
        %v3087 = vadd.f32 0.0, %v3086
        %3088 = vmatprep.mubr.f32.mxu0 0.0
        %3089 = vmatmul.mubr.f32.gmra.mrb[0].mxu0 %v2760
        %v3090 = vpop.f32.mrb[0].mxu0
        %v3091 = vadd.f32 0.0, %v3090
        %v3092 = vpop.f32.mrb[0].mxu0
        %v3093 = vadd.f32 0.0, %v3092
        %3094 = vmatprep.mubr.f32.mxu0 0.0
        %3095 = vmatmul.mubr.f32.gmra.mrb[0].mxu0 %v2763
        %v3096 = vpop.f32.mrb[0].mxu0
        %v3097 = vadd.f32 0.0, %v3096
        %v3098 = vpop.f32.mrb[0].mxu0
        %v3099 = vadd.f32 0.0, %v3098
        %3100 = vmatprep.mubr.f32.mxu0 0.0
        %3101 = vmatmul.mubr.f32.gmra.mrb[0].mxu0 %v2766
        %v3102 = vpop.f32.mrb[0].mxu0
        %v3103 = vadd.f32 0.0, %v3102
        %v3104 = vpop.f32.mrb[0].mxu0
        %v3105 = vadd.f32 0.0, %v3104
        %3106 = vdwg.mxu0
        %3107 = vmatprep.subr.mxu0 %v2687
        %3108 = vmatpush1.msra.mxu0 %v2686
        %3109 = vmatprep.subr.mxu0 %v2703
        %3110 = vmatpush1.msra.mxu0 %v2702
        %3111 = vmatprep.subr.mxu0 %v2719
        %3112 = vmatpush1.msra.mxu0 %v2718
        %3113 = vmatprep.subr.mxu0 %v2735
        %3114 = vmatpush1.msra.mxu0 %v2734
        %3115 = vmatprep.subr.mxu0 0.0
        %3116 = vmatpush1.msra.mxu0 0.0
        %3117 = vmatprep.subr.mxu0 0.0
        %3118 = vmatpush1.msra.mxu0 0.0
        %3119 = vmatprep.subr.mxu0 0.0
        %3120 = vmatpush1.msra.mxu0 0.0
        %3121 = vmatprep.subr.mxu0 0.0
        %3122 = vmatpush1.msra.mxu0 0.0
        %3123 = vmatprep.subr.mxu0 0.0
        %3124 = vmatpush1.msra.mxu0 0.0
        %3125 = vmatprep.subr.mxu0 0.0
        %3126 = vmatpush1.msra.mxu0 0.0
        %3127 = vmatprep.subr.mxu0 0.0
        %3128 = vmatpush1.msra.mxu0 0.0
        %3129 = vmatprep.subr.mxu0 0.0
        %3130 = vmatpush1.msra.mxu0 0.0
        %3131 = vmatprep.subr.mxu0 0.0
        %3132 = vmatpush1.msra.mxu0 0.0
        %3133 = vmatprep.subr.mxu0 0.0
        %3134 = vmatpush1.msra.mxu0 0.0
        %3135 = vmatprep.subr.mxu0 0.0
        %3136 = vmatpush1.msra.mxu0 0.0
        %3137 = vmatprep.subr.mxu0 0.0
        %3138 = vmatpush1.msra.mxu0 0.0
        %3139 = vmatprep.subr.mxu0 0.0
        %3140 = vmatpush1.msra.mxu0 0.0
        %3141 = vmatprep.subr.mxu0 0.0
        %3142 = vmatpush1.msra.mxu0 0.0
        %3143 = vmatprep.subr.mxu0 0.0
        %3144 = vmatpush1.msra.mxu0 0.0
        %3145 = vmatprep.subr.mxu0 0.0
        %3146 = vmatpush1.msra.mxu0 0.0
        %3147 = vmatprep.subr.mxu0 0.0
        %3148 = vmatpush1.msra.mxu0 0.0
        %3149 = vmatprep.subr.mxu0 0.0
        %3150 = vmatpush1.msra.mxu0 0.0
        %3151 = vmatprep.subr.mxu0 0.0
        %3152 = vmatpush1.msra.mxu0 0.0
        %3153 = vmatprep.subr.mxu0 0.0
        %3154 = vmatpush1.msra.mxu0 0.0
        %3155 = vmatprep.subr.mxu0 0.0
        %3156 = vmatpush1.msra.mxu0 0.0
        %3157 = vmatprep.subr.mxu0 0.0
        %3158 = vmatpush1.msra.mxu0 0.0
        %3159 = vmatprep.subr.mxu0 0.0
        %3160 = vmatpush1.msra.mxu0 0.0
        %3161 = vmatprep.subr.mxu0 0.0
        %3162 = vmatpush1.msra.mxu0 0.0
        %3163 = vmatprep.subr.mxu0 0.0
        %3164 = vmatpush1.msra.mxu0 0.0
        %3165 = vmatprep.subr.mxu0 0.0
        %3166 = vmatpush1.msra.mxu0 0.0
        %3167 = vmatprep.subr.mxu0 0.0
        %3168 = vmatpush1.msra.mxu0 0.0
        %3169 = vmatprep.subr.mxu0 0.0
        %3170 = vmatpush1.msra.mxu0 0.0
        %3171 = vmatprep.mubr.f32.mxu0 0.0
        %3172 = vmatmul.mubr.f32.gmra.mrb[0].mxu0 %v2745
        %v3173 = vpop.f32.mrb[0].mxu0
        %v3174 = vadd.f32 0.0, %v3173
        %v3175 = vpop.f32.mrb[0].mxu0
        %v3176 = vadd.f32 0.0, %v3175
        %3177 = vmatprep.mubr.f32.mxu0 0.0
        %3178 = vmatmul.mubr.f32.gmra.mrb[0].mxu0 %v2748
        %v3179 = vpop.f32.mrb[0].mxu0
        %v3180 = vadd.f32 0.0, %v3179
        %v3181 = vpop.f32.mrb[0].mxu0
        %v3182 = vadd.f32 0.0, %v3181
        %3183 = vmatprep.mubr.f32.mxu0 0.0
        %3184 = vmatmul.mubr.f32.gmra.mrb[0].mxu0 %v2751
        %v3185 = vpop.f32.mrb[0].mxu0
        %v3186 = vadd.f32 0.0, %v3185
        %v3187 = vpop.f32.mrb[0].mxu0
        %v3188 = vadd.f32 0.0, %v3187
        %3189 = vmatprep.mubr.f32.mxu0 0.0
        %3190 = vmatmul.mubr.f32.gmra.mrb[0].mxu0 %v2754
        %v3191 = vpop.f32.mrb[0].mxu0
        %v3192 = vadd.f32 0.0, %v3191
        %v3193 = vpop.f32.mrb[0].mxu0
        %v3194 = vadd.f32 0.0, %v3193
        %3195 = vmatprep.mubr.f32.mxu0 0.0
        %3196 = vmatmul.mubr.f32.gmra.mrb[0].mxu0 %v2757
        %v3197 = vpop.f32.mrb[0].mxu0
        %v3198 = vadd.f32 0.0, %v3197
        %v3199 = vpop.f32.mrb[0].mxu0
        %v3200 = vadd.f32 0.0, %v3199
        %3201 = vmatprep.mubr.f32.mxu0 0.0
        %3202 = vmatmul.mubr.f32.gmra.mrb[0].mxu0 %v2760
        %v3203 = vpop.f32.mrb[0].mxu0
        %v3204 = vadd.f32 0.0, %v3203
        %v3205 = vpop.f32.mrb[0].mxu0
        %v3206 = vadd.f32 0.0, %v3205
        %3207 = vmatprep.mubr.f32.mxu0 0.0
        %3208 = vmatmul.mubr.f32.gmra.mrb[0].mxu0 %v2763
        %v3209 = vpop.f32.mrb[0].mxu0
        %v3210 = vadd.f32 0.0, %v3209
        %v3211 = vpop.f32.mrb[0].mxu0
        %v3212 = vadd.f32 0.0, %v3211
        %3213 = vmatprep.mubr.f32.mxu0 0.0
        %3214 = vmatmul.mubr.f32.gmra.mrb[0].mxu0 %v2766
        %v3215 = vpop.f32.mrb[0].mxu0
        %v3216 = vadd.f32 0.0, %v3215
        %v3217 = vpop.f32.mrb[0].mxu0
        %v3218 = vadd.f32 0.0, %v3217
        %3219 = vdwg.mxu0
        %3220 = vmatprep.subr.mxu0 %v2689
        %3221 = vmatpush1.msra.mxu0 %v2688
        %3222 = vmatprep.subr.mxu0 %v2705
        %3223 = vmatpush1.msra.mxu0 %v2704
        %3224 = vmatprep.subr.mxu0 %v2721
        %3225 = vmatpush1.msra.mxu0 %v2720
        %3226 = vmatprep.subr.mxu0 %v2737
        %3227 = vmatpush1.msra.mxu0 %v2736
        %3228 = vmatprep.subr.mxu0 0.0
        %3229 = vmatpush1.msra.mxu0 0.0
        %3230 = vmatprep.subr.mxu0 0.0
        %3231 = vmatpush1.msra.mxu0 0.0
        %3232 = vmatprep.subr.mxu0 0.0
        %3233 = vmatpush1.msra.mxu0 0.0
        %3234 = vmatprep.subr.mxu0 0.0
        %3235 = vmatpush1.msra.mxu0 0.0
        %3236 = vmatprep.subr.mxu0 0.0
        %3237 = vmatpush1.msra.mxu0 0.0
        %3238 = vmatprep.subr.mxu0 0.0
        %3239 = vmatpush1.msra.mxu0 0.0
        %3240 = vmatprep.subr.mxu0 0.0
        %3241 = vmatpush1.msra.mxu0 0.0
        %3242 = vmatprep.subr.mxu0 0.0
        %3243 = vmatpush1.msra.mxu0 0.0
        %3244 = vmatprep.subr.mxu0 0.0
        %3245 = vmatpush1.msra.mxu0 0.0
        %3246 = vmatprep.subr.mxu0 0.0
        %3247 = vmatpush1.msra.mxu0 0.0
        %3248 = vmatprep.subr.mxu0 0.0
        %3249 = vmatpush1.msra.mxu0 0.0
        %3250 = vmatprep.subr.mxu0 0.0
        %3251 = vmatpush1.msra.mxu0 0.0
        %3252 = vmatprep.subr.mxu0 0.0
        %3253 = vmatpush1.msra.mxu0 0.0
        %3254 = vmatprep.subr.mxu0 0.0
        %3255 = vmatpush1.msra.mxu0 0.0
        %3256 = vmatprep.subr.mxu0 0.0
        %3257 = vmatpush1.msra.mxu0 0.0
        %3258 = vmatprep.subr.mxu0 0.0
        %3259 = vmatpush1.msra.mxu0 0.0
        %3260 = vmatprep.subr.mxu0 0.0
        %3261 = vmatpush1.msra.mxu0 0.0
        %3262 = vmatprep.subr.mxu0 0.0
        %3263 = vmatpush1.msra.mxu0 0.0
        %3264 = vmatprep.subr.mxu0 0.0
        %3265 = vmatpush1.msra.mxu0 0.0
        %3266 = vmatprep.subr.mxu0 0.0
        %3267 = vmatpush1.msra.mxu0 0.0
        %3268 = vmatprep.subr.mxu0 0.0
        %3269 = vmatpush1.msra.mxu0 0.0
        %3270 = vmatprep.subr.mxu0 0.0
        %3271 = vmatpush1.msra.mxu0 0.0
        %3272 = vmatprep.subr.mxu0 0.0
        %3273 = vmatpush1.msra.mxu0 0.0
        %3274 = vmatprep.subr.mxu0 0.0
        %3275 = vmatpush1.msra.mxu0 0.0
        %3276 = vmatprep.subr.mxu0 0.0
        %3277 = vmatpush1.msra.mxu0 0.0
        %3278 = vmatprep.subr.mxu0 0.0
        %3279 = vmatpush1.msra.mxu0 0.0
        %3280 = vmatprep.subr.mxu0 0.0
        %3281 = vmatpush1.msra.mxu0 0.0
        %3282 = vmatprep.subr.mxu0 0.0
        %3283 = vmatpush1.msra.mxu0 0.0
        %3284 = vmatprep.mubr.f32.mxu0 0.0
        %3285 = vmatmul.mubr.f32.gmra.mrb[0].mxu0 %v2745
        %v3286 = vpop.f32.mrb[0].mxu0
        %v3287 = vadd.f32 0.0, %v3286
        %v3288 = vpop.f32.mrb[0].mxu0
        %v3289 = vadd.f32 0.0, %v3288
        %3290 = vmatprep.mubr.f32.mxu0 0.0
        %3291 = vmatmul.mubr.f32.gmra.mrb[0].mxu0 %v2748
        %v3292 = vpop.f32.mrb[0].mxu0
        %v3293 = vadd.f32 0.0, %v3292
        %v3294 = vpop.f32.mrb[0].mxu0
        %v3295 = vadd.f32 0.0, %v3294
        %3296 = vmatprep.mubr.f32.mxu0 0.0
        %3297 = vmatmul.mubr.f32.gmra.mrb[0].mxu0 %v2751
        %v3298 = vpop.f32.mrb[0].mxu0
        %v3299 = vadd.f32 0.0, %v3298
        %v3300 = vpop.f32.mrb[0].mxu0
        %v3301 = vadd.f32 0.0, %v3300
        %3302 = vmatprep.mubr.f32.mxu0 0.0
        %3303 = vmatmul.mubr.f32.gmra.mrb[0].mxu0 %v2754
        %v3304 = vpop.f32.mrb[0].mxu0
        %v3305 = vadd.f32 0.0, %v3304
        %v3306 = vpop.f32.mrb[0].mxu0
        %v3307 = vadd.f32 0.0, %v3306
        %3308 = vmatprep.mubr.f32.mxu0 0.0
        %3309 = vmatmul.mubr.f32.gmra.mrb[0].mxu0 %v2757
        %v3310 = vpop.f32.mrb[0].mxu0
        %v3311 = vadd.f32 0.0, %v3310
        %v3312 = vpop.f32.mrb[0].mxu0
        %v3313 = vadd.f32 0.0, %v3312
        %3314 = vmatprep.mubr.f32.mxu0 0.0
        %3315 = vmatmul.mubr.f32.gmra.mrb[0].mxu0 %v2760
        %v3316 = vpop.f32.mrb[0].mxu0
        %v3317 = vadd.f32 0.0, %v3316
        %v3318 = vpop.f32.mrb[0].mxu0
        %v3319 = vadd.f32 0.0, %v3318
        %3320 = vmatprep.mubr.f32.mxu0 0.0
        %3321 = vmatmul.mubr.f32.gmra.mrb[0].mxu0 %v2763
        %v3322 = vpop.f32.mrb[0].mxu0
        %v3323 = vadd.f32 0.0, %v3322
        %v3324 = vpop.f32.mrb[0].mxu0
        %v3325 = vadd.f32 0.0, %v3324
        %3326 = vmatprep.mubr.f32.mxu0 0.0
        %3327 = vmatmul.mubr.f32.gmra.mrb[0].mxu0 %v2766
        %v3328 = vpop.f32.mrb[0].mxu0
        %v3329 = vadd.f32 0.0, %v3328
        %v3330 = vpop.f32.mrb[0].mxu0
        %v3331 = vadd.f32 0.0, %v3330
        %3332 = vdwg.mxu0
        %3333 = vmatprep.subr.mxu0 %v2691
        %3334 = vmatpush1.msra.mxu0 %v2690
        %3335 = vmatprep.subr.mxu0 %v2707
        %3336 = vmatpush1.msra.mxu0 %v2706
        %3337 = vmatprep.subr.mxu0 %v2723
        %3338 = vmatpush1.msra.mxu0 %v2722
        %3339 = vmatprep.subr.mxu0 %v2739
        %3340 = vmatpush1.msra.mxu0 %v2738
        %3341 = vmatprep.subr.mxu0 0.0
        %3342 = vmatpush1.msra.mxu0 0.0
        %3343 = vmatprep.subr.mxu0 0.0
        %3344 = vmatpush1.msra.mxu0 0.0
        %3345 = vmatprep.subr.mxu0 0.0
        %3346 = vmatpush1.msra.mxu0 0.0
        %3347 = vmatprep.subr.mxu0 0.0
        %3348 = vmatpush1.msra.mxu0 0.0
        %3349 = vmatprep.subr.mxu0 0.0
        %3350 = vmatpush1.msra.mxu0 0.0
        %3351 = vmatprep.subr.mxu0 0.0
        %3352 = vmatpush1.msra.mxu0 0.0
        %3353 = vmatprep.subr.mxu0 0.0
        %3354 = vmatpush1.msra.mxu0 0.0
        %3355 = vmatprep.subr.mxu0 0.0
        %3356 = vmatpush1.msra.mxu0 0.0
        %3357 = vmatprep.subr.mxu0 0.0
        %3358 = vmatpush1.msra.mxu0 0.0
        %3359 = vmatprep.subr.mxu0 0.0
        %3360 = vmatpush1.msra.mxu0 0.0
        %3361 = vmatprep.subr.mxu0 0.0
        %3362 = vmatpush1.msra.mxu0 0.0
        %3363 = vmatprep.subr.mxu0 0.0
        %3364 = vmatpush1.msra.mxu0 0.0
        %3365 = vmatprep.subr.mxu0 0.0
        %3366 = vmatpush1.msra.mxu0 0.0
        %3367 = vmatprep.subr.mxu0 0.0
        %3368 = vmatpush1.msra.mxu0 0.0
        %3369 = vmatprep.subr.mxu0 0.0
        %3370 = vmatpush1.msra.mxu0 0.0
        %3371 = vmatprep.subr.mxu0 0.0
        %3372 = vmatpush1.msra.mxu0 0.0
        %3373 = vmatprep.subr.mxu0 0.0
        %3374 = vmatpush1.msra.mxu0 0.0
        %3375 = vmatprep.subr.mxu0 0.0
        %3376 = vmatpush1.msra.mxu0 0.0
        %3377 = vmatprep.subr.mxu0 0.0
        %3378 = vmatpush1.msra.mxu0 0.0
        %3379 = vmatprep.subr.mxu0 0.0
        %3380 = vmatpush1.msra.mxu0 0.0
        %3381 = vmatprep.subr.mxu0 0.0
        %3382 = vmatpush1.msra.mxu0 0.0
        %3383 = vmatprep.subr.mxu0 0.0
        %3384 = vmatpush1.msra.mxu0 0.0
        %3385 = vmatprep.subr.mxu0 0.0
        %3386 = vmatpush1.msra.mxu0 0.0
        %3387 = vmatprep.subr.mxu0 0.0
        %3388 = vmatpush1.msra.mxu0 0.0
        %3389 = vmatprep.subr.mxu0 0.0
        %3390 = vmatpush1.msra.mxu0 0.0
        %3391 = vmatprep.subr.mxu0 0.0
        %3392 = vmatpush1.msra.mxu0 0.0
        %3393 = vmatprep.subr.mxu0 0.0
        %3394 = vmatpush1.msra.mxu0 0.0
        %3395 = vmatprep.subr.mxu0 0.0
        %3396 = vmatpush1.msra.mxu0 0.0
        %3397 = vmatprep.mubr.f32.mxu0 0.0
        %3398 = vmatmul.mubr.f32.gmra.mrb[0].mxu0 %v2745
        %v3399 = vpop.f32.mrb[0].mxu0
        %v3400 = vadd.f32 0.0, %v3399
        %v3401 = vpop.f32.mrb[0].mxu0
        %v3402 = vadd.f32 0.0, %v3401
        %3403 = vmatprep.mubr.f32.mxu0 0.0
        %3404 = vmatmul.mubr.f32.gmra.mrb[0].mxu0 %v2748
        %v3405 = vpop.f32.mrb[0].mxu0
        %v3406 = vadd.f32 0.0, %v3405
        %v3407 = vpop.f32.mrb[0].mxu0
        %v3408 = vadd.f32 0.0, %v3407
        %3409 = vmatprep.mubr.f32.mxu0 0.0
        %3410 = vmatmul.mubr.f32.gmra.mrb[0].mxu0 %v2751
        %v3411 = vpop.f32.mrb[0].mxu0
        %v3412 = vadd.f32 0.0, %v3411
        %v3413 = vpop.f32.mrb[0].mxu0
        %v3414 = vadd.f32 0.0, %v3413
        %3415 = vmatprep.mubr.f32.mxu0 0.0
        %3416 = vmatmul.mubr.f32.gmra.mrb[0].mxu0 %v2754
        %v3417 = vpop.f32.mrb[0].mxu0
        %v3418 = vadd.f32 0.0, %v3417
        %v3419 = vpop.f32.mrb[0].mxu0
        %v3420 = vadd.f32 0.0, %v3419
        %3421 = vmatprep.mubr.f32.mxu0 0.0
        %3422 = vmatmul.mubr.f32.gmra.mrb[0].mxu0 %v2757
        %v3423 = vpop.f32.mrb[0].mxu0
        %v3424 = vadd.f32 0.0, %v3423
        %v3425 = vpop.f32.mrb[0].mxu0
        %v3426 = vadd.f32 0.0, %v3425
        %3427 = vmatprep.mubr.f32.mxu0 0.0
        %3428 = vmatmul.mubr.f32.gmra.mrb[0].mxu0 %v2760
        %v3429 = vpop.f32.mrb[0].mxu0
        %v3430 = vadd.f32 0.0, %v3429
        %v3431 = vpop.f32.mrb[0].mxu0
        %v3432 = vadd.f32 0.0, %v3431
        %3433 = vmatprep.mubr.f32.mxu0 0.0
        %3434 = vmatmul.mubr.f32.gmra.mrb[0].mxu0 %v2763
        %v3435 = vpop.f32.mrb[0].mxu0
        %v3436 = vadd.f32 0.0, %v3435
        %v3437 = vpop.f32.mrb[0].mxu0
        %v3438 = vadd.f32 0.0, %v3437
        %3439 = vmatprep.mubr.f32.mxu0 0.0
        %3440 = vmatmul.mubr.f32.gmra.mrb[0].mxu0 %v2766
        %v3441 = vpop.f32.mrb[0].mxu0
        %v3442 = vadd.f32 0.0, %v3441
        %v3443 = vpop.f32.mrb[0].mxu0
        %v3444 = vadd.f32 0.0, %v3443
        %3445 = vdwg.mxu0
        %3446 = vmatprep.subr.mxu0 %v2693
        %3447 = vmatpush1.msra.mxu0 %v2692
        %3448 = vmatprep.subr.mxu0 %v2709
        %3449 = vmatpush1.msra.mxu0 %v2708
        %3450 = vmatprep.subr.mxu0 %v2725
        %3451 = vmatpush1.msra.mxu0 %v2724
        %3452 = vmatprep.subr.mxu0 %v2741
        %3453 = vmatpush1.msra.mxu0 %v2740
        %3454 = vmatprep.subr.mxu0 0.0
        %3455 = vmatpush1.msra.mxu0 0.0
        %3456 = vmatprep.subr.mxu0 0.0
        %3457 = vmatpush1.msra.mxu0 0.0
        %3458 = vmatprep.subr.mxu0 0.0
        %3459 = vmatpush1.msra.mxu0 0.0
        %3460 = vmatprep.subr.mxu0 0.0
        %3461 = vmatpush1.msra.mxu0 0.0
        %3462 = vmatprep.subr.mxu0 0.0
        %3463 = vmatpush1.msra.mxu0 0.0
        %3464 = vmatprep.subr.mxu0 0.0
        %3465 = vmatpush1.msra.mxu0 0.0
        %3466 = vmatprep.subr.mxu0 0.0
        %3467 = vmatpush1.msra.mxu0 0.0
        %3468 = vmatprep.subr.mxu0 0.0
        %3469 = vmatpush1.msra.mxu0 0.0
        %3470 = vmatprep.subr.mxu0 0.0
        %3471 = vmatpush1.msra.mxu0 0.0
        %3472 = vmatprep.subr.mxu0 0.0
        %3473 = vmatpush1.msra.mxu0 0.0
        %3474 = vmatprep.subr.mxu0 0.0
        %3475 = vmatpush1.msra.mxu0 0.0
        %3476 = vmatprep.subr.mxu0 0.0
        %3477 = vmatpush1.msra.mxu0 0.0
        %3478 = vmatprep.subr.mxu0 0.0
        %3479 = vmatpush1.msra.mxu0 0.0
        %3480 = vmatprep.subr.mxu0 0.0
        %3481 = vmatpush1.msra.mxu0 0.0
        %3482 = vmatprep.subr.mxu0 0.0
        %3483 = vmatpush1.msra.mxu0 0.0
        %3484 = vmatprep.subr.mxu0 0.0
        %3485 = vmatpush1.msra.mxu0 0.0
        %3486 = vmatprep.subr.mxu0 0.0
        %3487 = vmatpush1.msra.mxu0 0.0
        %3488 = vmatprep.subr.mxu0 0.0
        %3489 = vmatpush1.msra.mxu0 0.0
        %3490 = vmatprep.subr.mxu0 0.0
        %3491 = vmatpush1.msra.mxu0 0.0
        %3492 = vmatprep.subr.mxu0 0.0
        %3493 = vmatpush1.msra.mxu0 0.0
        %3494 = vmatprep.subr.mxu0 0.0
        %3495 = vmatpush1.msra.mxu0 0.0
        %3496 = vmatprep.subr.mxu0 0.0
        %3497 = vmatpush1.msra.mxu0 0.0
        %3498 = vmatprep.subr.mxu0 0.0
        %3499 = vmatpush1.msra.mxu0 0.0
        %3500 = vmatprep.subr.mxu0 0.0
        %3501 = vmatpush1.msra.mxu0 0.0
        %3502 = vmatprep.subr.mxu0 0.0
        %3503 = vmatpush1.msra.mxu0 0.0
        %3504 = vmatprep.subr.mxu0 0.0
        %3505 = vmatpush1.msra.mxu0 0.0
        %3506 = vmatprep.subr.mxu0 0.0
        %3507 = vmatpush1.msra.mxu0 0.0
        %3508 = vmatprep.subr.mxu0 0.0
        %3509 = vmatpush1.msra.mxu0 0.0
        %3510 = vmatprep.mubr.f32.mxu0 0.0
        %3511 = vmatmul.mubr.f32.gmra.mrb[0].mxu0 %v2745
        %v3512 = vpop.f32.mrb[0].mxu0
        %v3513 = vadd.f32 0.0, %v3512
        %v3514 = vpop.f32.mrb[0].mxu0
        %v3515 = vadd.f32 0.0, %v3514
        %3516 = vmatprep.mubr.f32.mxu0 0.0
        %3517 = vmatmul.mubr.f32.gmra.mrb[0].mxu0 %v2748
        %v3518 = vpop.f32.mrb[0].mxu0
        %v3519 = vadd.f32 0.0, %v3518
        %v3520 = vpop.f32.mrb[0].mxu0
        %v3521 = vadd.f32 0.0, %v3520
        %3522 = vmatprep.mubr.f32.mxu0 0.0
        %3523 = vmatmul.mubr.f32.gmra.mrb[0].mxu0 %v2751
        %v3524 = vpop.f32.mrb[0].mxu0
        %v3525 = vadd.f32 0.0, %v3524
        %v3526 = vpop.f32.mrb[0].mxu0
        %v3527 = vadd.f32 0.0, %v3526
        %3528 = vmatprep.mubr.f32.mxu0 0.0
        %3529 = vmatmul.mubr.f32.gmra.mrb[0].mxu0 %v2754
        %v3530 = vpop.f32.mrb[0].mxu0
        %v3531 = vadd.f32 0.0, %v3530
        %v3532 = vpop.f32.mrb[0].mxu0
        %v3533 = vadd.f32 0.0, %v3532
        %3534 = vmatprep.mubr.f32.mxu0 0.0
        %3535 = vmatmul.mubr.f32.gmra.mrb[0].mxu0 %v2757
        %v3536 = vpop.f32.mrb[0].mxu0
        %v3537 = vadd.f32 0.0, %v3536
        %v3538 = vpop.f32.mrb[0].mxu0
        %v3539 = vadd.f32 0.0, %v3538
        %3540 = vmatprep.mubr.f32.mxu0 0.0
        %3541 = vmatmul.mubr.f32.gmra.mrb[0].mxu0 %v2760
        %v3542 = vpop.f32.mrb[0].mxu0
        %v3543 = vadd.f32 0.0, %v3542
        %v3544 = vpop.f32.mrb[0].mxu0
        %v3545 = vadd.f32 0.0, %v3544
        %3546 = vmatprep.mubr.f32.mxu0 0.0
        %3547 = vmatmul.mubr.f32.gmra.mrb[0].mxu0 %v2763
        %v3548 = vpop.f32.mrb[0].mxu0
        %v3549 = vadd.f32 0.0, %v3548
        %v3550 = vpop.f32.mrb[0].mxu0
        %v3551 = vadd.f32 0.0, %v3550
        %3552 = vmatprep.mubr.f32.mxu0 0.0
        %3553 = vmatmul.mubr.f32.gmra.mrb[0].mxu0 %v2766
        %v3554 = vpop.f32.mrb[0].mxu0
        %v3555 = vadd.f32 0.0, %v3554
        %v3556 = vpop.f32.mrb[0].mxu0
        %v3557 = vadd.f32 0.0, %v3556
        %3558 = vdwg.mxu0
        %3559 = vmatprep.subr.mxu0 %v2695
        %3560 = vmatpush1.msra.mxu0 %v2694
        %3561 = vmatprep.subr.mxu0 %v2711
        %3562 = vmatpush1.msra.mxu0 %v2710
        %3563 = vmatprep.subr.mxu0 %v2727
        %3564 = vmatpush1.msra.mxu0 %v2726
        %3565 = vmatprep.subr.mxu0 %v2743
        %3566 = vmatpush1.msra.mxu0 %v2742
        %3567 = vmatprep.subr.mxu0 0.0
        %3568 = vmatpush1.msra.mxu0 0.0
        %3569 = vmatprep.subr.mxu0 0.0
        %3570 = vmatpush1.msra.mxu0 0.0
        %3571 = vmatprep.subr.mxu0 0.0
        %3572 = vmatpush1.msra.mxu0 0.0
        %3573 = vmatprep.subr.mxu0 0.0
        %3574 = vmatpush1.msra.mxu0 0.0
        %3575 = vmatprep.subr.mxu0 0.0
        %3576 = vmatpush1.msra.mxu0 0.0
        %3577 = vmatprep.subr.mxu0 0.0
        %3578 = vmatpush1.msra.mxu0 0.0
        %3579 = vmatprep.subr.mxu0 0.0
        %3580 = vmatpush1.msra.mxu0 0.0
        %3581 = vmatprep.subr.mxu0 0.0
        %3582 = vmatpush1.msra.mxu0 0.0
        %3583 = vmatprep.subr.mxu0 0.0
        %3584 = vmatpush1.msra.mxu0 0.0
        %3585 = vmatprep.subr.mxu0 0.0
        %3586 = vmatpush1.msra.mxu0 0.0
        %3587 = vmatprep.subr.mxu0 0.0
        %3588 = vmatpush1.msra.mxu0 0.0
        %3589 = vmatprep.subr.mxu0 0.0
        %3590 = vmatpush1.msra.mxu0 0.0
        %3591 = vmatprep.subr.mxu0 0.0
        %3592 = vmatpush1.msra.mxu0 0.0
        %3593 = vmatprep.subr.mxu0 0.0
        %3594 = vmatpush1.msra.mxu0 0.0
        %3595 = vmatprep.subr.mxu0 0.0
        %3596 = vmatpush1.msra.mxu0 0.0
        %3597 = vmatprep.subr.mxu0 0.0
        %3598 = vmatpush1.msra.mxu0 0.0
        %3599 = vmatprep.subr.mxu0 0.0
        %3600 = vmatpush1.msra.mxu0 0.0
        %3601 = vmatprep.subr.mxu0 0.0
        %3602 = vmatpush1.msra.mxu0 0.0
        %3603 = vmatprep.subr.mxu0 0.0
        %3604 = vmatpush1.msra.mxu0 0.0
        %3605 = vmatprep.subr.mxu0 0.0
        %3606 = vmatpush1.msra.mxu0 0.0
        %3607 = vmatprep.subr.mxu0 0.0
        %3608 = vmatpush1.msra.mxu0 0.0
        %3609 = vmatprep.subr.mxu0 0.0
        %3610 = vmatpush1.msra.mxu0 0.0
        %3611 = vmatprep.subr.mxu0 0.0
        %3612 = vmatpush1.msra.mxu0 0.0
        %3613 = vmatprep.subr.mxu0 0.0
        %3614 = vmatpush1.msra.mxu0 0.0
        %3615 = vmatprep.subr.mxu0 0.0
        %3616 = vmatpush1.msra.mxu0 0.0
        %3617 = vmatprep.subr.mxu0 0.0
        %3618 = vmatpush1.msra.mxu0 0.0
        %3619 = vmatprep.subr.mxu0 0.0
        %3620 = vmatpush1.msra.mxu0 0.0
        %3621 = vmatprep.subr.mxu0 0.0
        %3622 = vmatpush1.msra.mxu0 0.0
        %3623 = vmatprep.mubr.f32.mxu0 0.0
        %3624 = vmatmul.mubr.f32.gmra.mrb[0].mxu0 %v2745
        %v3625 = vpop.f32.mrb[0].mxu0
        %v3626 = vadd.f32 0.0, %v3625
        %v3627 = vpop.f32.mrb[0].mxu0
        %v3628 = vadd.f32 0.0, %v3627
        %3629 = vmatprep.mubr.f32.mxu0 0.0
        %3630 = vmatmul.mubr.f32.gmra.mrb[0].mxu0 %v2748
        %v3631 = vpop.f32.mrb[0].mxu0
        %v3632 = vadd.f32 0.0, %v3631
        %v3633 = vpop.f32.mrb[0].mxu0
        %v3634 = vadd.f32 0.0, %v3633
        %3635 = vmatprep.mubr.f32.mxu0 0.0
        %3636 = vmatmul.mubr.f32.gmra.mrb[0].mxu0 %v2751
        %v3637 = vpop.f32.mrb[0].mxu0
        %v3638 = vadd.f32 0.0, %v3637
        %v3639 = vpop.f32.mrb[0].mxu0
        %v3640 = vadd.f32 0.0, %v3639
        %3641 = vmatprep.mubr.f32.mxu0 0.0
        %3642 = vmatmul.mubr.f32.gmra.mrb[0].mxu0 %v2754
        %v3643 = vpop.f32.mrb[0].mxu0
        %v3644 = vadd.f32 0.0, %v3643
        %v3645 = vpop.f32.mrb[0].mxu0
        %v3646 = vadd.f32 0.0, %v3645
        %3647 = vmatprep.mubr.f32.mxu0 0.0
        %3648 = vmatmul.mubr.f32.gmra.mrb[0].mxu0 %v2757
        %v3649 = vpop.f32.mrb[0].mxu0
        %v3650 = vadd.f32 0.0, %v3649
        %v3651 = vpop.f32.mrb[0].mxu0
        %v3652 = vadd.f32 0.0, %v3651
        %3653 = vmatprep.mubr.f32.mxu0 0.0
        %3654 = vmatmul.mubr.f32.gmra.mrb[0].mxu0 %v2760
        %v3655 = vpop.f32.mrb[0].mxu0
        %v3656 = vadd.f32 0.0, %v3655
        %v3657 = vpop.f32.mrb[0].mxu0
        %v3658 = vadd.f32 0.0, %v3657
        %3659 = vmatprep.mubr.f32.mxu0 0.0
        %3660 = vmatmul.mubr.f32.gmra.mrb[0].mxu0 %v2763
        %v3661 = vpop.f32.mrb[0].mxu0
        %v3662 = vadd.f32 0.0, %v3661
        %v3663 = vpop.f32.mrb[0].mxu0
        %v3664 = vadd.f32 0.0, %v3663
        %3665 = vmatprep.mubr.f32.mxu0 0.0
        %3666 = vmatmul.mubr.f32.gmra.mrb[0].mxu0 %v2766
        %v3667 = vpop.f32.mrb[0].mxu0
        %v3668 = vadd.f32 0.0, %v3667
        %v3669 = vpop.f32.mrb[0].mxu0
        %v3670 = vadd.f32 0.0, %v3669
        %3671 = vdwg.mxu0
        %v3672 = vld [vmem:[#allocation12] sm:$0xf]
        %v3674 = vlaneseq
        %v3675 = vshrl.u32 %v3674, 7
        %v3676 = vsub.s32 0, %v3675
        %v3677 = vrot.slane %v3672, %v3676
        %v3678 = vlaneseq
        %v3679 = vshrl.u32 %v3678, 7
        %v3680 = vsub.s32 1, %v3679
        %v3681 = vrot.slane %v3672, %v3680
        %v3682 = vlaneseq
        %v3683 = vshrl.u32 %v3682, 7
        %v3684 = vsub.s32 2, %v3683
        %v3685 = vrot.slane %v3672, %v3684
        %v3686 = vlaneseq
        %v3687 = vshrl.u32 %v3686, 7
        %v3688 = vsub.s32 3, %v3687
        %v3689 = vrot.slane %v3672, %v3688
        %v3694 = vadd.f32 %v2835, %v3677
        %v3695 = vadd.f32 %v2837, %v3681
        %v3696 = vadd.f32 %v2948, %v3685
        %v3697 = vadd.f32 %v2950, %v3689
        %v3698 = vadd.f32 %v2841, %v3677
        %v3699 = vadd.f32 %v2843, %v3681
        %v3700 = vadd.f32 %v2954, %v3685
        %v3701 = vadd.f32 %v2956, %v3689
        %v3702 = vadd.f32 %v2847, %v3677
        %v3703 = vadd.f32 %v2849, %v3681
        %v3704 = vadd.f32 %v2960, %v3685
        %v3705 = vadd.f32 %v2962, %v3689
        %v3706 = vadd.f32 %v2853, %v3677
        %v3707 = vadd.f32 %v2855, %v3681
        %v3708 = vadd.f32 %v2966, %v3685
        %v3709 = vadd.f32 %v2968, %v3689
        %v3710 = vadd.f32 %v2859, %v3677
        %v3711 = vadd.f32 %v2861, %v3681
        %v3712 = vadd.f32 %v2972, %v3685
        %v3713 = vadd.f32 %v2974, %v3689
        %v3714 = vadd.f32 %v2865, %v3677
        %v3715 = vadd.f32 %v2867, %v3681
        %v3716 = vadd.f32 %v2978, %v3685
        %v3717 = vadd.f32 %v2980, %v3689
        %v3718 = vadd.f32 %v2871, %v3677
        %v3719 = vadd.f32 %v2873, %v3681
        %v3720 = vadd.f32 %v2984, %v3685
        %v3721 = vadd.f32 %v2986, %v3689
        %v3722 = vadd.f32 %v2877, %v3677
        %v3723 = vadd.f32 %v2879, %v3681
        %v3724 = vadd.f32 %v2990, %v3685
        %v3725 = vadd.f32 %v2992, %v3689
        %v3726 = vmax.f32 %v3694, 0.0
        %v3727 = vmax.f32 %v3695, 0.0
        %v3728 = vmax.f32 %v3696, 0.0
        %v3729 = vmax.f32 %v3697, 0.0
        %v3730 = vmax.f32 %v3698, 0.0
        %v3731 = vmax.f32 %v3699, 0.0
        %v3732 = vmax.f32 %v3700, 0.0
        %v3733 = vmax.f32 %v3701, 0.0
        %v3734 = vmax.f32 %v3702, 0.0
        %v3735 = vmax.f32 %v3703, 0.0
        %v3736 = vmax.f32 %v3704, 0.0
        %v3737 = vmax.f32 %v3705, 0.0
        %v3738 = vmax.f32 %v3706, 0.0
        %v3739 = vmax.f32 %v3707, 0.0
        %v3740 = vmax.f32 %v3708, 0.0
        %v3741 = vmax.f32 %v3709, 0.0
        %v3742 = vmax.f32 %v3710, 0.0
        %v3743 = vmax.f32 %v3711, 0.0
        %v3744 = vmax.f32 %v3712, 0.0
        %v3745 = vmax.f32 %v3713, 0.0
        %v3746 = vmax.f32 %v3714, 0.0
        %v3747 = vmax.f32 %v3715, 0.0
        %v3748 = vmax.f32 %v3716, 0.0
        %v3749 = vmax.f32 %v3717, 0.0
        %v3750 = vmax.f32 %v3718, 0.0
        %v3751 = vmax.f32 %v3719, 0.0
        %v3752 = vmax.f32 %v3720, 0.0
        %v3753 = vmax.f32 %v3721, 0.0
        %v3754 = vmax.f32 %v3722, 0.0
        %v3755 = vmax.f32 %v3723, 0.0
        %v3756 = vmax.f32 %v3724, 0.0
        %v3757 = vmax.f32 %v3725, 0.0
        %v3758 = vand.u32 2147483647, %v3694
        %v3759 = vand.u32 2147483647, %v3695
        %v3760 = vand.u32 2147483647, %v3696
        %v3761 = vand.u32 2147483647, %v3697
        %v3762 = vand.u32 2147483647, %v3698
        %v3763 = vand.u32 2147483647, %v3699
        %v3764 = vand.u32 2147483647, %v3700
        %v3765 = vand.u32 2147483647, %v3701
        %v3766 = vand.u32 2147483647, %v3702
        %v3767 = vand.u32 2147483647, %v3703
        %v3768 = vand.u32 2147483647, %v3704
        %v3769 = vand.u32 2147483647, %v3705
        %v3770 = vand.u32 2147483647, %v3706
        %v3771 = vand.u32 2147483647, %v3707
        %v3772 = vand.u32 2147483647, %v3708
        %v3773 = vand.u32 2147483647, %v3709
        %v3774 = vand.u32 2147483647, %v3710
        %v3775 = vand.u32 2147483647, %v3711
        %v3776 = vand.u32 2147483647, %v3712
        %v3777 = vand.u32 2147483647, %v3713
        %v3778 = vand.u32 2147483647, %v3714
        %v3779 = vand.u32 2147483647, %v3715
        %v3780 = vand.u32 2147483647, %v3716
        %v3781 = vand.u32 2147483647, %v3717
        %v3782 = vand.u32 2147483647, %v3718
        %v3783 = vand.u32 2147483647, %v3719
        %v3784 = vand.u32 2147483647, %v3720
        %v3785 = vand.u32 2147483647, %v3721
        %v3786 = vand.u32 2147483647, %v3722
        %v3787 = vand.u32 2147483647, %v3723
        %v3788 = vand.u32 2147483647, %v3724
        %v3789 = vand.u32 2147483647, %v3725
        %v3790 = vsub.f32 0.0, %v3758
        %v3791 = vsub.f32 0.0, %v3759
        %v3792 = vsub.f32 0.0, %v3760
        %v3793 = vsub.f32 0.0, %v3761
        %v3794 = vsub.f32 0.0, %v3762
        %v3795 = vsub.f32 0.0, %v3763
        %v3796 = vsub.f32 0.0, %v3764
        %v3797 = vsub.f32 0.0, %v3765
        %v3798 = vsub.f32 0.0, %v3766
        %v3799 = vsub.f32 0.0, %v3767
        %v3800 = vsub.f32 0.0, %v3768
        %v3801 = vsub.f32 0.0, %v3769
        %v3802 = vsub.f32 0.0, %v3770
        %v3803 = vsub.f32 0.0, %v3771
        %v3804 = vsub.f32 0.0, %v3772
        %v3805 = vsub.f32 0.0, %v3773
        %v3806 = vsub.f32 0.0, %v3774
        %v3807 = vsub.f32 0.0, %v3775
        %v3808 = vsub.f32 0.0, %v3776
        %v3809 = vsub.f32 0.0, %v3777
        %v3810 = vsub.f32 0.0, %v3778
        %v3811 = vsub.f32 0.0, %v3779
        %v3812 = vsub.f32 0.0, %v3780
        %v3813 = vsub.f32 0.0, %v3781
        %v3814 = vsub.f32 0.0, %v3782
        %v3815 = vsub.f32 0.0, %v3783
        %v3816 = vsub.f32 0.0, %v3784
        %v3817 = vsub.f32 0.0, %v3785
        %v3818 = vsub.f32 0.0, %v3786
        %v3819 = vsub.f32 0.0, %v3787
        %v3820 = vsub.f32 0.0, %v3788
        %v3821 = vsub.f32 0.0, %v3789
        %v3822 = vmul.f32 %v3790, 1.442695
        %v3823 = vpow.pop %v3822
        %v3824 = vmul.f32 %v3791, 1.442695
        %v3825 = vpow.pop %v3824
        %v3826 = vmul.f32 %v3792, 1.442695
        %v3827 = vpow.pop %v3826
        %v3828 = vmul.f32 %v3793, 1.442695
        %v3829 = vpow.pop %v3828
        %v3830 = vmul.f32 %v3794, 1.442695
        %v3831 = vpow.pop %v3830
        %v3832 = vmul.f32 %v3795, 1.442695
        %v3833 = vpow.pop %v3832
        %v3834 = vmul.f32 %v3796, 1.442695
        %v3835 = vpow.pop %v3834
        %v3836 = vmul.f32 %v3797, 1.442695
        %v3837 = vpow.pop %v3836
        %v3838 = vmul.f32 %v3798, 1.442695
        %v3839 = vpow.pop %v3838
        %v3840 = vmul.f32 %v3799, 1.442695
        %v3841 = vpow.pop %v3840
        %v3842 = vmul.f32 %v3800, 1.442695
        %v3843 = vpow.pop %v3842
        %v3844 = vmul.f32 %v3801, 1.442695
        %v3845 = vpow.pop %v3844
        %v3846 = vmul.f32 %v3802, 1.442695
        %v3847 = vpow.pop %v3846
        %v3848 = vmul.f32 %v3803, 1.442695
        %v3849 = vpow.pop %v3848
        %v3850 = vmul.f32 %v3804, 1.442695
        %v3851 = vpow.pop %v3850
        %v3852 = vmul.f32 %v3805, 1.442695
        %v3853 = vpow.pop %v3852
        %v3854 = vmul.f32 %v3806, 1.442695
        %v3855 = vpow.pop %v3854
        %v3856 = vmul.f32 %v3807, 1.442695
        %v3857 = vpow.pop %v3856
        %v3858 = vmul.f32 %v3808, 1.442695
        %v3859 = vpow.pop %v3858
        %v3860 = vmul.f32 %v3809, 1.442695
        %v3861 = vpow.pop %v3860
        %v3862 = vmul.f32 %v3810, 1.442695
        %v3863 = vpow.pop %v3862
        %v3864 = vmul.f32 %v3811, 1.442695
        %v3865 = vpow.pop %v3864
        %v3866 = vmul.f32 %v3812, 1.442695
        %v3867 = vpow.pop %v3866
        %v3868 = vmul.f32 %v3813, 1.442695
        %v3869 = vpow.pop %v3868
        %v3870 = vmul.f32 %v3814, 1.442695
        %v3871 = vpow.pop %v3870
        %v3872 = vmul.f32 %v3815, 1.442695
        %v3873 = vpow.pop %v3872
        %v3874 = vmul.f32 %v3816, 1.442695
        %v3875 = vpow.pop %v3874
        %v3876 = vmul.f32 %v3817, 1.442695
        %v3877 = vpow.pop %v3876
        %v3878 = vmul.f32 %v3818, 1.442695
        %v3879 = vpow.pop %v3878
        %v3880 = vmul.f32 %v3819, 1.442695
        %v3881 = vpow.pop %v3880
        %v3882 = vmul.f32 %v3820, 1.442695
        %v3883 = vpow.pop %v3882
        %v3884 = vmul.f32 %v3821, 1.442695
        %v3885 = vpow.pop %v3884
        %v3886 = vadd.f32 %v3823, 1.0
        %v3887 = vadd.f32 %v3825, 1.0
        %v3888 = vadd.f32 %v3827, 1.0
        %v3889 = vadd.f32 %v3829, 1.0
        %v3890 = vadd.f32 %v3831, 1.0
        %v3891 = vadd.f32 %v3833, 1.0
        %v3892 = vadd.f32 %v3835, 1.0
        %v3893 = vadd.f32 %v3837, 1.0
        %v3894 = vadd.f32 %v3839, 1.0
        %v3895 = vadd.f32 %v3841, 1.0
        %v3896 = vadd.f32 %v3843, 1.0
        %v3897 = vadd.f32 %v3845, 1.0
        %v3898 = vadd.f32 %v3847, 1.0
        %v3899 = vadd.f32 %v3849, 1.0
        %v3900 = vadd.f32 %v3851, 1.0
        %v3901 = vadd.f32 %v3853, 1.0
        %v3902 = vadd.f32 %v3855, 1.0
        %v3903 = vadd.f32 %v3857, 1.0
        %v3904 = vadd.f32 %v3859, 1.0
        %v3905 = vadd.f32 %v3861, 1.0
        %v3906 = vadd.f32 %v3863, 1.0
        %v3907 = vadd.f32 %v3865, 1.0
        %v3908 = vadd.f32 %v3867, 1.0
        %v3909 = vadd.f32 %v3869, 1.0
        %v3910 = vadd.f32 %v3871, 1.0
        %v3911 = vadd.f32 %v3873, 1.0
        %v3912 = vadd.f32 %v3875, 1.0
        %v3913 = vadd.f32 %v3877, 1.0
        %v3914 = vadd.f32 %v3879, 1.0
        %v3915 = vadd.f32 %v3881, 1.0
        %v3916 = vadd.f32 %v3883, 1.0
        %v3917 = vadd.f32 %v3885, 1.0
        %v3918 = vlog2.pop %v3886
        %v3919 = vmul.f32 %v3918, 0.6931472
        %v3920 = vlog2.pop %v3887
        %v3921 = vmul.f32 %v3920, 0.6931472
        %v3922 = vlog2.pop %v3888
        %v3923 = vmul.f32 %v3922, 0.6931472
        %v3924 = vlog2.pop %v3889
        %v3925 = vmul.f32 %v3924, 0.6931472
        %v3926 = vlog2.pop %v3890
        %v3927 = vmul.f32 %v3926, 0.6931472
        %v3928 = vlog2.pop %v3891
        %v3929 = vmul.f32 %v3928, 0.6931472
        %v3930 = vlog2.pop %v3892
        %v3931 = vmul.f32 %v3930, 0.6931472
        %v3932 = vlog2.pop %v3893
        %v3933 = vmul.f32 %v3932, 0.6931472
        %v3934 = vlog2.pop %v3894
        %v3935 = vmul.f32 %v3934, 0.6931472
        %v3936 = vlog2.pop %v3895
        %v3937 = vmul.f32 %v3936, 0.6931472
        %v3938 = vlog2.pop %v3896
        %v3939 = vmul.f32 %v3938, 0.6931472
        %v3940 = vlog2.pop %v3897
        %v3941 = vmul.f32 %v3940, 0.6931472
        %v3942 = vlog2.pop %v3898
        %v3943 = vmul.f32 %v3942, 0.6931472
        %v3944 = vlog2.pop %v3899
        %v3945 = vmul.f32 %v3944, 0.6931472
        %v3946 = vlog2.pop %v3900
        %v3947 = vmul.f32 %v3946, 0.6931472
        %v3948 = vlog2.pop %v3901
        %v3949 = vmul.f32 %v3948, 0.6931472
        %v3950 = vlog2.pop %v3902
        %v3951 = vmul.f32 %v3950, 0.6931472
        %v3952 = vlog2.pop %v3903
        %v3953 = vmul.f32 %v3952, 0.6931472
        %v3954 = vlog2.pop %v3904
        %v3955 = vmul.f32 %v3954, 0.6931472
        %v3956 = vlog2.pop %v3905
        %v3957 = vmul.f32 %v3956, 0.6931472
        %v3958 = vlog2.pop %v3906
        %v3959 = vmul.f32 %v3958, 0.6931472
        %v3960 = vlog2.pop %v3907
        %v3961 = vmul.f32 %v3960, 0.6931472
        %v3962 = vlog2.pop %v3908
        %v3963 = vmul.f32 %v3962, 0.6931472
        %v3964 = vlog2.pop %v3909
        %v3965 = vmul.f32 %v3964, 0.6931472
        %v3966 = vlog2.pop %v3910
        %v3967 = vmul.f32 %v3966, 0.6931472
        %v3968 = vlog2.pop %v3911
        %v3969 = vmul.f32 %v3968, 0.6931472
        %v3970 = vlog2.pop %v3912
        %v3971 = vmul.f32 %v3970, 0.6931472
        %v3972 = vlog2.pop %v3913
        %v3973 = vmul.f32 %v3972, 0.6931472
        %v3974 = vlog2.pop %v3914
        %v3975 = vmul.f32 %v3974, 0.6931472
        %v3976 = vlog2.pop %v3915
        %v3977 = vmul.f32 %v3976, 0.6931472
        %v3978 = vlog2.pop %v3916
        %v3979 = vmul.f32 %v3978, 0.6931472
        %v3980 = vlog2.pop %v3917
        %v3981 = vmul.f32 %v3980, 0.6931472
        %v3982 = vadd.f32 %v3726, %v3919
        %v3983 = vadd.f32 %v3727, %v3921
        %v3984 = vadd.f32 %v3728, %v3923
        %v3985 = vadd.f32 %v3729, %v3925
        %v3986 = vadd.f32 %v3730, %v3927
        %v3987 = vadd.f32 %v3731, %v3929
        %v3988 = vadd.f32 %v3732, %v3931
        %v3989 = vadd.f32 %v3733, %v3933
        %v3990 = vadd.f32 %v3734, %v3935
        %v3991 = vadd.f32 %v3735, %v3937
        %v3992 = vadd.f32 %v3736, %v3939
        %v3993 = vadd.f32 %v3737, %v3941
        %v3994 = vadd.f32 %v3738, %v3943
        %v3995 = vadd.f32 %v3739, %v3945
        %v3996 = vadd.f32 %v3740, %v3947
        %v3997 = vadd.f32 %v3741, %v3949
        %v3998 = vadd.f32 %v3742, %v3951
        %v3999 = vadd.f32 %v3743, %v3953
        %v4000 = vadd.f32 %v3744, %v3955
        %v4001 = vadd.f32 %v3745, %v3957
        %v4002 = vadd.f32 %v3746, %v3959
        %v4003 = vadd.f32 %v3747, %v3961
        %v4004 = vadd.f32 %v3748, %v3963
        %v4005 = vadd.f32 %v3749, %v3965
        %v4006 = vadd.f32 %v3750, %v3967
        %v4007 = vadd.f32 %v3751, %v3969
        %v4008 = vadd.f32 %v3752, %v3971
        %v4009 = vadd.f32 %v3753, %v3973
        %v4010 = vadd.f32 %v3754, %v3975
        %v4011 = vadd.f32 %v3755, %v3977
        %v4012 = vadd.f32 %v3756, %v3979
        %v4013 = vadd.f32 %v3757, %v3981
        %v4014 = vld [vmem:[%s10] sm:$0xf]
        %v4016 = vlaneseq
        %v4017 = vshrl.u32 %v4016, 7
        %v4018 = vsub.s32 0, %v4017
        %v4019 = vrot.slane %v4014, %v4018
        %v4020 = vlaneseq
        %v4021 = vshrl.u32 %v4020, 7
        %v4022 = vsub.s32 1, %v4021
        %v4023 = vrot.slane %v4014, %v4022
        %v4024 = vlaneseq
        %v4025 = vshrl.u32 %v4024, 7
        %v4026 = vsub.s32 2, %v4025
        %v4027 = vrot.slane %v4014, %v4026
        %v4028 = vlaneseq
        %v4029 = vshrl.u32 %v4028, 7
        %v4030 = vsub.s32 3, %v4029
        %v4031 = vrot.slane %v4014, %v4030
        %v4036 = vmul.f32 %v3982, %v4019
        %v4037 = vmul.f32 %v3983, %v4023
        %v4038 = vmul.f32 %v3984, %v4027
        %v4039 = vmul.f32 %v3985, %v4031
        %v4040 = vmul.f32 %v3986, %v4019
        %v4041 = vmul.f32 %v3987, %v4023
        %v4042 = vmul.f32 %v3988, %v4027
        %v4043 = vmul.f32 %v3989, %v4031
        %v4044 = vmul.f32 %v3990, %v4019
        %v4045 = vmul.f32 %v3991, %v4023
        %v4046 = vmul.f32 %v3992, %v4027
        %v4047 = vmul.f32 %v3993, %v4031
        %v4048 = vmul.f32 %v3994, %v4019
        %v4049 = vmul.f32 %v3995, %v4023
        %v4050 = vmul.f32 %v3996, %v4027
        %v4051 = vmul.f32 %v3997, %v4031
        %v4052 = vmul.f32 %v3998, %v4019
        %v4053 = vmul.f32 %v3999, %v4023
        %v4054 = vmul.f32 %v4000, %v4027
        %v4055 = vmul.f32 %v4001, %v4031
        %v4056 = vmul.f32 %v4002, %v4019
        %v4057 = vmul.f32 %v4003, %v4023
        %v4058 = vmul.f32 %v4004, %v4027
        %v4059 = vmul.f32 %v4005, %v4031
        %v4060 = vmul.f32 %v4006, %v4019
        %v4061 = vmul.f32 %v4007, %v4023
        %v4062 = vmul.f32 %v4008, %v4027
        %v4063 = vmul.f32 %v4009, %v4031
        %v4064 = vmul.f32 %v4010, %v4019
        %v4065 = vmul.f32 %v4011, %v4023
        %v4066 = vmul.f32 %v4012, %v4027
        %v4067 = vmul.f32 %v4013, %v4031
        %v4068 = vmul.f32 %v4036, 1.442695
        %v4069 = vpow.pop %v4068
        %v4070 = vmul.f32 %v4037, 1.442695
        %v4071 = vpow.pop %v4070
        %v4072 = vmul.f32 %v4038, 1.442695
        %v4073 = vpow.pop %v4072
        %v4074 = vmul.f32 %v4039, 1.442695
        %v4075 = vpow.pop %v4074
        %v4076 = vmul.f32 %v4040, 1.442695
        %v4077 = vpow.pop %v4076
        %v4078 = vmul.f32 %v4041, 1.442695
        %v4079 = vpow.pop %v4078
        %v4080 = vmul.f32 %v4042, 1.442695
        %v4081 = vpow.pop %v4080
        %v4082 = vmul.f32 %v4043, 1.442695
        %v4083 = vpow.pop %v4082
        %v4084 = vmul.f32 %v4044, 1.442695
        %v4085 = vpow.pop %v4084
        %v4086 = vmul.f32 %v4045, 1.442695
        %v4087 = vpow.pop %v4086
        %v4088 = vmul.f32 %v4046, 1.442695
        %v4089 = vpow.pop %v4088
        %v4090 = vmul.f32 %v4047, 1.442695
        %v4091 = vpow.pop %v4090
        %v4092 = vmul.f32 %v4048, 1.442695
        %v4093 = vpow.pop %v4092
        %v4094 = vmul.f32 %v4049, 1.442695
        %v4095 = vpow.pop %v4094
        %v4096 = vmul.f32 %v4050, 1.442695
        %v4097 = vpow.pop %v4096
        %v4098 = vmul.f32 %v4051, 1.442695
        %v4099 = vpow.pop %v4098
        %v4100 = vmul.f32 %v4052, 1.442695
        %v4101 = vpow.pop %v4100
        %v4102 = vmul.f32 %v4053, 1.442695
        %v4103 = vpow.pop %v4102
        %v4104 = vmul.f32 %v4054, 1.442695
        %v4105 = vpow.pop %v4104
        %v4106 = vmul.f32 %v4055, 1.442695
        %v4107 = vpow.pop %v4106
        %v4108 = vmul.f32 %v4056, 1.442695
        %v4109 = vpow.pop %v4108
        %v4110 = vmul.f32 %v4057, 1.442695
        %v4111 = vpow.pop %v4110
        %v4112 = vmul.f32 %v4058, 1.442695
        %v4113 = vpow.pop %v4112
        %v4114 = vmul.f32 %v4059, 1.442695
        %v4115 = vpow.pop %v4114
        %v4116 = vmul.f32 %v4060, 1.442695
        %v4117 = vpow.pop %v4116
        %v4118 = vmul.f32 %v4061, 1.442695
        %v4119 = vpow.pop %v4118
        %v4120 = vmul.f32 %v4062, 1.442695
        %v4121 = vpow.pop %v4120
        %v4122 = vmul.f32 %v4063, 1.442695
        %v4123 = vpow.pop %v4122
        %v4124 = vmul.f32 %v4064, 1.442695
        %v4125 = vpow.pop %v4124
        %v4126 = vmul.f32 %v4065, 1.442695
        %v4127 = vpow.pop %v4126
        %v4128 = vmul.f32 %v4066, 1.442695
        %v4129 = vpow.pop %v4128
        %v4130 = vmul.f32 %v4067, 1.442695
        %v4131 = vpow.pop %v4130
        %4132 = vst [vmem:[#allocation4] sm:$0xff] %v4069
        %4133 = vst [vmem:[#allocation4 + $0x8] sm:$0xff] %v4071
        %4134 = vst [vmem:[#allocation4 + $0x10] sm:$0xff] %v4073
        %4135 = vst [vmem:[#allocation4 + $0x18] sm:$0xff] %v4075
        %4136 = vst [vmem:[#allocation4 + $0x20] sm:$0xff] %v4077
        %4137 = vst [vmem:[#allocation4 + $0x28] sm:$0xff] %v4079
        %4138 = vst [vmem:[#allocation4 + $0x30] sm:$0xff] %v4081
        %4139 = vst [vmem:[#allocation4 + $0x38] sm:$0xff] %v4083
        %4140 = vst [vmem:[#allocation4 + $0x40] sm:$0xff] %v4085
        %4141 = vst [vmem:[#allocation4 + $0x48] sm:$0xff] %v4087
        %4142 = vst [vmem:[#allocation4 + $0x50] sm:$0xff] %v4089
        %4143 = vst [vmem:[#allocation4 + $0x58] sm:$0xff] %v4091
        %4144 = vst [vmem:[#allocation4 + $0x60] sm:$0xff] %v4093
        %4145 = vst [vmem:[#allocation4 + $0x68] sm:$0xff] %v4095
        %4146 = vst [vmem:[#allocation4 + $0x70] sm:$0xff] %v4097
        %4147 = vst [vmem:[#allocation4 + $0x78] sm:$0xff] %v4099
        %4148 = vst [vmem:[#allocation4 + $0x80] sm:$0xff] %v4101
        %4149 = vst [vmem:[#allocation4 + $0x88] sm:$0xff] %v4103
        %4150 = vst [vmem:[#allocation4 + $0x90] sm:$0xff] %v4105
        %4151 = vst [vmem:[#allocation4 + $0x98] sm:$0xff] %v4107
        %4152 = vst [vmem:[#allocation4 + $0xa0] sm:$0xff] %v4109
        %4153 = vst [vmem:[#allocation4 + $0xa8] sm:$0xff] %v4111
        %4154 = vst [vmem:[#allocation4 + $0xb0] sm:$0xff] %v4113
        %4155 = vst [vmem:[#allocation4 + $0xb8] sm:$0xff] %v4115
        %4156 = vst [vmem:[#allocation4 + $0xc0] sm:$0xff] %v4117
        %4157 = vst [vmem:[#allocation4 + $0xc8] sm:$0xff] %v4119
        %4158 = vst [vmem:[#allocation4 + $0xd0] sm:$0xff] %v4121
        %4159 = vst [vmem:[#allocation4 + $0xd8] sm:$0xff] %v4123
        %4160 = vst [vmem:[#allocation4 + $0xe0] sm:$0xff] %v4125
        %4161 = vst [vmem:[#allocation4 + $0xe8] sm:$0xff] %v4127
        %4162 = vst [vmem:[#allocation4 + $0xf0] sm:$0xff] %v4129
        %4163 = vst [vmem:[#allocation4 + $0xf8] sm:$0xff] %v4131
        %v4164 = vmul.f32 %v3982, %v3513
        %v4165 = vmul.f32 %v3983, %v3515
        %v4166 = vmul.f32 %v3984, %v3626
        %v4167 = vmul.f32 %v3985, %v3628
        %v4168 = vmul.f32 %v3986, %v3519
        %v4169 = vmul.f32 %v3987, %v3521
        %v4170 = vmul.f32 %v3988, %v3632
        %v4171 = vmul.f32 %v3989, %v3634
        %v4172 = vmul.f32 %v3990, %v3525
        %v4173 = vmul.f32 %v3991, %v3527
        %v4174 = vmul.f32 %v3992, %v3638
        %v4175 = vmul.f32 %v3993, %v3640
        %v4176 = vmul.f32 %v3994, %v3531
        %v4177 = vmul.f32 %v3995, %v3533
        %v4178 = vmul.f32 %v3996, %v3644
        %v4179 = vmul.f32 %v3997, %v3646
        %v4180 = vmul.f32 %v3998, %v3537
        %v4181 = vmul.f32 %v3999, %v3539
        %v4182 = vmul.f32 %v4000, %v3650
        %v4183 = vmul.f32 %v4001, %v3652
        %v4184 = vmul.f32 %v4002, %v3543
        %v4185 = vmul.f32 %v4003, %v3545
        %v4186 = vmul.f32 %v4004, %v3656
        %v4187 = vmul.f32 %v4005, %v3658
        %v4188 = vmul.f32 %v4006, %v3549
        %v4189 = vmul.f32 %v4007, %v3551
        %v4190 = vmul.f32 %v4008, %v3662
        %v4191 = vmul.f32 %v4009, %v3664
        %v4192 = vmul.f32 %v4010, %v3555
        %v4193 = vmul.f32 %v4011, %v3557
        %v4194 = vmul.f32 %v4012, %v3668
        %v4195 = vmul.f32 %v4013, %v3670
        %v4196 = vmul.f32 %v4164, %v3061
        %v4197 = vmul.f32 %v4165, %v3063
        %v4198 = vmul.f32 %v4166, %v3174
        %v4199 = vmul.f32 %v4167, %v3176
        %v4200 = vmul.f32 %v4168, %v3067
        %v4201 = vmul.f32 %v4169, %v3069
        %v4202 = vmul.f32 %v4170, %v3180
        %v4203 = vmul.f32 %v4171, %v3182
        %v4204 = vmul.f32 %v4172, %v3073
        %v4205 = vmul.f32 %v4173, %v3075
        %v4206 = vmul.f32 %v4174, %v3186
        %v4207 = vmul.f32 %v4175, %v3188
        %v4208 = vmul.f32 %v4176, %v3079
        %v4209 = vmul.f32 %v4177, %v3081
        %v4210 = vmul.f32 %v4178, %v3192
        %v4211 = vmul.f32 %v4179, %v3194
        %v4212 = vmul.f32 %v4180, %v3085
        %v4213 = vmul.f32 %v4181, %v3087
        %v4214 = vmul.f32 %v4182, %v3198
        %v4215 = vmul.f32 %v4183, %v3200
        %v4216 = vmul.f32 %v4184, %v3091
        %v4217 = vmul.f32 %v4185, %v3093
        %v4218 = vmul.f32 %v4186, %v3204
        %v4219 = vmul.f32 %v4187, %v3206
        %v4220 = vmul.f32 %v4188, %v3097
        %v4221 = vmul.f32 %v4189, %v3099
        %v4222 = vmul.f32 %v4190, %v3210
        %v4223 = vmul.f32 %v4191, %v3212
        %v4224 = vmul.f32 %v4192, %v3103
        %v4225 = vmul.f32 %v4193, %v3105
        %v4226 = vmul.f32 %v4194, %v3216
        %v4227 = vmul.f32 %v4195, %v3218
        %4228 = vst [vmem:[#allocation5] sm:$0xff] %v4196
        %4229 = vst [vmem:[#allocation5 + $0x8] sm:$0xff] %v4197
        %4230 = vst [vmem:[#allocation5 + $0x10] sm:$0xff] %v4198
        %4231 = vst [vmem:[#allocation5 + $0x18] sm:$0xff] %v4199
        %4232 = vst [vmem:[#allocation5 + $0x20] sm:$0xff] %v4200
        %4233 = vst [vmem:[#allocation5 + $0x28] sm:$0xff] %v4201
        %4234 = vst [vmem:[#allocation5 + $0x30] sm:$0xff] %v4202
        %4235 = vst [vmem:[#allocation5 + $0x38] sm:$0xff] %v4203
        %4236 = vst [vmem:[#allocation5 + $0x40] sm:$0xff] %v4204
        %4237 = vst [vmem:[#allocation5 + $0x48] sm:$0xff] %v4205
        %4238 = vst [vmem:[#allocation5 + $0x50] sm:$0xff] %v4206
        %4239 = vst [vmem:[#allocation5 + $0x58] sm:$0xff] %v4207
        %4240 = vst [vmem:[#allocation5 + $0x60] sm:$0xff] %v4208
        %4241 = vst [vmem:[#allocation5 + $0x68] sm:$0xff] %v4209
        %4242 = vst [vmem:[#allocation5 + $0x70] sm:$0xff] %v4210
        %4243 = vst [vmem:[#allocation5 + $0x78] sm:$0xff] %v4211
        %4244 = vst [vmem:[#allocation5 + $0x80] sm:$0xff] %v4212
        %4245 = vst [vmem:[#allocation5 + $0x88] sm:$0xff] %v4213
        %4246 = vst [vmem:[#allocation5 + $0x90] sm:$0xff] %v4214
        %4247 = vst [vmem:[#allocation5 + $0x98] sm:$0xff] %v4215
        %4248 = vst [vmem:[#allocation5 + $0xa0] sm:$0xff] %v4216
        %4249 = vst [vmem:[#allocation5 + $0xa8] sm:$0xff] %v4217
        %4250 = vst [vmem:[#allocation5 + $0xb0] sm:$0xff] %v4218
        %4251 = vst [vmem:[#allocation5 + $0xb8] sm:$0xff] %v4219
        %4252 = vst [vmem:[#allocation5 + $0xc0] sm:$0xff] %v4220
        %4253 = vst [vmem:[#allocation5 + $0xc8] sm:$0xff] %v4221
        %4254 = vst [vmem:[#allocation5 + $0xd0] sm:$0xff] %v4222
        %4255 = vst [vmem:[#allocation5 + $0xd8] sm:$0xff] %v4223
        %4256 = vst [vmem:[#allocation5 + $0xe0] sm:$0xff] %v4224
        %4257 = vst [vmem:[#allocation5 + $0xe8] sm:$0xff] %v4225
        %4258 = vst [vmem:[#allocation5 + $0xf0] sm:$0xff] %v4226
        %4259 = vst [vmem:[#allocation5 + $0xf8] sm:$0xff] %v4227
        %v4260 = vld [vmem:[#allocation4] ss:$8 sm:$0xf]
        %v4261 = vmul.f32 %v4260, 0.0
        %v4262 = vld [vmem:[#allocation5] ss:$8 sm:$0xf]
        %v4263 = vadd.f32 %v4261, %v4262
        %v4264 = vlaneseq
        %vm4265 = vcmp.ge.s32.totalorder %v4264, 0
        %vm4266 = vcmp.lt.s32.totalorder %v4264, 512
        %vm4267 = vmand %vm4265, %vm4266
        %4268 = vst.msk [vmem:[#allocation6] ss:$8 sm:$0xf] %vm4267, %v4263
        %4269 = vst.msk [vmem:[#allocation6] ss:$8 sm:$0x0] %vm4267, %v4263
        %s4270 = scalar_lea.vmem [#allocation4], 1
        %v4271 = vld [vmem:[%s4270] ss:$8 sm:$0xf]
        %v4272 = vmul.f32 %v4271, %v4263
        %s4273 = scalar_lea.vmem [#allocation5], 1
        %v4274 = vld [vmem:[%s4273] ss:$8 sm:$0xf]
        %v4275 = vadd.f32 %v4272, %v4274
        %s4276 = scalar_lea.vmem [#allocation6], 1
        %4277 = vst.msk [vmem:[%s4276] ss:$8 sm:$0xf] %vm4267, %v4275
        %4278 = vst.msk [vmem:[%s4276] ss:$8 sm:$0x0] %vm4267, %v4275
        %s4279 = scalar_lea.vmem [#allocation4], 2
        %v4280 = vld [vmem:[%s4279] ss:$8 sm:$0xf]
        %v4281 = vmul.f32 %v4280, %v4275
        %s4282 = scalar_lea.vmem [#allocation5], 2
        %v4283 = vld [vmem:[%s4282] ss:$8 sm:$0xf]
        %v4284 = vadd.f32 %v4281, %v4283
        %s4285 = scalar_lea.vmem [#allocation6], 2
        %4286 = vst.msk [vmem:[%s4285] ss:$8 sm:$0xf] %vm4267, %v4284
        %4287 = vst.msk [vmem:[%s4285] ss:$8 sm:$0x0] %vm4267, %v4284
        %s4288 = scalar_lea.vmem [#allocation4], 3
        %v4289 = vld [vmem:[%s4288] ss:$8 sm:$0xf]
        %v4290 = vmul.f32 %v4289, %v4284
        %s4291 = scalar_lea.vmem [#allocation5], 3
        %v4292 = vld [vmem:[%s4291] ss:$8 sm:$0xf]
        %v4293 = vadd.f32 %v4290, %v4292
        %s4294 = scalar_lea.vmem [#allocation6], 3
        %4295 = vst.msk [vmem:[%s4294] ss:$8 sm:$0xf] %vm4267, %v4293
        %4296 = vst.msk [vmem:[%s4294] ss:$8 sm:$0x0] %vm4267, %v4293
        %s4297 = scalar_lea.vmem [#allocation4], 4
        %v4298 = vld [vmem:[%s4297] ss:$8 sm:$0xf]
        %v4299 = vmul.f32 %v4298, %v4293
        %s4300 = scalar_lea.vmem [#allocation5], 4
        %v4301 = vld [vmem:[%s4300] ss:$8 sm:$0xf]
        %v4302 = vadd.f32 %v4299, %v4301
        %s4303 = scalar_lea.vmem [#allocation6], 4
        %4304 = vst.msk [vmem:[%s4303] ss:$8 sm:$0xf] %vm4267, %v4302
        %4305 = vst.msk [vmem:[%s4303] ss:$8 sm:$0x0] %vm4267, %v4302
        %s4306 = scalar_lea.vmem [#allocation4], 5
        %v4307 = vld [vmem:[%s4306] ss:$8 sm:$0xf]
        %v4308 = vmul.f32 %v4307, %v4302
        %s4309 = scalar_lea.vmem [#allocation5], 5
        %v4310 = vld [vmem:[%s4309] ss:$8 sm:$0xf]
        %v4311 = vadd.f32 %v4308, %v4310
        %s4312 = scalar_lea.vmem [#allocation6], 5
        %4313 = vst.msk [vmem:[%s4312] ss:$8 sm:$0xf] %vm4267, %v4311
        %4314 = vst.msk [vmem:[%s4312] ss:$8 sm:$0x0] %vm4267, %v4311
        %s4315 = scalar_lea.vmem [#allocation4], 6
        %v4316 = vld [vmem:[%s4315] ss:$8 sm:$0xf]
        %v4317 = vmul.f32 %v4316, %v4311
        %s4318 = scalar_lea.vmem [#allocation5], 6
        %v4319 = vld [vmem:[%s4318] ss:$8 sm:$0xf]
        %v4320 = vadd.f32 %v4317, %v4319
        %s4321 = scalar_lea.vmem [#allocation6], 6
        %4322 = vst.msk [vmem:[%s4321] ss:$8 sm:$0xf] %vm4267, %v4320
        %4323 = vst.msk [vmem:[%s4321] ss:$8 sm:$0x0] %vm4267, %v4320
        %s4324 = scalar_lea.vmem [#allocation4], 7
        %v4325 = vld [vmem:[%s4324] ss:$8 sm:$0xf]
        %v4326 = vmul.f32 %v4325, %v4320
        %s4327 = scalar_lea.vmem [#allocation5], 7
        %v4328 = vld [vmem:[%s4327] ss:$8 sm:$0xf]
        %v4329 = vadd.f32 %v4326, %v4328
        %s4330 = scalar_lea.vmem [#allocation6], 7
        %4331 = vst.msk [vmem:[%s4330] ss:$8 sm:$0xf] %vm4267, %v4329
        %4332 = vst.msk [vmem:[%s4330] ss:$8 sm:$0x0] %vm4267, %v4329
        %s4333 = scalar_lea.vmem [#allocation4], 32
        %v4334 = vld [vmem:[%s4333] ss:$8 sm:$0xf]
        %v4335 = vmul.f32 %v4334, %v4329
        %s4336 = scalar_lea.vmem [#allocation5], 32
        %v4337 = vld [vmem:[%s4336] ss:$8 sm:$0xf]
        %v4338 = vadd.f32 %v4335, %v4337
        %s4339 = scalar_lea.vmem [#allocation6], 32
        %4340 = vst.msk [vmem:[%s4339] ss:$8 sm:$0xf] %vm4267, %v4338
        %4341 = vst.msk [vmem:[%s4339] ss:$8 sm:$0x0] %vm4267, %v4338
        %s4342 = scalar_lea.vmem [#allocation4], 33
        %v4343 = vld [vmem:[%s4342] ss:$8 sm:$0xf]
        %v4344 = vmul.f32 %v4343, %v4338
        %s4345 = scalar_lea.vmem [#allocation5], 33
        %v4346 = vld [vmem:[%s4345] ss:$8 sm:$0xf]
        %v4347 = vadd.f32 %v4344, %v4346
        %s4348 = scalar_lea.vmem [#allocation6], 33
        %4349 = vst.msk [vmem:[%s4348] ss:$8 sm:$0xf] %vm4267, %v4347
        %4350 = vst.msk [vmem:[%s4348] ss:$8 sm:$0x0] %vm4267, %v4347
        %s4351 = scalar_lea.vmem [#allocation4], 34
        %v4352 = vld [vmem:[%s4351] ss:$8 sm:$0xf]
        %v4353 = vmul.f32 %v4352, %v4347
        %s4354 = scalar_lea.vmem [#allocation5], 34
        %v4355 = vld [vmem:[%s4354] ss:$8 sm:$0xf]
        %v4356 = vadd.f32 %v4353, %v4355
        %s4357 = scalar_lea.vmem [#allocation6], 34
        %4358 = vst.msk [vmem:[%s4357] ss:$8 sm:$0xf] %vm4267, %v4356
        %4359 = vst.msk [vmem:[%s4357] ss:$8 sm:$0x0] %vm4267, %v4356
        %s4360 = scalar_lea.vmem [#allocation4], 35
        %v4361 = vld [vmem:[%s4360] ss:$8 sm:$0xf]
        %v4362 = vmul.f32 %v4361, %v4356
        %s4363 = scalar_lea.vmem [#allocation5], 35
        %v4364 = vld [vmem:[%s4363] ss:$8 sm:$0xf]
        %v4365 = vadd.f32 %v4362, %v4364
        %s4366 = scalar_lea.vmem [#allocation6], 35
        %4367 = vst.msk [vmem:[%s4366] ss:$8 sm:$0xf] %vm4267, %v4365
        %4368 = vst.msk [vmem:[%s4366] ss:$8 sm:$0x0] %vm4267, %v4365
        %s4369 = scalar_lea.vmem [#allocation4], 36
        %v4370 = vld [vmem:[%s4369] ss:$8 sm:$0xf]
        %v4371 = vmul.f32 %v4370, %v4365
        %s4372 = scalar_lea.vmem [#allocation5], 36
        %v4373 = vld [vmem:[%s4372] ss:$8 sm:$0xf]
        %v4374 = vadd.f32 %v4371, %v4373
        %s4375 = scalar_lea.vmem [#allocation6], 36
        %4376 = vst.msk [vmem:[%s4375] ss:$8 sm:$0xf] %vm4267, %v4374
        %4377 = vst.msk [vmem:[%s4375] ss:$8 sm:$0x0] %vm4267, %v4374
        %s4378 = scalar_lea.vmem [#allocation4], 37
        %v4379 = vld [vmem:[%s4378] ss:$8 sm:$0xf]
        %v4380 = vmul.f32 %v4379, %v4374
        %s4381 = scalar_lea.vmem [#allocation5], 37
        %v4382 = vld [vmem:[%s4381] ss:$8 sm:$0xf]
        %v4383 = vadd.f32 %v4380, %v4382
        %s4384 = scalar_lea.vmem [#allocation6], 37
        %4385 = vst.msk [vmem:[%s4384] ss:$8 sm:$0xf] %vm4267, %v4383
        %4386 = vst.msk [vmem:[%s4384] ss:$8 sm:$0x0] %vm4267, %v4383
        %s4387 = scalar_lea.vmem [#allocation4], 38
        %v4388 = vld [vmem:[%s4387] ss:$8 sm:$0xf]
        %v4389 = vmul.f32 %v4388, %v4383
        %s4390 = scalar_lea.vmem [#allocation5], 38
        %v4391 = vld [vmem:[%s4390] ss:$8 sm:$0xf]
        %v4392 = vadd.f32 %v4389, %v4391
        %s4393 = scalar_lea.vmem [#allocation6], 38
        %4394 = vst.msk [vmem:[%s4393] ss:$8 sm:$0xf] %vm4267, %v4392
        %4395 = vst.msk [vmem:[%s4393] ss:$8 sm:$0x0] %vm4267, %v4392
        %s4396 = scalar_lea.vmem [#allocation4], 39
        %v4397 = vld [vmem:[%s4396] ss:$8 sm:$0xf]
        %v4398 = vmul.f32 %v4397, %v4392
        %s4399 = scalar_lea.vmem [#allocation5], 39
        %v4400 = vld [vmem:[%s4399] ss:$8 sm:$0xf]
        %v4401 = vadd.f32 %v4398, %v4400
        %s4402 = scalar_lea.vmem [#allocation6], 39
        %4403 = vst.msk [vmem:[%s4402] ss:$8 sm:$0xf] %vm4267, %v4401
        %4404 = vst.msk [vmem:[%s4402] ss:$8 sm:$0x0] %vm4267, %v4401
        %s4405 = scalar_lea.vmem [#allocation4], 64
        %v4406 = vld [vmem:[%s4405] ss:$8 sm:$0xf]
        %v4407 = vmul.f32 %v4406, %v4401
        %s4408 = scalar_lea.vmem [#allocation5], 64
        %v4409 = vld [vmem:[%s4408] ss:$8 sm:$0xf]
        %v4410 = vadd.f32 %v4407, %v4409
        %s4411 = scalar_lea.vmem [#allocation6], 64
        %4412 = vst.msk [vmem:[%s4411] ss:$8 sm:$0xf] %vm4267, %v4410
        %4413 = vst.msk [vmem:[%s4411] ss:$8 sm:$0x0] %vm4267, %v4410
        %s4414 = scalar_lea.vmem [#allocation4], 65
        %v4415 = vld [vmem:[%s4414] ss:$8 sm:$0xf]
        %v4416 = vmul.f32 %v4415, %v4410
        %s4417 = scalar_lea.vmem [#allocation5], 65
        %v4418 = vld [vmem:[%s4417] ss:$8 sm:$0xf]
        %v4419 = vadd.f32 %v4416, %v4418
        %s4420 = scalar_lea.vmem [#allocation6], 65
        %4421 = vst.msk [vmem:[%s4420] ss:$8 sm:$0xf] %vm4267, %v4419
        %4422 = vst.msk [vmem:[%s4420] ss:$8 sm:$0x0] %vm4267, %v4419
        %s4423 = scalar_lea.vmem [#allocation4], 66
        %v4424 = vld [vmem:[%s4423] ss:$8 sm:$0xf]
        %v4425 = vmul.f32 %v4424, %v4419
        %s4426 = scalar_lea.vmem [#allocation5], 66
        %v4427 = vld [vmem:[%s4426] ss:$8 sm:$0xf]
        %v4428 = vadd.f32 %v4425, %v4427
        %s4429 = scalar_lea.vmem [#allocation6], 66
        %4430 = vst.msk [vmem:[%s4429] ss:$8 sm:$0xf] %vm4267, %v4428
        %4431 = vst.msk [vmem:[%s4429] ss:$8 sm:$0x0] %vm4267, %v4428
        %s4432 = scalar_lea.vmem [#allocation4], 67
        %v4433 = vld [vmem:[%s4432] ss:$8 sm:$0xf]
        %v4434 = vmul.f32 %v4433, %v4428
        %s4435 = scalar_lea.vmem [#allocation5], 67
        %v4436 = vld [vmem:[%s4435] ss:$8 sm:$0xf]
        %v4437 = vadd.f32 %v4434, %v4436
        %s4438 = scalar_lea.vmem [#allocation6], 67
        %4439 = vst.msk [vmem:[%s4438] ss:$8 sm:$0xf] %vm4267, %v4437
        %4440 = vst.msk [vmem:[%s4438] ss:$8 sm:$0x0] %vm4267, %v4437
        %s4441 = scalar_lea.vmem [#allocation4], 68
        %v4442 = vld [vmem:[%s4441] ss:$8 sm:$0xf]
        %v4443 = vmul.f32 %v4442, %v4437
        %s4444 = scalar_lea.vmem [#allocation5], 68
        %v4445 = vld [vmem:[%s4444] ss:$8 sm:$0xf]
        %v4446 = vadd.f32 %v4443, %v4445
        %s4447 = scalar_lea.vmem [#allocation6], 68
        %4448 = vst.msk [vmem:[%s4447] ss:$8 sm:$0xf] %vm4267, %v4446
        %4449 = vst.msk [vmem:[%s4447] ss:$8 sm:$0x0] %vm4267, %v4446
        %s4450 = scalar_lea.vmem [#allocation4], 69
        %v4451 = vld [vmem:[%s4450] ss:$8 sm:$0xf]
        %v4452 = vmul.f32 %v4451, %v4446
        %s4453 = scalar_lea.vmem [#allocation5], 69
        %v4454 = vld [vmem:[%s4453] ss:$8 sm:$0xf]
        %v4455 = vadd.f32 %v4452, %v4454
        %s4456 = scalar_lea.vmem [#allocation6], 69
        %4457 = vst.msk [vmem:[%s4456] ss:$8 sm:$0xf] %vm4267, %v4455
        %4458 = vst.msk [vmem:[%s4456] ss:$8 sm:$0x0] %vm4267, %v4455
        %s4459 = scalar_lea.vmem [#allocation4], 70
        %v4460 = vld [vmem:[%s4459] ss:$8 sm:$0xf]
        %v4461 = vmul.f32 %v4460, %v4455
        %s4462 = scalar_lea.vmem [#allocation5], 70
        %v4463 = vld [vmem:[%s4462] ss:$8 sm:$0xf]
        %v4464 = vadd.f32 %v4461, %v4463
        %s4465 = scalar_lea.vmem [#allocation6], 70
        %4466 = vst.msk [vmem:[%s4465] ss:$8 sm:$0xf] %vm4267, %v4464
        %4467 = vst.msk [vmem:[%s4465] ss:$8 sm:$0x0] %vm4267, %v4464
        %s4468 = scalar_lea.vmem [#allocation4], 71
        %v4469 = vld [vmem:[%s4468] ss:$8 sm:$0xf]
        %v4470 = vmul.f32 %v4469, %v4464
        %s4471 = scalar_lea.vmem [#allocation5], 71
        %v4472 = vld [vmem:[%s4471] ss:$8 sm:$0xf]
        %v4473 = vadd.f32 %v4470, %v4472
        %s4474 = scalar_lea.vmem [#allocation6], 71
        %4475 = vst.msk [vmem:[%s4474] ss:$8 sm:$0xf] %vm4267, %v4473
        %4476 = vst.msk [vmem:[%s4474] ss:$8 sm:$0x0] %vm4267, %v4473
        %s4477 = scalar_lea.vmem [#allocation4], 96
        %v4478 = vld [vmem:[%s4477] ss:$8 sm:$0xf]
        %v4479 = vmul.f32 %v4478, %v4473
        %s4480 = scalar_lea.vmem [#allocation5], 96
        %v4481 = vld [vmem:[%s4480] ss:$8 sm:$0xf]
        %v4482 = vadd.f32 %v4479, %v4481
        %s4483 = scalar_lea.vmem [#allocation6], 96
        %4484 = vst.msk [vmem:[%s4483] ss:$8 sm:$0xf] %vm4267, %v4482
        %4485 = vst.msk [vmem:[%s4483] ss:$8 sm:$0x0] %vm4267, %v4482
        %s4486 = scalar_lea.vmem [#allocation4], 97
        %v4487 = vld [vmem:[%s4486] ss:$8 sm:$0xf]
        %v4488 = vmul.f32 %v4487, %v4482
        %s4489 = scalar_lea.vmem [#allocation5], 97
        %v4490 = vld [vmem:[%s4489] ss:$8 sm:$0xf]
        %v4491 = vadd.f32 %v4488, %v4490
        %s4492 = scalar_lea.vmem [#allocation6], 97
        %4493 = vst.msk [vmem:[%s4492] ss:$8 sm:$0xf] %vm4267, %v4491
        %4494 = vst.msk [vmem:[%s4492] ss:$8 sm:$0x0] %vm4267, %v4491
        %s4495 = scalar_lea.vmem [#allocation4], 98
        %v4496 = vld [vmem:[%s4495] ss:$8 sm:$0xf]
        %v4497 = vmul.f32 %v4496, %v4491
        %s4498 = scalar_lea.vmem [#allocation5], 98
        %v4499 = vld [vmem:[%s4498] ss:$8 sm:$0xf]
        %v4500 = vadd.f32 %v4497, %v4499
        %s4501 = scalar_lea.vmem [#allocation6], 98
        %4502 = vst.msk [vmem:[%s4501] ss:$8 sm:$0xf] %vm4267, %v4500
        %4503 = vst.msk [vmem:[%s4501] ss:$8 sm:$0x0] %vm4267, %v4500
        %s4504 = scalar_lea.vmem [#allocation4], 99
        %v4505 = vld [vmem:[%s4504] ss:$8 sm:$0xf]
        %v4506 = vmul.f32 %v4505, %v4500
        %s4507 = scalar_lea.vmem [#allocation5], 99
        %v4508 = vld [vmem:[%s4507] ss:$8 sm:$0xf]
        %v4509 = vadd.f32 %v4506, %v4508
        %s4510 = scalar_lea.vmem [#allocation6], 99
        %4511 = vst.msk [vmem:[%s4510] ss:$8 sm:$0xf] %vm4267, %v4509
        %4512 = vst.msk [vmem:[%s4510] ss:$8 sm:$0x0] %vm4267, %v4509
        %s4513 = scalar_lea.vmem [#allocation4], 100
        %v4514 = vld [vmem:[%s4513] ss:$8 sm:$0xf]
        %v4515 = vmul.f32 %v4514, %v4509
        %s4516 = scalar_lea.vmem [#allocation5], 100
        %v4517 = vld [vmem:[%s4516] ss:$8 sm:$0xf]
        %v4518 = vadd.f32 %v4515, %v4517
        %s4519 = scalar_lea.vmem [#allocation6], 100
        %4520 = vst.msk [vmem:[%s4519] ss:$8 sm:$0xf] %vm4267, %v4518
        %4521 = vst.msk [vmem:[%s4519] ss:$8 sm:$0x0] %vm4267, %v4518
        %s4522 = scalar_lea.vmem [#allocation4], 101
        %v4523 = vld [vmem:[%s4522] ss:$8 sm:$0xf]
        %v4524 = vmul.f32 %v4523, %v4518
        %s4525 = scalar_lea.vmem [#allocation5], 101
        %v4526 = vld [vmem:[%s4525] ss:$8 sm:$0xf]
        %v4527 = vadd.f32 %v4524, %v4526
        %s4528 = scalar_lea.vmem [#allocation6], 101
        %4529 = vst.msk [vmem:[%s4528] ss:$8 sm:$0xf] %vm4267, %v4527
        %4530 = vst.msk [vmem:[%s4528] ss:$8 sm:$0x0] %vm4267, %v4527
        %s4531 = scalar_lea.vmem [#allocation4], 102
        %v4532 = vld [vmem:[%s4531] ss:$8 sm:$0xf]
        %v4533 = vmul.f32 %v4532, %v4527
        %s4534 = scalar_lea.vmem [#allocation5], 102
        %v4535 = vld [vmem:[%s4534] ss:$8 sm:$0xf]
        %v4536 = vadd.f32 %v4533, %v4535
        %s4537 = scalar_lea.vmem [#allocation6], 102
        %4538 = vst.msk [vmem:[%s4537] ss:$8 sm:$0xf] %vm4267, %v4536
        %4539 = vst.msk [vmem:[%s4537] ss:$8 sm:$0x0] %vm4267, %v4536
        %s4540 = scalar_lea.vmem [#allocation4], 103
        %v4541 = vld [vmem:[%s4540] ss:$8 sm:$0xf]
        %v4542 = vmul.f32 %v4541, %v4536
        %s4543 = scalar_lea.vmem [#allocation5], 103
        %v4544 = vld [vmem:[%s4543] ss:$8 sm:$0xf]
        %v4545 = vadd.f32 %v4542, %v4544
        %s4546 = scalar_lea.vmem [#allocation6], 103
        %4547 = vst.msk [vmem:[%s4546] ss:$8 sm:$0xf] %vm4267, %v4545
        %4548 = vst.msk [vmem:[%s4546] ss:$8 sm:$0x0] %vm4267, %v4545
        %s4549 = scalar_lea.vmem [#allocation4], 128
        %v4550 = vld [vmem:[%s4549] ss:$8 sm:$0xf]
        %v4551 = vmul.f32 %v4550, %v4545
        %s4552 = scalar_lea.vmem [#allocation5], 128
        %v4553 = vld [vmem:[%s4552] ss:$8 sm:$0xf]
        %v4554 = vadd.f32 %v4551, %v4553
        %s4555 = scalar_lea.vmem [#allocation6], 128
        %4556 = vst.msk [vmem:[%s4555] ss:$8 sm:$0xf] %vm4267, %v4554
        %4557 = vst.msk [vmem:[%s4555] ss:$8 sm:$0x0] %vm4267, %v4554
        %s4558 = scalar_lea.vmem [#allocation4], 129
        %v4559 = vld [vmem:[%s4558] ss:$8 sm:$0xf]
        %v4560 = vmul.f32 %v4559, %v4554
        %s4561 = scalar_lea.vmem [#allocation5], 129
        %v4562 = vld [vmem:[%s4561] ss:$8 sm:$0xf]
        %v4563 = vadd.f32 %v4560, %v4562
        %s4564 = scalar_lea.vmem [#allocation6], 129
        %4565 = vst.msk [vmem:[%s4564] ss:$8 sm:$0xf] %vm4267, %v4563
        %4566 = vst.msk [vmem:[%s4564] ss:$8 sm:$0x0] %vm4267, %v4563
        %s4567 = scalar_lea.vmem [#allocation4], 130
        %v4568 = vld [vmem:[%s4567] ss:$8 sm:$0xf]
        %v4569 = vmul.f32 %v4568, %v4563
        %s4570 = scalar_lea.vmem [#allocation5], 130
        %v4571 = vld [vmem:[%s4570] ss:$8 sm:$0xf]
        %v4572 = vadd.f32 %v4569, %v4571
        %s4573 = scalar_lea.vmem [#allocation6], 130
        %4574 = vst.msk [vmem:[%s4573] ss:$8 sm:$0xf] %vm4267, %v4572
        %4575 = vst.msk [vmem:[%s4573] ss:$8 sm:$0x0] %vm4267, %v4572
        %s4576 = scalar_lea.vmem [#allocation4], 131
        %v4577 = vld [vmem:[%s4576] ss:$8 sm:$0xf]
        %v4578 = vmul.f32 %v4577, %v4572
        %s4579 = scalar_lea.vmem [#allocation5], 131
        %v4580 = vld [vmem:[%s4579] ss:$8 sm:$0xf]
        %v4581 = vadd.f32 %v4578, %v4580
        %s4582 = scalar_lea.vmem [#allocation6], 131
        %4583 = vst.msk [vmem:[%s4582] ss:$8 sm:$0xf] %vm4267, %v4581
        %4584 = vst.msk [vmem:[%s4582] ss:$8 sm:$0x0] %vm4267, %v4581
        %s4585 = scalar_lea.vmem [#allocation4], 132
        %v4586 = vld [vmem:[%s4585] ss:$8 sm:$0xf]
        %v4587 = vmul.f32 %v4586, %v4581
        %s4588 = scalar_lea.vmem [#allocation5], 132
        %v4589 = vld [vmem:[%s4588] ss:$8 sm:$0xf]
        %v4590 = vadd.f32 %v4587, %v4589
        %s4591 = scalar_lea.vmem [#allocation6], 132
        %4592 = vst.msk [vmem:[%s4591] ss:$8 sm:$0xf] %vm4267, %v4590
        %4593 = vst.msk [vmem:[%s4591] ss:$8 sm:$0x0] %vm4267, %v4590
        %s4594 = scalar_lea.vmem [#allocation4], 133
        %v4595 = vld [vmem:[%s4594] ss:$8 sm:$0xf]
        %v4596 = vmul.f32 %v4595, %v4590
        %s4597 = scalar_lea.vmem [#allocation5], 133
        %v4598 = vld [vmem:[%s4597] ss:$8 sm:$0xf]
        %v4599 = vadd.f32 %v4596, %v4598
        %s4600 = scalar_lea.vmem [#allocation6], 133
        %4601 = vst.msk [vmem:[%s4600] ss:$8 sm:$0xf] %vm4267, %v4599
        %4602 = vst.msk [vmem:[%s4600] ss:$8 sm:$0x0] %vm4267, %v4599
        %s4603 = scalar_lea.vmem [#allocation4], 134
        %v4604 = vld [vmem:[%s4603] ss:$8 sm:$0xf]
        %v4605 = vmul.f32 %v4604, %v4599
        %s4606 = scalar_lea.vmem [#allocation5], 134
        %v4607 = vld [vmem:[%s4606] ss:$8 sm:$0xf]
        %v4608 = vadd.f32 %v4605, %v4607
        %s4609 = scalar_lea.vmem [#allocation6], 134
        %4610 = vst.msk [vmem:[%s4609] ss:$8 sm:$0xf] %vm4267, %v4608
        %4611 = vst.msk [vmem:[%s4609] ss:$8 sm:$0x0] %vm4267, %v4608
        %s4612 = scalar_lea.vmem [#allocation4], 135
        %v4613 = vld [vmem:[%s4612] ss:$8 sm:$0xf]
        %v4614 = vmul.f32 %v4613, %v4608
        %s4615 = scalar_lea.vmem [#allocation5], 135
        %v4616 = vld [vmem:[%s4615] ss:$8 sm:$0xf]
        %v4617 = vadd.f32 %v4614, %v4616
        %s4618 = scalar_lea.vmem [#allocation6], 135
        %4619 = vst.msk [vmem:[%s4618] ss:$8 sm:$0xf] %vm4267, %v4617
        %4620 = vst.msk [vmem:[%s4618] ss:$8 sm:$0x0] %vm4267, %v4617
        %s4621 = scalar_lea.vmem [#allocation4], 160
        %v4622 = vld [vmem:[%s4621] ss:$8 sm:$0xf]
        %v4623 = vmul.f32 %v4622, %v4617
        %s4624 = scalar_lea.vmem [#allocation5], 160
        %v4625 = vld [vmem:[%s4624] ss:$8 sm:$0xf]
        %v4626 = vadd.f32 %v4623, %v4625
        %s4627 = scalar_lea.vmem [#allocation6], 160
        %4628 = vst.msk [vmem:[%s4627] ss:$8 sm:$0xf] %vm4267, %v4626
        %4629 = vst.msk [vmem:[%s4627] ss:$8 sm:$0x0] %vm4267, %v4626
        %s4630 = scalar_lea.vmem [#allocation4], 161
        %v4631 = vld [vmem:[%s4630] ss:$8 sm:$0xf]
        %v4632 = vmul.f32 %v4631, %v4626
        %s4633 = scalar_lea.vmem [#allocation5], 161
        %v4634 = vld [vmem:[%s4633] ss:$8 sm:$0xf]
        %v4635 = vadd.f32 %v4632, %v4634
        %s4636 = scalar_lea.vmem [#allocation6], 161
        %4637 = vst.msk [vmem:[%s4636] ss:$8 sm:$0xf] %vm4267, %v4635
        %4638 = vst.msk [vmem:[%s4636] ss:$8 sm:$0x0] %vm4267, %v4635
        %s4639 = scalar_lea.vmem [#allocation4], 162
        %v4640 = vld [vmem:[%s4639] ss:$8 sm:$0xf]
        %v4641 = vmul.f32 %v4640, %v4635
        %s4642 = scalar_lea.vmem [#allocation5], 162
        %v4643 = vld [vmem:[%s4642] ss:$8 sm:$0xf]
        %v4644 = vadd.f32 %v4641, %v4643
        %s4645 = scalar_lea.vmem [#allocation6], 162
        %4646 = vst.msk [vmem:[%s4645] ss:$8 sm:$0xf] %vm4267, %v4644
        %4647 = vst.msk [vmem:[%s4645] ss:$8 sm:$0x0] %vm4267, %v4644
        %s4648 = scalar_lea.vmem [#allocation4], 163
        %v4649 = vld [vmem:[%s4648] ss:$8 sm:$0xf]
        %v4650 = vmul.f32 %v4649, %v4644
        %s4651 = scalar_lea.vmem [#allocation5], 163
        %v4652 = vld [vmem:[%s4651] ss:$8 sm:$0xf]
        %v4653 = vadd.f32 %v4650, %v4652
        %s4654 = scalar_lea.vmem [#allocation6], 163
        %4655 = vst.msk [vmem:[%s4654] ss:$8 sm:$0xf] %vm4267, %v4653
        %4656 = vst.msk [vmem:[%s4654] ss:$8 sm:$0x0] %vm4267, %v4653
        %s4657 = scalar_lea.vmem [#allocation4], 164
        %v4658 = vld [vmem:[%s4657] ss:$8 sm:$0xf]
        %v4659 = vmul.f32 %v4658, %v4653
        %s4660 = scalar_lea.vmem [#allocation5], 164
        %v4661 = vld [vmem:[%s4660] ss:$8 sm:$0xf]
        %v4662 = vadd.f32 %v4659, %v4661
        %s4663 = scalar_lea.vmem [#allocation6], 164
        %4664 = vst.msk [vmem:[%s4663] ss:$8 sm:$0xf] %vm4267, %v4662
        %4665 = vst.msk [vmem:[%s4663] ss:$8 sm:$0x0] %vm4267, %v4662
        %s4666 = scalar_lea.vmem [#allocation4], 165
        %v4667 = vld [vmem:[%s4666] ss:$8 sm:$0xf]
        %v4668 = vmul.f32 %v4667, %v4662
        %s4669 = scalar_lea.vmem [#allocation5], 165
        %v4670 = vld [vmem:[%s4669] ss:$8 sm:$0xf]
        %v4671 = vadd.f32 %v4668, %v4670
        %s4672 = scalar_lea.vmem [#allocation6], 165
        %4673 = vst.msk [vmem:[%s4672] ss:$8 sm:$0xf] %vm4267, %v4671
        %4674 = vst.msk [vmem:[%s4672] ss:$8 sm:$0x0] %vm4267, %v4671
        %s4675 = scalar_lea.vmem [#allocation4], 166
        %v4676 = vld [vmem:[%s4675] ss:$8 sm:$0xf]
        %v4677 = vmul.f32 %v4676, %v4671
        %s4678 = scalar_lea.vmem [#allocation5], 166
        %v4679 = vld [vmem:[%s4678] ss:$8 sm:$0xf]
        %v4680 = vadd.f32 %v4677, %v4679
        %s4681 = scalar_lea.vmem [#allocation6], 166
        %4682 = vst.msk [vmem:[%s4681] ss:$8 sm:$0xf] %vm4267, %v4680
        %4683 = vst.msk [vmem:[%s4681] ss:$8 sm:$0x0] %vm4267, %v4680
        %s4684 = scalar_lea.vmem [#allocation4], 167
        %v4685 = vld [vmem:[%s4684] ss:$8 sm:$0xf]
        %v4686 = vmul.f32 %v4685, %v4680
        %s4687 = scalar_lea.vmem [#allocation5], 167
        %v4688 = vld [vmem:[%s4687] ss:$8 sm:$0xf]
        %v4689 = vadd.f32 %v4686, %v4688
        %s4690 = scalar_lea.vmem [#allocation6], 167
        %4691 = vst.msk [vmem:[%s4690] ss:$8 sm:$0xf] %vm4267, %v4689
        %4692 = vst.msk [vmem:[%s4690] ss:$8 sm:$0x0] %vm4267, %v4689
        %s4693 = scalar_lea.vmem [#allocation4], 192
        %v4694 = vld [vmem:[%s4693] ss:$8 sm:$0xf]
        %v4695 = vmul.f32 %v4694, %v4689
        %s4696 = scalar_lea.vmem [#allocation5], 192
        %v4697 = vld [vmem:[%s4696] ss:$8 sm:$0xf]
        %v4698 = vadd.f32 %v4695, %v4697
        %s4699 = scalar_lea.vmem [#allocation6], 192
        %4700 = vst.msk [vmem:[%s4699] ss:$8 sm:$0xf] %vm4267, %v4698
        %4701 = vst.msk [vmem:[%s4699] ss:$8 sm:$0x0] %vm4267, %v4698
        %s4702 = scalar_lea.vmem [#allocation4], 193
        %v4703 = vld [vmem:[%s4702] ss:$8 sm:$0xf]
        %v4704 = vmul.f32 %v4703, %v4698
        %s4705 = scalar_lea.vmem [#allocation5], 193
        %v4706 = vld [vmem:[%s4705] ss:$8 sm:$0xf]
        %v4707 = vadd.f32 %v4704, %v4706
        %s4708 = scalar_lea.vmem [#allocation6], 193
        %4709 = vst.msk [vmem:[%s4708] ss:$8 sm:$0xf] %vm4267, %v4707
        %4710 = vst.msk [vmem:[%s4708] ss:$8 sm:$0x0] %vm4267, %v4707
        %s4711 = scalar_lea.vmem [#allocation4], 194
        %v4712 = vld [vmem:[%s4711] ss:$8 sm:$0xf]
        %v4713 = vmul.f32 %v4712, %v4707
        %s4714 = scalar_lea.vmem [#allocation5], 194
        %v4715 = vld [vmem:[%s4714] ss:$8 sm:$0xf]
        %v4716 = vadd.f32 %v4713, %v4715
        %s4717 = scalar_lea.vmem [#allocation6], 194
        %4718 = vst.msk [vmem:[%s4717] ss:$8 sm:$0xf] %vm4267, %v4716
        %4719 = vst.msk [vmem:[%s4717] ss:$8 sm:$0x0] %vm4267, %v4716
        %s4720 = scalar_lea.vmem [#allocation4], 195
        %v4721 = vld [vmem:[%s4720] ss:$8 sm:$0xf]
        %v4722 = vmul.f32 %v4721, %v4716
        %s4723 = scalar_lea.vmem [#allocation5], 195
        %v4724 = vld [vmem:[%s4723] ss:$8 sm:$0xf]
        %v4725 = vadd.f32 %v4722, %v4724
        %s4726 = scalar_lea.vmem [#allocation6], 195
        %4727 = vst.msk [vmem:[%s4726] ss:$8 sm:$0xf] %vm4267, %v4725
        %4728 = vst.msk [vmem:[%s4726] ss:$8 sm:$0x0] %vm4267, %v4725
        %s4729 = scalar_lea.vmem [#allocation4], 196
        %v4730 = vld [vmem:[%s4729] ss:$8 sm:$0xf]
        %v4731 = vmul.f32 %v4730, %v4725
        %s4732 = scalar_lea.vmem [#allocation5], 196
        %v4733 = vld [vmem:[%s4732] ss:$8 sm:$0xf]
        %v4734 = vadd.f32 %v4731, %v4733
        %s4735 = scalar_lea.vmem [#allocation6], 196
        %4736 = vst.msk [vmem:[%s4735] ss:$8 sm:$0xf] %vm4267, %v4734
        %4737 = vst.msk [vmem:[%s4735] ss:$8 sm:$0x0] %vm4267, %v4734
        %s4738 = scalar_lea.vmem [#allocation4], 197
        %v4739 = vld [vmem:[%s4738] ss:$8 sm:$0xf]
        %v4740 = vmul.f32 %v4739, %v4734
        %s4741 = scalar_lea.vmem [#allocation5], 197
        %v4742 = vld [vmem:[%s4741] ss:$8 sm:$0xf]
        %v4743 = vadd.f32 %v4740, %v4742
        %s4744 = scalar_lea.vmem [#allocation6], 197
        %4745 = vst.msk [vmem:[%s4744] ss:$8 sm:$0xf] %vm4267, %v4743
        %4746 = vst.msk [vmem:[%s4744] ss:$8 sm:$0x0] %vm4267, %v4743
        %s4747 = scalar_lea.vmem [#allocation4], 198
        %v4748 = vld [vmem:[%s4747] ss:$8 sm:$0xf]
        %v4749 = vmul.f32 %v4748, %v4743
        %s4750 = scalar_lea.vmem [#allocation5], 198
        %v4751 = vld [vmem:[%s4750] ss:$8 sm:$0xf]
        %v4752 = vadd.f32 %v4749, %v4751
        %s4753 = scalar_lea.vmem [#allocation6], 198
        %4754 = vst.msk [vmem:[%s4753] ss:$8 sm:$0xf] %vm4267, %v4752
        %4755 = vst.msk [vmem:[%s4753] ss:$8 sm:$0x0] %vm4267, %v4752
        %s4756 = scalar_lea.vmem [#allocation4], 199
        %v4757 = vld [vmem:[%s4756] ss:$8 sm:$0xf]
        %v4758 = vmul.f32 %v4757, %v4752
        %s4759 = scalar_lea.vmem [#allocation5], 199
        %v4760 = vld [vmem:[%s4759] ss:$8 sm:$0xf]
        %v4761 = vadd.f32 %v4758, %v4760
        %s4762 = scalar_lea.vmem [#allocation6], 199
        %4763 = vst.msk [vmem:[%s4762] ss:$8 sm:$0xf] %vm4267, %v4761
        %4764 = vst.msk [vmem:[%s4762] ss:$8 sm:$0x0] %vm4267, %v4761
        %s4765 = scalar_lea.vmem [#allocation4], 224
        %v4766 = vld [vmem:[%s4765] ss:$8 sm:$0xf]
        %v4767 = vmul.f32 %v4766, %v4761
        %s4768 = scalar_lea.vmem [#allocation5], 224
        %v4769 = vld [vmem:[%s4768] ss:$8 sm:$0xf]
        %v4770 = vadd.f32 %v4767, %v4769
        %s4771 = scalar_lea.vmem [#allocation6], 224
        %4772 = vst.msk [vmem:[%s4771] ss:$8 sm:$0xf] %vm4267, %v4770
        %4773 = vst.msk [vmem:[%s4771] ss:$8 sm:$0x0] %vm4267, %v4770
        %s4774 = scalar_lea.vmem [#allocation4], 225
        %v4775 = vld [vmem:[%s4774] ss:$8 sm:$0xf]
        %v4776 = vmul.f32 %v4775, %v4770
        %s4777 = scalar_lea.vmem [#allocation5], 225
        %v4778 = vld [vmem:[%s4777] ss:$8 sm:$0xf]
        %v4779 = vadd.f32 %v4776, %v4778
        %s4780 = scalar_lea.vmem [#allocation6], 225
        %4781 = vst.msk [vmem:[%s4780] ss:$8 sm:$0xf] %vm4267, %v4779
        %4782 = vst.msk [vmem:[%s4780] ss:$8 sm:$0x0] %vm4267, %v4779
        %s4783 = scalar_lea.vmem [#allocation4], 226
        %v4784 = vld [vmem:[%s4783] ss:$8 sm:$0xf]
        %v4785 = vmul.f32 %v4784, %v4779
        %s4786 = scalar_lea.vmem [#allocation5], 226
        %v4787 = vld [vmem:[%s4786] ss:$8 sm:$0xf]
        %v4788 = vadd.f32 %v4785, %v4787
        %s4789 = scalar_lea.vmem [#allocation6], 226
        %4790 = vst.msk [vmem:[%s4789] ss:$8 sm:$0xf] %vm4267, %v4788
        %4791 = vst.msk [vmem:[%s4789] ss:$8 sm:$0x0] %vm4267, %v4788
        %s4792 = scalar_lea.vmem [#allocation4], 227
        %v4793 = vld [vmem:[%s4792] ss:$8 sm:$0xf]
        %v4794 = vmul.f32 %v4793, %v4788
        %s4795 = scalar_lea.vmem [#allocation5], 227
        %v4796 = vld [vmem:[%s4795] ss:$8 sm:$0xf]
        %v4797 = vadd.f32 %v4794, %v4796
        %s4798 = scalar_lea.vmem [#allocation6], 227
        %4799 = vst.msk [vmem:[%s4798] ss:$8 sm:$0xf] %vm4267, %v4797
        %4800 = vst.msk [vmem:[%s4798] ss:$8 sm:$0x0] %vm4267, %v4797
        %s4801 = scalar_lea.vmem [#allocation4], 228
        %v4802 = vld [vmem:[%s4801] ss:$8 sm:$0xf]
        %v4803 = vmul.f32 %v4802, %v4797
        %s4804 = scalar_lea.vmem [#allocation5], 228
        %v4805 = vld [vmem:[%s4804] ss:$8 sm:$0xf]
        %v4806 = vadd.f32 %v4803, %v4805
        %s4807 = scalar_lea.vmem [#allocation6], 228
        %4808 = vst.msk [vmem:[%s4807] ss:$8 sm:$0xf] %vm4267, %v4806
        %4809 = vst.msk [vmem:[%s4807] ss:$8 sm:$0x0] %vm4267, %v4806
        %s4810 = scalar_lea.vmem [#allocation4], 229
        %v4811 = vld [vmem:[%s4810] ss:$8 sm:$0xf]
        %v4812 = vmul.f32 %v4811, %v4806
        %s4813 = scalar_lea.vmem [#allocation5], 229
        %v4814 = vld [vmem:[%s4813] ss:$8 sm:$0xf]
        %v4815 = vadd.f32 %v4812, %v4814
        %s4816 = scalar_lea.vmem [#allocation6], 229
        %4817 = vst.msk [vmem:[%s4816] ss:$8 sm:$0xf] %vm4267, %v4815
        %4818 = vst.msk [vmem:[%s4816] ss:$8 sm:$0x0] %vm4267, %v4815
        %s4819 = scalar_lea.vmem [#allocation4], 230
        %v4820 = vld [vmem:[%s4819] ss:$8 sm:$0xf]
        %v4821 = vmul.f32 %v4820, %v4815
        %s4822 = scalar_lea.vmem [#allocation5], 230
        %v4823 = vld [vmem:[%s4822] ss:$8 sm:$0xf]
        %v4824 = vadd.f32 %v4821, %v4823
        %s4825 = scalar_lea.vmem [#allocation6], 230
        %4826 = vst.msk [vmem:[%s4825] ss:$8 sm:$0xf] %vm4267, %v4824
        %4827 = vst.msk [vmem:[%s4825] ss:$8 sm:$0x0] %vm4267, %v4824
        %s4828 = scalar_lea.vmem [#allocation4], 231
        %v4829 = vld [vmem:[%s4828] ss:$8 sm:$0xf]
        %v4830 = vmul.f32 %v4829, %v4824
        %s4831 = scalar_lea.vmem [#allocation5], 231
        %v4832 = vld [vmem:[%s4831] ss:$8 sm:$0xf]
        %v4833 = vadd.f32 %v4830, %v4832
        %s4834 = scalar_lea.vmem [#allocation6], 231
        %4835 = vst.msk [vmem:[%s4834] ss:$8 sm:$0xf] %vm4267, %v4833
        %4836 = vst.msk [vmem:[%s4834] ss:$8 sm:$0x0] %vm4267, %v4833
        %v4837 = vld [vmem:[#allocation6] sm:$0xff]
        %v4838 = vld [vmem:[#allocation6 + $0x8] sm:$0xff]
        %v4839 = vld [vmem:[#allocation6 + $0x10] sm:$0xff]
        %v4840 = vld [vmem:[#allocation6 + $0x18] sm:$0xff]
        %v4841 = vld [vmem:[#allocation6 + $0x20] sm:$0xff]
        %v4842 = vld [vmem:[#allocation6 + $0x28] sm:$0xff]
        %v4843 = vld [vmem:[#allocation6 + $0x30] sm:$0xff]
        %v4844 = vld [vmem:[#allocation6 + $0x38] sm:$0xff]
        %v4845 = vld [vmem:[#allocation6 + $0x40] sm:$0xff]
        %v4846 = vld [vmem:[#allocation6 + $0x48] sm:$0xff]
        %v4847 = vld [vmem:[#allocation6 + $0x50] sm:$0xff]
        %v4848 = vld [vmem:[#allocation6 + $0x58] sm:$0xff]
        %v4849 = vld [vmem:[#allocation6 + $0x60] sm:$0xff]
        %v4850 = vld [vmem:[#allocation6 + $0x68] sm:$0xff]
        %v4851 = vld [vmem:[#allocation6 + $0x70] sm:$0xff]
        %v4852 = vld [vmem:[#allocation6 + $0x78] sm:$0xff]
        %v4853 = vld [vmem:[#allocation6 + $0x80] sm:$0xff]
        %v4854 = vld [vmem:[#allocation6 + $0x88] sm:$0xff]
        %v4855 = vld [vmem:[#allocation6 + $0x90] sm:$0xff]
        %v4856 = vld [vmem:[#allocation6 + $0x98] sm:$0xff]
        %v4857 = vld [vmem:[#allocation6 + $0xa0] sm:$0xff]
        %v4858 = vld [vmem:[#allocation6 + $0xa8] sm:$0xff]
        %v4859 = vld [vmem:[#allocation6 + $0xb0] sm:$0xff]
        %v4860 = vld [vmem:[#allocation6 + $0xb8] sm:$0xff]
        %v4861 = vld [vmem:[#allocation6 + $0xc0] sm:$0xff]
        %v4862 = vld [vmem:[#allocation6 + $0xc8] sm:$0xff]
        %v4863 = vld [vmem:[#allocation6 + $0xd0] sm:$0xff]
        %v4864 = vld [vmem:[#allocation6 + $0xd8] sm:$0xff]
        %v4865 = vld [vmem:[#allocation6 + $0xe0] sm:$0xff]
        %v4866 = vld [vmem:[#allocation6 + $0xe8] sm:$0xff]
        %v4867 = vld [vmem:[#allocation6 + $0xf0] sm:$0xff]
        %v4868 = vld [vmem:[#allocation6 + $0xf8] sm:$0xff]
        %v4869 = vmul.f32 %v4837, %v3287
        %v4870 = vmul.f32 %v4838, %v3289
        %v4871 = vmul.f32 %v4839, %v3400
        %v4872 = vmul.f32 %v4840, %v3402
        %v4873 = vmul.f32 %v4841, %v3293
        %v4874 = vmul.f32 %v4842, %v3295
        %v4875 = vmul.f32 %v4843, %v3406
        %v4876 = vmul.f32 %v4844, %v3408
        %v4877 = vmul.f32 %v4845, %v3299
        %v4878 = vmul.f32 %v4846, %v3301
        %v4879 = vmul.f32 %v4847, %v3412
        %v4880 = vmul.f32 %v4848, %v3414
        %v4881 = vmul.f32 %v4849, %v3305
        %v4882 = vmul.f32 %v4850, %v3307
        %v4883 = vmul.f32 %v4851, %v3418
        %v4884 = vmul.f32 %v4852, %v3420
        %v4885 = vmul.f32 %v4853, %v3311
        %v4886 = vmul.f32 %v4854, %v3313
        %v4887 = vmul.f32 %v4855, %v3424
        %v4888 = vmul.f32 %v4856, %v3426
        %v4889 = vmul.f32 %v4857, %v3317
        %v4890 = vmul.f32 %v4858, %v3319
        %v4891 = vmul.f32 %v4859, %v3430
        %v4892 = vmul.f32 %v4860, %v3432
        %v4893 = vmul.f32 %v4861, %v3323
        %v4894 = vmul.f32 %v4862, %v3325
        %v4895 = vmul.f32 %v4863, %v3436
        %v4896 = vmul.f32 %v4864, %v3438
        %v4897 = vmul.f32 %v4865, %v3329
        %v4898 = vmul.f32 %v4866, %v3331
        %v4899 = vmul.f32 %v4867, %v3442
        %v4900 = vmul.f32 %v4868, %v3444
        %v4901 = vld [vmem:[%s12] sm:$0xff]
        %v4902 = vld [vmem:[%s12 + $0x8] sm:$0xff]
        %v4903 = vld [vmem:[%s12 + $0x10] sm:$0xff]
        %v4904 = vld [vmem:[%s12 + $0x18] sm:$0xff]
        %v4905 = vld [vmem:[%s12 + $0x20] sm:$0xff]
        %v4906 = vld [vmem:[%s12 + $0x28] sm:$0xff]
        %v4907 = vld [vmem:[%s12 + $0x30] sm:$0xff]
        %v4908 = vld [vmem:[%s12 + $0x38] sm:$0xff]
        %v4909 = vld [vmem:[%s12 + $0x40] sm:$0xff]
        %v4910 = vld [vmem:[%s12 + $0x48] sm:$0xff]
        %v4911 = vld [vmem:[%s12 + $0x50] sm:$0xff]
        %v4912 = vld [vmem:[%s12 + $0x58] sm:$0xff]
        %v4913 = vld [vmem:[%s12 + $0x60] sm:$0xff]
        %v4914 = vld [vmem:[%s12 + $0x68] sm:$0xff]
        %v4915 = vld [vmem:[%s12 + $0x70] sm:$0xff]
        %v4916 = vld [vmem:[%s12 + $0x78] sm:$0xff]
        %v4917 = vld [vmem:[%s12 + $0x80] sm:$0xff]
        %v4918 = vld [vmem:[%s12 + $0x88] sm:$0xff]
        %v4919 = vld [vmem:[%s12 + $0x90] sm:$0xff]
        %v4920 = vld [vmem:[%s12 + $0x98] sm:$0xff]
        %v4921 = vld [vmem:[%s12 + $0xa0] sm:$0xff]
        %v4922 = vld [vmem:[%s12 + $0xa8] sm:$0xff]
        %v4923 = vld [vmem:[%s12 + $0xb0] sm:$0xff]
        %v4924 = vld [vmem:[%s12 + $0xb8] sm:$0xff]
        %v4925 = vld [vmem:[%s12 + $0xc0] sm:$0xff]
        %v4926 = vld [vmem:[%s12 + $0xc8] sm:$0xff]
        %v4927 = vld [vmem:[%s12 + $0xd0] sm:$0xff]
        %v4928 = vld [vmem:[%s12 + $0xd8] sm:$0xff]
        %v4929 = vld [vmem:[%s12 + $0xe0] sm:$0xff]
        %v4930 = vld [vmem:[%s12 + $0xe8] sm:$0xff]
        %v4931 = vld [vmem:[%s12 + $0xf0] sm:$0xff]
        %v4932 = vld [vmem:[%s12 + $0xf8] sm:$0xff]
        %v4933 = vld [vmem:[%s12 + $0x100] sm:$0xff]
        %v4934 = vld [vmem:[%s12 + $0x108] sm:$0xff]
        %v4935 = vld [vmem:[%s12 + $0x110] sm:$0xff]
        %v4936 = vld [vmem:[%s12 + $0x118] sm:$0xff]
        %v4937 = vld [vmem:[%s12 + $0x120] sm:$0xff]
        %v4938 = vld [vmem:[%s12 + $0x128] sm:$0xff]
        %v4939 = vld [vmem:[%s12 + $0x130] sm:$0xff]
        %v4940 = vld [vmem:[%s12 + $0x138] sm:$0xff]
        %v4941 = vld [vmem:[%s12 + $0x140] sm:$0xff]
        %v4942 = vld [vmem:[%s12 + $0x148] sm:$0xff]
        %v4943 = vld [vmem:[%s12 + $0x150] sm:$0xff]
        %v4944 = vld [vmem:[%s12 + $0x158] sm:$0xff]
        %v4945 = vld [vmem:[%s12 + $0x160] sm:$0xff]
        %v4946 = vld [vmem:[%s12 + $0x168] sm:$0xff]
        %v4947 = vld [vmem:[%s12 + $0x170] sm:$0xff]
        %v4948 = vld [vmem:[%s12 + $0x178] sm:$0xff]
        %v4949 = vld [vmem:[%s12 + $0x180] sm:$0xff]
        %v4950 = vld [vmem:[%s12 + $0x188] sm:$0xff]
        %v4951 = vld [vmem:[%s12 + $0x190] sm:$0xff]
        %v4952 = vld [vmem:[%s12 + $0x198] sm:$0xff]
        %v4953 = vld [vmem:[%s12 + $0x1a0] sm:$0xff]
        %v4954 = vld [vmem:[%s12 + $0x1a8] sm:$0xff]
        %v4955 = vld [vmem:[%s12 + $0x1b0] sm:$0xff]
        %v4956 = vld [vmem:[%s12 + $0x1b8] sm:$0xff]
        %v4957 = vld [vmem:[%s12 + $0x1c0] sm:$0xff]
        %v4958 = vld [vmem:[%s12 + $0x1c8] sm:$0xff]
        %v4959 = vld [vmem:[%s12 + $0x1d0] sm:$0xff]
        %v4960 = vld [vmem:[%s12 + $0x1d8] sm:$0xff]
        %v4961 = vld [vmem:[%s12 + $0x1e0] sm:$0xff]
        %v4962 = vld [vmem:[%s12 + $0x1e8] sm:$0xff]
        %v4963 = vld [vmem:[%s12 + $0x1f0] sm:$0xff]
        %v4964 = vld [vmem:[%s12 + $0x1f8] sm:$0xff]
        %v4965 = vld [vmem:[#allocation14] sm:$0x1]
        %v4967 = vlaneseq
        %v4968 = vshrl.u32 %v4967, 7
        %v4969 = vsub.s32 0, %v4968
        %v4970 = vrot.slane %v4965, %v4969
        %v4972 = vmul.f32 %v2672, %v4970
        %v4973 = vmul.f32 %v2673, %v4970
        %v4974 = vmul.f32 %v2674, %v4970
        %v4975 = vmul.f32 %v2675, %v4970
        %v4976 = vmul.f32 %v2676, %v4970
        %v4977 = vmul.f32 %v2677, %v4970
        %v4978 = vmul.f32 %v2678, %v4970
        %v4979 = vmul.f32 %v2679, %v4970
        %4980 = vmatprep.subr.mxu0 0.0
        %4981 = vmatpush1.msra.mxu0 %v4901
        %4982 = vmatprep.subr.mxu0 0.0
        %4983 = vmatpush1.msra.mxu0 %v4902
        %4984 = vmatprep.subr.mxu0 0.0
        %4985 = vmatpush1.msra.mxu0 %v4903
        %4986 = vmatprep.subr.mxu0 0.0
        %4987 = vmatpush1.msra.mxu0 %v4904
        %4988 = vmatprep.subr.mxu0 0.0
        %4989 = vmatpush1.msra.mxu0 %v4905
        %4990 = vmatprep.subr.mxu0 0.0
        %4991 = vmatpush1.msra.mxu0 %v4906
        %4992 = vmatprep.subr.mxu0 0.0
        %4993 = vmatpush1.msra.mxu0 %v4907
        %4994 = vmatprep.subr.mxu0 0.0
        %4995 = vmatpush1.msra.mxu0 %v4908
        %4996 = vmatprep.subr.mxu0 0.0
        %4997 = vmatpush1.msra.mxu0 %v4909
        %4998 = vmatprep.subr.mxu0 0.0
        %4999 = vmatpush1.msra.mxu0 %v4910
        %5000 = vmatprep.subr.mxu0 0.0
        %5001 = vmatpush1.msra.mxu0 %v4911
        %5002 = vmatprep.subr.mxu0 0.0
        %5003 = vmatpush1.msra.mxu0 %v4912
        %5004 = vmatprep.subr.mxu0 0.0
        %5005 = vmatpush1.msra.mxu0 %v4913
        %5006 = vmatprep.subr.mxu0 0.0
        %5007 = vmatpush1.msra.mxu0 %v4914
        %5008 = vmatprep.subr.mxu0 0.0
        %5009 = vmatpush1.msra.mxu0 %v4915
        %5010 = vmatprep.subr.mxu0 0.0
        %5011 = vmatpush1.msra.mxu0 %v4916
        %5012 = vmatprep.subr.mxu0 0.0
        %5013 = vmatpush1.msra.mxu0 %v4917
        %5014 = vmatprep.subr.mxu0 0.0
        %5015 = vmatpush1.msra.mxu0 %v4918
        %5016 = vmatprep.subr.mxu0 0.0
        %5017 = vmatpush1.msra.mxu0 %v4919
        %5018 = vmatprep.subr.mxu0 0.0
        %5019 = vmatpush1.msra.mxu0 %v4920
        %5020 = vmatprep.subr.mxu0 0.0
        %5021 = vmatpush1.msra.mxu0 %v4921
        %5022 = vmatprep.subr.mxu0 0.0
        %5023 = vmatpush1.msra.mxu0 %v4922
        %5024 = vmatprep.subr.mxu0 0.0
        %5025 = vmatpush1.msra.mxu0 %v4923
        %5026 = vmatprep.subr.mxu0 0.0
        %5027 = vmatpush1.msra.mxu0 %v4924
        %5028 = vmatprep.subr.mxu0 0.0
        %5029 = vmatpush1.msra.mxu0 %v4925
        %5030 = vmatprep.subr.mxu0 0.0
        %5031 = vmatpush1.msra.mxu0 %v4926
        %5032 = vmatprep.subr.mxu0 0.0
        %5033 = vmatpush1.msra.mxu0 %v4927
        %5034 = vmatprep.subr.mxu0 0.0
        %5035 = vmatpush1.msra.mxu0 %v4928
        %5036 = vmatprep.subr.mxu0 0.0
        %5037 = vmatpush1.msra.mxu0 %v4929
        %5038 = vmatprep.subr.mxu0 0.0
        %5039 = vmatpush1.msra.mxu0 %v4930
        %5040 = vmatprep.subr.mxu0 0.0
        %5041 = vmatpush1.msra.mxu0 %v4931
        %5042 = vmatprep.subr.mxu0 0.0
        %5043 = vmatpush1.msra.mxu0 %v4932
        %5044 = vmatprep.mubr.f32.mxu0 %v4870
        %5045 = vmatmul.mubr.f32.gmra.mrb[0].mxu0 %v4869
        %v5046 = vpop.f32.mrb[0].mxu0
        %v5047 = vadd.f32 %v4972, %v5046
        %v5048 = vpop.f32.mrb[0].mxu0
        %5049 = vmatprep.mubr.f32.mxu0 %v4874
        %5050 = vmatmul.mubr.f32.gmra.mrb[0].mxu0 %v4873
        %v5051 = vpop.f32.mrb[0].mxu0
        %v5052 = vadd.f32 %v4973, %v5051
        %v5053 = vpop.f32.mrb[0].mxu0
        %5054 = vmatprep.mubr.f32.mxu0 %v4878
        %5055 = vmatmul.mubr.f32.gmra.mrb[0].mxu0 %v4877
        %v5056 = vpop.f32.mrb[0].mxu0
        %v5057 = vadd.f32 %v4974, %v5056
        %v5058 = vpop.f32.mrb[0].mxu0
        %5059 = vmatprep.mubr.f32.mxu0 %v4882
        %5060 = vmatmul.mubr.f32.gmra.mrb[0].mxu0 %v4881
        %v5061 = vpop.f32.mrb[0].mxu0
        %v5062 = vadd.f32 %v4975, %v5061
        %v5063 = vpop.f32.mrb[0].mxu0
        %5064 = vmatprep.mubr.f32.mxu0 %v4886
        %5065 = vmatmul.mubr.f32.gmra.mrb[0].mxu0 %v4885
        %v5066 = vpop.f32.mrb[0].mxu0
        %v5067 = vadd.f32 %v4976, %v5066
        %v5068 = vpop.f32.mrb[0].mxu0
        %5069 = vmatprep.mubr.f32.mxu0 %v4890
        %5070 = vmatmul.mubr.f32.gmra.mrb[0].mxu0 %v4889
        %v5071 = vpop.f32.mrb[0].mxu0
        %v5072 = vadd.f32 %v4977, %v5071
        %v5073 = vpop.f32.mrb[0].mxu0
        %5074 = vmatprep.mubr.f32.mxu0 %v4894
        %5075 = vmatmul.mubr.f32.gmra.mrb[0].mxu0 %v4893
        %v5076 = vpop.f32.mrb[0].mxu0
        %v5077 = vadd.f32 %v4978, %v5076
        %v5078 = vpop.f32.mrb[0].mxu0
        %5079 = vmatprep.mubr.f32.mxu0 %v4898
        %5080 = vmatmul.mubr.f32.gmra.mrb[0].mxu0 %v4897
        %v5081 = vpop.f32.mrb[0].mxu0
        %v5082 = vadd.f32 %v4979, %v5081
        %v5083 = vpop.f32.mrb[0].mxu0
        %5084 = vdwg.mxu0
        %5085 = vmatprep.subr.mxu0 0.0
        %5086 = vmatpush1.msra.mxu0 %v4933
        %5087 = vmatprep.subr.mxu0 0.0
        %5088 = vmatpush1.msra.mxu0 %v4934
        %5089 = vmatprep.subr.mxu0 0.0
        %5090 = vmatpush1.msra.mxu0 %v4935
        %5091 = vmatprep.subr.mxu0 0.0
        %5092 = vmatpush1.msra.mxu0 %v4936
        %5093 = vmatprep.subr.mxu0 0.0
        %5094 = vmatpush1.msra.mxu0 %v4937
        %5095 = vmatprep.subr.mxu0 0.0
        %5096 = vmatpush1.msra.mxu0 %v4938
        %5097 = vmatprep.subr.mxu0 0.0
        %5098 = vmatpush1.msra.mxu0 %v4939
        %5099 = vmatprep.subr.mxu0 0.0
        %5100 = vmatpush1.msra.mxu0 %v4940
        %5101 = vmatprep.subr.mxu0 0.0
        %5102 = vmatpush1.msra.mxu0 %v4941
        %5103 = vmatprep.subr.mxu0 0.0
        %5104 = vmatpush1.msra.mxu0 %v4942
        %5105 = vmatprep.subr.mxu0 0.0
        %5106 = vmatpush1.msra.mxu0 %v4943
        %5107 = vmatprep.subr.mxu0 0.0
        %5108 = vmatpush1.msra.mxu0 %v4944
        %5109 = vmatprep.subr.mxu0 0.0
        %5110 = vmatpush1.msra.mxu0 %v4945
        %5111 = vmatprep.subr.mxu0 0.0
        %5112 = vmatpush1.msra.mxu0 %v4946
        %5113 = vmatprep.subr.mxu0 0.0
        %5114 = vmatpush1.msra.mxu0 %v4947
        %5115 = vmatprep.subr.mxu0 0.0
        %5116 = vmatpush1.msra.mxu0 %v4948
        %5117 = vmatprep.subr.mxu0 0.0
        %5118 = vmatpush1.msra.mxu0 %v4949
        %5119 = vmatprep.subr.mxu0 0.0
        %5120 = vmatpush1.msra.mxu0 %v4950
        %5121 = vmatprep.subr.mxu0 0.0
        %5122 = vmatpush1.msra.mxu0 %v4951
        %5123 = vmatprep.subr.mxu0 0.0
        %5124 = vmatpush1.msra.mxu0 %v4952
        %5125 = vmatprep.subr.mxu0 0.0
        %5126 = vmatpush1.msra.mxu0 %v4953
        %5127 = vmatprep.subr.mxu0 0.0
        %5128 = vmatpush1.msra.mxu0 %v4954
        %5129 = vmatprep.subr.mxu0 0.0
        %5130 = vmatpush1.msra.mxu0 %v4955
        %5131 = vmatprep.subr.mxu0 0.0
        %5132 = vmatpush1.msra.mxu0 %v4956
        %5133 = vmatprep.subr.mxu0 0.0
        %5134 = vmatpush1.msra.mxu0 %v4957
        %5135 = vmatprep.subr.mxu0 0.0
        %5136 = vmatpush1.msra.mxu0 %v4958
        %5137 = vmatprep.subr.mxu0 0.0
        %5138 = vmatpush1.msra.mxu0 %v4959
        %5139 = vmatprep.subr.mxu0 0.0
        %5140 = vmatpush1.msra.mxu0 %v4960
        %5141 = vmatprep.subr.mxu0 0.0
        %5142 = vmatpush1.msra.mxu0 %v4961
        %5143 = vmatprep.subr.mxu0 0.0
        %5144 = vmatpush1.msra.mxu0 %v4962
        %5145 = vmatprep.subr.mxu0 0.0
        %5146 = vmatpush1.msra.mxu0 %v4963
        %5147 = vmatprep.subr.mxu0 0.0
        %5148 = vmatpush1.msra.mxu0 %v4964
        %5149 = vmatprep.mubr.f32.mxu0 %v4872
        %5150 = vmatmul.mubr.f32.gmra.mrb[0].mxu0 %v4871
        %v5151 = vpop.f32.mrb[0].mxu0
        %v5152 = vadd.f32 %v5047, %v5151
        %v5153 = vpop.f32.mrb[0].mxu0
        %5154 = vmatprep.mubr.f32.mxu0 %v4876
        %5155 = vmatmul.mubr.f32.gmra.mrb[0].mxu0 %v4875
        %v5156 = vpop.f32.mrb[0].mxu0
        %v5157 = vadd.f32 %v5052, %v5156
        %v5158 = vpop.f32.mrb[0].mxu0
        %5159 = vmatprep.mubr.f32.mxu0 %v4880
        %5160 = vmatmul.mubr.f32.gmra.mrb[0].mxu0 %v4879
        %v5161 = vpop.f32.mrb[0].mxu0
        %v5162 = vadd.f32 %v5057, %v5161
        %v5163 = vpop.f32.mrb[0].mxu0
        %5164 = vmatprep.mubr.f32.mxu0 %v4884
        %5165 = vmatmul.mubr.f32.gmra.mrb[0].mxu0 %v4883
        %v5166 = vpop.f32.mrb[0].mxu0
        %v5167 = vadd.f32 %v5062, %v5166
        %v5168 = vpop.f32.mrb[0].mxu0
        %5169 = vmatprep.mubr.f32.mxu0 %v4888
        %5170 = vmatmul.mubr.f32.gmra.mrb[0].mxu0 %v4887
        %v5171 = vpop.f32.mrb[0].mxu0
        %v5172 = vadd.f32 %v5067, %v5171
        %v5173 = vpop.f32.mrb[0].mxu0
        %5174 = vmatprep.mubr.f32.mxu0 %v4892
        %5175 = vmatmul.mubr.f32.gmra.mrb[0].mxu0 %v4891
        %v5176 = vpop.f32.mrb[0].mxu0
        %v5177 = vadd.f32 %v5072, %v5176
        %v5178 = vpop.f32.mrb[0].mxu0
        %5179 = vmatprep.mubr.f32.mxu0 %v4896
        %5180 = vmatmul.mubr.f32.gmra.mrb[0].mxu0 %v4895
        %v5181 = vpop.f32.mrb[0].mxu0
        %v5182 = vadd.f32 %v5077, %v5181
        %v5183 = vpop.f32.mrb[0].mxu0
        %5184 = vmatprep.mubr.f32.mxu0 %v4900
        %5185 = vmatmul.mubr.f32.gmra.mrb[0].mxu0 %v4899
        %v5186 = vpop.f32.mrb[0].mxu0
        %v5187 = vadd.f32 %v5082, %v5186
        %v5188 = vpop.f32.mrb[0].mxu0
        %5189 = vdwg.mxu0
        %v5190 = vsub.f32 0.0, %v2468
        %v5191 = vsub.f32 0.0, %v2469
        %v5192 = vsub.f32 0.0, %v2470
        %v5193 = vsub.f32 0.0, %v2471
        %v5194 = vsub.f32 0.0, %v2472
        %v5195 = vsub.f32 0.0, %v2473
        %v5196 = vsub.f32 0.0, %v2474
        %v5197 = vsub.f32 0.0, %v2475
        %v5198 = vmul.f32 %v5190, 1.442695
        %v5199 = vpow.pop %v5198
        %v5200 = vmul.f32 %v5191, 1.442695
        %v5201 = vpow.pop %v5200
        %v5202 = vmul.f32 %v5192, 1.442695
        %v5203 = vpow.pop %v5202
        %v5204 = vmul.f32 %v5193, 1.442695
        %v5205 = vpow.pop %v5204
        %v5206 = vmul.f32 %v5194, 1.442695
        %v5207 = vpow.pop %v5206
        %v5208 = vmul.f32 %v5195, 1.442695
        %v5209 = vpow.pop %v5208
        %v5210 = vmul.f32 %v5196, 1.442695
        %v5211 = vpow.pop %v5210
        %v5212 = vmul.f32 %v5197, 1.442695
        %v5213 = vpow.pop %v5212
        %v5214 = vadd.f32 %v5199, 1.0
        %v5215 = vadd.f32 %v5201, 1.0
        %v5216 = vadd.f32 %v5203, 1.0
        %v5217 = vadd.f32 %v5205, 1.0
        %v5218 = vadd.f32 %v5207, 1.0
        %v5219 = vadd.f32 %v5209, 1.0
        %v5220 = vadd.f32 %v5211, 1.0
        %v5221 = vadd.f32 %v5213, 1.0
        %v5222 = vrcp.pop %v5214
        %v5223 = vmul.f32 1.0, %v5222
        %v5224 = vrcp.pop %v5215
        %v5225 = vmul.f32 1.0, %v5224
        %v5226 = vrcp.pop %v5216
        %v5227 = vmul.f32 1.0, %v5226
        %v5228 = vrcp.pop %v5217
        %v5229 = vmul.f32 1.0, %v5228
        %v5230 = vrcp.pop %v5218
        %v5231 = vmul.f32 1.0, %v5230
        %v5232 = vrcp.pop %v5219
        %v5233 = vmul.f32 1.0, %v5232
        %v5234 = vrcp.pop %v5220
        %v5235 = vmul.f32 1.0, %v5234
        %v5236 = vrcp.pop %v5221
        %v5237 = vmul.f32 1.0, %v5236
        %v5238 = vmul.f32 %v2468, %v5223
        %v5239 = vmul.f32 %v2469, %v5225
        %v5240 = vmul.f32 %v2470, %v5227
        %v5241 = vmul.f32 %v2471, %v5229
        %v5242 = vmul.f32 %v2472, %v5231
        %v5243 = vmul.f32 %v2473, %v5233
        %v5244 = vmul.f32 %v2474, %v5235
        %v5245 = vmul.f32 %v2475, %v5237
        %5254 = vrot.lane.b32.xlu0 %v5238, 96
        %v5255 = vpop.permute.xlu0 %5254
        %5256 = vrot.lane.b32.xlu0 %v5239, 96
        %v5257 = vpop.permute.xlu0 %5256
        %5258 = vrot.lane.b32.xlu0 %v5240, 96
        %v5259 = vpop.permute.xlu0 %5258
        %5260 = vrot.lane.b32.xlu0 %v5241, 96
        %v5261 = vpop.permute.xlu0 %5260
        %5262 = vrot.lane.b32.xlu0 %v5242, 96
        %v5263 = vpop.permute.xlu0 %5262
        %5264 = vrot.lane.b32.xlu0 %v5243, 96
        %v5265 = vpop.permute.xlu0 %5264
        %5266 = vrot.lane.b32.xlu0 %v5244, 96
        %v5267 = vpop.permute.xlu0 %5266
        %5268 = vrot.lane.b32.xlu0 %v5245, 96
        %v5269 = vpop.permute.xlu0 %5268
        %v5278 = vmul.f32 %v5152, %v5255
        %v5279 = vmul.f32 %v5157, %v5257
        %v5280 = vmul.f32 %v5162, %v5259
        %v5281 = vmul.f32 %v5167, %v5261
        %v5282 = vmul.f32 %v5172, %v5263
        %v5283 = vmul.f32 %v5177, %v5265
        %v5284 = vmul.f32 %v5182, %v5267
        %v5285 = vmul.f32 %v5187, %v5269
        %v5286 = vld [vmem:[#allocation15] sm:$0xff]
        %v5287 = vld [vmem:[#allocation15 + $0x8] sm:$0xff]
        %v5288 = vld [vmem:[#allocation15 + $0x10] sm:$0xff]
        %v5289 = vld [vmem:[#allocation15 + $0x18] sm:$0xff]
        %v5291 = vsel %vm1637, %v5278, 0
        %v5294 = vsel %vm1637, %v5279, 0
        %v5297 = vsel %vm1637, %v5280, 0
        %v5300 = vsel %vm1637, %v5281, 0
        %v5303 = vsel %vm1637, %v5282, 0
        %v5306 = vsel %vm1637, %v5283, 0
        %v5309 = vsel %vm1637, %v5284, 0
        %v5312 = vsel %vm1637, %v5285, 0
        %5314 = vmatprep.subr.mxu0 0.0
        %5315 = vmatpush1.msra.mxu0 %v5286
        %5316 = vmatprep.subr.mxu0 0.0
        %5317 = vmatpush1.msra.mxu0 %v5287
        %5318 = vmatprep.subr.mxu0 0.0
        %5319 = vmatpush1.msra.mxu0 %v5288
        %5320 = vmatprep.subr.mxu0 0.0
        %5321 = vmatpush1.msra.mxu0 %v5289
        %5322 = vmatprep.subr.mxu0 0.0
        %5323 = vmatpush1.msra.mxu0 0.0
        %5324 = vmatprep.subr.mxu0 0.0
        %5325 = vmatpush1.msra.mxu0 0.0
        %5326 = vmatprep.subr.mxu0 0.0
        %5327 = vmatpush1.msra.mxu0 0.0
        %5328 = vmatprep.subr.mxu0 0.0
        %5329 = vmatpush1.msra.mxu0 0.0
        %5330 = vmatprep.subr.mxu0 0.0
        %5331 = vmatpush1.msra.mxu0 0.0
        %5332 = vmatprep.subr.mxu0 0.0
        %5333 = vmatpush1.msra.mxu0 0.0
        %5334 = vmatprep.subr.mxu0 0.0
        %5335 = vmatpush1.msra.mxu0 0.0
        %5336 = vmatprep.subr.mxu0 0.0
        %5337 = vmatpush1.msra.mxu0 0.0
        %5338 = vmatprep.subr.mxu0 0.0
        %5339 = vmatpush1.msra.mxu0 0.0
        %5340 = vmatprep.subr.mxu0 0.0
        %5341 = vmatpush1.msra.mxu0 0.0
        %5342 = vmatprep.subr.mxu0 0.0
        %5343 = vmatpush1.msra.mxu0 0.0
        %5344 = vmatprep.subr.mxu0 0.0
        %5345 = vmatpush1.msra.mxu0 0.0
        %5346 = vmatprep.subr.mxu0 0.0
        %5347 = vmatpush1.msra.mxu0 0.0
        %5348 = vmatprep.subr.mxu0 0.0
        %5349 = vmatpush1.msra.mxu0 0.0
        %5350 = vmatprep.subr.mxu0 0.0
        %5351 = vmatpush1.msra.mxu0 0.0
        %5352 = vmatprep.subr.mxu0 0.0
        %5353 = vmatpush1.msra.mxu0 0.0
        %5354 = vmatprep.subr.mxu0 0.0
        %5355 = vmatpush1.msra.mxu0 0.0
        %5356 = vmatprep.subr.mxu0 0.0
        %5357 = vmatpush1.msra.mxu0 0.0
        %5358 = vmatprep.subr.mxu0 0.0
        %5359 = vmatpush1.msra.mxu0 0.0
        %5360 = vmatprep.subr.mxu0 0.0
        %5361 = vmatpush1.msra.mxu0 0.0
        %5362 = vmatprep.subr.mxu0 0.0
        %5363 = vmatpush1.msra.mxu0 0.0
        %5364 = vmatprep.subr.mxu0 0.0
        %5365 = vmatpush1.msra.mxu0 0.0
        %5366 = vmatprep.subr.mxu0 0.0
        %5367 = vmatpush1.msra.mxu0 0.0
        %5368 = vmatprep.subr.mxu0 0.0
        %5369 = vmatpush1.msra.mxu0 0.0
        %5370 = vmatprep.subr.mxu0 0.0
        %5371 = vmatpush1.msra.mxu0 0.0
        %5372 = vmatprep.subr.mxu0 0.0
        %5373 = vmatpush1.msra.mxu0 0.0
        %5374 = vmatprep.subr.mxu0 0.0
        %5375 = vmatpush1.msra.mxu0 0.0
        %5376 = vmatprep.subr.mxu0 0.0
        %5377 = vmatpush1.msra.mxu0 0.0
        %5378 = vmatprep.mubr.f32.mxu0 0.0
        %5379 = vmatmul.mubr.f32.gmra.mrb[0].mxu0 %v5291
        %v5380 = vpop.f32.mrb[0].mxu0
        %v5381 = vadd.f32 0.0, %v5380
        %v5382 = vpop.f32.mrb[0].mxu0
        %5383 = vmatprep.mubr.f32.mxu0 0.0
        %5384 = vmatmul.mubr.f32.gmra.mrb[0].mxu0 %v5294
        %v5385 = vpop.f32.mrb[0].mxu0
        %v5386 = vadd.f32 0.0, %v5385
        %v5387 = vpop.f32.mrb[0].mxu0
        %5388 = vmatprep.mubr.f32.mxu0 0.0
        %5389 = vmatmul.mubr.f32.gmra.mrb[0].mxu0 %v5297
        %v5390 = vpop.f32.mrb[0].mxu0
        %v5391 = vadd.f32 0.0, %v5390
        %v5392 = vpop.f32.mrb[0].mxu0
        %5393 = vmatprep.mubr.f32.mxu0 0.0
        %5394 = vmatmul.mubr.f32.gmra.mrb[0].mxu0 %v5300
        %v5395 = vpop.f32.mrb[0].mxu0
        %v5396 = vadd.f32 0.0, %v5395
        %v5397 = vpop.f32.mrb[0].mxu0
        %5398 = vmatprep.mubr.f32.mxu0 0.0
        %5399 = vmatmul.mubr.f32.gmra.mrb[0].mxu0 %v5303
        %v5400 = vpop.f32.mrb[0].mxu0
        %v5401 = vadd.f32 0.0, %v5400
        %v5402 = vpop.f32.mrb[0].mxu0
        %5403 = vmatprep.mubr.f32.mxu0 0.0
        %5404 = vmatmul.mubr.f32.gmra.mrb[0].mxu0 %v5306
        %v5405 = vpop.f32.mrb[0].mxu0
        %v5406 = vadd.f32 0.0, %v5405
        %v5407 = vpop.f32.mrb[0].mxu0
        %5408 = vmatprep.mubr.f32.mxu0 0.0
        %5409 = vmatmul.mubr.f32.gmra.mrb[0].mxu0 %v5309
        %v5410 = vpop.f32.mrb[0].mxu0
        %v5411 = vadd.f32 0.0, %v5410
        %v5412 = vpop.f32.mrb[0].mxu0
        %5413 = vmatprep.mubr.f32.mxu0 0.0
        %5414 = vmatmul.mubr.f32.gmra.mrb[0].mxu0 %v5312
        %v5415 = vpop.f32.mrb[0].mxu0
        %v5416 = vadd.f32 0.0, %v5415
        %v5417 = vpop.f32.mrb[0].mxu0
        %5418 = vdwg.mxu0
        %5419 = vst [vmem:[%s576] sm:$0xff] %v5381
        %5420 = vst [vmem:[%s576 + $0x8] sm:$0xff] %v5386
        %5421 = vst [vmem:[%s576 + $0x10] sm:$0xff] %v5391
        %5422 = vst [vmem:[%s576 + $0x18] sm:$0xff] %v5396
        %5423 = vst [vmem:[%s576 + $0x20] sm:$0xff] %v5401
        %5424 = vst [vmem:[%s576 + $0x28] sm:$0xff] %v5406
        %5425 = vst [vmem:[%s576 + $0x30] sm:$0xff] %v5411
        %5426 = vst [vmem:[%s576 + $0x38] sm:$0xff] %v5416
        %p5427 = scmp.lt.s32.totalorder %s30, 1
        %s5428 = scalar_select %p5427, %s30, 1
        %s5429 = smul.addr %s5428, 8
        %s5430 = smul.addr %s5429, 8
        %s5431 = scalar_lea.vmem %s15, %s5430
        // Predicated region
        $region105: #{mamba_forward.1} parent=79 // pred_check
          %p5432 = pneg %p368
        $region106: #{mamba_forward.1} parent=79 // pred_check_branch
          %5434 = sbr.rel (%p5432) target = $region108
        $region107: #{mamba_forward.1} parent=79 // pred_region
          _
        $region108: #{mamba_forward.1} parent=79 // pred_fallthru
          _
      $region80: #{mamba_forward.1} parent=5 // pred_fallthru
        _
      %p5435 = scmp.le.s32.totalorder 2, %s25
      // Predicated region
      $region109: #{mamba_forward.1} parent=5 // pred_check
        %p5436 = pneg %p5435
      $region110: #{mamba_forward.1} parent=5 // pred_check_branch
        %5438 = sbr.rel (%p5436) target = $region112
      $region111: #{mamba_forward.1} parent=5 // pred_region
        %s5439 = ssub.s32 %s25, 2
        // Predicated region
        $region113: #{mamba_forward.1} parent=111 // pred_check
          %p5440 = pneg %p374
        $region114: #{mamba_forward.1} parent=111 // pred_check_branch
          %5442 = sbr.rel (%p5440) target = $region116
        $region115: #{mamba_forward.1} parent=111 // pred_region
          %p5443 = scmp.lt.s32.totalorder %s31, 1
          %s5444 = scalar_select %p5443, %s31, 1
          %s5445 = smul.addr %s5444, 8
          %s5446 = smul.addr %s5445, 8
          %s5447 = scalar_lea.vmem %s15, %s5446
        $region116: #{mamba_forward.1} parent=111 // pred_fallthru
          _
      $region112: #{mamba_forward.1} parent=5 // pred_fallthru
        _
    $region6: #{mamba_forward.1} parent=1 // loop_footer
      %s29 = sadd.s32 1, %s25
    $region7: #{mamba_forward.1} parent=1 // loop_footer_branch
      %24 = sbr.rel target = $region3
    $region8: #{mamba_forward.1} parent=1 // loop_exit
      _
    %5448 = vsyncpa [#allocation8], 1
    %s5449 = scalar_lea.sflag [#allocation8], 1
    %5450 = vsyncpa %s5449, 1
    %5451 = vsyncpa [#allocation10], 1
    %5452 = vsyncpa [#allocation13], 1
    %5453 = vsyncpa [#allocation16], 1

</llo_original>
